<compile_context>
chip_gen: v7x
topology: tpu7x:2x2x1
jax: 0.10.0
libtpu: 0.0.40
codegen_flags: <defaults>
</compile_context>

<pallas_src>
import numpy as np
import jax
import jax.numpy as jnp
from jax.experimental import pallas as pl
from jax.experimental.pallas import tpu as pltpu


def _round_up(v, m):
    return -(-v // m) * m


# ---------------------------------------------------------------------------
# Host-side constants
# ---------------------------------------------------------------------------
def _dft_matrices(height, width):
    """Shifted 2-D DFT as one Kronecker (M, M) matrix; returns Re/Im transposed
    so that X_shift(flat) = x(flat) @ KreT (+ i * x @ KimT)."""
    u = np.arange(height)[:, None] - height // 2
    h = np.arange(height)[None, :]
    fh = np.exp(-2j * np.pi * (u * h) / height)          # (H, H)  [u, h]
    v = np.arange(width)[:, None] - width // 2
    w = np.arange(width)[None, :]
    fw = np.exp(-2j * np.pi * (v * w) / width)           # (W, W)  [v, w]
    kk = np.kron(fh, fw)                                 # [(u*W+v), (h*W+w)]
    kre_t = jnp.asarray(np.ascontiguousarray(kk.real.T), jnp.float32)
    kim_t = jnp.asarray(np.ascontiguousarray(kk.imag.T), jnp.float32)
    return kre_t, kim_t


def _conv_masks(height, width):
    """(9, 1, H*W) validity masks for the 9 taps of a zero-padded 3x3 conv."""
    m = height * width
    hh, ww = np.divmod(np.arange(m), width)
    masks = np.zeros((9, 1, m), np.float32)
    for t in range(9):
        dh, dw = t // 3 - 1, t % 3 - 1
        valid = ((hh + dh >= 0) & (hh + dh < height) &
                 (ww + dw >= 0) & (ww + dw < width))
        masks[t, 0, :] = valid.astype(np.float32)
    return jnp.asarray(masks)


# ---------------------------------------------------------------------------
# In-kernel helpers
# ---------------------------------------------------------------------------
def _atan2(y, x):
    """atan2(y, x) from basic VPU ops (Cephes atanf polynomial + quadrant
    fixups).  Mosaic has no native atan2 lowering; matches torch.angle to
    ~1e-6 rad."""
    ax, ay = jnp.abs(x), jnp.abs(y)
    mx, mn = jnp.maximum(ax, ay), jnp.minimum(ax, ay)
    t = mn / jnp.maximum(mx, 1e-30)
    big = t > 0.4142135623730951                      # tan(pi/8) range reduction
    u = jnp.where(big, (t - 1.0) / (t + 1.0), t)
    z = u * u
    p = ((((8.05374449538e-2 * z - 1.38776856032e-1) * z
           + 1.99777106478e-1) * z - 3.33329491539e-1) * z * u + u)
    a = jnp.where(big, p + 0.7853981633974483, p)     # atan(t), t in [0, 1]
    a = jnp.where(ay > ax, 1.5707963267948966 - a, a)
    a = jnp.where(x < 0.0, 3.141592653589793 - a, a)
    return jnp.where(y < 0.0, -a, a)


def _im2col(x, masks_ref, x9_ref, *, width):
    """x: (Cin, M) f32 with Cin a multiple of 16.  Writes the 3x3 'same'
    patch matrix (tap-major: row t*Cin + c) into rows [0, 9*Cin) of the bf16
    x9_ref scratch.  Returns K = 9*Cin."""
    cin, m = x.shape
    for t in range(9):
        dh, dw = t // 3 - 1, t % 3 - 1
        if dh == 0 and dw == 0:
            xs = x
        else:
            shift = (-(dh * width + dw)) % m          # xs[:, r] = x[:, r+dh*W+dw]
            xs = pltpu.roll(x, shift, axis=1) * masks_ref[t]
        x9_ref[t * cin:(t + 1) * cin, :] = xs.astype(x9_ref.dtype)
    return 9 * cin


def _dense(w_ref, b_ref, rhs, dst_ref, *, dst_off=0, relu=False, tile=128):
    """dst[dst_off:dst_off+Cout] = act(W @ rhs + b).  One full-K MXU dot per
    128-wide Cout tile: Mosaic chains the K accumulation internally (MRB on
    v7x), so only the 32-vreg f32 result tile is live."""
    cout = w_ref.shape[0]
    for c0 in range(0, cout, tile):
        cw = min(tile, cout - c0)
        r = jnp.dot(w_ref[c0:c0 + cw, :], rhs,
                    preferred_element_type=jnp.float32)
        r = r + b_ref[c0:c0 + cw, :]
        if relu:
            r = jnp.maximum(r, 0.0)
        dst_ref[dst_off + c0:dst_off + c0 + cw, :] = r.astype(dst_ref.dtype)


# ---------------------------------------------------------------------------
# Fully fused kernel
# ---------------------------------------------------------------------------
def _make_kernel(*, c_pad, width, n_out):
    def kernel(x_ref, kre_ref, kim_ref, masks_ref,
               w1, b1, w2, b2, w3, b3, w4, b4,
               wp1, bp1, wp2, bp2, wo, bo,
               out_ref,
               feat_ref, x9_ref, h1_ref, h2_ref, h3_ref, hp_ref, comb_ref):
        # ---- FFT features: shifted 2-D DFT as one Kronecker matmul ----------
        xb = x_ref[...]                                         # (c_pad, M) f32
        re = jnp.dot(xb, kre_ref[...], preferred_element_type=jnp.float32)
        im = jnp.dot(xb, kim_ref[...], preferred_element_type=jnp.float32)
        feat_ref[0:c_pad, :] = jnp.log(jnp.sqrt(re * re + im * im) + 1e-10)
        feat_ref[c_pad:2 * c_pad, :] = _atan2(im, re)           # torch.angle

        # ---- conv trunk; conv1 and phase-conv1 share one patch matrix -------
        k = _im2col(feat_ref[...], masks_ref, x9_ref, width=width)
        _dense(w1, b1, x9_ref[0:k, :], h1_ref, relu=True)       # conv1+BN+ReLU
        _dense(wp1, bp1, x9_ref[0:k, :], hp_ref, relu=True)     # p1  +BN+ReLU
        k = _im2col(h1_ref[...], masks_ref, x9_ref, width=width)
        _dense(w2, b2, x9_ref[0:k, :], h2_ref, relu=True)       # conv2+BN+ReLU
        k = _im2col(h2_ref[...], masks_ref, x9_ref, width=width)
        _dense(w3, b3, x9_ref[0:k, :], h3_ref, relu=True)       # conv3+BN+ReLU
        _dense(w4, b4, h3_ref[...], comb_ref, dst_off=0)        # 1x1 conv4

        # ---- phase path ------------------------------------------------------
        k = _im2col(hp_ref[...], masks_ref, x9_ref, width=width)
        _dense(wp2, bp2, x9_ref[0:k, :], comb_ref, dst_off=n_out)   # p2

        # ---- concat already materialized in comb -> final 1x1 ---------------
        _dense(wo, bo, comb_ref[...], out_ref)

    return kernel


def fourier_domain_branch(x_nchw, params):
    N, C, H, W = x_nchw.shape
    M = H * W
    c_pad = _round_up(C, 8)
    n_out = params["out"][0].shape[0]

    kre_t, kim_t = _dft_matrices(H, W)
    masks = _conv_masks(H, W)

    x2 = x_nchw.reshape(N, C, M).astype(jnp.float32)
    if c_pad != C:                                    # pad channels for aligned tiles
        x2 = jnp.concatenate(
            [x2, jnp.zeros((N, c_pad - C, M), jnp.float32)], axis=1)

    consts = [kre_t, kim_t, masks]
    for name in ("c1", "c2", "c3", "c4", "p1", "p2", "out"):
        w, b = params[name]
        consts += [w.astype(jnp.bfloat16), b]         # bf16 weights, f32 bias

    def cspec(a):
        nd = a.ndim
        return pl.BlockSpec(a.shape, lambda n, _nd=nd: (0,) * _nd)

    max_cin = max(2 * c_pad, 128)                     # widest 3x3-conv input
    grid_spec = pltpu.PrefetchScalarGridSpec(
        num_scalar_prefetch=0,
        grid=(N,),
        in_specs=[pl.BlockSpec((None, c_pad, M), lambda n: (n, 0, 0))]
                 + [cspec(a) for a in consts],
        out_specs=pl.BlockSpec((None, n_out, M), lambda n: (n, 0, 0)),
        scratch_shapes=[
            pltpu.VMEM((2 * c_pad, M), jnp.float32),      # feat = [log|X|; angle]
            pltpu.VMEM((9 * max_cin, M), jnp.bfloat16),   # shared im2col patches
            pltpu.VMEM((64, M), jnp.float32),             # conv1 activation
            pltpu.VMEM((128, M), jnp.float32),            # conv2 activation
            pltpu.VMEM((256, M), jnp.bfloat16),           # conv3 activation
            pltpu.VMEM((32, M), jnp.float32),             # phase conv1 activation
            pltpu.VMEM((2 * n_out, M), jnp.bfloat16),     # [conv_feat; phase_feat]
        ],
    )
    out = pl.pallas_call(
        _make_kernel(c_pad=c_pad, width=W, n_out=n_out),
        out_shape=jax.ShapeDtypeStruct((N, n_out, M), jnp.float32),
        grid_spec=grid_spec,
        compiler_params=pltpu.CompilerParams(
            dimension_semantics=("parallel",)),           # N -> both v7x TCs
    )(x2, *consts)
    return out.reshape(N, n_out, H, W)                    # NCHW, no transpose


# ---------------------------------------------------------------------------
# Parameter init (deterministic, synthetic), eval-mode BatchNorm folded in.
# 3x3 conv weights are pre-packed for the kernel's im2col layout:
#   (Cout, 9*Cin_pad) with K index = tap*Cin_pad + channel, tap=(dh+1)*3+(dw+1)
# ---------------------------------------------------------------------------
def init_params(key, input_channels=3, output_channels=64):
    eps = 1e-5
    bn_scale = float(1.0 / np.sqrt(1.0 + eps))   # gamma=1, var=1, mean=0, beta=0
    c = input_channels
    c_pad = _round_up(c, 8)
    ks = jax.random.split(key, 14)

    def w3x3(k, cin, cout):                      # logical layout (cout, 9, cin)
        return jax.random.normal(k, (cout, 9, cin), jnp.float32) / np.sqrt(9 * cin)

    def w1x1(k, cin, cout):
        return jax.random.normal(k, (cout, cin), jnp.float32) / np.sqrt(cin)

    def bias(k, cout):
        return jax.random.normal(k, (cout, 1), jnp.float32) * 0.01

    def pack(w, cin_pad, placements):
        """Scatter logical input channels into the padded channel axis."""
        cout = w.shape[0]
        wp = jnp.zeros((cout, 9, cin_pad), jnp.float32)
        for (lo, hi), off in placements:
            wp = wp.at[:, :, off:off + hi - lo].set(w[:, :, lo:hi])
        return wp.reshape(cout, 9 * cin_pad)

    def fold(w, b):                              # fold eval-mode default BN
        return w * bn_scale, b * bn_scale

    p = {}
    # Trunk input = padded feat: log-amp at channels [0, c), phase at [c_pad, c_pad+c)
    w1 = w3x3(ks[0], 2 * c, 64)
    p["c1"] = fold(pack(w1, 2 * c_pad, [((0, c), 0), ((c, 2 * c), c_pad)]),
                   bias(ks[1], 64))
    p["c2"] = fold(w3x3(ks[2], 64, 128).reshape(128, 9 * 64), bias(ks[3], 128))
    p["c3"] = fold(w3x3(ks[4], 128, 256).reshape(256, 9 * 128), bias(ks[5], 256))
    p["c4"] = (w1x1(ks[6], 256, output_channels), bias(ks[7], output_channels))
    # Phase path input = phase channels only (padded channels [c_pad, c_pad+c))
    p["p1"] = fold(pack(w3x3(ks[8], c, 32), 2 * c_pad, [((0, c), c_pad)]),
                   bias(ks[9], 32))
    p["p2"] = (w3x3(ks[10], 32, output_channels).reshape(output_channels, 9 * 32),
               bias(ks[11], output_channels))
    p["out"] = (w1x1(ks[12], output_channels * 2, output_channels),
                bias(ks[13], output_channels))
    return p


if __name__ == "__main__":
    key = jax.random.PRNGKey(0)
    k_x, k_p = jax.random.split(key)
    x = jax.random.normal(k_x, (2, 3, 16, 16), dtype=jnp.float32)  # NCHW
    params = init_params(k_p, input_channels=3, output_channels=64)

    fwd = jax.jit(lambda xx: fourier_domain_branch(xx, params))
    out = jax.block_until_ready(fwd(x))

    assert out.shape == (2, 64, 16, 16), out.shape
    assert out.dtype == jnp.float32
    assert bool(jnp.all(jnp.isfinite(out)))
    print("KERNEL_OK")
</pallas_src>

<mosaic_0001>
module attributes {stable_mosaic.version = 11 : i64} {
  func.func @kernel(%arg0: i32, %arg1: memref<1x8x256xf32, #tpu.memory_space<vmem>>, %arg2: memref<256x256xf32, #tpu.memory_space<vmem>>, %arg3: memref<256x256xf32, #tpu.memory_space<vmem>>, %arg4: memref<9x1x256xf32, #tpu.memory_space<vmem>>, %arg5: memref<64x144xbf16, #tpu.memory_space<vmem>>, %arg6: memref<64x1xf32, #tpu.memory_space<vmem>>, %arg7: memref<128x576xbf16, #tpu.memory_space<vmem>>, %arg8: memref<128x1xf32, #tpu.memory_space<vmem>>, %arg9: memref<256x1152xbf16, #tpu.memory_space<vmem>>, %arg10: memref<256x1xf32, #tpu.memory_space<vmem>>, %arg11: memref<64x256xbf16, #tpu.memory_space<vmem>>, %arg12: memref<64x1xf32, #tpu.memory_space<vmem>>, %arg13: memref<32x144xbf16, #tpu.memory_space<vmem>>, %arg14: memref<32x1xf32, #tpu.memory_space<vmem>>, %arg15: memref<64x288xbf16, #tpu.memory_space<vmem>>, %arg16: memref<64x1xf32, #tpu.memory_space<vmem>>, %arg17: memref<64x128xbf16, #tpu.memory_space<vmem>>, %arg18: memref<64x1xf32, #tpu.memory_space<vmem>>, %arg19: memref<1x64x256xf32, #tpu.memory_space<vmem>>, %arg20: memref<16x256xf32, #tpu.memory_space<vmem>>, %arg21: memref<1152x256xbf16, #tpu.memory_space<vmem>>, %arg22: memref<64x256xf32, #tpu.memory_space<vmem>>, %arg23: memref<128x256xf32, #tpu.memory_space<vmem>>, %arg24: memref<256x256xbf16, #tpu.memory_space<vmem>>, %arg25: memref<32x256xf32, #tpu.memory_space<vmem>>, %arg26: memref<128x256xbf16, #tpu.memory_space<vmem>>) attributes {dimension_semantics = [#tpu.dimension_semantics<parallel>], iteration_bounds = array<i64: 2>, scalar_prefetch = 0 : i64, scratch_operands = 7 : i64, tpu.core_type = #tpu.core_type<tc>, window_params = [{transform_indices = @transform_0, window_bounds = array<i64: 1, 8, 256>}, {pipeline_mode = #tpu.pipeline_mode<synchronous>, transform_indices = @transform_1, window_bounds = array<i64: 256, 256>}, {pipeline_mode = #tpu.pipeline_mode<synchronous>, transform_indices = @transform_2, window_bounds = array<i64: 256, 256>}, {pipeline_mode = #tpu.pipeline_mode<synchronous>, transform_indices = @transform_3, window_bounds = array<i64: 9, 1, 256>}, {pipeline_mode = #tpu.pipeline_mode<synchronous>, transform_indices = @transform_4, window_bounds = array<i64: 64, 144>}, {pipeline_mode = #tpu.pipeline_mode<synchronous>, transform_indices = @transform_5, window_bounds = array<i64: 64, 1>}, {pipeline_mode = #tpu.pipeline_mode<synchronous>, transform_indices = @transform_6, window_bounds = array<i64: 128, 576>}, {pipeline_mode = #tpu.pipeline_mode<synchronous>, transform_indices = @transform_7, window_bounds = array<i64: 128, 1>}, {pipeline_mode = #tpu.pipeline_mode<synchronous>, transform_indices = @transform_8, window_bounds = array<i64: 256, 1152>}, {pipeline_mode = #tpu.pipeline_mode<synchronous>, transform_indices = @transform_9, window_bounds = array<i64: 256, 1>}, {pipeline_mode = #tpu.pipeline_mode<synchronous>, transform_indices = @transform_10, window_bounds = array<i64: 64, 256>}, {pipeline_mode = #tpu.pipeline_mode<synchronous>, transform_indices = @transform_11, window_bounds = array<i64: 64, 1>}, {pipeline_mode = #tpu.pipeline_mode<synchronous>, transform_indices = @transform_12, window_bounds = array<i64: 32, 144>}, {pipeline_mode = #tpu.pipeline_mode<synchronous>, transform_indices = @transform_13, window_bounds = array<i64: 32, 1>}, {pipeline_mode = #tpu.pipeline_mode<synchronous>, transform_indices = @transform_14, window_bounds = array<i64: 64, 288>}, {pipeline_mode = #tpu.pipeline_mode<synchronous>, transform_indices = @transform_15, window_bounds = array<i64: 64, 1>}, {pipeline_mode = #tpu.pipeline_mode<synchronous>, transform_indices = @transform_16, window_bounds = array<i64: 64, 128>}, {pipeline_mode = #tpu.pipeline_mode<synchronous>, transform_indices = @transform_17, window_bounds = array<i64: 64, 1>}, {transform_indices = @transform_18, window_bounds = array<i64: 1, 64, 256>}]} {
    %c0 = arith.constant 0 : index
    %c0_0 = arith.constant 0 : index
    %c0_1 = arith.constant 0 : index
    %0 = vector.load %arg1[%c0, %c0_0, %c0_1] : memref<1x8x256xf32, #tpu.memory_space<vmem>>, vector<1x8x256xf32>
    %1 = vector.shape_cast %0 : vector<1x8x256xf32> to vector<8x256xf32>
    %c0_2 = arith.constant 0 : index
    %c0_3 = arith.constant 0 : index
    %2 = vector.load %arg2[%c0_2, %c0_3] : memref<256x256xf32, #tpu.memory_space<vmem>>, vector<256x256xf32>
    %cst = arith.constant dense<0.000000e+00> : vector<8x256xf32>
    %3 = tpu.matmul %1, %2, %cst {dimension_numbers = #tpu.dot_dimension_numbers<[1], [0], [0], [1], [0, 0, 1, 1], [], []>} : vector<8x256xf32>, vector<256x256xf32>, vector<8x256xf32> -> vector<8x256xf32>
    %c0_4 = arith.constant 0 : index
    %c0_5 = arith.constant 0 : index
    %4 = vector.load %arg3[%c0_4, %c0_5] : memref<256x256xf32, #tpu.memory_space<vmem>>, vector<256x256xf32>
    %cst_6 = arith.constant dense<0.000000e+00> : vector<8x256xf32>
    %5 = tpu.matmul %1, %4, %cst_6 {dimension_numbers = #tpu.dot_dimension_numbers<[1], [0], [0], [1], [0, 0, 1, 1], [], []>} : vector<8x256xf32>, vector<256x256xf32>, vector<8x256xf32> -> vector<8x256xf32>
    %6 = arith.mulf %3, %3 : vector<8x256xf32>
    %7 = arith.mulf %5, %5 : vector<8x256xf32>
    %8 = arith.addf %6, %7 : vector<8x256xf32>
    %9 = math.sqrt %8 : vector<8x256xf32>
    %cst_7 = arith.constant 1.000000e-10 : f32
    %10 = vector.broadcast %cst_7 : f32 to vector<8x256xf32>
    %11 = arith.addf %9, %10 : vector<8x256xf32>
    %12 = math.log %11 : vector<8x256xf32>
    %c0_8 = arith.constant 0 : index
    %c0_9 = arith.constant 0 : index
    %13 = vector.load %arg20[%c0_8, %c0_9] : memref<16x256xf32, #tpu.memory_space<vmem>>, vector<8x256xf32>
    tpu.vector_store %arg20[%c0_8, %c0_9], %12 {strides = array<i32>} : memref<16x256xf32, #tpu.memory_space<vmem>>, vector<8x256xf32>,
    %14 = math.absf %3 : vector<8x256xf32>
    %15 = math.absf %5 : vector<8x256xf32>
    %16 = arith.maximumf %14, %15 : vector<8x256xf32>
    %17 = arith.minimumf %14, %15 : vector<8x256xf32>
    %cst_10 = arith.constant 1.000000e-30 : f32
    %18 = vector.broadcast %cst_10 : f32 to vector<8x256xf32>
    %19 = arith.maximumf %16, %18 : vector<8x256xf32>
    %20 = arith.divf %17, %19 : vector<8x256xf32>
    %cst_11 = arith.constant 0.414213568 : f32
    %21 = vector.broadcast %cst_11 : f32 to vector<8x256xf32>
    %22 = arith.cmpf ogt, %20, %21 : vector<8x256xf32>
    %cst_12 = arith.constant 1.000000e+00 : f32
    %23 = vector.broadcast %cst_12 : f32 to vector<8x256xf32>
    %24 = arith.subf %20, %23 : vector<8x256xf32>
    %cst_13 = arith.constant 1.000000e+00 : f32
    %25 = vector.broadcast %cst_13 : f32 to vector<8x256xf32>
    %26 = arith.addf %20, %25 : vector<8x256xf32>
    %27 = arith.divf %24, %26 : vector<8x256xf32>
    %28 = arith.select %22, %27, %20 : vector<8x256xi1>, vector<8x256xf32>
    %29 = arith.mulf %28, %28 : vector<8x256xf32>
    %cst_14 = arith.constant 0.0805374458 : f32
    %30 = vector.broadcast %cst_14 : f32 to vector<8x256xf32>
    %31 = arith.mulf %30, %29 : vector<8x256xf32>
    %cst_15 = arith.constant 0.138776854 : f32
    %32 = vector.broadcast %cst_15 : f32 to vector<8x256xf32>
    %33 = arith.subf %31, %32 : vector<8x256xf32>
    %34 = arith.mulf %33, %29 : vector<8x256xf32>
    %cst_16 = arith.constant 0.199777111 : f32
    %35 = vector.broadcast %cst_16 : f32 to vector<8x256xf32>
    %36 = arith.addf %34, %35 : vector<8x256xf32>
    %37 = arith.mulf %36, %29 : vector<8x256xf32>
    %cst_17 = arith.constant 0.333329499 : f32
    %38 = vector.broadcast %cst_17 : f32 to vector<8x256xf32>
    %39 = arith.subf %37, %38 : vector<8x256xf32>
    %40 = arith.mulf %39, %29 : vector<8x256xf32>
    %41 = arith.mulf %40, %28 : vector<8x256xf32>
    %42 = arith.addf %41, %28 : vector<8x256xf32>
    %cst_18 = arith.constant 0.785398185 : f32
    %43 = vector.broadcast %cst_18 : f32 to vector<8x256xf32>
    %44 = arith.addf %42, %43 : vector<8x256xf32>
    %45 = arith.select %22, %44, %42 : vector<8x256xi1>, vector<8x256xf32>
    %46 = arith.cmpf ogt, %15, %14 : vector<8x256xf32>
    %cst_19 = arith.constant 1.57079637 : f32
    %47 = vector.broadcast %cst_19 : f32 to vector<8x256xf32>
    %48 = arith.subf %47, %45 : vector<8x256xf32>
    %49 = arith.select %46, %48, %45 : vector<8x256xi1>, vector<8x256xf32>
    %cst_20 = arith.constant 0.000000e+00 : f32
    %50 = vector.broadcast %cst_20 : f32 to vector<8x256xf32>
    %51 = arith.cmpf olt, %3, %50 : vector<8x256xf32>
    %cst_21 = arith.constant 3.14159274 : f32
    %52 = vector.broadcast %cst_21 : f32 to vector<8x256xf32>
    %53 = arith.subf %52, %49 : vector<8x256xf32>
    %54 = arith.select %51, %53, %49 : vector<8x256xi1>, vector<8x256xf32>
    %cst_22 = arith.constant 0.000000e+00 : f32
    %55 = vector.broadcast %cst_22 : f32 to vector<8x256xf32>
    %56 = arith.cmpf olt, %5, %55 : vector<8x256xf32>
    %cst_23 = arith.constant 0.000000e+00 : f32
    %57 = vector.broadcast %cst_23 : f32 to vector<8x256xf32>
    %58 = arith.subf %57, %54 : vector<8x256xf32>
    %59 = arith.select %56, %58, %54 : vector<8x256xi1>, vector<8x256xf32>
    %c8 = arith.constant 8 : index
    %c0_24 = arith.constant 0 : index
    %60 = vector.load %arg20[%c8, %c0_24] : memref<16x256xf32, #tpu.memory_space<vmem>>, vector<8x256xf32>
    tpu.vector_store %arg20[%c8, %c0_24], %59 {strides = array<i32>} : memref<16x256xf32, #tpu.memory_space<vmem>>, vector<8x256xf32>,
    %c0_25 = arith.constant 0 : index
    %c0_26 = arith.constant 0 : index
    %61 = vector.load %arg20[%c0_25, %c0_26] : memref<16x256xf32, #tpu.memory_space<vmem>>, vector<16x256xf32>
    %c17_i32 = arith.constant 17 : i32
    %62 = tpu.dynamic_rotate %61 by %c17_i32 dim 1 : vector<16x256xf32>, i32 -> vector<16x256xf32>
    %c0_27 = arith.constant 0 : index
    %c0_28 = arith.constant 0 : index
    %c0_29 = arith.constant 0 : index
    %63 = vector.load %arg4[%c0_27, %c0_28, %c0_29] : memref<9x1x256xf32, #tpu.memory_space<vmem>>, vector<1x1x256xf32>
    %64 = vector.shape_cast %63 : vector<1x1x256xf32> to vector<1x256xf32>
    %65 = vector.broadcast %64 : vector<1x256xf32> to vector<16x256xf32>
    %66 = arith.mulf %62, %65 : vector<16x256xf32>
    %67 = arith.truncf %66 : vector<16x256xf32> to vector<16x256xbf16>
    %c0_30 = arith.constant 0 : index
    %c0_31 = arith.constant 0 : index
    %68 = vector.load %arg21[%c0_30, %c0_31] : memref<1152x256xbf16, #tpu.memory_space<vmem>>, vector<16x256xbf16>
    tpu.vector_store %arg21[%c0_30, %c0_31], %67 {strides = array<i32>} : memref<1152x256xbf16, #tpu.memory_space<vmem>>, vector<16x256xbf16>,
    %c16_i32 = arith.constant 16 : i32
    %69 = tpu.dynamic_rotate %61 by %c16_i32 dim 1 : vector<16x256xf32>, i32 -> vector<16x256xf32>
    %c1 = arith.constant 1 : index
    %c0_32 = arith.constant 0 : index
    %c0_33 = arith.constant 0 : index
    %70 = vector.load %arg4[%c1, %c0_32, %c0_33] : memref<9x1x256xf32, #tpu.memory_space<vmem>>, vector<1x1x256xf32>
    %71 = vector.shape_cast %70 : vector<1x1x256xf32> to vector<1x256xf32>
    %72 = vector.broadcast %71 : vector<1x256xf32> to vector<16x256xf32>
    %73 = arith.mulf %69, %72 : vector<16x256xf32>
    %74 = arith.truncf %73 : vector<16x256xf32> to vector<16x256xbf16>
    %c16 = arith.constant 16 : index
    %c0_34 = arith.constant 0 : index
    %75 = vector.load %arg21[%c16, %c0_34] : memref<1152x256xbf16, #tpu.memory_space<vmem>>, vector<16x256xbf16>
    tpu.vector_store %arg21[%c16, %c0_34], %74 {strides = array<i32>} : memref<1152x256xbf16, #tpu.memory_space<vmem>>, vector<16x256xbf16>,
    %c15_i32 = arith.constant 15 : i32
    %76 = tpu.dynamic_rotate %61 by %c15_i32 dim 1 : vector<16x256xf32>, i32 -> vector<16x256xf32>
    %c2 = arith.constant 2 : index
    %c0_35 = arith.constant 0 : index
    %c0_36 = arith.constant 0 : index
    %77 = vector.load %arg4[%c2, %c0_35, %c0_36] : memref<9x1x256xf32, #tpu.memory_space<vmem>>, vector<1x1x256xf32>
    %78 = vector.shape_cast %77 : vector<1x1x256xf32> to vector<1x256xf32>
    %79 = vector.broadcast %78 : vector<1x256xf32> to vector<16x256xf32>
    %80 = arith.mulf %76, %79 : vector<16x256xf32>
    %81 = arith.truncf %80 : vector<16x256xf32> to vector<16x256xbf16>
    %c32 = arith.constant 32 : index
    %c0_37 = arith.constant 0 : index
    %82 = vector.load %arg21[%c32, %c0_37] : memref<1152x256xbf16, #tpu.memory_space<vmem>>, vector<16x256xbf16>
    tpu.vector_store %arg21[%c32, %c0_37], %81 {strides = array<i32>} : memref<1152x256xbf16, #tpu.memory_space<vmem>>, vector<16x256xbf16>,
    %c1_i32 = arith.constant 1 : i32
    %83 = tpu.dynamic_rotate %61 by %c1_i32 dim 1 : vector<16x256xf32>, i32 -> vector<16x256xf32>
    %c3 = arith.constant 3 : index
    %c0_38 = arith.constant 0 : index
    %c0_39 = arith.constant 0 : index
    %84 = vector.load %arg4[%c3, %c0_38, %c0_39] : memref<9x1x256xf32, #tpu.memory_space<vmem>>, vector<1x1x256xf32>
    %85 = vector.shape_cast %84 : vector<1x1x256xf32> to vector<1x256xf32>
    %86 = vector.broadcast %85 : vector<1x256xf32> to vector<16x256xf32>
    %87 = arith.mulf %83, %86 : vector<16x256xf32>
    %88 = arith.truncf %87 : vector<16x256xf32> to vector<16x256xbf16>
    %c48 = arith.constant 48 : index
    %c0_40 = arith.constant 0 : index
    %89 = vector.load %arg21[%c48, %c0_40] : memref<1152x256xbf16, #tpu.memory_space<vmem>>, vector<16x256xbf16>
    tpu.vector_store %arg21[%c48, %c0_40], %88 {strides = array<i32>} : memref<1152x256xbf16, #tpu.memory_space<vmem>>, vector<16x256xbf16>,
    %90 = arith.truncf %61 : vector<16x256xf32> to vector<16x256xbf16>
    %c64 = arith.constant 64 : index
    %c0_41 = arith.constant 0 : index
    %91 = vector.load %arg21[%c64, %c0_41] : memref<1152x256xbf16, #tpu.memory_space<vmem>>, vector<16x256xbf16>
    tpu.vector_store %arg21[%c64, %c0_41], %90 {strides = array<i32>} : memref<1152x256xbf16, #tpu.memory_space<vmem>>, vector<16x256xbf16>,
    %c255_i32 = arith.constant 255 : i32
    %92 = tpu.dynamic_rotate %61 by %c255_i32 dim 1 : vector<16x256xf32>, i32 -> vector<16x256xf32>
    %c5 = arith.constant 5 : index
    %c0_42 = arith.constant 0 : index
    %c0_43 = arith.constant 0 : index
    %93 = vector.load %arg4[%c5, %c0_42, %c0_43] : memref<9x1x256xf32, #tpu.memory_space<vmem>>, vector<1x1x256xf32>
    %94 = vector.shape_cast %93 : vector<1x1x256xf32> to vector<1x256xf32>
    %95 = vector.broadcast %94 : vector<1x256xf32> to vector<16x256xf32>
    %96 = arith.mulf %92, %95 : vector<16x256xf32>
    %97 = arith.truncf %96 : vector<16x256xf32> to vector<16x256xbf16>
    %c80 = arith.constant 80 : index
    %c0_44 = arith.constant 0 : index
    %98 = vector.load %arg21[%c80, %c0_44] : memref<1152x256xbf16, #tpu.memory_space<vmem>>, vector<16x256xbf16>
    tpu.vector_store %arg21[%c80, %c0_44], %97 {strides = array<i32>} : memref<1152x256xbf16, #tpu.memory_space<vmem>>, vector<16x256xbf16>,
    %c241_i32 = arith.constant 241 : i32
    %99 = tpu.dynamic_rotate %61 by %c241_i32 dim 1 : vector<16x256xf32>, i32 -> vector<16x256xf32>
    %c6 = arith.constant 6 : index
    %c0_45 = arith.constant 0 : index
    %c0_46 = arith.constant 0 : index
    %100 = vector.load %arg4[%c6, %c0_45, %c0_46] : memref<9x1x256xf32, #tpu.memory_space<vmem>>, vector<1x1x256xf32>
    %101 = vector.shape_cast %100 : vector<1x1x256xf32> to vector<1x256xf32>
    %102 = vector.broadcast %101 : vector<1x256xf32> to vector<16x256xf32>
    %103 = arith.mulf %99, %102 : vector<16x256xf32>
    %104 = arith.truncf %103 : vector<16x256xf32> to vector<16x256xbf16>
    %c96 = arith.constant 96 : index
    %c0_47 = arith.constant 0 : index
    %105 = vector.load %arg21[%c96, %c0_47] : memref<1152x256xbf16, #tpu.memory_space<vmem>>, vector<16x256xbf16>
    tpu.vector_store %arg21[%c96, %c0_47], %104 {strides = array<i32>} : memref<1152x256xbf16, #tpu.memory_space<vmem>>, vector<16x256xbf16>,
    %c240_i32 = arith.constant 240 : i32
    %106 = tpu.dynamic_rotate %61 by %c240_i32 dim 1 : vector<16x256xf32>, i32 -> vector<16x256xf32>
    %c7 = arith.constant 7 : index
    %c0_48 = arith.constant 0 : index
    %c0_49 = arith.constant 0 : index
    %107 = vector.load %arg4[%c7, %c0_48, %c0_49] : memref<9x1x256xf32, #tpu.memory_space<vmem>>, vector<1x1x256xf32>
    %108 = vector.shape_cast %107 : vector<1x1x256xf32> to vector<1x256xf32>
    %109 = vector.broadcast %108 : vector<1x256xf32> to vector<16x256xf32>
    %110 = arith.mulf %106, %109 : vector<16x256xf32>
    %111 = arith.truncf %110 : vector<16x256xf32> to vector<16x256xbf16>
    %c112 = arith.constant 112 : index
    %c0_50 = arith.constant 0 : index
    %112 = vector.load %arg21[%c112, %c0_50] : memref<1152x256xbf16, #tpu.memory_space<vmem>>, vector<16x256xbf16>
    tpu.vector_store %arg21[%c112, %c0_50], %111 {strides = array<i32>} : memref<1152x256xbf16, #tpu.memory_space<vmem>>, vector<16x256xbf16>,
    %c239_i32 = arith.constant 239 : i32
    %113 = tpu.dynamic_rotate %61 by %c239_i32 dim 1 : vector<16x256xf32>, i32 -> vector<16x256xf32>
    %c8_51 = arith.constant 8 : index
    %c0_52 = arith.constant 0 : index
    %c0_53 = arith.constant 0 : index
    %114 = vector.load %arg4[%c8_51, %c0_52, %c0_53] : memref<9x1x256xf32, #tpu.memory_space<vmem>>, vector<1x1x256xf32>
    %115 = vector.shape_cast %114 : vector<1x1x256xf32> to vector<1x256xf32>
    %116 = vector.broadcast %115 : vector<1x256xf32> to vector<16x256xf32>
    %117 = arith.mulf %113, %116 : vector<16x256xf32>
    %118 = arith.truncf %117 : vector<16x256xf32> to vector<16x256xbf16>
    %c128 = arith.constant 128 : index
    %c0_54 = arith.constant 0 : index
    %119 = vector.load %arg21[%c128, %c0_54] : memref<1152x256xbf16, #tpu.memory_space<vmem>>, vector<16x256xbf16>
    tpu.vector_store %arg21[%c128, %c0_54], %118 {strides = array<i32>} : memref<1152x256xbf16, #tpu.memory_space<vmem>>, vector<16x256xbf16>,
    %c0_55 = arith.constant 0 : index
    %c0_56 = arith.constant 0 : index
    %120 = vector.load %arg21[%c0_55, %c0_56] : memref<1152x256xbf16, #tpu.memory_space<vmem>>, vector<144x256xbf16>
    %c0_57 = arith.constant 0 : index
    %c0_58 = arith.constant 0 : index
    %121 = vector.load %arg5[%c0_57, %c0_58] : memref<64x144xbf16, #tpu.memory_space<vmem>>, vector<64x144xbf16>
    %cst_59 = arith.constant dense<0.000000e+00> : vector<64x256xf32>
    %122 = tpu.matmul %121, %120, %cst_59 {dimension_numbers = #tpu.dot_dimension_numbers<[1], [0], [0], [1], [0, 0, 1, 1], [], []>} : vector<64x144xbf16>, vector<144x256xbf16>, vector<64x256xf32> -> vector<64x256xf32>
    %c0_60 = arith.constant 0 : index
    %c0_61 = arith.constant 0 : index
    %123 = vector.load %arg6[%c0_60, %c0_61] : memref<64x1xf32, #tpu.memory_space<vmem>>, vector<64x1xf32>
    %124 = vector.broadcast %123 : vector<64x1xf32> to vector<64x256xf32>
    %125 = arith.addf %122, %124 : vector<64x256xf32>
    %cst_62 = arith.constant 0.000000e+00 : f32
    %126 = vector.broadcast %cst_62 : f32 to vector<64x256xf32>
    %127 = arith.maximumf %125, %126 : vector<64x256xf32>
    %c0_63 = arith.constant 0 : index
    %c0_64 = arith.constant 0 : index
    %128 = vector.load %arg22[%c0_63, %c0_64] : memref<64x256xf32, #tpu.memory_space<vmem>>, vector<64x256xf32>
    tpu.vector_store %arg22[%c0_63, %c0_64], %127 {strides = array<i32>} : memref<64x256xf32, #tpu.memory_space<vmem>>, vector<64x256xf32>,
    %c0_65 = arith.constant 0 : index
    %c0_66 = arith.constant 0 : index
    %129 = vector.load %arg21[%c0_65, %c0_66] : memref<1152x256xbf16, #tpu.memory_space<vmem>>, vector<144x256xbf16>
    %c0_67 = arith.constant 0 : index
    %c0_68 = arith.constant 0 : index
    %130 = vector.load %arg13[%c0_67, %c0_68] : memref<32x144xbf16, #tpu.memory_space<vmem>>, vector<32x144xbf16>
    %cst_69 = arith.constant dense<0.000000e+00> : vector<32x256xf32>
    %131 = tpu.matmul %130, %129, %cst_69 {dimension_numbers = #tpu.dot_dimension_numbers<[1], [0], [0], [1], [0, 0, 1, 1], [], []>} : vector<32x144xbf16>, vector<144x256xbf16>, vector<32x256xf32> -> vector<32x256xf32>
    %c0_70 = arith.constant 0 : index
    %c0_71 = arith.constant 0 : index
    %132 = vector.load %arg14[%c0_70, %c0_71] : memref<32x1xf32, #tpu.memory_space<vmem>>, vector<32x1xf32>
    %133 = vector.broadcast %132 : vector<32x1xf32> to vector<32x256xf32>
    %134 = arith.addf %131, %133 : vector<32x256xf32>
    %cst_72 = arith.constant 0.000000e+00 : f32
    %135 = vector.broadcast %cst_72 : f32 to vector<32x256xf32>
    %136 = arith.maximumf %134, %135 : vector<32x256xf32>
    %c0_73 = arith.constant 0 : index
    %c0_74 = arith.constant 0 : index
    %137 = vector.load %arg25[%c0_73, %c0_74] : memref<32x256xf32, #tpu.memory_space<vmem>>, vector<32x256xf32>
    tpu.vector_store %arg25[%c0_73, %c0_74], %136 {strides = array<i32>} : memref<32x256xf32, #tpu.memory_space<vmem>>, vector<32x256xf32>,
    %c0_75 = arith.constant 0 : index
    %c0_76 = arith.constant 0 : index
    %138 = vector.load %arg22[%c0_75, %c0_76] : memref<64x256xf32, #tpu.memory_space<vmem>>, vector<64x256xf32>
    %c17_i32_77 = arith.constant 17 : i32
    %139 = tpu.dynamic_rotate %138 by %c17_i32_77 dim 1 : vector<64x256xf32>, i32 -> vector<64x256xf32>
    %c0_78 = arith.constant 0 : index
    %c0_79 = arith.constant 0 : index
    %c0_80 = arith.constant 0 : index
    %140 = vector.load %arg4[%c0_78, %c0_79, %c0_80] : memref<9x1x256xf32, #tpu.memory_space<vmem>>, vector<1x1x256xf32>
    %141 = vector.shape_cast %140 : vector<1x1x256xf32> to vector<1x256xf32>
    %142 = vector.broadcast %141 : vector<1x256xf32> to vector<64x256xf32>
    %143 = arith.mulf %139, %142 : vector<64x256xf32>
    %144 = arith.truncf %143 : vector<64x256xf32> to vector<64x256xbf16>
    %c0_81 = arith.constant 0 : index
    %c0_82 = arith.constant 0 : index
    %145 = vector.load %arg21[%c0_81, %c0_82] : memref<1152x256xbf16, #tpu.memory_space<vmem>>, vector<64x256xbf16>
    tpu.vector_store %arg21[%c0_81, %c0_82], %144 {strides = array<i32>} : memref<1152x256xbf16, #tpu.memory_space<vmem>>, vector<64x256xbf16>,
    %c16_i32_83 = arith.constant 16 : i32
    %146 = tpu.dynamic_rotate %138 by %c16_i32_83 dim 1 : vector<64x256xf32>, i32 -> vector<64x256xf32>
    %c1_84 = arith.constant 1 : index
    %c0_85 = arith.constant 0 : index
    %c0_86 = arith.constant 0 : index
    %147 = vector.load %arg4[%c1_84, %c0_85, %c0_86] : memref<9x1x256xf32, #tpu.memory_space<vmem>>, vector<1x1x256xf32>
    %148 = vector.shape_cast %147 : vector<1x1x256xf32> to vector<1x256xf32>
    %149 = vector.broadcast %148 : vector<1x256xf32> to vector<64x256xf32>
    %150 = arith.mulf %146, %149 : vector<64x256xf32>
    %151 = arith.truncf %150 : vector<64x256xf32> to vector<64x256xbf16>
    %c64_87 = arith.constant 64 : index
    %c0_88 = arith.constant 0 : index
    %152 = vector.load %arg21[%c64_87, %c0_88] : memref<1152x256xbf16, #tpu.memory_space<vmem>>, vector<64x256xbf16>
    tpu.vector_store %arg21[%c64_87, %c0_88], %151 {strides = array<i32>} : memref<1152x256xbf16, #tpu.memory_space<vmem>>, vector<64x256xbf16>,
    %c15_i32_89 = arith.constant 15 : i32
    %153 = tpu.dynamic_rotate %138 by %c15_i32_89 dim 1 : vector<64x256xf32>, i32 -> vector<64x256xf32>
    %c2_90 = arith.constant 2 : index
    %c0_91 = arith.constant 0 : index
    %c0_92 = arith.constant 0 : index
    %154 = vector.load %arg4[%c2_90, %c0_91, %c0_92] : memref<9x1x256xf32, #tpu.memory_space<vmem>>, vector<1x1x256xf32>
    %155 = vector.shape_cast %154 : vector<1x1x256xf32> to vector<1x256xf32>
    %156 = vector.broadcast %155 : vector<1x256xf32> to vector<64x256xf32>
    %157 = arith.mulf %153, %156 : vector<64x256xf32>
    %158 = arith.truncf %157 : vector<64x256xf32> to vector<64x256xbf16>
    %c128_93 = arith.constant 128 : index
    %c0_94 = arith.constant 0 : index
    %159 = vector.load %arg21[%c128_93, %c0_94] : memref<1152x256xbf16, #tpu.memory_space<vmem>>, vector<64x256xbf16>
    tpu.vector_store %arg21[%c128_93, %c0_94], %158 {strides = array<i32>} : memref<1152x256xbf16, #tpu.memory_space<vmem>>, vector<64x256xbf16>,
    %c1_i32_95 = arith.constant 1 : i32
    %160 = tpu.dynamic_rotate %138 by %c1_i32_95 dim 1 : vector<64x256xf32>, i32 -> vector<64x256xf32>
    %c3_96 = arith.constant 3 : index
    %c0_97 = arith.constant 0 : index
    %c0_98 = arith.constant 0 : index
    %161 = vector.load %arg4[%c3_96, %c0_97, %c0_98] : memref<9x1x256xf32, #tpu.memory_space<vmem>>, vector<1x1x256xf32>
    %162 = vector.shape_cast %161 : vector<1x1x256xf32> to vector<1x256xf32>
    %163 = vector.broadcast %162 : vector<1x256xf32> to vector<64x256xf32>
    %164 = arith.mulf %160, %163 : vector<64x256xf32>
    %165 = arith.truncf %164 : vector<64x256xf32> to vector<64x256xbf16>
    %c192 = arith.constant 192 : index
    %c0_99 = arith.constant 0 : index
    %166 = vector.load %arg21[%c192, %c0_99] : memref<1152x256xbf16, #tpu.memory_space<vmem>>, vector<64x256xbf16>
    tpu.vector_store %arg21[%c192, %c0_99], %165 {strides = array<i32>} : memref<1152x256xbf16, #tpu.memory_space<vmem>>, vector<64x256xbf16>,
    %167 = arith.truncf %138 : vector<64x256xf32> to vector<64x256xbf16>
    %c256 = arith.constant 256 : index
    %c0_100 = arith.constant 0 : index
    %168 = vector.load %arg21[%c256, %c0_100] : memref<1152x256xbf16, #tpu.memory_space<vmem>>, vector<64x256xbf16>
    tpu.vector_store %arg21[%c256, %c0_100], %167 {strides = array<i32>} : memref<1152x256xbf16, #tpu.memory_space<vmem>>, vector<64x256xbf16>,
    %c255_i32_101 = arith.constant 255 : i32
    %169 = tpu.dynamic_rotate %138 by %c255_i32_101 dim 1 : vector<64x256xf32>, i32 -> vector<64x256xf32>
    %c5_102 = arith.constant 5 : index
    %c0_103 = arith.constant 0 : index
    %c0_104 = arith.constant 0 : index
    %170 = vector.load %arg4[%c5_102, %c0_103, %c0_104] : memref<9x1x256xf32, #tpu.memory_space<vmem>>, vector<1x1x256xf32>
    %171 = vector.shape_cast %170 : vector<1x1x256xf32> to vector<1x256xf32>
    %172 = vector.broadcast %171 : vector<1x256xf32> to vector<64x256xf32>
    %173 = arith.mulf %169, %172 : vector<64x256xf32>
    %174 = arith.truncf %173 : vector<64x256xf32> to vector<64x256xbf16>
    %c320 = arith.constant 320 : index
    %c0_105 = arith.constant 0 : index
    %175 = vector.load %arg21[%c320, %c0_105] : memref<1152x256xbf16, #tpu.memory_space<vmem>>, vector<64x256xbf16>
    tpu.vector_store %arg21[%c320, %c0_105], %174 {strides = array<i32>} : memref<1152x256xbf16, #tpu.memory_space<vmem>>, vector<64x256xbf16>,
    %c241_i32_106 = arith.constant 241 : i32
    %176 = tpu.dynamic_rotate %138 by %c241_i32_106 dim 1 : vector<64x256xf32>, i32 -> vector<64x256xf32>
    %c6_107 = arith.constant 6 : index
    %c0_108 = arith.constant 0 : index
    %c0_109 = arith.constant 0 : index
    %177 = vector.load %arg4[%c6_107, %c0_108, %c0_109] : memref<9x1x256xf32, #tpu.memory_space<vmem>>, vector<1x1x256xf32>
    %178 = vector.shape_cast %177 : vector<1x1x256xf32> to vector<1x256xf32>
    %179 = vector.broadcast %178 : vector<1x256xf32> to vector<64x256xf32>
    %180 = arith.mulf %176, %179 : vector<64x256xf32>
    %181 = arith.truncf %180 : vector<64x256xf32> to vector<64x256xbf16>
    %c384 = arith.constant 384 : index
    %c0_110 = arith.constant 0 : index
    %182 = vector.load %arg21[%c384, %c0_110] : memref<1152x256xbf16, #tpu.memory_space<vmem>>, vector<64x256xbf16>
    tpu.vector_store %arg21[%c384, %c0_110], %181 {strides = array<i32>} : memref<1152x256xbf16, #tpu.memory_space<vmem>>, vector<64x256xbf16>,
    %c240_i32_111 = arith.constant 240 : i32
    %183 = tpu.dynamic_rotate %138 by %c240_i32_111 dim 1 : vector<64x256xf32>, i32 -> vector<64x256xf32>
    %c7_112 = arith.constant 7 : index
    %c0_113 = arith.constant 0 : index
    %c0_114 = arith.constant 0 : index
    %184 = vector.load %arg4[%c7_112, %c0_113, %c0_114] : memref<9x1x256xf32, #tpu.memory_space<vmem>>, vector<1x1x256xf32>
    %185 = vector.shape_cast %184 : vector<1x1x256xf32> to vector<1x256xf32>
    %186 = vector.broadcast %185 : vector<1x256xf32> to vector<64x256xf32>
    %187 = arith.mulf %183, %186 : vector<64x256xf32>
    %188 = arith.truncf %187 : vector<64x256xf32> to vector<64x256xbf16>
    %c448 = arith.constant 448 : index
    %c0_115 = arith.constant 0 : index
    %189 = vector.load %arg21[%c448, %c0_115] : memref<1152x256xbf16, #tpu.memory_space<vmem>>, vector<64x256xbf16>
    tpu.vector_store %arg21[%c448, %c0_115], %188 {strides = array<i32>} : memref<1152x256xbf16, #tpu.memory_space<vmem>>, vector<64x256xbf16>,
    %c239_i32_116 = arith.constant 239 : i32
    %190 = tpu.dynamic_rotate %138 by %c239_i32_116 dim 1 : vector<64x256xf32>, i32 -> vector<64x256xf32>
    %c8_117 = arith.constant 8 : index
    %c0_118 = arith.constant 0 : index
    %c0_119 = arith.constant 0 : index
    %191 = vector.load %arg4[%c8_117, %c0_118, %c0_119] : memref<9x1x256xf32, #tpu.memory_space<vmem>>, vector<1x1x256xf32>
    %192 = vector.shape_cast %191 : vector<1x1x256xf32> to vector<1x256xf32>
    %193 = vector.broadcast %192 : vector<1x256xf32> to vector<64x256xf32>
    %194 = arith.mulf %190, %193 : vector<64x256xf32>
    %195 = arith.truncf %194 : vector<64x256xf32> to vector<64x256xbf16>
    %c512 = arith.constant 512 : index
    %c0_120 = arith.constant 0 : index
    %196 = vector.load %arg21[%c512, %c0_120] : memref<1152x256xbf16, #tpu.memory_space<vmem>>, vector<64x256xbf16>
    tpu.vector_store %arg21[%c512, %c0_120], %195 {strides = array<i32>} : memref<1152x256xbf16, #tpu.memory_space<vmem>>, vector<64x256xbf16>,
    %c0_121 = arith.constant 0 : index
    %c0_122 = arith.constant 0 : index
    %197 = vector.load %arg21[%c0_121, %c0_122] : memref<1152x256xbf16, #tpu.memory_space<vmem>>, vector<576x256xbf16>
    %c0_123 = arith.constant 0 : index
    %c0_124 = arith.constant 0 : index
    %198 = vector.load %arg7[%c0_123, %c0_124] : memref<128x576xbf16, #tpu.memory_space<vmem>>, vector<128x576xbf16>
    %cst_125 = arith.constant dense<0.000000e+00> : vector<128x256xf32>
    %199 = tpu.matmul %198, %197, %cst_125 {dimension_numbers = #tpu.dot_dimension_numbers<[1], [0], [0], [1], [0, 0, 1, 1], [], []>} : vector<128x576xbf16>, vector<576x256xbf16>, vector<128x256xf32> -> vector<128x256xf32>
    %c0_126 = arith.constant 0 : index
    %c0_127 = arith.constant 0 : index
    %200 = vector.load %arg8[%c0_126, %c0_127] : memref<128x1xf32, #tpu.memory_space<vmem>>, vector<128x1xf32>
    %201 = vector.broadcast %200 : vector<128x1xf32> to vector<128x256xf32>
    %202 = arith.addf %199, %201 : vector<128x256xf32>
    %cst_128 = arith.constant 0.000000e+00 : f32
    %203 = vector.broadcast %cst_128 : f32 to vector<128x256xf32>
    %204 = arith.maximumf %202, %203 : vector<128x256xf32>
    %c0_129 = arith.constant 0 : index
    %c0_130 = arith.constant 0 : index
    %205 = vector.load %arg23[%c0_129, %c0_130] : memref<128x256xf32, #tpu.memory_space<vmem>>, vector<128x256xf32>
    tpu.vector_store %arg23[%c0_129, %c0_130], %204 {strides = array<i32>} : memref<128x256xf32, #tpu.memory_space<vmem>>, vector<128x256xf32>,
    %c0_131 = arith.constant 0 : index
    %c0_132 = arith.constant 0 : index
    %206 = vector.load %arg23[%c0_131, %c0_132] : memref<128x256xf32, #tpu.memory_space<vmem>>, vector<128x256xf32>
    %c17_i32_133 = arith.constant 17 : i32
    %207 = tpu.dynamic_rotate %206 by %c17_i32_133 dim 1 : vector<128x256xf32>, i32 -> vector<128x256xf32>
    %c0_134 = arith.constant 0 : index
    %c0_135 = arith.constant 0 : index
    %c0_136 = arith.constant 0 : index
    %208 = vector.load %arg4[%c0_134, %c0_135, %c0_136] : memref<9x1x256xf32, #tpu.memory_space<vmem>>, vector<1x1x256xf32>
    %209 = vector.shape_cast %208 : vector<1x1x256xf32> to vector<1x256xf32>
    %210 = vector.broadcast %209 : vector<1x256xf32> to vector<128x256xf32>
    %211 = arith.mulf %207, %210 : vector<128x256xf32>
    %212 = arith.truncf %211 : vector<128x256xf32> to vector<128x256xbf16>
    %c0_137 = arith.constant 0 : index
    %c0_138 = arith.constant 0 : index
    %213 = vector.load %arg21[%c0_137, %c0_138] : memref<1152x256xbf16, #tpu.memory_space<vmem>>, vector<128x256xbf16>
    tpu.vector_store %arg21[%c0_137, %c0_138], %212 {strides = array<i32>} : memref<1152x256xbf16, #tpu.memory_space<vmem>>, vector<128x256xbf16>,
    %c16_i32_139 = arith.constant 16 : i32
    %214 = tpu.dynamic_rotate %206 by %c16_i32_139 dim 1 : vector<128x256xf32>, i32 -> vector<128x256xf32>
    %c1_140 = arith.constant 1 : index
    %c0_141 = arith.constant 0 : index
    %c0_142 = arith.constant 0 : index
    %215 = vector.load %arg4[%c1_140, %c0_141, %c0_142] : memref<9x1x256xf32, #tpu.memory_space<vmem>>, vector<1x1x256xf32>
    %216 = vector.shape_cast %215 : vector<1x1x256xf32> to vector<1x256xf32>
    %217 = vector.broadcast %216 : vector<1x256xf32> to vector<128x256xf32>
    %218 = arith.mulf %214, %217 : vector<128x256xf32>
    %219 = arith.truncf %218 : vector<128x256xf32> to vector<128x256xbf16>
    %c128_143 = arith.constant 128 : index
    %c0_144 = arith.constant 0 : index
    %220 = vector.load %arg21[%c128_143, %c0_144] : memref<1152x256xbf16, #tpu.memory_space<vmem>>, vector<128x256xbf16>
    tpu.vector_store %arg21[%c128_143, %c0_144], %219 {strides = array<i32>} : memref<1152x256xbf16, #tpu.memory_space<vmem>>, vector<128x256xbf16>,
    %c15_i32_145 = arith.constant 15 : i32
    %221 = tpu.dynamic_rotate %206 by %c15_i32_145 dim 1 : vector<128x256xf32>, i32 -> vector<128x256xf32>
    %c2_146 = arith.constant 2 : index
    %c0_147 = arith.constant 0 : index
    %c0_148 = arith.constant 0 : index
    %222 = vector.load %arg4[%c2_146, %c0_147, %c0_148] : memref<9x1x256xf32, #tpu.memory_space<vmem>>, vector<1x1x256xf32>
    %223 = vector.shape_cast %222 : vector<1x1x256xf32> to vector<1x256xf32>
    %224 = vector.broadcast %223 : vector<1x256xf32> to vector<128x256xf32>
    %225 = arith.mulf %221, %224 : vector<128x256xf32>
    %226 = arith.truncf %225 : vector<128x256xf32> to vector<128x256xbf16>
    %c256_149 = arith.constant 256 : index
    %c0_150 = arith.constant 0 : index
    %227 = vector.load %arg21[%c256_149, %c0_150] : memref<1152x256xbf16, #tpu.memory_space<vmem>>, vector<128x256xbf16>
    tpu.vector_store %arg21[%c256_149, %c0_150], %226 {strides = array<i32>} : memref<1152x256xbf16, #tpu.memory_space<vmem>>, vector<128x256xbf16>,
    %c1_i32_151 = arith.constant 1 : i32
    %228 = tpu.dynamic_rotate %206 by %c1_i32_151 dim 1 : vector<128x256xf32>, i32 -> vector<128x256xf32>
    %c3_152 = arith.constant 3 : index
    %c0_153 = arith.constant 0 : index
    %c0_154 = arith.constant 0 : index
    %229 = vector.load %arg4[%c3_152, %c0_153, %c0_154] : memref<9x1x256xf32, #tpu.memory_space<vmem>>, vector<1x1x256xf32>
    %230 = vector.shape_cast %229 : vector<1x1x256xf32> to vector<1x256xf32>
    %231 = vector.broadcast %230 : vector<1x256xf32> to vector<128x256xf32>
    %232 = arith.mulf %228, %231 : vector<128x256xf32>
    %233 = arith.truncf %232 : vector<128x256xf32> to vector<128x256xbf16>
    %c384_155 = arith.constant 384 : index
    %c0_156 = arith.constant 0 : index
    %234 = vector.load %arg21[%c384_155, %c0_156] : memref<1152x256xbf16, #tpu.memory_space<vmem>>, vector<128x256xbf16>
    tpu.vector_store %arg21[%c384_155, %c0_156], %233 {strides = array<i32>} : memref<1152x256xbf16, #tpu.memory_space<vmem>>, vector<128x256xbf16>,
    %235 = arith.truncf %206 : vector<128x256xf32> to vector<128x256xbf16>
    %c512_157 = arith.constant 512 : index
    %c0_158 = arith.constant 0 : index
    %236 = vector.load %arg21[%c512_157, %c0_158] : memref<1152x256xbf16, #tpu.memory_space<vmem>>, vector<128x256xbf16>
    tpu.vector_store %arg21[%c512_157, %c0_158], %235 {strides = array<i32>} : memref<1152x256xbf16, #tpu.memory_space<vmem>>, vector<128x256xbf16>,
    %c255_i32_159 = arith.constant 255 : i32
    %237 = tpu.dynamic_rotate %206 by %c255_i32_159 dim 1 : vector<128x256xf32>, i32 -> vector<128x256xf32>
    %c5_160 = arith.constant 5 : index
    %c0_161 = arith.constant 0 : index
    %c0_162 = arith.constant 0 : index
    %238 = vector.load %arg4[%c5_160, %c0_161, %c0_162] : memref<9x1x256xf32, #tpu.memory_space<vmem>>, vector<1x1x256xf32>
    %239 = vector.shape_cast %238 : vector<1x1x256xf32> to vector<1x256xf32>
    %240 = vector.broadcast %239 : vector<1x256xf32> to vector<128x256xf32>
    %241 = arith.mulf %237, %240 : vector<128x256xf32>
    %242 = arith.truncf %241 : vector<128x256xf32> to vector<128x256xbf16>
    %c640 = arith.constant 640 : index
    %c0_163 = arith.constant 0 : index
    %243 = vector.load %arg21[%c640, %c0_163] : memref<1152x256xbf16, #tpu.memory_space<vmem>>, vector<128x256xbf16>
    tpu.vector_store %arg21[%c640, %c0_163], %242 {strides = array<i32>} : memref<1152x256xbf16, #tpu.memory_space<vmem>>, vector<128x256xbf16>,
    %c241_i32_164 = arith.constant 241 : i32
    %244 = tpu.dynamic_rotate %206 by %c241_i32_164 dim 1 : vector<128x256xf32>, i32 -> vector<128x256xf32>
    %c6_165 = arith.constant 6 : index
    %c0_166 = arith.constant 0 : index
    %c0_167 = arith.constant 0 : index
    %245 = vector.load %arg4[%c6_165, %c0_166, %c0_167] : memref<9x1x256xf32, #tpu.memory_space<vmem>>, vector<1x1x256xf32>
    %246 = vector.shape_cast %245 : vector<1x1x256xf32> to vector<1x256xf32>
    %247 = vector.broadcast %246 : vector<1x256xf32> to vector<128x256xf32>
    %248 = arith.mulf %244, %247 : vector<128x256xf32>
    %249 = arith.truncf %248 : vector<128x256xf32> to vector<128x256xbf16>
    %c768 = arith.constant 768 : index
    %c0_168 = arith.constant 0 : index
    %250 = vector.load %arg21[%c768, %c0_168] : memref<1152x256xbf16, #tpu.memory_space<vmem>>, vector<128x256xbf16>
    tpu.vector_store %arg21[%c768, %c0_168], %249 {strides = array<i32>} : memref<1152x256xbf16, #tpu.memory_space<vmem>>, vector<128x256xbf16>,
    %c240_i32_169 = arith.constant 240 : i32
    %251 = tpu.dynamic_rotate %206 by %c240_i32_169 dim 1 : vector<128x256xf32>, i32 -> vector<128x256xf32>
    %c7_170 = arith.constant 7 : index
    %c0_171 = arith.constant 0 : index
    %c0_172 = arith.constant 0 : index
    %252 = vector.load %arg4[%c7_170, %c0_171, %c0_172] : memref<9x1x256xf32, #tpu.memory_space<vmem>>, vector<1x1x256xf32>
    %253 = vector.shape_cast %252 : vector<1x1x256xf32> to vector<1x256xf32>
    %254 = vector.broadcast %253 : vector<1x256xf32> to vector<128x256xf32>
    %255 = arith.mulf %251, %254 : vector<128x256xf32>
    %256 = arith.truncf %255 : vector<128x256xf32> to vector<128x256xbf16>
    %c896 = arith.constant 896 : index
    %c0_173 = arith.constant 0 : index
    %257 = vector.load %arg21[%c896, %c0_173] : memref<1152x256xbf16, #tpu.memory_space<vmem>>, vector<128x256xbf16>
    tpu.vector_store %arg21[%c896, %c0_173], %256 {strides = array<i32>} : memref<1152x256xbf16, #tpu.memory_space<vmem>>, vector<128x256xbf16>,
    %c239_i32_174 = arith.constant 239 : i32
    %258 = tpu.dynamic_rotate %206 by %c239_i32_174 dim 1 : vector<128x256xf32>, i32 -> vector<128x256xf32>
    %c8_175 = arith.constant 8 : index
    %c0_176 = arith.constant 0 : index
    %c0_177 = arith.constant 0 : index
    %259 = vector.load %arg4[%c8_175, %c0_176, %c0_177] : memref<9x1x256xf32, #tpu.memory_space<vmem>>, vector<1x1x256xf32>
    %260 = vector.shape_cast %259 : vector<1x1x256xf32> to vector<1x256xf32>
    %261 = vector.broadcast %260 : vector<1x256xf32> to vector<128x256xf32>
    %262 = arith.mulf %258, %261 : vector<128x256xf32>
    %263 = arith.truncf %262 : vector<128x256xf32> to vector<128x256xbf16>
    %c1024 = arith.constant 1024 : index
    %c0_178 = arith.constant 0 : index
    %264 = vector.load %arg21[%c1024, %c0_178] : memref<1152x256xbf16, #tpu.memory_space<vmem>>, vector<128x256xbf16>
    tpu.vector_store %arg21[%c1024, %c0_178], %263 {strides = array<i32>} : memref<1152x256xbf16, #tpu.memory_space<vmem>>, vector<128x256xbf16>,
    %c0_179 = arith.constant 0 : index
    %c0_180 = arith.constant 0 : index
    %265 = vector.load %arg21[%c0_179, %c0_180] : memref<1152x256xbf16, #tpu.memory_space<vmem>>, vector<1152x256xbf16>
    %c0_181 = arith.constant 0 : index
    %c0_182 = arith.constant 0 : index
    %266 = vector.load %arg9[%c0_181, %c0_182] : memref<256x1152xbf16, #tpu.memory_space<vmem>>, vector<128x1152xbf16>
    %cst_183 = arith.constant dense<0.000000e+00> : vector<128x256xf32>
    %267 = tpu.matmul %266, %265, %cst_183 {dimension_numbers = #tpu.dot_dimension_numbers<[1], [0], [0], [1], [0, 0, 1, 1], [], []>} : vector<128x1152xbf16>, vector<1152x256xbf16>, vector<128x256xf32> -> vector<128x256xf32>
    %c0_184 = arith.constant 0 : index
    %c0_185 = arith.constant 0 : index
    %268 = vector.load %arg10[%c0_184, %c0_185] : memref<256x1xf32, #tpu.memory_space<vmem>>, vector<128x1xf32>
    %269 = vector.broadcast %268 : vector<128x1xf32> to vector<128x256xf32>
    %270 = arith.addf %267, %269 : vector<128x256xf32>
    %cst_186 = arith.constant 0.000000e+00 : f32
    %271 = vector.broadcast %cst_186 : f32 to vector<128x256xf32>
    %272 = arith.maximumf %270, %271 : vector<128x256xf32>
    %273 = arith.truncf %272 : vector<128x256xf32> to vector<128x256xbf16>
    %c0_187 = arith.constant 0 : index
    %c0_188 = arith.constant 0 : index
    %274 = vector.load %arg24[%c0_187, %c0_188] : memref<256x256xbf16, #tpu.memory_space<vmem>>, vector<128x256xbf16>
    tpu.vector_store %arg24[%c0_187, %c0_188], %273 {strides = array<i32>} : memref<256x256xbf16, #tpu.memory_space<vmem>>, vector<128x256xbf16>,
    %c128_189 = arith.constant 128 : index
    %c0_190 = arith.constant 0 : index
    %275 = vector.load %arg9[%c128_189, %c0_190] : memref<256x1152xbf16, #tpu.memory_space<vmem>>, vector<128x1152xbf16>
    %cst_191 = arith.constant dense<0.000000e+00> : vector<128x256xf32>
    %276 = tpu.matmul %275, %265, %cst_191 {dimension_numbers = #tpu.dot_dimension_numbers<[1], [0], [0], [1], [0, 0, 1, 1], [], []>} : vector<128x1152xbf16>, vector<1152x256xbf16>, vector<128x256xf32> -> vector<128x256xf32>
    %c128_192 = arith.constant 128 : index
    %c0_193 = arith.constant 0 : index
    %277 = vector.load %arg10[%c128_192, %c0_193] : memref<256x1xf32, #tpu.memory_space<vmem>>, vector<128x1xf32>
    %278 = vector.broadcast %277 : vector<128x1xf32> to vector<128x256xf32>
    %279 = arith.addf %276, %278 : vector<128x256xf32>
    %cst_194 = arith.constant 0.000000e+00 : f32
    %280 = vector.broadcast %cst_194 : f32 to vector<128x256xf32>
    %281 = arith.maximumf %279, %280 : vector<128x256xf32>
    %282 = arith.truncf %281 : vector<128x256xf32> to vector<128x256xbf16>
    %c128_195 = arith.constant 128 : index
    %c0_196 = arith.constant 0 : index
    %283 = vector.load %arg24[%c128_195, %c0_196] : memref<256x256xbf16, #tpu.memory_space<vmem>>, vector<128x256xbf16>
    tpu.vector_store %arg24[%c128_195, %c0_196], %282 {strides = array<i32>} : memref<256x256xbf16, #tpu.memory_space<vmem>>, vector<128x256xbf16>,
    %c0_197 = arith.constant 0 : index
    %c0_198 = arith.constant 0 : index
    %284 = vector.load %arg24[%c0_197, %c0_198] : memref<256x256xbf16, #tpu.memory_space<vmem>>, vector<256x256xbf16>
    %c0_199 = arith.constant 0 : index
    %c0_200 = arith.constant 0 : index
    %285 = vector.load %arg11[%c0_199, %c0_200] : memref<64x256xbf16, #tpu.memory_space<vmem>>, vector<64x256xbf16>
    %cst_201 = arith.constant dense<0.000000e+00> : vector<64x256xf32>
    %286 = tpu.matmul %285, %284, %cst_201 {dimension_numbers = #tpu.dot_dimension_numbers<[1], [0], [0], [1], [0, 0, 1, 1], [], []>} : vector<64x256xbf16>, vector<256x256xbf16>, vector<64x256xf32> -> vector<64x256xf32>
    %c0_202 = arith.constant 0 : index
    %c0_203 = arith.constant 0 : index
    %287 = vector.load %arg12[%c0_202, %c0_203] : memref<64x1xf32, #tpu.memory_space<vmem>>, vector<64x1xf32>
    %288 = vector.broadcast %287 : vector<64x1xf32> to vector<64x256xf32>
    %289 = arith.addf %286, %288 : vector<64x256xf32>
    %290 = arith.truncf %289 : vector<64x256xf32> to vector<64x256xbf16>
    %c0_204 = arith.constant 0 : index
    %c0_205 = arith.constant 0 : index
    %291 = vector.load %arg26[%c0_204, %c0_205] : memref<128x256xbf16, #tpu.memory_space<vmem>>, vector<64x256xbf16>
    tpu.vector_store %arg26[%c0_204, %c0_205], %290 {strides = array<i32>} : memref<128x256xbf16, #tpu.memory_space<vmem>>, vector<64x256xbf16>,
    %c0_206 = arith.constant 0 : index
    %c0_207 = arith.constant 0 : index
    %292 = vector.load %arg25[%c0_206, %c0_207] : memref<32x256xf32, #tpu.memory_space<vmem>>, vector<32x256xf32>
    %c17_i32_208 = arith.constant 17 : i32
    %293 = tpu.dynamic_rotate %292 by %c17_i32_208 dim 1 : vector<32x256xf32>, i32 -> vector<32x256xf32>
    %c0_209 = arith.constant 0 : index
    %c0_210 = arith.constant 0 : index
    %c0_211 = arith.constant 0 : index
    %294 = vector.load %arg4[%c0_209, %c0_210, %c0_211] : memref<9x1x256xf32, #tpu.memory_space<vmem>>, vector<1x1x256xf32>
    %295 = vector.shape_cast %294 : vector<1x1x256xf32> to vector<1x256xf32>
    %296 = vector.broadcast %295 : vector<1x256xf32> to vector<32x256xf32>
    %297 = arith.mulf %293, %296 : vector<32x256xf32>
    %298 = arith.truncf %297 : vector<32x256xf32> to vector<32x256xbf16>
    %c0_212 = arith.constant 0 : index
    %c0_213 = arith.constant 0 : index
    %299 = vector.load %arg21[%c0_212, %c0_213] : memref<1152x256xbf16, #tpu.memory_space<vmem>>, vector<32x256xbf16>
    tpu.vector_store %arg21[%c0_212, %c0_213], %298 {strides = array<i32>} : memref<1152x256xbf16, #tpu.memory_space<vmem>>, vector<32x256xbf16>,
    %c16_i32_214 = arith.constant 16 : i32
    %300 = tpu.dynamic_rotate %292 by %c16_i32_214 dim 1 : vector<32x256xf32>, i32 -> vector<32x256xf32>
    %c1_215 = arith.constant 1 : index
    %c0_216 = arith.constant 0 : index
    %c0_217 = arith.constant 0 : index
    %301 = vector.load %arg4[%c1_215, %c0_216, %c0_217] : memref<9x1x256xf32, #tpu.memory_space<vmem>>, vector<1x1x256xf32>
    %302 = vector.shape_cast %301 : vector<1x1x256xf32> to vector<1x256xf32>
    %303 = vector.broadcast %302 : vector<1x256xf32> to vector<32x256xf32>
    %304 = arith.mulf %300, %303 : vector<32x256xf32>
    %305 = arith.truncf %304 : vector<32x256xf32> to vector<32x256xbf16>
    %c32_218 = arith.constant 32 : index
    %c0_219 = arith.constant 0 : index
    %306 = vector.load %arg21[%c32_218, %c0_219] : memref<1152x256xbf16, #tpu.memory_space<vmem>>, vector<32x256xbf16>
    tpu.vector_store %arg21[%c32_218, %c0_219], %305 {strides = array<i32>} : memref<1152x256xbf16, #tpu.memory_space<vmem>>, vector<32x256xbf16>,
    %c15_i32_220 = arith.constant 15 : i32
    %307 = tpu.dynamic_rotate %292 by %c15_i32_220 dim 1 : vector<32x256xf32>, i32 -> vector<32x256xf32>
    %c2_221 = arith.constant 2 : index
    %c0_222 = arith.constant 0 : index
    %c0_223 = arith.constant 0 : index
    %308 = vector.load %arg4[%c2_221, %c0_222, %c0_223] : memref<9x1x256xf32, #tpu.memory_space<vmem>>, vector<1x1x256xf32>
    %309 = vector.shape_cast %308 : vector<1x1x256xf32> to vector<1x256xf32>
    %310 = vector.broadcast %309 : vector<1x256xf32> to vector<32x256xf32>
    %311 = arith.mulf %307, %310 : vector<32x256xf32>
    %312 = arith.truncf %311 : vector<32x256xf32> to vector<32x256xbf16>
    %c64_224 = arith.constant 64 : index
    %c0_225 = arith.constant 0 : index
    %313 = vector.load %arg21[%c64_224, %c0_225] : memref<1152x256xbf16, #tpu.memory_space<vmem>>, vector<32x256xbf16>
    tpu.vector_store %arg21[%c64_224, %c0_225], %312 {strides = array<i32>} : memref<1152x256xbf16, #tpu.memory_space<vmem>>, vector<32x256xbf16>,
    %c1_i32_226 = arith.constant 1 : i32
    %314 = tpu.dynamic_rotate %292 by %c1_i32_226 dim 1 : vector<32x256xf32>, i32 -> vector<32x256xf32>
    %c3_227 = arith.constant 3 : index
    %c0_228 = arith.constant 0 : index
    %c0_229 = arith.constant 0 : index
    %315 = vector.load %arg4[%c3_227, %c0_228, %c0_229] : memref<9x1x256xf32, #tpu.memory_space<vmem>>, vector<1x1x256xf32>
    %316 = vector.shape_cast %315 : vector<1x1x256xf32> to vector<1x256xf32>
    %317 = vector.broadcast %316 : vector<1x256xf32> to vector<32x256xf32>
    %318 = arith.mulf %314, %317 : vector<32x256xf32>
    %319 = arith.truncf %318 : vector<32x256xf32> to vector<32x256xbf16>
    %c96_230 = arith.constant 96 : index
    %c0_231 = arith.constant 0 : index
    %320 = vector.load %arg21[%c96_230, %c0_231] : memref<1152x256xbf16, #tpu.memory_space<vmem>>, vector<32x256xbf16>
    tpu.vector_store %arg21[%c96_230, %c0_231], %319 {strides = array<i32>} : memref<1152x256xbf16, #tpu.memory_space<vmem>>, vector<32x256xbf16>,
    %321 = arith.truncf %292 : vector<32x256xf32> to vector<32x256xbf16>
    %c128_232 = arith.constant 128 : index
    %c0_233 = arith.constant 0 : index
    %322 = vector.load %arg21[%c128_232, %c0_233] : memref<1152x256xbf16, #tpu.memory_space<vmem>>, vector<32x256xbf16>
    tpu.vector_store %arg21[%c128_232, %c0_233], %321 {strides = array<i32>} : memref<1152x256xbf16, #tpu.memory_space<vmem>>, vector<32x256xbf16>,
    %c255_i32_234 = arith.constant 255 : i32
    %323 = tpu.dynamic_rotate %292 by %c255_i32_234 dim 1 : vector<32x256xf32>, i32 -> vector<32x256xf32>
    %c5_235 = arith.constant 5 : index
    %c0_236 = arith.constant 0 : index
    %c0_237 = arith.constant 0 : index
    %324 = vector.load %arg4[%c5_235, %c0_236, %c0_237] : memref<9x1x256xf32, #tpu.memory_space<vmem>>, vector<1x1x256xf32>
    %325 = vector.shape_cast %324 : vector<1x1x256xf32> to vector<1x256xf32>
    %326 = vector.broadcast %325 : vector<1x256xf32> to vector<32x256xf32>
    %327 = arith.mulf %323, %326 : vector<32x256xf32>
    %328 = arith.truncf %327 : vector<32x256xf32> to vector<32x256xbf16>
    %c160 = arith.constant 160 : index
    %c0_238 = arith.constant 0 : index
    %329 = vector.load %arg21[%c160, %c0_238] : memref<1152x256xbf16, #tpu.memory_space<vmem>>, vector<32x256xbf16>
    tpu.vector_store %arg21[%c160, %c0_238], %328 {strides = array<i32>} : memref<1152x256xbf16, #tpu.memory_space<vmem>>, vector<32x256xbf16>,
    %c241_i32_239 = arith.constant 241 : i32
    %330 = tpu.dynamic_rotate %292 by %c241_i32_239 dim 1 : vector<32x256xf32>, i32 -> vector<32x256xf32>
    %c6_240 = arith.constant 6 : index
    %c0_241 = arith.constant 0 : index
    %c0_242 = arith.constant 0 : index
    %331 = vector.load %arg4[%c6_240, %c0_241, %c0_242] : memref<9x1x256xf32, #tpu.memory_space<vmem>>, vector<1x1x256xf32>
    %332 = vector.shape_cast %331 : vector<1x1x256xf32> to vector<1x256xf32>
    %333 = vector.broadcast %332 : vector<1x256xf32> to vector<32x256xf32>
    %334 = arith.mulf %330, %333 : vector<32x256xf32>
    %335 = arith.truncf %334 : vector<32x256xf32> to vector<32x256xbf16>
    %c192_243 = arith.constant 192 : index
    %c0_244 = arith.constant 0 : index
    %336 = vector.load %arg21[%c192_243, %c0_244] : memref<1152x256xbf16, #tpu.memory_space<vmem>>, vector<32x256xbf16>
    tpu.vector_store %arg21[%c192_243, %c0_244], %335 {strides = array<i32>} : memref<1152x256xbf16, #tpu.memory_space<vmem>>, vector<32x256xbf16>,
    %c240_i32_245 = arith.constant 240 : i32
    %337 = tpu.dynamic_rotate %292 by %c240_i32_245 dim 1 : vector<32x256xf32>, i32 -> vector<32x256xf32>
    %c7_246 = arith.constant 7 : index
    %c0_247 = arith.constant 0 : index
    %c0_248 = arith.constant 0 : index
    %338 = vector.load %arg4[%c7_246, %c0_247, %c0_248] : memref<9x1x256xf32, #tpu.memory_space<vmem>>, vector<1x1x256xf32>
    %339 = vector.shape_cast %338 : vector<1x1x256xf32> to vector<1x256xf32>
    %340 = vector.broadcast %339 : vector<1x256xf32> to vector<32x256xf32>
    %341 = arith.mulf %337, %340 : vector<32x256xf32>
    %342 = arith.truncf %341 : vector<32x256xf32> to vector<32x256xbf16>
    %c224 = arith.constant 224 : index
    %c0_249 = arith.constant 0 : index
    %343 = vector.load %arg21[%c224, %c0_249] : memref<1152x256xbf16, #tpu.memory_space<vmem>>, vector<32x256xbf16>
    tpu.vector_store %arg21[%c224, %c0_249], %342 {strides = array<i32>} : memref<1152x256xbf16, #tpu.memory_space<vmem>>, vector<32x256xbf16>,
    %c239_i32_250 = arith.constant 239 : i32
    %344 = tpu.dynamic_rotate %292 by %c239_i32_250 dim 1 : vector<32x256xf32>, i32 -> vector<32x256xf32>
    %c8_251 = arith.constant 8 : index
    %c0_252 = arith.constant 0 : index
    %c0_253 = arith.constant 0 : index
    %345 = vector.load %arg4[%c8_251, %c0_252, %c0_253] : memref<9x1x256xf32, #tpu.memory_space<vmem>>, vector<1x1x256xf32>
    %346 = vector.shape_cast %345 : vector<1x1x256xf32> to vector<1x256xf32>
    %347 = vector.broadcast %346 : vector<1x256xf32> to vector<32x256xf32>
    %348 = arith.mulf %344, %347 : vector<32x256xf32>
    %349 = arith.truncf %348 : vector<32x256xf32> to vector<32x256xbf16>
    %c256_254 = arith.constant 256 : index
    %c0_255 = arith.constant 0 : index
    %350 = vector.load %arg21[%c256_254, %c0_255] : memref<1152x256xbf16, #tpu.memory_space<vmem>>, vector<32x256xbf16>
    tpu.vector_store %arg21[%c256_254, %c0_255], %349 {strides = array<i32>} : memref<1152x256xbf16, #tpu.memory_space<vmem>>, vector<32x256xbf16>,
    %c0_256 = arith.constant 0 : index
    %c0_257 = arith.constant 0 : index
    %351 = vector.load %arg21[%c0_256, %c0_257] : memref<1152x256xbf16, #tpu.memory_space<vmem>>, vector<288x256xbf16>
    %c0_258 = arith.constant 0 : index
    %c0_259 = arith.constant 0 : index
    %352 = vector.load %arg15[%c0_258, %c0_259] : memref<64x288xbf16, #tpu.memory_space<vmem>>, vector<64x288xbf16>
    %cst_260 = arith.constant dense<0.000000e+00> : vector<64x256xf32>
    %353 = tpu.matmul %352, %351, %cst_260 {dimension_numbers = #tpu.dot_dimension_numbers<[1], [0], [0], [1], [0, 0, 1, 1], [], []>} : vector<64x288xbf16>, vector<288x256xbf16>, vector<64x256xf32> -> vector<64x256xf32>
    %c0_261 = arith.constant 0 : index
    %c0_262 = arith.constant 0 : index
    %354 = vector.load %arg16[%c0_261, %c0_262] : memref<64x1xf32, #tpu.memory_space<vmem>>, vector<64x1xf32>
    %355 = vector.broadcast %354 : vector<64x1xf32> to vector<64x256xf32>
    %356 = arith.addf %353, %355 : vector<64x256xf32>
    %357 = arith.truncf %356 : vector<64x256xf32> to vector<64x256xbf16>
    %c64_263 = arith.constant 64 : index
    %c0_264 = arith.constant 0 : index
    %358 = vector.load %arg26[%c64_263, %c0_264] : memref<128x256xbf16, #tpu.memory_space<vmem>>, vector<64x256xbf16>
    tpu.vector_store %arg26[%c64_263, %c0_264], %357 {strides = array<i32>} : memref<128x256xbf16, #tpu.memory_space<vmem>>, vector<64x256xbf16>,
    %c0_265 = arith.constant 0 : index
    %c0_266 = arith.constant 0 : index
    %359 = vector.load %arg26[%c0_265, %c0_266] : memref<128x256xbf16, #tpu.memory_space<vmem>>, vector<128x256xbf16>
    %c0_267 = arith.constant 0 : index
    %c0_268 = arith.constant 0 : index
    %360 = vector.load %arg17[%c0_267, %c0_268] : memref<64x128xbf16, #tpu.memory_space<vmem>>, vector<64x128xbf16>
    %cst_269 = arith.constant dense<0.000000e+00> : vector<64x256xf32>
    %361 = tpu.matmul %360, %359, %cst_269 {dimension_numbers = #tpu.dot_dimension_numbers<[1], [0], [0], [1], [0, 0, 1, 1], [], []>} : vector<64x128xbf16>, vector<128x256xbf16>, vector<64x256xf32> -> vector<64x256xf32>
    %c0_270 = arith.constant 0 : index
    %c0_271 = arith.constant 0 : index
    %362 = vector.load %arg18[%c0_270, %c0_271] : memref<64x1xf32, #tpu.memory_space<vmem>>, vector<64x1xf32>
    %363 = vector.broadcast %362 : vector<64x1xf32> to vector<64x256xf32>
    %364 = arith.addf %361, %363 : vector<64x256xf32>
    %c0_272 = arith.constant 0 : index
    %c0_273 = arith.constant 0 : index
    %c0_274 = arith.constant 0 : index
    %365 = vector.load %arg19[%c0_272, %c0_273, %c0_274] : memref<1x64x256xf32, #tpu.memory_space<vmem>>, vector<1x64x256xf32>
    %366 = vector.shape_cast %365 : vector<1x64x256xf32> to vector<64x256xf32>
    %367 = vector.shape_cast %364 : vector<64x256xf32> to vector<1x64x256xf32>
    tpu.vector_store %arg19[%c0_272, %c0_273, %c0_274], %367 {strides = array<i32>} : memref<1x64x256xf32, #tpu.memory_space<vmem>>, vector<1x64x256xf32>,
    return
  }
  func.func @transform_0(%arg0: i32) -> (i32, i32, i32) {
    %c0_i32 = arith.constant 0 : i32
    %c0_i32_0 = arith.constant 0 : i32
    %c0_i32_1 = arith.constant 0 : i32
    return %arg0, %c0_i32, %c0_i32_0 : i32, i32, i32
  }
  func.func @transform_1(%arg0: i32) -> (i32, i32) {
    %c0_i32 = arith.constant 0 : i32
    %c0_i32_0 = arith.constant 0 : i32
    %c0_i32_1 = arith.constant 0 : i32
    return %c0_i32, %c0_i32_0 : i32, i32
  }
  func.func @transform_2(%arg0: i32) -> (i32, i32) {
    %c0_i32 = arith.constant 0 : i32
    %c0_i32_0 = arith.constant 0 : i32
    %c0_i32_1 = arith.constant 0 : i32
    return %c0_i32, %c0_i32_0 : i32, i32
  }
  func.func @transform_3(%arg0: i32) -> (i32, i32, i32) {
    %c0_i32 = arith.constant 0 : i32
    %c0_i32_0 = arith.constant 0 : i32
    %c0_i32_1 = arith.constant 0 : i32
    %c0_i32_2 = arith.constant 0 : i32
    return %c0_i32, %c0_i32_0, %c0_i32_1 : i32, i32, i32
  }
  func.func @transform_4(%arg0: i32) -> (i32, i32) {
    %c0_i32 = arith.constant 0 : i32
    %c0_i32_0 = arith.constant 0 : i32
    %c0_i32_1 = arith.constant 0 : i32
    return %c0_i32, %c0_i32_0 : i32, i32
  }
  func.func @transform_5(%arg0: i32) -> (i32, i32) {
    %c0_i32 = arith.constant 0 : i32
    %c0_i32_0 = arith.constant 0 : i32
    %c0_i32_1 = arith.constant 0 : i32
    return %c0_i32, %c0_i32_0 : i32, i32
  }
  func.func @transform_6(%arg0: i32) -> (i32, i32) {
    %c0_i32 = arith.constant 0 : i32
    %c0_i32_0 = arith.constant 0 : i32
    %c0_i32_1 = arith.constant 0 : i32
    return %c0_i32, %c0_i32_0 : i32, i32
  }
  func.func @transform_7(%arg0: i32) -> (i32, i32) {
    %c0_i32 = arith.constant 0 : i32
    %c0_i32_0 = arith.constant 0 : i32
    %c0_i32_1 = arith.constant 0 : i32
    return %c0_i32, %c0_i32_0 : i32, i32
  }
  func.func @transform_8(%arg0: i32) -> (i32, i32) {
    %c0_i32 = arith.constant 0 : i32
    %c0_i32_0 = arith.constant 0 : i32
    %c0_i32_1 = arith.constant 0 : i32
    return %c0_i32, %c0_i32_0 : i32, i32
  }
  func.func @transform_9(%arg0: i32) -> (i32, i32) {
    %c0_i32 = arith.constant 0 : i32
    %c0_i32_0 = arith.constant 0 : i32
    %c0_i32_1 = arith.constant 0 : i32
    return %c0_i32, %c0_i32_0 : i32, i32
  }
  func.func @transform_10(%arg0: i32) -> (i32, i32) {
    %c0_i32 = arith.constant 0 : i32
    %c0_i32_0 = arith.constant 0 : i32
    %c0_i32_1 = arith.constant 0 : i32
    return %c0_i32, %c0_i32_0 : i32, i32
  }
  func.func @transform_11(%arg0: i32) -> (i32, i32) {
    %c0_i32 = arith.constant 0 : i32
    %c0_i32_0 = arith.constant 0 : i32
    %c0_i32_1 = arith.constant 0 : i32
    return %c0_i32, %c0_i32_0 : i32, i32
  }
  func.func @transform_12(%arg0: i32) -> (i32, i32) {
    %c0_i32 = arith.constant 0 : i32
    %c0_i32_0 = arith.constant 0 : i32
    %c0_i32_1 = arith.constant 0 : i32
    return %c0_i32, %c0_i32_0 : i32, i32
  }
  func.func @transform_13(%arg0: i32) -> (i32, i32) {
    %c0_i32 = arith.constant 0 : i32
    %c0_i32_0 = arith.constant 0 : i32
    %c0_i32_1 = arith.constant 0 : i32
    return %c0_i32, %c0_i32_0 : i32, i32
  }
  func.func @transform_14(%arg0: i32) -> (i32, i32) {
    %c0_i32 = arith.constant 0 : i32
    %c0_i32_0 = arith.constant 0 : i32
    %c0_i32_1 = arith.constant 0 : i32
    return %c0_i32, %c0_i32_0 : i32, i32
  }
  func.func @transform_15(%arg0: i32) -> (i32, i32) {
    %c0_i32 = arith.constant 0 : i32
    %c0_i32_0 = arith.constant 0 : i32
    %c0_i32_1 = arith.constant 0 : i32
    return %c0_i32, %c0_i32_0 : i32, i32
  }
  func.func @transform_16(%arg0: i32) -> (i32, i32) {
    %c0_i32 = arith.constant 0 : i32
    %c0_i32_0 = arith.constant 0 : i32
    %c0_i32_1 = arith.constant 0 : i32
    return %c0_i32, %c0_i32_0 : i32, i32
  }
  func.func @transform_17(%arg0: i32) -> (i32, i32) {
    %c0_i32 = arith.constant 0 : i32
    %c0_i32_0 = arith.constant 0 : i32
    %c0_i32_1 = arith.constant 0 : i32
    return %c0_i32, %c0_i32_0 : i32, i32
  }
  func.func @transform_18(%arg0: i32) -> (i32, i32, i32) {
    %c0_i32 = arith.constant 0 : i32
    %c0_i32_0 = arith.constant 0 : i32
    %c0_i32_1 = arith.constant 0 : i32
    return %arg0, %c0_i32, %c0_i32_0 : i32, i32, i32
  }
}

</mosaic_0001>

<llo_original>
// kernel: _lambda_.1
$region0: #{_lambda_.1}
  #allocation0 [shape = 'u32[]', space=smem, size = 0x4, offset = 0x4, fixed_abs, tag = 'smem constant byte address 0x4 - core index']
  #allocation1 [shape = 'u32[144,128]{1,0:T(1,128)}', space=vmem, size = 0x12000, scoped, tag = 'internal scratch']
  #allocation2 [shape = 'f32[16,256]{1,0:T(8,128)}', space=vmem, size = 0x4000, scoped, tag = 'scratch operand']
  #allocation3 [shape = 'bf16[1152,256]{1,0:T(16,128)(2,1)}', space=vmem, size = 0x90000, scoped, tag = 'scratch operand']
  #allocation4 [shape = 'f32[64,256]{1,0:T(8,128)}', space=vmem, size = 0x10000, scoped, tag = 'scratch operand']
  #allocation5 [shape = 'f32[128,256]{1,0:T(8,128)}', space=vmem, size = 0x20000, scoped, tag = 'scratch operand']
  #allocation6 [shape = 'bf16[256,256]{1,0:T(16,128)(2,1)}', space=vmem, size = 0x20000, scoped, tag = 'scratch operand']
  #allocation7 [shape = 'f32[32,256]{1,0:T(8,128)}', space=vmem, size = 0x8000, scoped, tag = 'scratch operand']
  #allocation8 [shape = 'bf16[128,256]{1,0:T(16,128)(2,1)}', space=vmem, size = 0x10000, scoped, tag = 'scratch operand']
  %s0 = inlined_call_operand.vmem [shape: f32[2,8,256], index: 0, kind: input, shape index: {}]
  %s1 = inlined_call_operand.vmem [shape: f32[256,256], index: 1, kind: input, shape index: {}]
  %s2 = inlined_call_operand.vmem [shape: f32[256,256], index: 2, kind: input, shape index: {}]
  %s3 = inlined_call_operand.vmem [shape: f32[9,1,256], index: 3, kind: input, shape index: {}]
  %s4 = inlined_call_operand.vmem [shape: bf16[64,144], index: 4, kind: input, shape index: {}]
  %s5 = inlined_call_operand.vmem [shape: f32[64,1], index: 5, kind: input, shape index: {}]
  %s6 = inlined_call_operand.vmem [shape: bf16[128,576], index: 6, kind: input, shape index: {}]
  %s7 = inlined_call_operand.vmem [shape: f32[128,1], index: 7, kind: input, shape index: {}]
  %s8 = inlined_call_operand.vmem [shape: bf16[256,1152], index: 8, kind: input, shape index: {}]
  %s9 = inlined_call_operand.vmem [shape: f32[256,1], index: 9, kind: input, shape index: {}]
  %s10 = inlined_call_operand.vmem [shape: bf16[64,256], index: 10, kind: input, shape index: {}]
  %s11 = inlined_call_operand.vmem [shape: f32[64,1], index: 11, kind: input, shape index: {}]
  %s12 = inlined_call_operand.vmem [shape: bf16[32,144], index: 12, kind: input, shape index: {}]
  %s13 = inlined_call_operand.vmem [shape: f32[32,1], index: 13, kind: input, shape index: {}]
  %s14 = inlined_call_operand.vmem [shape: bf16[64,288], index: 14, kind: input, shape index: {}]
  %s15 = inlined_call_operand.vmem [shape: f32[64,1], index: 15, kind: input, shape index: {}]
  %s16 = inlined_call_operand.vmem [shape: bf16[64,128], index: 16, kind: input, shape index: {}]
  %s17 = inlined_call_operand.vmem [shape: f32[64,1], index: 17, kind: input, shape index: {}]
  %s18 = inlined_call_operand.vmem [shape: f32[2,64,256], index: 18, kind: output, shape index: {}]
  %s19 = sld [smem:[#allocation0]]
  $region105: #{_lambda_.1} parent=0
    _
  %s21 = ssub.s32 1, %s19
  %s22 = scalar_select 0, %s21, %s19
  loop: start=0, step=1, limit=4
  $region2: #{_lambda_.1} parent=0 // loop_pre_header
    _
  $region3: #{_lambda_.1} parent=0 // loop_header
    %s24 = sphi 0, %s28
    %p25 = scmp.ge.s32.totalorder %s24, 4
    %s34 = sphi 0, %s36
    %s37 = sphi 0, %s34
    %s38 = sphi 0, %s37
    %s54 = sphi 0, %s38
    %s58 = sphi 0, %s58
    %s60 = sphi 0, %s58
    %s61 = sphi 0, %s60
    %s75 = sphi 0, %s61
    %s79 = sphi 0, %s79
    %s81 = sphi 0, %s79
    %s82 = sphi 0, %s81
    %s96 = sphi 0, %s82
    %s100 = sphi 0, %s100
    %s102 = sphi 0, %s100
    %s103 = sphi 0, %s102
    %s117 = sphi 0, %s103
    %s121 = sphi 0, %s121
    %s123 = sphi 0, %s121
    %s124 = sphi 0, %s123
    %s138 = sphi 0, %s124
    %s142 = sphi 0, %s142
    %s144 = sphi 0, %s142
    %s145 = sphi 0, %s144
    %s159 = sphi 0, %s145
    %s163 = sphi 0, %s163
    %s165 = sphi 0, %s163
    %s166 = sphi 0, %s165
    %s180 = sphi 0, %s166
    %s184 = sphi 0, %s184
    %s186 = sphi 0, %s184
    %s187 = sphi 0, %s186
    %s201 = sphi 0, %s187
    %s205 = sphi 0, %s205
    %s207 = sphi 0, %s205
    %s208 = sphi 0, %s207
    %s222 = sphi 0, %s208
    %s226 = sphi 0, %s226
    %s228 = sphi 0, %s226
    %s229 = sphi 0, %s228
    %s243 = sphi 0, %s229
    %s247 = sphi 0, %s247
    %s249 = sphi 0, %s247
    %s250 = sphi 0, %s249
    %s264 = sphi 0, %s250
    %s268 = sphi 0, %s268
    %s270 = sphi 0, %s268
    %s271 = sphi 0, %s270
    %s285 = sphi 0, %s271
    %s289 = sphi 0, %s289
    %s291 = sphi 0, %s289
    %s292 = sphi 0, %s291
    %s306 = sphi 0, %s292
    %s310 = sphi 0, %s310
    %s312 = sphi 0, %s310
    %s313 = sphi 0, %s312
    %s327 = sphi 0, %s313
    %s331 = sphi 0, %s331
    %s333 = sphi 0, %s331
    %s334 = sphi 0, %s333
    %s348 = sphi 0, %s334
    %s352 = sphi 0, %s352
    %s354 = sphi 0, %s352
    %s355 = sphi 0, %s354
    %s369 = sphi 0, %s355
    %s373 = sphi 0, %s373
    %s375 = sphi 0, %s373
    %s376 = sphi 0, %s375
    %s390 = sphi 0, %s376
    %s394 = sphi 0, %s394
    %s396 = sphi 0, %s394
    %s397 = sphi 0, %s396
    %s411 = sphi 0, %s397
    %s417 = sphi 0, %s419
    %s420 = sphi 0, %s417
    %s421 = sphi 0, %s420
    %s437 = sphi 0, %s421
  $region4: #{_lambda_.1} parent=0 // loop_header_branch
    %27 = sbr.rel (%p25) target = $region8
  $region5: #{_lambda_.1} parent=0 // loop_body
    %s29 = ssub.s32 %s24, 1
    %s30 = ssub.s32 %s24, 2
    %s31 = sadd.s32 %s24, 1
    %s32 = ssub.s32 %s24, %s31
    %p33 = scmp.eq.s32.totalorder %s32, 0
    %s35 = sadd.s32 %s34, 1
    %s36 = scalar_select %p33, %s34, %s35
    %p39 = pneg %p33
    %p40 = scmp.eq.s32.totalorder %s24, 1
    %p41 = por %p39, %p40
    %p42 = scmp.ne.s32.totalorder %s34, %s37
    %p43 = scmp.eq.s32.totalorder %s24, 0
    %p44 = por %p42, %p43
    %p45 = scmp.ne.s32.totalorder %s34, %s37
    %p46 = scmp.eq.s32.totalorder %s29, 1
    %p47 = por %p45, %p46
    %p48 = scmp.ne.s32.totalorder %s37, %s38
    %p49 = scmp.eq.s32.totalorder %s29, 0
    %p50 = por %p48, %p49
    %p51 = scmp.ne.s32.totalorder %s37, %s38
    %p52 = scmp.eq.s32.totalorder %s30, 1
    %p53 = por %p51, %p52
    %p55 = scmp.ne.s32.totalorder %s38, %s54
    %p56 = scmp.eq.s32.totalorder %s30, 0
    %p57 = por %p55, %p56
    %s59 = sadd.s32 %s58, 1
    %p62 = scmp.eq.s32.totalorder %s24, 1
    %p63 = scmp.ne.s32.totalorder %s58, %s60
    %p64 = scmp.eq.s32.totalorder %s24, 0
    %p65 = por %p63, %p64
    %p66 = scmp.ne.s32.totalorder %s58, %s60
    %p67 = scmp.eq.s32.totalorder %s29, 1
    %p68 = por %p66, %p67
    %p69 = scmp.ne.s32.totalorder %s60, %s61
    %p70 = scmp.eq.s32.totalorder %s29, 0
    %p71 = por %p69, %p70
    %p72 = scmp.ne.s32.totalorder %s60, %s61
    %p73 = scmp.eq.s32.totalorder %s30, 1
    %p74 = por %p72, %p73
    %p76 = scmp.ne.s32.totalorder %s61, %s75
    %p77 = scmp.eq.s32.totalorder %s30, 0
    %p78 = por %p76, %p77
    %s80 = sadd.s32 %s79, 1
    %p83 = scmp.eq.s32.totalorder %s24, 1
    %p84 = scmp.ne.s32.totalorder %s79, %s81
    %p85 = scmp.eq.s32.totalorder %s24, 0
    %p86 = por %p84, %p85
    %p87 = scmp.ne.s32.totalorder %s79, %s81
    %p88 = scmp.eq.s32.totalorder %s29, 1
    %p89 = por %p87, %p88
    %p90 = scmp.ne.s32.totalorder %s81, %s82
    %p91 = scmp.eq.s32.totalorder %s29, 0
    %p92 = por %p90, %p91
    %p93 = scmp.ne.s32.totalorder %s81, %s82
    %p94 = scmp.eq.s32.totalorder %s30, 1
    %p95 = por %p93, %p94
    %p97 = scmp.ne.s32.totalorder %s82, %s96
    %p98 = scmp.eq.s32.totalorder %s30, 0
    %p99 = por %p97, %p98
    %s101 = sadd.s32 %s100, 1
    %p104 = scmp.eq.s32.totalorder %s24, 1
    %p105 = scmp.ne.s32.totalorder %s100, %s102
    %p106 = scmp.eq.s32.totalorder %s24, 0
    %p107 = por %p105, %p106
    %p108 = scmp.ne.s32.totalorder %s100, %s102
    %p109 = scmp.eq.s32.totalorder %s29, 1
    %p110 = por %p108, %p109
    %p111 = scmp.ne.s32.totalorder %s102, %s103
    %p112 = scmp.eq.s32.totalorder %s29, 0
    %p113 = por %p111, %p112
    %p114 = scmp.ne.s32.totalorder %s102, %s103
    %p115 = scmp.eq.s32.totalorder %s30, 1
    %p116 = por %p114, %p115
    %p118 = scmp.ne.s32.totalorder %s103, %s117
    %p119 = scmp.eq.s32.totalorder %s30, 0
    %p120 = por %p118, %p119
    %s122 = sadd.s32 %s121, 1
    %p125 = scmp.eq.s32.totalorder %s24, 1
    %p126 = scmp.ne.s32.totalorder %s121, %s123
    %p127 = scmp.eq.s32.totalorder %s24, 0
    %p128 = por %p126, %p127
    %p129 = scmp.ne.s32.totalorder %s121, %s123
    %p130 = scmp.eq.s32.totalorder %s29, 1
    %p131 = por %p129, %p130
    %p132 = scmp.ne.s32.totalorder %s123, %s124
    %p133 = scmp.eq.s32.totalorder %s29, 0
    %p134 = por %p132, %p133
    %p135 = scmp.ne.s32.totalorder %s123, %s124
    %p136 = scmp.eq.s32.totalorder %s30, 1
    %p137 = por %p135, %p136
    %p139 = scmp.ne.s32.totalorder %s124, %s138
    %p140 = scmp.eq.s32.totalorder %s30, 0
    %p141 = por %p139, %p140
    %s143 = sadd.s32 %s142, 1
    %p146 = scmp.eq.s32.totalorder %s24, 1
    %p147 = scmp.ne.s32.totalorder %s142, %s144
    %p148 = scmp.eq.s32.totalorder %s24, 0
    %p149 = por %p147, %p148
    %p150 = scmp.ne.s32.totalorder %s142, %s144
    %p151 = scmp.eq.s32.totalorder %s29, 1
    %p152 = por %p150, %p151
    %p153 = scmp.ne.s32.totalorder %s144, %s145
    %p154 = scmp.eq.s32.totalorder %s29, 0
    %p155 = por %p153, %p154
    %p156 = scmp.ne.s32.totalorder %s144, %s145
    %p157 = scmp.eq.s32.totalorder %s30, 1
    %p158 = por %p156, %p157
    %p160 = scmp.ne.s32.totalorder %s145, %s159
    %p161 = scmp.eq.s32.totalorder %s30, 0
    %p162 = por %p160, %p161
    %s164 = sadd.s32 %s163, 1
    %p167 = scmp.eq.s32.totalorder %s24, 1
    %p168 = scmp.ne.s32.totalorder %s163, %s165
    %p169 = scmp.eq.s32.totalorder %s24, 0
    %p170 = por %p168, %p169
    %p171 = scmp.ne.s32.totalorder %s163, %s165
    %p172 = scmp.eq.s32.totalorder %s29, 1
    %p173 = por %p171, %p172
    %p174 = scmp.ne.s32.totalorder %s165, %s166
    %p175 = scmp.eq.s32.totalorder %s29, 0
    %p176 = por %p174, %p175
    %p177 = scmp.ne.s32.totalorder %s165, %s166
    %p178 = scmp.eq.s32.totalorder %s30, 1
    %p179 = por %p177, %p178
    %p181 = scmp.ne.s32.totalorder %s166, %s180
    %p182 = scmp.eq.s32.totalorder %s30, 0
    %p183 = por %p181, %p182
    %s185 = sadd.s32 %s184, 1
    %p188 = scmp.eq.s32.totalorder %s24, 1
    %p189 = scmp.ne.s32.totalorder %s184, %s186
    %p190 = scmp.eq.s32.totalorder %s24, 0
    %p191 = por %p189, %p190
    %p192 = scmp.ne.s32.totalorder %s184, %s186
    %p193 = scmp.eq.s32.totalorder %s29, 1
    %p194 = por %p192, %p193
    %p195 = scmp.ne.s32.totalorder %s186, %s187
    %p196 = scmp.eq.s32.totalorder %s29, 0
    %p197 = por %p195, %p196
    %p198 = scmp.ne.s32.totalorder %s186, %s187
    %p199 = scmp.eq.s32.totalorder %s30, 1
    %p200 = por %p198, %p199
    %p202 = scmp.ne.s32.totalorder %s187, %s201
    %p203 = scmp.eq.s32.totalorder %s30, 0
    %p204 = por %p202, %p203
    %s206 = sadd.s32 %s205, 1
    %p209 = scmp.eq.s32.totalorder %s24, 1
    %p210 = scmp.ne.s32.totalorder %s205, %s207
    %p211 = scmp.eq.s32.totalorder %s24, 0
    %p212 = por %p210, %p211
    %p213 = scmp.ne.s32.totalorder %s205, %s207
    %p214 = scmp.eq.s32.totalorder %s29, 1
    %p215 = por %p213, %p214
    %p216 = scmp.ne.s32.totalorder %s207, %s208
    %p217 = scmp.eq.s32.totalorder %s29, 0
    %p218 = por %p216, %p217
    %p219 = scmp.ne.s32.totalorder %s207, %s208
    %p220 = scmp.eq.s32.totalorder %s30, 1
    %p221 = por %p219, %p220
    %p223 = scmp.ne.s32.totalorder %s208, %s222
    %p224 = scmp.eq.s32.totalorder %s30, 0
    %p225 = por %p223, %p224
    %s227 = sadd.s32 %s226, 1
    %p230 = scmp.eq.s32.totalorder %s24, 1
    %p231 = scmp.ne.s32.totalorder %s226, %s228
    %p232 = scmp.eq.s32.totalorder %s24, 0
    %p233 = por %p231, %p232
    %p234 = scmp.ne.s32.totalorder %s226, %s228
    %p235 = scmp.eq.s32.totalorder %s29, 1
    %p236 = por %p234, %p235
    %p237 = scmp.ne.s32.totalorder %s228, %s229
    %p238 = scmp.eq.s32.totalorder %s29, 0
    %p239 = por %p237, %p238
    %p240 = scmp.ne.s32.totalorder %s228, %s229
    %p241 = scmp.eq.s32.totalorder %s30, 1
    %p242 = por %p240, %p241
    %p244 = scmp.ne.s32.totalorder %s229, %s243
    %p245 = scmp.eq.s32.totalorder %s30, 0
    %p246 = por %p244, %p245
    %s248 = sadd.s32 %s247, 1
    %p251 = scmp.eq.s32.totalorder %s24, 1
    %p252 = scmp.ne.s32.totalorder %s247, %s249
    %p253 = scmp.eq.s32.totalorder %s24, 0
    %p254 = por %p252, %p253
    %p255 = scmp.ne.s32.totalorder %s247, %s249
    %p256 = scmp.eq.s32.totalorder %s29, 1
    %p257 = por %p255, %p256
    %p258 = scmp.ne.s32.totalorder %s249, %s250
    %p259 = scmp.eq.s32.totalorder %s29, 0
    %p260 = por %p258, %p259
    %p261 = scmp.ne.s32.totalorder %s249, %s250
    %p262 = scmp.eq.s32.totalorder %s30, 1
    %p263 = por %p261, %p262
    %p265 = scmp.ne.s32.totalorder %s250, %s264
    %p266 = scmp.eq.s32.totalorder %s30, 0
    %p267 = por %p265, %p266
    %s269 = sadd.s32 %s268, 1
    %p272 = scmp.eq.s32.totalorder %s24, 1
    %p273 = scmp.ne.s32.totalorder %s268, %s270
    %p274 = scmp.eq.s32.totalorder %s24, 0
    %p275 = por %p273, %p274
    %p276 = scmp.ne.s32.totalorder %s268, %s270
    %p277 = scmp.eq.s32.totalorder %s29, 1
    %p278 = por %p276, %p277
    %p279 = scmp.ne.s32.totalorder %s270, %s271
    %p280 = scmp.eq.s32.totalorder %s29, 0
    %p281 = por %p279, %p280
    %p282 = scmp.ne.s32.totalorder %s270, %s271
    %p283 = scmp.eq.s32.totalorder %s30, 1
    %p284 = por %p282, %p283
    %p286 = scmp.ne.s32.totalorder %s271, %s285
    %p287 = scmp.eq.s32.totalorder %s30, 0
    %p288 = por %p286, %p287
    %s290 = sadd.s32 %s289, 1
    %p293 = scmp.eq.s32.totalorder %s24, 1
    %p294 = scmp.ne.s32.totalorder %s289, %s291
    %p295 = scmp.eq.s32.totalorder %s24, 0
    %p296 = por %p294, %p295
    %p297 = scmp.ne.s32.totalorder %s289, %s291
    %p298 = scmp.eq.s32.totalorder %s29, 1
    %p299 = por %p297, %p298
    %p300 = scmp.ne.s32.totalorder %s291, %s292
    %p301 = scmp.eq.s32.totalorder %s29, 0
    %p302 = por %p300, %p301
    %p303 = scmp.ne.s32.totalorder %s291, %s292
    %p304 = scmp.eq.s32.totalorder %s30, 1
    %p305 = por %p303, %p304
    %p307 = scmp.ne.s32.totalorder %s292, %s306
    %p308 = scmp.eq.s32.totalorder %s30, 0
    %p309 = por %p307, %p308
    %s311 = sadd.s32 %s310, 1
    %p314 = scmp.eq.s32.totalorder %s24, 1
    %p315 = scmp.ne.s32.totalorder %s310, %s312
    %p316 = scmp.eq.s32.totalorder %s24, 0
    %p317 = por %p315, %p316
    %p318 = scmp.ne.s32.totalorder %s310, %s312
    %p319 = scmp.eq.s32.totalorder %s29, 1
    %p320 = por %p318, %p319
    %p321 = scmp.ne.s32.totalorder %s312, %s313
    %p322 = scmp.eq.s32.totalorder %s29, 0
    %p323 = por %p321, %p322
    %p324 = scmp.ne.s32.totalorder %s312, %s313
    %p325 = scmp.eq.s32.totalorder %s30, 1
    %p326 = por %p324, %p325
    %p328 = scmp.ne.s32.totalorder %s313, %s327
    %p329 = scmp.eq.s32.totalorder %s30, 0
    %p330 = por %p328, %p329
    %s332 = sadd.s32 %s331, 1
    %p335 = scmp.eq.s32.totalorder %s24, 1
    %p336 = scmp.ne.s32.totalorder %s331, %s333
    %p337 = scmp.eq.s32.totalorder %s24, 0
    %p338 = por %p336, %p337
    %p339 = scmp.ne.s32.totalorder %s331, %s333
    %p340 = scmp.eq.s32.totalorder %s29, 1
    %p341 = por %p339, %p340
    %p342 = scmp.ne.s32.totalorder %s333, %s334
    %p343 = scmp.eq.s32.totalorder %s29, 0
    %p344 = por %p342, %p343
    %p345 = scmp.ne.s32.totalorder %s333, %s334
    %p346 = scmp.eq.s32.totalorder %s30, 1
    %p347 = por %p345, %p346
    %p349 = scmp.ne.s32.totalorder %s334, %s348
    %p350 = scmp.eq.s32.totalorder %s30, 0
    %p351 = por %p349, %p350
    %s353 = sadd.s32 %s352, 1
    %p356 = scmp.eq.s32.totalorder %s24, 1
    %p357 = scmp.ne.s32.totalorder %s352, %s354
    %p358 = scmp.eq.s32.totalorder %s24, 0
    %p359 = por %p357, %p358
    %p360 = scmp.ne.s32.totalorder %s352, %s354
    %p361 = scmp.eq.s32.totalorder %s29, 1
    %p362 = por %p360, %p361
    %p363 = scmp.ne.s32.totalorder %s354, %s355
    %p364 = scmp.eq.s32.totalorder %s29, 0
    %p365 = por %p363, %p364
    %p366 = scmp.ne.s32.totalorder %s354, %s355
    %p367 = scmp.eq.s32.totalorder %s30, 1
    %p368 = por %p366, %p367
    %p370 = scmp.ne.s32.totalorder %s355, %s369
    %p371 = scmp.eq.s32.totalorder %s30, 0
    %p372 = por %p370, %p371
    %s374 = sadd.s32 %s373, 1
    %p377 = scmp.eq.s32.totalorder %s24, 1
    %p378 = scmp.ne.s32.totalorder %s373, %s375
    %p379 = scmp.eq.s32.totalorder %s24, 0
    %p380 = por %p378, %p379
    %p381 = scmp.ne.s32.totalorder %s373, %s375
    %p382 = scmp.eq.s32.totalorder %s29, 1
    %p383 = por %p381, %p382
    %p384 = scmp.ne.s32.totalorder %s375, %s376
    %p385 = scmp.eq.s32.totalorder %s29, 0
    %p386 = por %p384, %p385
    %p387 = scmp.ne.s32.totalorder %s375, %s376
    %p388 = scmp.eq.s32.totalorder %s30, 1
    %p389 = por %p387, %p388
    %p391 = scmp.ne.s32.totalorder %s376, %s390
    %p392 = scmp.eq.s32.totalorder %s30, 0
    %p393 = por %p391, %p392
    %s395 = sadd.s32 %s394, 1
    %p398 = scmp.eq.s32.totalorder %s24, 1
    %p399 = scmp.ne.s32.totalorder %s394, %s396
    %p400 = scmp.eq.s32.totalorder %s24, 0
    %p401 = por %p399, %p400
    %p402 = scmp.ne.s32.totalorder %s394, %s396
    %p403 = scmp.eq.s32.totalorder %s29, 1
    %p404 = por %p402, %p403
    %p405 = scmp.ne.s32.totalorder %s396, %s397
    %p406 = scmp.eq.s32.totalorder %s29, 0
    %p407 = por %p405, %p406
    %p408 = scmp.ne.s32.totalorder %s396, %s397
    %p409 = scmp.eq.s32.totalorder %s30, 1
    %p410 = por %p408, %p409
    %p412 = scmp.ne.s32.totalorder %s397, %s411
    %p413 = scmp.eq.s32.totalorder %s30, 0
    %p414 = por %p412, %p413
    %s415 = ssub.s32 %s24, %s31
    %p416 = scmp.eq.s32.totalorder %s415, 0
    %s418 = sadd.s32 %s417, 1
    %s419 = scalar_select %p416, %s417, %s418
    %p422 = pneg %p416
    %p423 = scmp.eq.s32.totalorder %s24, 1
    %p424 = por %p422, %p423
    %p425 = scmp.ne.s32.totalorder %s417, %s420
    %p426 = scmp.eq.s32.totalorder %s24, 0
    %p427 = por %p425, %p426
    %p428 = scmp.ne.s32.totalorder %s417, %s420
    %p429 = scmp.eq.s32.totalorder %s29, 1
    %p430 = por %p428, %p429
    %p431 = scmp.ne.s32.totalorder %s420, %s421
    %p432 = scmp.eq.s32.totalorder %s29, 0
    %p433 = por %p431, %p432
    %p434 = scmp.ne.s32.totalorder %s420, %s421
    %p435 = scmp.eq.s32.totalorder %s30, 1
    %p436 = por %p434, %p435
    %p438 = scmp.ne.s32.totalorder %s421, %s437
    %p439 = scmp.eq.s32.totalorder %s30, 0
    %p440 = por %p438, %p439
    %p441 = scmp.le.s32.totalorder 1, %s24
    %p442 = scmp.lt.s32.totalorder %s24, 3
    %p443 = pnand %p441, %p442
    %p444 = pneg %p443
    // Predicated region
    $region9: #{_lambda_.1} parent=5 // pred_check
      _
    $region10: #{_lambda_.1} parent=5 // pred_check_branch
      %446 = sbr.rel (%p443) target = $region12
    $region11: #{_lambda_.1} parent=5 // pred_region
      %s447 = ssub.s32 %s24, 1
      // Predicated region
      $region13: #{_lambda_.1} parent=11 // pred_check
        %p448 = pneg %p71
      $region14: #{_lambda_.1} parent=11 // pred_check_branch
        %450 = sbr.rel (%p448) target = $region16
      $region15: #{_lambda_.1} parent=11 // pred_region
        _
      $region16: #{_lambda_.1} parent=11 // pred_fallthru
        _
      // Predicated region
      $region17: #{_lambda_.1} parent=11 // pred_check
        %p451 = pneg %p92
      $region18: #{_lambda_.1} parent=11 // pred_check_branch
        %453 = sbr.rel (%p451) target = $region20
      $region19: #{_lambda_.1} parent=11 // pred_region
        _
      $region20: #{_lambda_.1} parent=11 // pred_fallthru
        _
      // Predicated region
      $region21: #{_lambda_.1} parent=11 // pred_check
        %p454 = pneg %p113
      $region22: #{_lambda_.1} parent=11 // pred_check_branch
        %456 = sbr.rel (%p454) target = $region24
      $region23: #{_lambda_.1} parent=11 // pred_region
        _
      $region24: #{_lambda_.1} parent=11 // pred_fallthru
        _
      // Predicated region
      $region25: #{_lambda_.1} parent=11 // pred_check
        %p457 = pneg %p134
      $region26: #{_lambda_.1} parent=11 // pred_check_branch
        %459 = sbr.rel (%p457) target = $region28
      $region27: #{_lambda_.1} parent=11 // pred_region
        _
      $region28: #{_lambda_.1} parent=11 // pred_fallthru
        _
      // Predicated region
      $region29: #{_lambda_.1} parent=11 // pred_check
        %p460 = pneg %p155
      $region30: #{_lambda_.1} parent=11 // pred_check_branch
        %462 = sbr.rel (%p460) target = $region32
      $region31: #{_lambda_.1} parent=11 // pred_region
        _
      $region32: #{_lambda_.1} parent=11 // pred_fallthru
        _
      // Predicated region
      $region33: #{_lambda_.1} parent=11 // pred_check
        %p463 = pneg %p176
      $region34: #{_lambda_.1} parent=11 // pred_check_branch
        %465 = sbr.rel (%p463) target = $region36
      $region35: #{_lambda_.1} parent=11 // pred_region
        _
      $region36: #{_lambda_.1} parent=11 // pred_fallthru
        _
      // Predicated region
      $region37: #{_lambda_.1} parent=11 // pred_check
        %p466 = pneg %p197
      $region38: #{_lambda_.1} parent=11 // pred_check_branch
        %468 = sbr.rel (%p466) target = $region40
      $region39: #{_lambda_.1} parent=11 // pred_region
        _
      $region40: #{_lambda_.1} parent=11 // pred_fallthru
        _
      // Predicated region
      $region41: #{_lambda_.1} parent=11 // pred_check
        %p469 = pneg %p218
      $region42: #{_lambda_.1} parent=11 // pred_check_branch
        %471 = sbr.rel (%p469) target = $region44
      $region43: #{_lambda_.1} parent=11 // pred_region
        _
      $region44: #{_lambda_.1} parent=11 // pred_fallthru
        _
      // Predicated region
      $region45: #{_lambda_.1} parent=11 // pred_check
        %p472 = pneg %p239
      $region46: #{_lambda_.1} parent=11 // pred_check_branch
        %474 = sbr.rel (%p472) target = $region48
      $region47: #{_lambda_.1} parent=11 // pred_region
        _
      $region48: #{_lambda_.1} parent=11 // pred_fallthru
        _
      // Predicated region
      $region49: #{_lambda_.1} parent=11 // pred_check
        %p475 = pneg %p260
      $region50: #{_lambda_.1} parent=11 // pred_check_branch
        %477 = sbr.rel (%p475) target = $region52
      $region51: #{_lambda_.1} parent=11 // pred_region
        _
      $region52: #{_lambda_.1} parent=11 // pred_fallthru
        _
      // Predicated region
      $region53: #{_lambda_.1} parent=11 // pred_check
        %p478 = pneg %p281
      $region54: #{_lambda_.1} parent=11 // pred_check_branch
        %480 = sbr.rel (%p478) target = $region56
      $region55: #{_lambda_.1} parent=11 // pred_region
        _
      $region56: #{_lambda_.1} parent=11 // pred_fallthru
        _
      // Predicated region
      $region57: #{_lambda_.1} parent=11 // pred_check
        %p481 = pneg %p302
      $region58: #{_lambda_.1} parent=11 // pred_check_branch
        %483 = sbr.rel (%p481) target = $region60
      $region59: #{_lambda_.1} parent=11 // pred_region
        _
      $region60: #{_lambda_.1} parent=11 // pred_fallthru
        _
      // Predicated region
      $region61: #{_lambda_.1} parent=11 // pred_check
        %p484 = pneg %p323
      $region62: #{_lambda_.1} parent=11 // pred_check_branch
        %486 = sbr.rel (%p484) target = $region64
      $region63: #{_lambda_.1} parent=11 // pred_region
        _
      $region64: #{_lambda_.1} parent=11 // pred_fallthru
        _
      // Predicated region
      $region65: #{_lambda_.1} parent=11 // pred_check
        %p487 = pneg %p344
      $region66: #{_lambda_.1} parent=11 // pred_check_branch
        %489 = sbr.rel (%p487) target = $region68
      $region67: #{_lambda_.1} parent=11 // pred_region
        _
      $region68: #{_lambda_.1} parent=11 // pred_fallthru
        _
      // Predicated region
      $region69: #{_lambda_.1} parent=11 // pred_check
        %p490 = pneg %p365
      $region70: #{_lambda_.1} parent=11 // pred_check_branch
        %492 = sbr.rel (%p490) target = $region72
      $region71: #{_lambda_.1} parent=11 // pred_region
        _
      $region72: #{_lambda_.1} parent=11 // pred_fallthru
        _
      // Predicated region
      $region73: #{_lambda_.1} parent=11 // pred_check
        %p493 = pneg %p386
      $region74: #{_lambda_.1} parent=11 // pred_check_branch
        %495 = sbr.rel (%p493) target = $region76
      $region75: #{_lambda_.1} parent=11 // pred_region
        _
      $region76: #{_lambda_.1} parent=11 // pred_fallthru
        _
      // Predicated region
      $region77: #{_lambda_.1} parent=11 // pred_check
        %p496 = pneg %p407
      $region78: #{_lambda_.1} parent=11 // pred_check_branch
        %498 = sbr.rel (%p496) target = $region80
      $region79: #{_lambda_.1} parent=11 // pred_region
        _
      $region80: #{_lambda_.1} parent=11 // pred_fallthru
        _
    $region12: #{_lambda_.1} parent=5 // pred_fallthru
      _
    %p499 = scmp.lt.s32.totalorder %s24, 2
    // Predicated region
    $region81: #{_lambda_.1} parent=5 // pred_check
      %p500 = pneg %p499
    $region82: #{_lambda_.1} parent=5 // pred_check_branch
      %502 = sbr.rel (%p500) target = $region84
    $region83: #{_lambda_.1} parent=5 // pred_region
      // Predicated region
      $region85: #{_lambda_.1} parent=83 // pred_check
        %p503 = pneg %p44
      $region86: #{_lambda_.1} parent=83 // pred_check_branch
        %505 = sbr.rel (%p503) target = $region88
      $region87: #{_lambda_.1} parent=83 // pred_region
        %p506 = scmp.lt.s32.totalorder %s24, 1
        %s507 = scalar_select %p506, %s24, 1
        %s508 = smul.addr %s507, 2
        %s509 = smul.addr %s508, 8
        %s510 = scalar_lea.vmem %s0, %s509
      $region88: #{_lambda_.1} parent=83 // pred_fallthru
        _
    $region84: #{_lambda_.1} parent=5 // pred_fallthru
      _
    %p511 = scmp.le.s32.totalorder 1, %s24
    %p512 = scmp.lt.s32.totalorder %s24, 3
    %p513 = pnand %p511, %p512
    %p514 = pneg %p513
    // Predicated region
    $region89: #{_lambda_.1} parent=5 // pred_check
      _
    $region90: #{_lambda_.1} parent=5 // pred_check_branch
      %516 = sbr.rel (%p513) target = $region92
    $region91: #{_lambda_.1} parent=5 // pred_region
      %s517 = ssub.s32 %s24, 1
      %p518 = scmp.lt.s32.totalorder %s29, 1
      %s519 = scalar_select %p518, %s29, 1
      %s520 = smul.addr %s519, 2
      %s521 = smul.addr %s520, 8
      %s522 = scalar_lea.vmem %s0, %s521
      %p523 = pneg %p50
      %p524 = pneg %p47
      %p525 = pneg %p71
      %p526 = pneg %p68
      %p527 = pneg %p92
      %p528 = pneg %p89
      %p529 = pneg %p113
      %p530 = pneg %p110
      %p531 = pneg %p134
      %p532 = pneg %p131
      %p533 = pneg %p155
      %p534 = pneg %p152
      %p535 = pneg %p176
      %p536 = pneg %p173
      %p537 = pneg %p197
      %p538 = pneg %p194
      %p539 = pneg %p218
      %p540 = pneg %p215
      %p541 = pneg %p239
      %p542 = pneg %p236
      %p543 = pneg %p260
      %p544 = pneg %p257
      %p545 = pneg %p281
      %p546 = pneg %p278
      %p547 = pneg %p302
      %p548 = pneg %p299
      %p549 = pneg %p323
      %p550 = pneg %p320
      %p551 = pneg %p344
      %p552 = pneg %p341
      %p553 = pneg %p365
      %p554 = pneg %p362
      %p555 = pneg %p386
      %p556 = pneg %p383
      %p557 = pneg %p407
      %p558 = pneg %p404
      %p559 = pneg %p433
      %p560 = pneg %p430
      %p561 = scmp.lt.s32.totalorder %s29, 1
      %s562 = scalar_select %p561, %s29, 1
      %s563 = smul.addr %s562, 16
      %s564 = smul.addr %s563, 8
      %s565 = scalar_lea.vmem %s18, %s564
      %p566 = scmp.lt.s32.totalorder %s29, 1
      %s567 = scalar_select %p566, %s29, 1
      %s568 = smul.addr %s567, 2
      %s569 = smul.addr %s568, 8
      %s570 = scalar_lea.vmem %s0, %s569
      %p571 = scmp.lt.s32.totalorder %s29, 1
      %s572 = scalar_select %p571, %s29, 1
      %s573 = smul.addr %s572, 16
      %s574 = smul.addr %s573, 8
      %s575 = scalar_lea.vmem %s18, %s574
      %v577 = vld [vmem:[%s570] sm:$0xff]
      %v578 = vld [vmem:[%s570 + $0x8] sm:$0xff]
      %v579 = vld [vmem:[%s1] sm:$0xff]
      %v580 = vld [vmem:[%s1 + $0x8] sm:$0xff]
      %v581 = vld [vmem:[%s1 + $0x10] sm:$0xff]
      %v582 = vld [vmem:[%s1 + $0x18] sm:$0xff]
      %v583 = vld [vmem:[%s1 + $0x20] sm:$0xff]
      %v584 = vld [vmem:[%s1 + $0x28] sm:$0xff]
      %v585 = vld [vmem:[%s1 + $0x30] sm:$0xff]
      %v586 = vld [vmem:[%s1 + $0x38] sm:$0xff]
      %v587 = vld [vmem:[%s1 + $0x40] sm:$0xff]
      %v588 = vld [vmem:[%s1 + $0x48] sm:$0xff]
      %v589 = vld [vmem:[%s1 + $0x50] sm:$0xff]
      %v590 = vld [vmem:[%s1 + $0x58] sm:$0xff]
      %v591 = vld [vmem:[%s1 + $0x60] sm:$0xff]
      %v592 = vld [vmem:[%s1 + $0x68] sm:$0xff]
      %v593 = vld [vmem:[%s1 + $0x70] sm:$0xff]
      %v594 = vld [vmem:[%s1 + $0x78] sm:$0xff]
      %v595 = vld [vmem:[%s1 + $0x80] sm:$0xff]
      %v596 = vld [vmem:[%s1 + $0x88] sm:$0xff]
      %v597 = vld [vmem:[%s1 + $0x90] sm:$0xff]
      %v598 = vld [vmem:[%s1 + $0x98] sm:$0xff]
      %v599 = vld [vmem:[%s1 + $0xa0] sm:$0xff]
      %v600 = vld [vmem:[%s1 + $0xa8] sm:$0xff]
      %v601 = vld [vmem:[%s1 + $0xb0] sm:$0xff]
      %v602 = vld [vmem:[%s1 + $0xb8] sm:$0xff]
      %v603 = vld [vmem:[%s1 + $0xc0] sm:$0xff]
      %v604 = vld [vmem:[%s1 + $0xc8] sm:$0xff]
      %v605 = vld [vmem:[%s1 + $0xd0] sm:$0xff]
      %v606 = vld [vmem:[%s1 + $0xd8] sm:$0xff]
      %v607 = vld [vmem:[%s1 + $0xe0] sm:$0xff]
      %v608 = vld [vmem:[%s1 + $0xe8] sm:$0xff]
      %v609 = vld [vmem:[%s1 + $0xf0] sm:$0xff]
      %v610 = vld [vmem:[%s1 + $0xf8] sm:$0xff]
      %v611 = vld [vmem:[%s1 + $0x100] sm:$0xff]
      %v612 = vld [vmem:[%s1 + $0x108] sm:$0xff]
      %v613 = vld [vmem:[%s1 + $0x110] sm:$0xff]
      %v614 = vld [vmem:[%s1 + $0x118] sm:$0xff]
      %v615 = vld [vmem:[%s1 + $0x120] sm:$0xff]
      %v616 = vld [vmem:[%s1 + $0x128] sm:$0xff]
      %v617 = vld [vmem:[%s1 + $0x130] sm:$0xff]
      %v618 = vld [vmem:[%s1 + $0x138] sm:$0xff]
      %v619 = vld [vmem:[%s1 + $0x140] sm:$0xff]
      %v620 = vld [vmem:[%s1 + $0x148] sm:$0xff]
      %v621 = vld [vmem:[%s1 + $0x150] sm:$0xff]
      %v622 = vld [vmem:[%s1 + $0x158] sm:$0xff]
      %v623 = vld [vmem:[%s1 + $0x160] sm:$0xff]
      %v624 = vld [vmem:[%s1 + $0x168] sm:$0xff]
      %v625 = vld [vmem:[%s1 + $0x170] sm:$0xff]
      %v626 = vld [vmem:[%s1 + $0x178] sm:$0xff]
      %v627 = vld [vmem:[%s1 + $0x180] sm:$0xff]
      %v628 = vld [vmem:[%s1 + $0x188] sm:$0xff]
      %v629 = vld [vmem:[%s1 + $0x190] sm:$0xff]
      %v630 = vld [vmem:[%s1 + $0x198] sm:$0xff]
      %v631 = vld [vmem:[%s1 + $0x1a0] sm:$0xff]
      %v632 = vld [vmem:[%s1 + $0x1a8] sm:$0xff]
      %v633 = vld [vmem:[%s1 + $0x1b0] sm:$0xff]
      %v634 = vld [vmem:[%s1 + $0x1b8] sm:$0xff]
      %v635 = vld [vmem:[%s1 + $0x1c0] sm:$0xff]
      %v636 = vld [vmem:[%s1 + $0x1c8] sm:$0xff]
      %v637 = vld [vmem:[%s1 + $0x1d0] sm:$0xff]
      %v638 = vld [vmem:[%s1 + $0x1d8] sm:$0xff]
      %v639 = vld [vmem:[%s1 + $0x1e0] sm:$0xff]
      %v640 = vld [vmem:[%s1 + $0x1e8] sm:$0xff]
      %v641 = vld [vmem:[%s1 + $0x1f0] sm:$0xff]
      %v642 = vld [vmem:[%s1 + $0x1f8] sm:$0xff]
      %643 = vmatprep.subr.mxu0 %v580
      %644 = vmatpush1.msra.mxu0 %v579
      %645 = vmatprep.subr.mxu0 %v582
      %646 = vmatpush1.msra.mxu0 %v581
      %647 = vmatprep.subr.mxu0 %v584
      %648 = vmatpush1.msra.mxu0 %v583
      %649 = vmatprep.subr.mxu0 %v586
      %650 = vmatpush1.msra.mxu0 %v585
      %651 = vmatprep.subr.mxu0 %v588
      %652 = vmatpush1.msra.mxu0 %v587
      %653 = vmatprep.subr.mxu0 %v590
      %654 = vmatpush1.msra.mxu0 %v589
      %655 = vmatprep.subr.mxu0 %v592
      %656 = vmatpush1.msra.mxu0 %v591
      %657 = vmatprep.subr.mxu0 %v594
      %658 = vmatpush1.msra.mxu0 %v593
      %659 = vmatprep.subr.mxu0 %v596
      %660 = vmatpush1.msra.mxu0 %v595
      %661 = vmatprep.subr.mxu0 %v598
      %662 = vmatpush1.msra.mxu0 %v597
      %663 = vmatprep.subr.mxu0 %v600
      %664 = vmatpush1.msra.mxu0 %v599
      %665 = vmatprep.subr.mxu0 %v602
      %666 = vmatpush1.msra.mxu0 %v601
      %667 = vmatprep.subr.mxu0 %v604
      %668 = vmatpush1.msra.mxu0 %v603
      %669 = vmatprep.subr.mxu0 %v606
      %670 = vmatpush1.msra.mxu0 %v605
      %671 = vmatprep.subr.mxu0 %v608
      %672 = vmatpush1.msra.mxu0 %v607
      %673 = vmatprep.subr.mxu0 %v610
      %674 = vmatpush1.msra.mxu0 %v609
      %675 = vmatprep.subr.mxu0 %v612
      %676 = vmatpush1.msra.mxu0 %v611
      %677 = vmatprep.subr.mxu0 %v614
      %678 = vmatpush1.msra.mxu0 %v613
      %679 = vmatprep.subr.mxu0 %v616
      %680 = vmatpush1.msra.mxu0 %v615
      %681 = vmatprep.subr.mxu0 %v618
      %682 = vmatpush1.msra.mxu0 %v617
      %683 = vmatprep.subr.mxu0 %v620
      %684 = vmatpush1.msra.mxu0 %v619
      %685 = vmatprep.subr.mxu0 %v622
      %686 = vmatpush1.msra.mxu0 %v621
      %687 = vmatprep.subr.mxu0 %v624
      %688 = vmatpush1.msra.mxu0 %v623
      %689 = vmatprep.subr.mxu0 %v626
      %690 = vmatpush1.msra.mxu0 %v625
      %691 = vmatprep.subr.mxu0 %v628
      %692 = vmatpush1.msra.mxu0 %v627
      %693 = vmatprep.subr.mxu0 %v630
      %694 = vmatpush1.msra.mxu0 %v629
      %695 = vmatprep.subr.mxu0 %v632
      %696 = vmatpush1.msra.mxu0 %v631
      %697 = vmatprep.subr.mxu0 %v634
      %698 = vmatpush1.msra.mxu0 %v633
      %699 = vmatprep.subr.mxu0 %v636
      %700 = vmatpush1.msra.mxu0 %v635
      %701 = vmatprep.subr.mxu0 %v638
      %702 = vmatpush1.msra.mxu0 %v637
      %703 = vmatprep.subr.mxu0 %v640
      %704 = vmatpush1.msra.mxu0 %v639
      %705 = vmatprep.subr.mxu0 %v642
      %706 = vmatpush1.msra.mxu0 %v641
      %707 = vmatprep.mubr.f32.mxu0 %v578
      %708 = vmatmul.mubr.f32.gmra.mrb[0].mxu0 %v577
      %v709 = vpop.f32.mrb[0].mxu0
      %v710 = vadd.f32 0.0, %v709
      %v711 = vpop.f32.mrb[0].mxu0
      %v712 = vadd.f32 0.0, %v711
      %713 = vdwg.mxu0
      %v714 = vld [vmem:[%s2] sm:$0xff]
      %v715 = vld [vmem:[%s2 + $0x8] sm:$0xff]
      %v716 = vld [vmem:[%s2 + $0x10] sm:$0xff]
      %v717 = vld [vmem:[%s2 + $0x18] sm:$0xff]
      %v718 = vld [vmem:[%s2 + $0x20] sm:$0xff]
      %v719 = vld [vmem:[%s2 + $0x28] sm:$0xff]
      %v720 = vld [vmem:[%s2 + $0x30] sm:$0xff]
      %v721 = vld [vmem:[%s2 + $0x38] sm:$0xff]
      %v722 = vld [vmem:[%s2 + $0x40] sm:$0xff]
      %v723 = vld [vmem:[%s2 + $0x48] sm:$0xff]
      %v724 = vld [vmem:[%s2 + $0x50] sm:$0xff]
      %v725 = vld [vmem:[%s2 + $0x58] sm:$0xff]
      %v726 = vld [vmem:[%s2 + $0x60] sm:$0xff]
      %v727 = vld [vmem:[%s2 + $0x68] sm:$0xff]
      %v728 = vld [vmem:[%s2 + $0x70] sm:$0xff]
      %v729 = vld [vmem:[%s2 + $0x78] sm:$0xff]
      %v730 = vld [vmem:[%s2 + $0x80] sm:$0xff]
      %v731 = vld [vmem:[%s2 + $0x88] sm:$0xff]
      %v732 = vld [vmem:[%s2 + $0x90] sm:$0xff]
      %v733 = vld [vmem:[%s2 + $0x98] sm:$0xff]
      %v734 = vld [vmem:[%s2 + $0xa0] sm:$0xff]
      %v735 = vld [vmem:[%s2 + $0xa8] sm:$0xff]
      %v736 = vld [vmem:[%s2 + $0xb0] sm:$0xff]
      %v737 = vld [vmem:[%s2 + $0xb8] sm:$0xff]
      %v738 = vld [vmem:[%s2 + $0xc0] sm:$0xff]
      %v739 = vld [vmem:[%s2 + $0xc8] sm:$0xff]
      %v740 = vld [vmem:[%s2 + $0xd0] sm:$0xff]
      %v741 = vld [vmem:[%s2 + $0xd8] sm:$0xff]
      %v742 = vld [vmem:[%s2 + $0xe0] sm:$0xff]
      %v743 = vld [vmem:[%s2 + $0xe8] sm:$0xff]
      %v744 = vld [vmem:[%s2 + $0xf0] sm:$0xff]
      %v745 = vld [vmem:[%s2 + $0xf8] sm:$0xff]
      %v746 = vld [vmem:[%s2 + $0x100] sm:$0xff]
      %v747 = vld [vmem:[%s2 + $0x108] sm:$0xff]
      %v748 = vld [vmem:[%s2 + $0x110] sm:$0xff]
      %v749 = vld [vmem:[%s2 + $0x118] sm:$0xff]
      %v750 = vld [vmem:[%s2 + $0x120] sm:$0xff]
      %v751 = vld [vmem:[%s2 + $0x128] sm:$0xff]
      %v752 = vld [vmem:[%s2 + $0x130] sm:$0xff]
      %v753 = vld [vmem:[%s2 + $0x138] sm:$0xff]
      %v754 = vld [vmem:[%s2 + $0x140] sm:$0xff]
      %v755 = vld [vmem:[%s2 + $0x148] sm:$0xff]
      %v756 = vld [vmem:[%s2 + $0x150] sm:$0xff]
      %v757 = vld [vmem:[%s2 + $0x158] sm:$0xff]
      %v758 = vld [vmem:[%s2 + $0x160] sm:$0xff]
      %v759 = vld [vmem:[%s2 + $0x168] sm:$0xff]
      %v760 = vld [vmem:[%s2 + $0x170] sm:$0xff]
      %v761 = vld [vmem:[%s2 + $0x178] sm:$0xff]
      %v762 = vld [vmem:[%s2 + $0x180] sm:$0xff]
      %v763 = vld [vmem:[%s2 + $0x188] sm:$0xff]
      %v764 = vld [vmem:[%s2 + $0x190] sm:$0xff]
      %v765 = vld [vmem:[%s2 + $0x198] sm:$0xff]
      %v766 = vld [vmem:[%s2 + $0x1a0] sm:$0xff]
      %v767 = vld [vmem:[%s2 + $0x1a8] sm:$0xff]
      %v768 = vld [vmem:[%s2 + $0x1b0] sm:$0xff]
      %v769 = vld [vmem:[%s2 + $0x1b8] sm:$0xff]
      %v770 = vld [vmem:[%s2 + $0x1c0] sm:$0xff]
      %v771 = vld [vmem:[%s2 + $0x1c8] sm:$0xff]
      %v772 = vld [vmem:[%s2 + $0x1d0] sm:$0xff]
      %v773 = vld [vmem:[%s2 + $0x1d8] sm:$0xff]
      %v774 = vld [vmem:[%s2 + $0x1e0] sm:$0xff]
      %v775 = vld [vmem:[%s2 + $0x1e8] sm:$0xff]
      %v776 = vld [vmem:[%s2 + $0x1f0] sm:$0xff]
      %v777 = vld [vmem:[%s2 + $0x1f8] sm:$0xff]
      %778 = vmatprep.subr.mxu0 %v715
      %779 = vmatpush1.msra.mxu0 %v714
      %780 = vmatprep.subr.mxu0 %v717
      %781 = vmatpush1.msra.mxu0 %v716
      %782 = vmatprep.subr.mxu0 %v719
      %783 = vmatpush1.msra.mxu0 %v718
      %784 = vmatprep.subr.mxu0 %v721
      %785 = vmatpush1.msra.mxu0 %v720
      %786 = vmatprep.subr.mxu0 %v723
      %787 = vmatpush1.msra.mxu0 %v722
      %788 = vmatprep.subr.mxu0 %v725
      %789 = vmatpush1.msra.mxu0 %v724
      %790 = vmatprep.subr.mxu0 %v727
      %791 = vmatpush1.msra.mxu0 %v726
      %792 = vmatprep.subr.mxu0 %v729
      %793 = vmatpush1.msra.mxu0 %v728
      %794 = vmatprep.subr.mxu0 %v731
      %795 = vmatpush1.msra.mxu0 %v730
      %796 = vmatprep.subr.mxu0 %v733
      %797 = vmatpush1.msra.mxu0 %v732
      %798 = vmatprep.subr.mxu0 %v735
      %799 = vmatpush1.msra.mxu0 %v734
      %800 = vmatprep.subr.mxu0 %v737
      %801 = vmatpush1.msra.mxu0 %v736
      %802 = vmatprep.subr.mxu0 %v739
      %803 = vmatpush1.msra.mxu0 %v738
      %804 = vmatprep.subr.mxu0 %v741
      %805 = vmatpush1.msra.mxu0 %v740
      %806 = vmatprep.subr.mxu0 %v743
      %807 = vmatpush1.msra.mxu0 %v742
      %808 = vmatprep.subr.mxu0 %v745
      %809 = vmatpush1.msra.mxu0 %v744
      %810 = vmatprep.subr.mxu0 %v747
      %811 = vmatpush1.msra.mxu0 %v746
      %812 = vmatprep.subr.mxu0 %v749
      %813 = vmatpush1.msra.mxu0 %v748
      %814 = vmatprep.subr.mxu0 %v751
      %815 = vmatpush1.msra.mxu0 %v750
      %816 = vmatprep.subr.mxu0 %v753
      %817 = vmatpush1.msra.mxu0 %v752
      %818 = vmatprep.subr.mxu0 %v755
      %819 = vmatpush1.msra.mxu0 %v754
      %820 = vmatprep.subr.mxu0 %v757
      %821 = vmatpush1.msra.mxu0 %v756
      %822 = vmatprep.subr.mxu0 %v759
      %823 = vmatpush1.msra.mxu0 %v758
      %824 = vmatprep.subr.mxu0 %v761
      %825 = vmatpush1.msra.mxu0 %v760
      %826 = vmatprep.subr.mxu0 %v763
      %827 = vmatpush1.msra.mxu0 %v762
      %828 = vmatprep.subr.mxu0 %v765
      %829 = vmatpush1.msra.mxu0 %v764
      %830 = vmatprep.subr.mxu0 %v767
      %831 = vmatpush1.msra.mxu0 %v766
      %832 = vmatprep.subr.mxu0 %v769
      %833 = vmatpush1.msra.mxu0 %v768
      %834 = vmatprep.subr.mxu0 %v771
      %835 = vmatpush1.msra.mxu0 %v770
      %836 = vmatprep.subr.mxu0 %v773
      %837 = vmatpush1.msra.mxu0 %v772
      %838 = vmatprep.subr.mxu0 %v775
      %839 = vmatpush1.msra.mxu0 %v774
      %840 = vmatprep.subr.mxu0 %v777
      %841 = vmatpush1.msra.mxu0 %v776
      %842 = vmatprep.mubr.f32.mxu0 %v578
      %843 = vmatmul.mubr.f32.gmra.mrb[0].mxu0 %v577
      %v844 = vpop.f32.mrb[0].mxu0
      %v845 = vadd.f32 0.0, %v844
      %v846 = vpop.f32.mrb[0].mxu0
      %v847 = vadd.f32 0.0, %v846
      %848 = vdwg.mxu0
      %v849 = vmul.f32 %v710, %v710
      %v850 = vmul.f32 %v712, %v712
      %v851 = vmul.f32 %v845, %v845
      %v852 = vmul.f32 %v847, %v847
      %v853 = vadd.f32 %v849, %v851
      %v854 = vadd.f32 %v850, %v852
      %v855 = vrsqrt.pop %v853
      %v856 = vmul.f32 %v853, %v855
      %vm857 = vcmp.eq.f32.partialorder %v853, inf
      %v858 = vsel %vm857, %v853, %v856
      %vm859 = vcmp.eq.f32.partialorder %v853, 0.0
      %v860 = vand.u32 %v853, 2147483648
      %v861 = vsel %vm859, %v860, %v858
      %v862 = vrsqrt.pop %v854
      %v863 = vmul.f32 %v854, %v862
      %vm864 = vcmp.eq.f32.partialorder %v854, inf
      %v865 = vsel %vm864, %v854, %v863
      %vm866 = vcmp.eq.f32.partialorder %v854, 0.0
      %v867 = vand.u32 %v854, 2147483648
      %v868 = vsel %vm866, %v867, %v865
      %v869 = vadd.f32 %v861, 1e-10
      %v870 = vadd.f32 %v868, 1e-10
      %v871 = vlog2.pop %v869
      %v872 = vmul.f32 %v871, 0.6931472
      %v873 = vlog2.pop %v870
      %v874 = vmul.f32 %v873, 0.6931472
      %875 = vst [vmem:[#allocation2] sm:$0xff] %v872
      %876 = vst [vmem:[#allocation2 + $0x8] sm:$0xff] %v874
      %v877 = vand.u32 2147483647, %v710
      %v878 = vand.u32 2147483647, %v712
      %v879 = vand.u32 2147483647, %v845
      %v880 = vand.u32 2147483647, %v847
      %v881 = vmax.f32 %v877, %v879
      %v882 = vmax.f32 %v878, %v880
      %v883 = vmin.f32 %v877, %v879
      %v884 = vmin.f32 %v878, %v880
      %v885 = vmax.f32 %v881, 1e-30
      %v886 = vmax.f32 %v882, 1e-30
      %v887 = vrcp.pop %v885
      %v888 = vmul.f32 %v883, %v887
      %v889 = vrcp.pop %v886
      %v890 = vmul.f32 %v884, %v889
      %vm891 = vcmp.gt.f32.partialorder %v888, 0.41421357
      %vm892 = vcmp.gt.f32.partialorder %v890, 0.41421357
      %v893 = vsub.f32 %v888, 1.0
      %v894 = vsub.f32 %v890, 1.0
      %v895 = vadd.f32 %v888, 1.0
      %v896 = vadd.f32 %v890, 1.0
      %v897 = vrcp.pop %v895
      %v898 = vmul.f32 %v893, %v897
      %v899 = vrcp.pop %v896
      %v900 = vmul.f32 %v894, %v899
      %v901 = vsel %vm891, %v898, %v888
      %v902 = vsel %vm892, %v900, %v890
      %v903 = vmul.f32 %v901, %v901
      %v904 = vmul.f32 %v902, %v902
      %v905 = vmul.f32 %v903, 0.080537446
      %v906 = vmul.f32 %v904, 0.080537446
      %v907 = vsub.f32 %v905, 0.13877685
      %v908 = vsub.f32 %v906, 0.13877685
      %v909 = vmul.f32 %v907, %v903
      %v910 = vmul.f32 %v908, %v904
      %v911 = vadd.f32 %v909, 0.19977711
      %v912 = vadd.f32 %v910, 0.19977711
      %v913 = vmul.f32 %v911, %v903
      %v914 = vmul.f32 %v912, %v904
      %v915 = vsub.f32 %v913, 0.3333295
      %v916 = vsub.f32 %v914, 0.3333295
      %v917 = vmul.f32 %v915, %v903
      %v918 = vmul.f32 %v916, %v904
      %v919 = vmul.f32 %v917, %v901
      %v920 = vmul.f32 %v918, %v902
      %v921 = vadd.f32 %v919, %v901
      %v922 = vadd.f32 %v920, %v902
      %v923 = vadd.f32 %v921, 0.7853982
      %v924 = vadd.f32 %v922, 0.7853982
      %v925 = vsel %vm891, %v923, %v921
      %v926 = vsel %vm892, %v924, %v922
      %vm927 = vcmp.gt.f32.partialorder %v879, %v877
      %vm928 = vcmp.gt.f32.partialorder %v880, %v878
      %v929 = vsub.f32 1.5707964, %v925
      %v930 = vsub.f32 1.5707964, %v926
      %v931 = vsel %vm927, %v929, %v925
      %v932 = vsel %vm928, %v930, %v926
      %vm933 = vcmp.lt.f32.partialorder %v710, 0.0
      %vm934 = vcmp.lt.f32.partialorder %v712, 0.0
      %v935 = vsub.f32 3.1415927, %v931
      %v936 = vsub.f32 3.1415927, %v932
      %v937 = vsel %vm933, %v935, %v931
      %v938 = vsel %vm934, %v936, %v932
      %vm939 = vcmp.lt.f32.partialorder %v845, 0.0
      %vm940 = vcmp.lt.f32.partialorder %v847, 0.0
      %v941 = vsub.f32 0.0, %v937
      %v942 = vsub.f32 0.0, %v938
      %v943 = vsel %vm939, %v941, %v937
      %v944 = vsel %vm940, %v942, %v938
      %945 = vst [vmem:[#allocation2 + $0x10] sm:$0xff] %v943
      %946 = vst [vmem:[#allocation2 + $0x18] sm:$0xff] %v944
      %v947 = vld [vmem:[#allocation2] sm:$0xff]
      %v948 = vld [vmem:[#allocation2 + $0x8] sm:$0xff]
      %v949 = vld [vmem:[#allocation2 + $0x10] sm:$0xff]
      %v950 = vld [vmem:[#allocation2 + $0x18] sm:$0xff]
      %951 = vrot.lane.b32.xlu0 %v947, 17
      %v952 = vpop.permute.xlu0 %951
      %953 = vrot.lane.b32.xlu0 %v949, 17
      %v954 = vpop.permute.xlu0 %953
      %955 = vrot.lane.b32.xlu0 %v948, 17
      %v956 = vpop.permute.xlu0 %955
      %957 = vrot.lane.b32.xlu0 %v950, 17
      %v958 = vpop.permute.xlu0 %957
      %v959 = vlaneseq
      %v960 = vand.u32 %v959, 127
      %vm961 = vcmp.lt.s32.totalorder %v960, 17
      %v962 = vsel %vm961, %v952, %v956
      %v963 = vsel %vm961, %v954, %v958
      %v964 = vsel %vm961, %v956, %v952
      %v965 = vsel %vm961, %v958, %v954
      %v966 = vld [vmem:[%s3] sm:$0x3]
      %v968 = vlaneseq
      %v969 = vshrl.u32 %v968, 7
      %v970 = vsub.s32 0, %v969
      %v971 = vrot.slane %v966, %v970
      %v972 = vlaneseq
      %v973 = vshrl.u32 %v972, 7
      %v974 = vsub.s32 1, %v973
      %v975 = vrot.slane %v966, %v974
      %v978 = vmul.f32 %v964, %v971
      %v979 = vmul.f32 %v962, %v975
      %v980 = vmul.f32 %v965, %v971
      %v981 = vmul.f32 %v963, %v975
      %v982 = vpack.c.bf16 %v980, %v978
      %v983 = vpack.c.bf16 %v981, %v979
      %984 = vst [vmem:[#allocation3] sm:$0xff] %v982
      %985 = vst [vmem:[#allocation3 + $0x8] sm:$0xff] %v983
      %986 = vrot.lane.b32.xlu0 %v947, 16
      %v987 = vpop.permute.xlu0 %986
      %988 = vrot.lane.b32.xlu0 %v949, 16
      %v989 = vpop.permute.xlu0 %988
      %990 = vrot.lane.b32.xlu0 %v948, 16
      %v991 = vpop.permute.xlu0 %990
      %992 = vrot.lane.b32.xlu0 %v950, 16
      %v993 = vpop.permute.xlu0 %992
      %vm994 = vcmp.lt.s32.totalorder %v960, 16
      %v995 = vsel %vm994, %v987, %v991
      %v996 = vsel %vm994, %v989, %v993
      %v997 = vsel %vm994, %v991, %v987
      %v998 = vsel %vm994, %v993, %v989
      %s999 = scalar_lea.vmem %s3, 2
      %v1000 = vld [vmem:[%s999] sm:$0x3]
      %v1002 = vlaneseq
      %v1003 = vshrl.u32 %v1002, 7
      %v1004 = vsub.s32 0, %v1003
      %v1005 = vrot.slane %v1000, %v1004
      %v1006 = vlaneseq
      %v1007 = vshrl.u32 %v1006, 7
      %v1008 = vsub.s32 1, %v1007
      %v1009 = vrot.slane %v1000, %v1008
      %v1012 = vmul.f32 %v997, %v1005
      %v1013 = vmul.f32 %v995, %v1009
      %v1014 = vmul.f32 %v998, %v1005
      %v1015 = vmul.f32 %v996, %v1009
      %v1016 = vpack.c.bf16 %v1014, %v1012
      %v1017 = vpack.c.bf16 %v1015, %v1013
      %1018 = vst [vmem:[#allocation3 + $0x10] sm:$0xff] %v1016
      %1019 = vst [vmem:[#allocation3 + $0x18] sm:$0xff] %v1017
      %1020 = vrot.lane.b32.xlu0 %v947, 15
      %v1021 = vpop.permute.xlu0 %1020
      %1022 = vrot.lane.b32.xlu0 %v949, 15
      %v1023 = vpop.permute.xlu0 %1022
      %1024 = vrot.lane.b32.xlu0 %v948, 15
      %v1025 = vpop.permute.xlu0 %1024
      %1026 = vrot.lane.b32.xlu0 %v950, 15
      %v1027 = vpop.permute.xlu0 %1026
      %vm1028 = vcmp.lt.s32.totalorder %v960, 15
      %v1029 = vsel %vm1028, %v1021, %v1025
      %v1030 = vsel %vm1028, %v1023, %v1027
      %v1031 = vsel %vm1028, %v1025, %v1021
      %v1032 = vsel %vm1028, %v1027, %v1023
      %s1033 = scalar_lea.vmem %s3, 4
      %v1034 = vld [vmem:[%s1033] sm:$0x3]
      %v1036 = vlaneseq
      %v1037 = vshrl.u32 %v1036, 7
      %v1038 = vsub.s32 0, %v1037
      %v1039 = vrot.slane %v1034, %v1038
      %v1040 = vlaneseq
      %v1041 = vshrl.u32 %v1040, 7
      %v1042 = vsub.s32 1, %v1041
      %v1043 = vrot.slane %v1034, %v1042
      %v1046 = vmul.f32 %v1031, %v1039
      %v1047 = vmul.f32 %v1029, %v1043
      %v1048 = vmul.f32 %v1032, %v1039
      %v1049 = vmul.f32 %v1030, %v1043
      %v1050 = vpack.c.bf16 %v1048, %v1046
      %v1051 = vpack.c.bf16 %v1049, %v1047
      %1052 = vst [vmem:[#allocation3 + $0x20] sm:$0xff] %v1050
      %1053 = vst [vmem:[#allocation3 + $0x28] sm:$0xff] %v1051
      %1054 = vrot.lane.b32.xlu0 %v947, 1
      %v1055 = vpop.permute.xlu0 %1054
      %1056 = vrot.lane.b32.xlu0 %v949, 1
      %v1057 = vpop.permute.xlu0 %1056
      %1058 = vrot.lane.b32.xlu0 %v948, 1
      %v1059 = vpop.permute.xlu0 %1058
      %1060 = vrot.lane.b32.xlu0 %v950, 1
      %v1061 = vpop.permute.xlu0 %1060
      %vm1062 = vcmp.lt.s32.totalorder %v960, 1
      %v1063 = vsel %vm1062, %v1055, %v1059
      %v1064 = vsel %vm1062, %v1057, %v1061
      %v1065 = vsel %vm1062, %v1059, %v1055
      %v1066 = vsel %vm1062, %v1061, %v1057
      %s1067 = scalar_lea.vmem %s3, 6
      %v1068 = vld [vmem:[%s1067] sm:$0x3]
      %v1070 = vlaneseq
      %v1071 = vshrl.u32 %v1070, 7
      %v1072 = vsub.s32 0, %v1071
      %v1073 = vrot.slane %v1068, %v1072
      %v1074 = vlaneseq
      %v1075 = vshrl.u32 %v1074, 7
      %v1076 = vsub.s32 1, %v1075
      %v1077 = vrot.slane %v1068, %v1076
      %v1080 = vmul.f32 %v1065, %v1073
      %v1081 = vmul.f32 %v1063, %v1077
      %v1082 = vmul.f32 %v1066, %v1073
      %v1083 = vmul.f32 %v1064, %v1077
      %v1084 = vpack.c.bf16 %v1082, %v1080
      %v1085 = vpack.c.bf16 %v1083, %v1081
      %1086 = vst [vmem:[#allocation3 + $0x30] sm:$0xff] %v1084
      %1087 = vst [vmem:[#allocation3 + $0x38] sm:$0xff] %v1085
      %v1088 = vpack.c.bf16 %v949, %v947
      %v1089 = vpack.c.bf16 %v950, %v948
      %1090 = vst [vmem:[#allocation3 + $0x40] sm:$0xff] %v1088
      %1091 = vst [vmem:[#allocation3 + $0x48] sm:$0xff] %v1089
      %1092 = vrot.lane.b32.xlu0 %v947, 127
      %v1093 = vpop.permute.xlu0 %1092
      %1094 = vrot.lane.b32.xlu0 %v949, 127
      %v1095 = vpop.permute.xlu0 %1094
      %1096 = vrot.lane.b32.xlu0 %v948, 127
      %v1097 = vpop.permute.xlu0 %1096
      %1098 = vrot.lane.b32.xlu0 %v950, 127
      %v1099 = vpop.permute.xlu0 %1098
      %vm1100 = vcmp.lt.s32.totalorder %v960, 127
      %v1101 = vsel %vm1100, %v1093, %v1097
      %v1102 = vsel %vm1100, %v1095, %v1099
      %v1103 = vsel %vm1100, %v1097, %v1093
      %v1104 = vsel %vm1100, %v1099, %v1095
      %s1105 = scalar_lea.vmem %s3, 10
      %v1106 = vld [vmem:[%s1105] sm:$0x3]
      %v1108 = vlaneseq
      %v1109 = vshrl.u32 %v1108, 7
      %v1110 = vsub.s32 0, %v1109
      %v1111 = vrot.slane %v1106, %v1110
      %v1112 = vlaneseq
      %v1113 = vshrl.u32 %v1112, 7
      %v1114 = vsub.s32 1, %v1113
      %v1115 = vrot.slane %v1106, %v1114
      %v1118 = vmul.f32 %v1101, %v1111
      %v1119 = vmul.f32 %v1103, %v1115
      %v1120 = vmul.f32 %v1102, %v1111
      %v1121 = vmul.f32 %v1104, %v1115
      %v1122 = vpack.c.bf16 %v1120, %v1118
      %v1123 = vpack.c.bf16 %v1121, %v1119
      %1124 = vst [vmem:[#allocation3 + $0x50] sm:$0xff] %v1122
      %1125 = vst [vmem:[#allocation3 + $0x58] sm:$0xff] %v1123
      %1126 = vrot.lane.b32.xlu0 %v947, 113
      %v1127 = vpop.permute.xlu0 %1126
      %1128 = vrot.lane.b32.xlu0 %v949, 113
      %v1129 = vpop.permute.xlu0 %1128
      %1130 = vrot.lane.b32.xlu0 %v948, 113
      %v1131 = vpop.permute.xlu0 %1130
      %1132 = vrot.lane.b32.xlu0 %v950, 113
      %v1133 = vpop.permute.xlu0 %1132
      %vm1134 = vcmp.lt.s32.totalorder %v960, 113
      %v1135 = vsel %vm1134, %v1127, %v1131
      %v1136 = vsel %vm1134, %v1129, %v1133
      %v1137 = vsel %vm1134, %v1131, %v1127
      %v1138 = vsel %vm1134, %v1133, %v1129
      %s1139 = scalar_lea.vmem %s3, 12
      %v1140 = vld [vmem:[%s1139] sm:$0x3]
      %v1142 = vlaneseq
      %v1143 = vshrl.u32 %v1142, 7
      %v1144 = vsub.s32 0, %v1143
      %v1145 = vrot.slane %v1140, %v1144
      %v1146 = vlaneseq
      %v1147 = vshrl.u32 %v1146, 7
      %v1148 = vsub.s32 1, %v1147
      %v1149 = vrot.slane %v1140, %v1148
      %v1152 = vmul.f32 %v1135, %v1145
      %v1153 = vmul.f32 %v1137, %v1149
      %v1154 = vmul.f32 %v1136, %v1145
      %v1155 = vmul.f32 %v1138, %v1149
      %v1156 = vpack.c.bf16 %v1154, %v1152
      %v1157 = vpack.c.bf16 %v1155, %v1153
      %1158 = vst [vmem:[#allocation3 + $0x60] sm:$0xff] %v1156
      %1159 = vst [vmem:[#allocation3 + $0x68] sm:$0xff] %v1157
      %1160 = vrot.lane.b32.xlu0 %v947, 112
      %v1161 = vpop.permute.xlu0 %1160
      %1162 = vrot.lane.b32.xlu0 %v949, 112
      %v1163 = vpop.permute.xlu0 %1162
      %1164 = vrot.lane.b32.xlu0 %v948, 112
      %v1165 = vpop.permute.xlu0 %1164
      %1166 = vrot.lane.b32.xlu0 %v950, 112
      %v1167 = vpop.permute.xlu0 %1166
      %vm1168 = vcmp.lt.s32.totalorder %v960, 112
      %v1169 = vsel %vm1168, %v1161, %v1165
      %v1170 = vsel %vm1168, %v1163, %v1167
      %v1171 = vsel %vm1168, %v1165, %v1161
      %v1172 = vsel %vm1168, %v1167, %v1163
      %s1173 = scalar_lea.vmem %s3, 14
      %v1174 = vld [vmem:[%s1173] sm:$0x3]
      %v1176 = vlaneseq
      %v1177 = vshrl.u32 %v1176, 7
      %v1178 = vsub.s32 0, %v1177
      %v1179 = vrot.slane %v1174, %v1178
      %v1180 = vlaneseq
      %v1181 = vshrl.u32 %v1180, 7
      %v1182 = vsub.s32 1, %v1181
      %v1183 = vrot.slane %v1174, %v1182
      %v1186 = vmul.f32 %v1169, %v1179
      %v1187 = vmul.f32 %v1171, %v1183
      %v1188 = vmul.f32 %v1170, %v1179
      %v1189 = vmul.f32 %v1172, %v1183
      %v1190 = vpack.c.bf16 %v1188, %v1186
      %v1191 = vpack.c.bf16 %v1189, %v1187
      %1192 = vst [vmem:[#allocation3 + $0x70] sm:$0xff] %v1190
      %1193 = vst [vmem:[#allocation3 + $0x78] sm:$0xff] %v1191
      %1194 = vrot.lane.b32.xlu0 %v947, 111
      %v1195 = vpop.permute.xlu0 %1194
      %1196 = vrot.lane.b32.xlu0 %v949, 111
      %v1197 = vpop.permute.xlu0 %1196
      %1198 = vrot.lane.b32.xlu0 %v948, 111
      %v1199 = vpop.permute.xlu0 %1198
      %1200 = vrot.lane.b32.xlu0 %v950, 111
      %v1201 = vpop.permute.xlu0 %1200
      %vm1202 = vcmp.lt.s32.totalorder %v960, 111
      %v1203 = vsel %vm1202, %v1195, %v1199
      %v1204 = vsel %vm1202, %v1197, %v1201
      %v1205 = vsel %vm1202, %v1199, %v1195
      %v1206 = vsel %vm1202, %v1201, %v1197
      %s1207 = scalar_lea.vmem %s3, 16
      %v1208 = vld [vmem:[%s1207] sm:$0x3]
      %v1210 = vlaneseq
      %v1211 = vshrl.u32 %v1210, 7
      %v1212 = vsub.s32 0, %v1211
      %v1213 = vrot.slane %v1208, %v1212
      %v1214 = vlaneseq
      %v1215 = vshrl.u32 %v1214, 7
      %v1216 = vsub.s32 1, %v1215
      %v1217 = vrot.slane %v1208, %v1216
      %v1220 = vmul.f32 %v1203, %v1213
      %v1221 = vmul.f32 %v1205, %v1217
      %v1222 = vmul.f32 %v1204, %v1213
      %v1223 = vmul.f32 %v1206, %v1217
      %v1224 = vpack.c.bf16 %v1222, %v1220
      %v1225 = vpack.c.bf16 %v1223, %v1221
      %1226 = vst [vmem:[#allocation3 + $0x80] sm:$0xff] %v1224
      %1227 = vst [vmem:[#allocation3 + $0x88] sm:$0xff] %v1225
      %v1228 = vld [vmem:[#allocation3] sm:$0xff]
      %v1229 = vld [vmem:[#allocation3 + $0x8] sm:$0xff]
      %v1230 = vld [vmem:[#allocation3 + $0x10] sm:$0xff]
      %v1231 = vld [vmem:[#allocation3 + $0x18] sm:$0xff]
      %v1232 = vld [vmem:[#allocation3 + $0x20] sm:$0xff]
      %v1233 = vld [vmem:[#allocation3 + $0x28] sm:$0xff]
      %v1234 = vld [vmem:[#allocation3 + $0x30] sm:$0xff]
      %v1235 = vld [vmem:[#allocation3 + $0x38] sm:$0xff]
      %v1236 = vld [vmem:[#allocation3 + $0x40] sm:$0xff]
      %v1237 = vld [vmem:[#allocation3 + $0x48] sm:$0xff]
      %v1238 = vld [vmem:[#allocation3 + $0x50] sm:$0xff]
      %v1239 = vld [vmem:[#allocation3 + $0x58] sm:$0xff]
      %v1240 = vld [vmem:[#allocation3 + $0x60] sm:$0xff]
      %v1241 = vld [vmem:[#allocation3 + $0x68] sm:$0xff]
      %v1242 = vld [vmem:[#allocation3 + $0x70] sm:$0xff]
      %v1243 = vld [vmem:[#allocation3 + $0x78] sm:$0xff]
      %v1244 = vld [vmem:[#allocation3 + $0x80] sm:$0xff]
      %v1245 = vld [vmem:[#allocation3 + $0x88] sm:$0xff]
      %v1246 = vld [vmem:[%s4] sm:$0xff]
      %v1247 = vld [vmem:[%s4 + $0x8] sm:$0xff]
      %v1248 = vld [vmem:[%s4 + $0x10] sm:$0xff]
      %v1249 = vld [vmem:[%s4 + $0x18] sm:$0xff]
      %v1250 = vld [vmem:[%s4 + $0x20] sm:$0xff]
      %v1251 = vld [vmem:[%s4 + $0x28] sm:$0xff]
      %v1252 = vld [vmem:[%s4 + $0x30] sm:$0xff]
      %v1253 = vld [vmem:[%s4 + $0x38] sm:$0xff]
      %v1254 = vld [vmem:[%s5] sm:$0xff]
      %v1255 = vld [vmem:[%s5 + $0x8] sm:$0xff]
      %v1256 = vld [vmem:[%s5 + $0x10] sm:$0xff]
      %v1257 = vld [vmem:[%s5 + $0x18] sm:$0xff]
      %v1258 = vld [vmem:[%s5 + $0x20] sm:$0xff]
      %v1259 = vld [vmem:[%s5 + $0x28] sm:$0xff]
      %v1260 = vld [vmem:[%s5 + $0x30] sm:$0xff]
      %v1261 = vld [vmem:[%s5 + $0x38] sm:$0xff]
      %1263 = vset.pattern.permute.xlu0 0
      %1264 = vperm.xlu0 %1263, %v1254
      %v1265 = vpop.permute.xlu0 %1264
      %1268 = vset.pattern.permute.xlu0 0
      %1269 = vperm.xlu0 %1268, %v1255
      %v1270 = vpop.permute.xlu0 %1269
      %1273 = vset.pattern.permute.xlu0 0
      %1274 = vperm.xlu0 %1273, %v1256
      %v1275 = vpop.permute.xlu0 %1274
      %1278 = vset.pattern.permute.xlu0 0
      %1279 = vperm.xlu0 %1278, %v1257
      %v1280 = vpop.permute.xlu0 %1279
      %1283 = vset.pattern.permute.xlu0 0
      %1284 = vperm.xlu0 %1283, %v1258
      %v1285 = vpop.permute.xlu0 %1284
      %1288 = vset.pattern.permute.xlu0 0
      %1289 = vperm.xlu0 %1288, %v1259
      %v1290 = vpop.permute.xlu0 %1289
      %1293 = vset.pattern.permute.xlu0 0
      %1294 = vperm.xlu0 %1293, %v1260
      %v1295 = vpop.permute.xlu0 %1294
      %1298 = vset.pattern.permute.xlu0 0
      %1299 = vperm.xlu0 %1298, %v1261
      %v1300 = vpop.permute.xlu0 %1299
      %v1310 = vunpack.c.l.b16 %v1246
      %v1311 = vunpack.c.h.b16 %v1246
      %v1312 = vunpack.c.l.b16 %v1247
      %v1313 = vunpack.c.h.b16 %v1247
      %v1314 = vunpack.c.l.b16 %v1248
      %v1315 = vunpack.c.h.b16 %v1248
      %v1316 = vunpack.c.l.b16 %v1249
      %v1317 = vunpack.c.h.b16 %v1249
      %v1318 = vunpack.c.l.b16 %v1250
      %v1319 = vunpack.c.h.b16 %v1250
      %v1320 = vunpack.c.l.b16 %v1251
      %v1321 = vunpack.c.h.b16 %v1251
      %v1322 = vunpack.c.l.b16 %v1252
      %v1323 = vunpack.c.h.b16 %v1252
      %v1324 = vunpack.c.l.b16 %v1253
      %v1325 = vunpack.c.h.b16 %v1253
      %v1326 = vpack.c.b16 %v1312, %v1310
      %v1327 = vpack.c.b16 %v1313, %v1311
      %v1328 = vpack.c.b16 %v1316, %v1314
      %v1329 = vpack.c.b16 %v1317, %v1315
      %v1330 = vpack.c.b16 %v1320, %v1318
      %v1331 = vpack.c.b16 %v1321, %v1319
      %v1332 = vpack.c.b16 %v1324, %v1322
      %v1333 = vpack.c.b16 %v1325, %v1323
      %vm1338 = vcmask 130048
      %v1340 = vsel %vm1338, %v1327, 0
      %v1343 = vsel %vm1338, %v1329, 0
      %v1346 = vsel %vm1338, %v1331, 0
      %v1349 = vsel %vm1338, %v1333, 0
      %1351 = vmatprep.subr.bf16.mxu0 %v1229
      %1352 = vmatpush1.bf16.msra.mxu0 %v1228
      %1353 = vmatprep.subr.bf16.mxu0 %v1231
      %1354 = vmatpush1.bf16.msra.mxu0 %v1230
      %1355 = vmatprep.subr.bf16.mxu0 %v1233
      %1356 = vmatpush1.bf16.msra.mxu0 %v1232
      %1357 = vmatprep.subr.bf16.mxu0 %v1235
      %1358 = vmatpush1.bf16.msra.mxu0 %v1234
      %1359 = vmatprep.subr.bf16.mxu0 %v1237
      %1360 = vmatpush1.bf16.msra.mxu0 %v1236
      %1361 = vmatprep.subr.bf16.mxu0 %v1239
      %1362 = vmatpush1.bf16.msra.mxu0 %v1238
      %1363 = vmatprep.subr.bf16.mxu0 %v1241
      %1364 = vmatpush1.bf16.msra.mxu0 %v1240
      %1365 = vmatprep.subr.bf16.mxu0 %v1243
      %1366 = vmatpush1.bf16.msra.mxu0 %v1242
      %1367 = vmatprep.subr.bf16.mxu0 %v1245
      %1368 = vmatpush1.bf16.msra.mxu0 %v1244
      %1369 = vmatprep.subr.bf16.mxu0 0
      %1370 = vmatpush1.bf16.msra.mxu0 0
      %1371 = vmatprep.subr.bf16.mxu0 0
      %1372 = vmatpush1.bf16.msra.mxu0 0
      %1373 = vmatprep.subr.bf16.mxu0 0
      %1374 = vmatpush1.bf16.msra.mxu0 0
      %1375 = vmatprep.subr.bf16.mxu0 0
      %1376 = vmatpush1.bf16.msra.mxu0 0
      %1377 = vmatprep.subr.bf16.mxu0 0
      %1378 = vmatpush1.bf16.msra.mxu0 0
      %1379 = vmatprep.subr.bf16.mxu0 0
      %1380 = vmatpush1.bf16.msra.mxu0 0
      %1381 = vmatprep.subr.bf16.mxu0 0
      %1382 = vmatpush1.bf16.msra.mxu0 0
      %1383 = vmatprep.mubr.bf16.mxu0 %v1340
      %1384 = vmatmul.mubr.bf16.gmra.mrb[0].mxu0 %v1326
      %v1385 = vpop.f32.mrb[0].mxu0
      %v1386 = vadd.f32 %v1265, %v1385
      %v1387 = vpop.f32.mrb[0].mxu0
      %v1388 = vadd.f32 %v1265, %v1387
      %v1389 = vpop.f32.mrb[0].mxu0
      %v1390 = vadd.f32 %v1270, %v1389
      %v1391 = vpop.f32.mrb[0].mxu0
      %v1392 = vadd.f32 %v1270, %v1391
      %1393 = vmatprep.mubr.bf16.mxu0 %v1343
      %1394 = vmatmul.mubr.bf16.gmra.mrb[0].mxu0 %v1328
      %v1395 = vpop.f32.mrb[0].mxu0
      %v1396 = vadd.f32 %v1275, %v1395
      %v1397 = vpop.f32.mrb[0].mxu0
      %v1398 = vadd.f32 %v1275, %v1397
      %v1399 = vpop.f32.mrb[0].mxu0
      %v1400 = vadd.f32 %v1280, %v1399
      %v1401 = vpop.f32.mrb[0].mxu0
      %v1402 = vadd.f32 %v1280, %v1401
      %1403 = vmatprep.mubr.bf16.mxu0 %v1346
      %1404 = vmatmul.mubr.bf16.gmra.mrb[0].mxu0 %v1330
      %v1405 = vpop.f32.mrb[0].mxu0
      %v1406 = vadd.f32 %v1285, %v1405
      %v1407 = vpop.f32.mrb[0].mxu0
      %v1408 = vadd.f32 %v1285, %v1407
      %v1409 = vpop.f32.mrb[0].mxu0
      %v1410 = vadd.f32 %v1290, %v1409
      %v1411 = vpop.f32.mrb[0].mxu0
      %v1412 = vadd.f32 %v1290, %v1411
      %1413 = vmatprep.mubr.bf16.mxu0 %v1349
      %1414 = vmatmul.mubr.bf16.gmra.mrb[0].mxu0 %v1332
      %v1415 = vpop.f32.mrb[0].mxu0
      %v1416 = vadd.f32 %v1295, %v1415
      %v1417 = vpop.f32.mrb[0].mxu0
      %v1418 = vadd.f32 %v1295, %v1417
      %v1419 = vpop.f32.mrb[0].mxu0
      %v1420 = vadd.f32 %v1300, %v1419
      %v1421 = vpop.f32.mrb[0].mxu0
      %v1422 = vadd.f32 %v1300, %v1421
      %1423 = vdwg.mxu0
      %v1424 = vmax.f32 %v1386, 0.0
      %v1425 = vmax.f32 %v1388, 0.0
      %v1426 = vmax.f32 %v1390, 0.0
      %v1427 = vmax.f32 %v1392, 0.0
      %v1428 = vmax.f32 %v1396, 0.0
      %v1429 = vmax.f32 %v1398, 0.0
      %v1430 = vmax.f32 %v1400, 0.0
      %v1431 = vmax.f32 %v1402, 0.0
      %v1432 = vmax.f32 %v1406, 0.0
      %v1433 = vmax.f32 %v1408, 0.0
      %v1434 = vmax.f32 %v1410, 0.0
      %v1435 = vmax.f32 %v1412, 0.0
      %v1436 = vmax.f32 %v1416, 0.0
      %v1437 = vmax.f32 %v1418, 0.0
      %v1438 = vmax.f32 %v1420, 0.0
      %v1439 = vmax.f32 %v1422, 0.0
      %1440 = vst [vmem:[#allocation4] sm:$0xff] %v1424
      %1441 = vst [vmem:[#allocation4 + $0x8] sm:$0xff] %v1425
      %1442 = vst [vmem:[#allocation4 + $0x10] sm:$0xff] %v1426
      %1443 = vst [vmem:[#allocation4 + $0x18] sm:$0xff] %v1427
      %1444 = vst [vmem:[#allocation4 + $0x20] sm:$0xff] %v1428
      %1445 = vst [vmem:[#allocation4 + $0x28] sm:$0xff] %v1429
      %1446 = vst [vmem:[#allocation4 + $0x30] sm:$0xff] %v1430
      %1447 = vst [vmem:[#allocation4 + $0x38] sm:$0xff] %v1431
      %1448 = vst [vmem:[#allocation4 + $0x40] sm:$0xff] %v1432
      %1449 = vst [vmem:[#allocation4 + $0x48] sm:$0xff] %v1433
      %1450 = vst [vmem:[#allocation4 + $0x50] sm:$0xff] %v1434
      %1451 = vst [vmem:[#allocation4 + $0x58] sm:$0xff] %v1435
      %1452 = vst [vmem:[#allocation4 + $0x60] sm:$0xff] %v1436
      %1453 = vst [vmem:[#allocation4 + $0x68] sm:$0xff] %v1437
      %1454 = vst [vmem:[#allocation4 + $0x70] sm:$0xff] %v1438
      %1455 = vst [vmem:[#allocation4 + $0x78] sm:$0xff] %v1439
      %v1456 = vld [vmem:[#allocation3] sm:$0xff]
      %v1457 = vld [vmem:[#allocation3 + $0x8] sm:$0xff]
      %v1458 = vld [vmem:[#allocation3 + $0x10] sm:$0xff]
      %v1459 = vld [vmem:[#allocation3 + $0x18] sm:$0xff]
      %v1460 = vld [vmem:[#allocation3 + $0x20] sm:$0xff]
      %v1461 = vld [vmem:[#allocation3 + $0x28] sm:$0xff]
      %v1462 = vld [vmem:[#allocation3 + $0x30] sm:$0xff]
      %v1463 = vld [vmem:[#allocation3 + $0x38] sm:$0xff]
      %v1464 = vld [vmem:[#allocation3 + $0x40] sm:$0xff]
      %v1465 = vld [vmem:[#allocation3 + $0x48] sm:$0xff]
      %v1466 = vld [vmem:[#allocation3 + $0x50] sm:$0xff]
      %v1467 = vld [vmem:[#allocation3 + $0x58] sm:$0xff]
      %v1468 = vld [vmem:[#allocation3 + $0x60] sm:$0xff]
      %v1469 = vld [vmem:[#allocation3 + $0x68] sm:$0xff]
      %v1470 = vld [vmem:[#allocation3 + $0x70] sm:$0xff]
      %v1471 = vld [vmem:[#allocation3 + $0x78] sm:$0xff]
      %v1472 = vld [vmem:[#allocation3 + $0x80] sm:$0xff]
      %v1473 = vld [vmem:[#allocation3 + $0x88] sm:$0xff]
      %v1474 = vld [vmem:[%s12] sm:$0xff]
      %v1475 = vld [vmem:[%s12 + $0x8] sm:$0xff]
      %v1476 = vld [vmem:[%s12 + $0x10] sm:$0xff]
      %v1477 = vld [vmem:[%s12 + $0x18] sm:$0xff]
      %v1478 = vld [vmem:[%s13] sm:$0xff]
      %v1479 = vld [vmem:[%s13 + $0x8] sm:$0xff]
      %v1480 = vld [vmem:[%s13 + $0x10] sm:$0xff]
      %v1481 = vld [vmem:[%s13 + $0x18] sm:$0xff]
      %1483 = vset.pattern.permute.xlu0 0
      %1484 = vperm.xlu0 %1483, %v1478
      %v1485 = vpop.permute.xlu0 %1484
      %1488 = vset.pattern.permute.xlu0 0
      %1489 = vperm.xlu0 %1488, %v1479
      %v1490 = vpop.permute.xlu0 %1489
      %1493 = vset.pattern.permute.xlu0 0
      %1494 = vperm.xlu0 %1493, %v1480
      %v1495 = vpop.permute.xlu0 %1494
      %1498 = vset.pattern.permute.xlu0 0
      %1499 = vperm.xlu0 %1498, %v1481
      %v1500 = vpop.permute.xlu0 %1499
      %v1506 = vunpack.c.l.b16 %v1474
      %v1507 = vunpack.c.h.b16 %v1474
      %v1508 = vunpack.c.l.b16 %v1475
      %v1509 = vunpack.c.h.b16 %v1475
      %v1510 = vunpack.c.l.b16 %v1476
      %v1511 = vunpack.c.h.b16 %v1476
      %v1512 = vunpack.c.l.b16 %v1477
      %v1513 = vunpack.c.h.b16 %v1477
      %v1514 = vpack.c.b16 %v1508, %v1506
      %v1515 = vpack.c.b16 %v1509, %v1507
      %v1516 = vpack.c.b16 %v1512, %v1510
      %v1517 = vpack.c.b16 %v1513, %v1511
      %v1521 = vsel %vm1338, %v1515, 0
      %v1524 = vsel %vm1338, %v1517, 0
      %1526 = vmatprep.subr.bf16.mxu0 %v1457
      %1527 = vmatpush1.bf16.msra.mxu0 %v1456
      %1528 = vmatprep.subr.bf16.mxu0 %v1459
      %1529 = vmatpush1.bf16.msra.mxu0 %v1458
      %1530 = vmatprep.subr.bf16.mxu0 %v1461
      %1531 = vmatpush1.bf16.msra.mxu0 %v1460
      %1532 = vmatprep.subr.bf16.mxu0 %v1463
      %1533 = vmatpush1.bf16.msra.mxu0 %v1462
      %1534 = vmatprep.subr.bf16.mxu0 %v1465
      %1535 = vmatpush1.bf16.msra.mxu0 %v1464
      %1536 = vmatprep.subr.bf16.mxu0 %v1467
      %1537 = vmatpush1.bf16.msra.mxu0 %v1466
      %1538 = vmatprep.subr.bf16.mxu0 %v1469
      %1539 = vmatpush1.bf16.msra.mxu0 %v1468
      %1540 = vmatprep.subr.bf16.mxu0 %v1471
      %1541 = vmatpush1.bf16.msra.mxu0 %v1470
      %1542 = vmatprep.subr.bf16.mxu0 %v1473
      %1543 = vmatpush1.bf16.msra.mxu0 %v1472
      %1544 = vmatprep.subr.bf16.mxu0 0
      %1545 = vmatpush1.bf16.msra.mxu0 0
      %1546 = vmatprep.subr.bf16.mxu0 0
      %1547 = vmatpush1.bf16.msra.mxu0 0
      %1548 = vmatprep.subr.bf16.mxu0 0
      %1549 = vmatpush1.bf16.msra.mxu0 0
      %1550 = vmatprep.subr.bf16.mxu0 0
      %1551 = vmatpush1.bf16.msra.mxu0 0
      %1552 = vmatprep.subr.bf16.mxu0 0
      %1553 = vmatpush1.bf16.msra.mxu0 0
      %1554 = vmatprep.subr.bf16.mxu0 0
      %1555 = vmatpush1.bf16.msra.mxu0 0
      %1556 = vmatprep.subr.bf16.mxu0 0
      %1557 = vmatpush1.bf16.msra.mxu0 0
      %1558 = vmatprep.mubr.bf16.mxu0 %v1521
      %1559 = vmatmul.mubr.bf16.gmra.mrb[0].mxu0 %v1514
      %v1560 = vpop.f32.mrb[0].mxu0
      %v1561 = vadd.f32 %v1485, %v1560
      %v1562 = vpop.f32.mrb[0].mxu0
      %v1563 = vadd.f32 %v1485, %v1562
      %v1564 = vpop.f32.mrb[0].mxu0
      %v1565 = vadd.f32 %v1490, %v1564
      %v1566 = vpop.f32.mrb[0].mxu0
      %v1567 = vadd.f32 %v1490, %v1566
      %1568 = vmatprep.mubr.bf16.mxu0 %v1524
      %1569 = vmatmul.mubr.bf16.gmra.mrb[0].mxu0 %v1516
      %v1570 = vpop.f32.mrb[0].mxu0
      %v1571 = vadd.f32 %v1495, %v1570
      %v1572 = vpop.f32.mrb[0].mxu0
      %v1573 = vadd.f32 %v1495, %v1572
      %v1574 = vpop.f32.mrb[0].mxu0
      %v1575 = vadd.f32 %v1500, %v1574
      %v1576 = vpop.f32.mrb[0].mxu0
      %v1577 = vadd.f32 %v1500, %v1576
      %1578 = vdwg.mxu0
      %v1579 = vmax.f32 %v1561, 0.0
      %v1580 = vmax.f32 %v1563, 0.0
      %v1581 = vmax.f32 %v1565, 0.0
      %v1582 = vmax.f32 %v1567, 0.0
      %v1583 = vmax.f32 %v1571, 0.0
      %v1584 = vmax.f32 %v1573, 0.0
      %v1585 = vmax.f32 %v1575, 0.0
      %v1586 = vmax.f32 %v1577, 0.0
      %1587 = vst [vmem:[#allocation7] sm:$0xff] %v1579
      %1588 = vst [vmem:[#allocation7 + $0x8] sm:$0xff] %v1580
      %1589 = vst [vmem:[#allocation7 + $0x10] sm:$0xff] %v1581
      %1590 = vst [vmem:[#allocation7 + $0x18] sm:$0xff] %v1582
      %1591 = vst [vmem:[#allocation7 + $0x20] sm:$0xff] %v1583
      %1592 = vst [vmem:[#allocation7 + $0x28] sm:$0xff] %v1584
      %1593 = vst [vmem:[#allocation7 + $0x30] sm:$0xff] %v1585
      %1594 = vst [vmem:[#allocation7 + $0x38] sm:$0xff] %v1586
      %v1595 = vld [vmem:[#allocation4] sm:$0xff]
      %v1596 = vld [vmem:[#allocation4 + $0x8] sm:$0xff]
      %v1597 = vld [vmem:[#allocation4 + $0x10] sm:$0xff]
      %v1598 = vld [vmem:[#allocation4 + $0x18] sm:$0xff]
      %v1599 = vld [vmem:[#allocation4 + $0x20] sm:$0xff]
      %v1600 = vld [vmem:[#allocation4 + $0x28] sm:$0xff]
      %v1601 = vld [vmem:[#allocation4 + $0x30] sm:$0xff]
      %v1602 = vld [vmem:[#allocation4 + $0x38] sm:$0xff]
      %v1603 = vld [vmem:[#allocation4 + $0x40] sm:$0xff]
      %v1604 = vld [vmem:[#allocation4 + $0x48] sm:$0xff]
      %v1605 = vld [vmem:[#allocation4 + $0x50] sm:$0xff]
      %v1606 = vld [vmem:[#allocation4 + $0x58] sm:$0xff]
      %v1607 = vld [vmem:[#allocation4 + $0x60] sm:$0xff]
      %v1608 = vld [vmem:[#allocation4 + $0x68] sm:$0xff]
      %v1609 = vld [vmem:[#allocation4 + $0x70] sm:$0xff]
      %v1610 = vld [vmem:[#allocation4 + $0x78] sm:$0xff]
      %1611 = vrot.lane.b32.xlu0 %v1595, 17
      %v1612 = vpop.permute.xlu0 %1611
      %1613 = vrot.lane.b32.xlu0 %v1597, 17
      %v1614 = vpop.permute.xlu0 %1613
      %1615 = vrot.lane.b32.xlu0 %v1599, 17
      %v1616 = vpop.permute.xlu0 %1615
      %1617 = vrot.lane.b32.xlu0 %v1601, 17
      %v1618 = vpop.permute.xlu0 %1617
      %1619 = vrot.lane.b32.xlu0 %v1603, 17
      %v1620 = vpop.permute.xlu0 %1619
      %1621 = vrot.lane.b32.xlu0 %v1605, 17
      %v1622 = vpop.permute.xlu0 %1621
      %1623 = vrot.lane.b32.xlu0 %v1607, 17
      %v1624 = vpop.permute.xlu0 %1623
      %1625 = vrot.lane.b32.xlu0 %v1609, 17
      %v1626 = vpop.permute.xlu0 %1625
      %1627 = vrot.lane.b32.xlu0 %v1596, 17
      %v1628 = vpop.permute.xlu0 %1627
      %1629 = vrot.lane.b32.xlu0 %v1598, 17
      %v1630 = vpop.permute.xlu0 %1629
      %1631 = vrot.lane.b32.xlu0 %v1600, 17
      %v1632 = vpop.permute.xlu0 %1631
      %1633 = vrot.lane.b32.xlu0 %v1602, 17
      %v1634 = vpop.permute.xlu0 %1633
      %1635 = vrot.lane.b32.xlu0 %v1604, 17
      %v1636 = vpop.permute.xlu0 %1635
      %1637 = vrot.lane.b32.xlu0 %v1606, 17
      %v1638 = vpop.permute.xlu0 %1637
      %1639 = vrot.lane.b32.xlu0 %v1608, 17
      %v1640 = vpop.permute.xlu0 %1639
      %1641 = vrot.lane.b32.xlu0 %v1610, 17
      %v1642 = vpop.permute.xlu0 %1641
      %v1643 = vsel %vm961, %v1612, %v1628
      %v1644 = vsel %vm961, %v1614, %v1630
      %v1645 = vsel %vm961, %v1616, %v1632
      %v1646 = vsel %vm961, %v1618, %v1634
      %v1647 = vsel %vm961, %v1620, %v1636
      %v1648 = vsel %vm961, %v1622, %v1638
      %v1649 = vsel %vm961, %v1624, %v1640
      %v1650 = vsel %vm961, %v1626, %v1642
      %v1651 = vsel %vm961, %v1628, %v1612
      %v1652 = vsel %vm961, %v1630, %v1614
      %v1653 = vsel %vm961, %v1632, %v1616
      %v1654 = vsel %vm961, %v1634, %v1618
      %v1655 = vsel %vm961, %v1636, %v1620
      %v1656 = vsel %vm961, %v1638, %v1622
      %v1657 = vsel %vm961, %v1640, %v1624
      %v1658 = vsel %vm961, %v1642, %v1626
      %v1659 = vld [vmem:[%s3] sm:$0x3]
      %v1661 = vlaneseq
      %v1662 = vshrl.u32 %v1661, 7
      %v1663 = vsub.s32 0, %v1662
      %v1664 = vrot.slane %v1659, %v1663
      %v1665 = vlaneseq
      %v1666 = vshrl.u32 %v1665, 7
      %v1667 = vsub.s32 1, %v1666
      %v1668 = vrot.slane %v1659, %v1667
      %v1671 = vmul.f32 %v1651, %v1664
      %v1672 = vmul.f32 %v1643, %v1668
      %v1673 = vmul.f32 %v1652, %v1664
      %v1674 = vmul.f32 %v1644, %v1668
      %v1675 = vmul.f32 %v1653, %v1664
      %v1676 = vmul.f32 %v1645, %v1668
      %v1677 = vmul.f32 %v1654, %v1664
      %v1678 = vmul.f32 %v1646, %v1668
      %v1679 = vmul.f32 %v1655, %v1664
      %v1680 = vmul.f32 %v1647, %v1668
      %v1681 = vmul.f32 %v1656, %v1664
      %v1682 = vmul.f32 %v1648, %v1668
      %v1683 = vmul.f32 %v1657, %v1664
      %v1684 = vmul.f32 %v1649, %v1668
      %v1685 = vmul.f32 %v1658, %v1664
      %v1686 = vmul.f32 %v1650, %v1668
      %v1687 = vpack.c.bf16 %v1673, %v1671
      %v1688 = vpack.c.bf16 %v1674, %v1672
      %v1689 = vpack.c.bf16 %v1677, %v1675
      %v1690 = vpack.c.bf16 %v1678, %v1676
      %v1691 = vpack.c.bf16 %v1681, %v1679
      %v1692 = vpack.c.bf16 %v1682, %v1680
      %v1693 = vpack.c.bf16 %v1685, %v1683
      %v1694 = vpack.c.bf16 %v1686, %v1684
      %1695 = vst [vmem:[#allocation3] sm:$0xff] %v1687
      %1696 = vst [vmem:[#allocation3 + $0x8] sm:$0xff] %v1688
      %1697 = vst [vmem:[#allocation3 + $0x10] sm:$0xff] %v1689
      %1698 = vst [vmem:[#allocation3 + $0x18] sm:$0xff] %v1690
      %1699 = vst [vmem:[#allocation3 + $0x20] sm:$0xff] %v1691
      %1700 = vst [vmem:[#allocation3 + $0x28] sm:$0xff] %v1692
      %1701 = vst [vmem:[#allocation3 + $0x30] sm:$0xff] %v1693
      %1702 = vst [vmem:[#allocation3 + $0x38] sm:$0xff] %v1694
      %1703 = vrot.lane.b32.xlu0 %v1595, 16
      %v1704 = vpop.permute.xlu0 %1703
      %1705 = vrot.lane.b32.xlu0 %v1597, 16
      %v1706 = vpop.permute.xlu0 %1705
      %1707 = vrot.lane.b32.xlu0 %v1599, 16
      %v1708 = vpop.permute.xlu0 %1707
      %1709 = vrot.lane.b32.xlu0 %v1601, 16
      %v1710 = vpop.permute.xlu0 %1709
      %1711 = vrot.lane.b32.xlu0 %v1603, 16
      %v1712 = vpop.permute.xlu0 %1711
      %1713 = vrot.lane.b32.xlu0 %v1605, 16
      %v1714 = vpop.permute.xlu0 %1713
      %1715 = vrot.lane.b32.xlu0 %v1607, 16
      %v1716 = vpop.permute.xlu0 %1715
      %1717 = vrot.lane.b32.xlu0 %v1609, 16
      %v1718 = vpop.permute.xlu0 %1717
      %1719 = vrot.lane.b32.xlu0 %v1596, 16
      %v1720 = vpop.permute.xlu0 %1719
      %1721 = vrot.lane.b32.xlu0 %v1598, 16
      %v1722 = vpop.permute.xlu0 %1721
      %1723 = vrot.lane.b32.xlu0 %v1600, 16
      %v1724 = vpop.permute.xlu0 %1723
      %1725 = vrot.lane.b32.xlu0 %v1602, 16
      %v1726 = vpop.permute.xlu0 %1725
      %1727 = vrot.lane.b32.xlu0 %v1604, 16
      %v1728 = vpop.permute.xlu0 %1727
      %1729 = vrot.lane.b32.xlu0 %v1606, 16
      %v1730 = vpop.permute.xlu0 %1729
      %1731 = vrot.lane.b32.xlu0 %v1608, 16
      %v1732 = vpop.permute.xlu0 %1731
      %1733 = vrot.lane.b32.xlu0 %v1610, 16
      %v1734 = vpop.permute.xlu0 %1733
      %v1735 = vsel %vm994, %v1704, %v1720
      %v1736 = vsel %vm994, %v1706, %v1722
      %v1737 = vsel %vm994, %v1708, %v1724
      %v1738 = vsel %vm994, %v1710, %v1726
      %v1739 = vsel %vm994, %v1712, %v1728
      %v1740 = vsel %vm994, %v1714, %v1730
      %v1741 = vsel %vm994, %v1716, %v1732
      %v1742 = vsel %vm994, %v1718, %v1734
      %v1743 = vsel %vm994, %v1720, %v1704
      %v1744 = vsel %vm994, %v1722, %v1706
      %v1745 = vsel %vm994, %v1724, %v1708
      %v1746 = vsel %vm994, %v1726, %v1710
      %v1747 = vsel %vm994, %v1728, %v1712
      %v1748 = vsel %vm994, %v1730, %v1714
      %v1749 = vsel %vm994, %v1732, %v1716
      %v1750 = vsel %vm994, %v1734, %v1718
      %v1751 = vld [vmem:[%s999] sm:$0x3]
      %v1753 = vlaneseq
      %v1754 = vshrl.u32 %v1753, 7
      %v1755 = vsub.s32 0, %v1754
      %v1756 = vrot.slane %v1751, %v1755
      %v1757 = vlaneseq
      %v1758 = vshrl.u32 %v1757, 7
      %v1759 = vsub.s32 1, %v1758
      %v1760 = vrot.slane %v1751, %v1759
      %v1763 = vmul.f32 %v1743, %v1756
      %v1764 = vmul.f32 %v1735, %v1760
      %v1765 = vmul.f32 %v1744, %v1756
      %v1766 = vmul.f32 %v1736, %v1760
      %v1767 = vmul.f32 %v1745, %v1756
      %v1768 = vmul.f32 %v1737, %v1760
      %v1769 = vmul.f32 %v1746, %v1756
      %v1770 = vmul.f32 %v1738, %v1760
      %v1771 = vmul.f32 %v1747, %v1756
      %v1772 = vmul.f32 %v1739, %v1760
      %v1773 = vmul.f32 %v1748, %v1756
      %v1774 = vmul.f32 %v1740, %v1760
      %v1775 = vmul.f32 %v1749, %v1756
      %v1776 = vmul.f32 %v1741, %v1760
      %v1777 = vmul.f32 %v1750, %v1756
      %v1778 = vmul.f32 %v1742, %v1760
      %v1779 = vpack.c.bf16 %v1765, %v1763
      %v1780 = vpack.c.bf16 %v1766, %v1764
      %v1781 = vpack.c.bf16 %v1769, %v1767
      %v1782 = vpack.c.bf16 %v1770, %v1768
      %v1783 = vpack.c.bf16 %v1773, %v1771
      %v1784 = vpack.c.bf16 %v1774, %v1772
      %v1785 = vpack.c.bf16 %v1777, %v1775
      %v1786 = vpack.c.bf16 %v1778, %v1776
      %1787 = vst [vmem:[#allocation3 + $0x40] sm:$0xff] %v1779
      %1788 = vst [vmem:[#allocation3 + $0x48] sm:$0xff] %v1780
      %1789 = vst [vmem:[#allocation3 + $0x50] sm:$0xff] %v1781
      %1790 = vst [vmem:[#allocation3 + $0x58] sm:$0xff] %v1782
      %1791 = vst [vmem:[#allocation3 + $0x60] sm:$0xff] %v1783
      %1792 = vst [vmem:[#allocation3 + $0x68] sm:$0xff] %v1784
      %1793 = vst [vmem:[#allocation3 + $0x70] sm:$0xff] %v1785
      %1794 = vst [vmem:[#allocation3 + $0x78] sm:$0xff] %v1786
      %1795 = vrot.lane.b32.xlu0 %v1595, 15
      %v1796 = vpop.permute.xlu0 %1795
      %1797 = vrot.lane.b32.xlu0 %v1597, 15
      %v1798 = vpop.permute.xlu0 %1797
      %1799 = vrot.lane.b32.xlu0 %v1599, 15
      %v1800 = vpop.permute.xlu0 %1799
      %1801 = vrot.lane.b32.xlu0 %v1601, 15
      %v1802 = vpop.permute.xlu0 %1801
      %1803 = vrot.lane.b32.xlu0 %v1603, 15
      %v1804 = vpop.permute.xlu0 %1803
      %1805 = vrot.lane.b32.xlu0 %v1605, 15
      %v1806 = vpop.permute.xlu0 %1805
      %1807 = vrot.lane.b32.xlu0 %v1607, 15
      %v1808 = vpop.permute.xlu0 %1807
      %1809 = vrot.lane.b32.xlu0 %v1609, 15
      %v1810 = vpop.permute.xlu0 %1809
      %1811 = vrot.lane.b32.xlu0 %v1596, 15
      %v1812 = vpop.permute.xlu0 %1811
      %1813 = vrot.lane.b32.xlu0 %v1598, 15
      %v1814 = vpop.permute.xlu0 %1813
      %1815 = vrot.lane.b32.xlu0 %v1600, 15
      %v1816 = vpop.permute.xlu0 %1815
      %1817 = vrot.lane.b32.xlu0 %v1602, 15
      %v1818 = vpop.permute.xlu0 %1817
      %1819 = vrot.lane.b32.xlu0 %v1604, 15
      %v1820 = vpop.permute.xlu0 %1819
      %1821 = vrot.lane.b32.xlu0 %v1606, 15
      %v1822 = vpop.permute.xlu0 %1821
      %1823 = vrot.lane.b32.xlu0 %v1608, 15
      %v1824 = vpop.permute.xlu0 %1823
      %1825 = vrot.lane.b32.xlu0 %v1610, 15
      %v1826 = vpop.permute.xlu0 %1825
      %v1827 = vsel %vm1028, %v1796, %v1812
      %v1828 = vsel %vm1028, %v1798, %v1814
      %v1829 = vsel %vm1028, %v1800, %v1816
      %v1830 = vsel %vm1028, %v1802, %v1818
      %v1831 = vsel %vm1028, %v1804, %v1820
      %v1832 = vsel %vm1028, %v1806, %v1822
      %v1833 = vsel %vm1028, %v1808, %v1824
      %v1834 = vsel %vm1028, %v1810, %v1826
      %v1835 = vsel %vm1028, %v1812, %v1796
      %v1836 = vsel %vm1028, %v1814, %v1798
      %v1837 = vsel %vm1028, %v1816, %v1800
      %v1838 = vsel %vm1028, %v1818, %v1802
      %v1839 = vsel %vm1028, %v1820, %v1804
      %v1840 = vsel %vm1028, %v1822, %v1806
      %v1841 = vsel %vm1028, %v1824, %v1808
      %v1842 = vsel %vm1028, %v1826, %v1810
      %v1843 = vld [vmem:[%s1033] sm:$0x3]
      %v1845 = vlaneseq
      %v1846 = vshrl.u32 %v1845, 7
      %v1847 = vsub.s32 0, %v1846
      %v1848 = vrot.slane %v1843, %v1847
      %v1849 = vlaneseq
      %v1850 = vshrl.u32 %v1849, 7
      %v1851 = vsub.s32 1, %v1850
      %v1852 = vrot.slane %v1843, %v1851
      %v1855 = vmul.f32 %v1835, %v1848
      %v1856 = vmul.f32 %v1827, %v1852
      %v1857 = vmul.f32 %v1836, %v1848
      %v1858 = vmul.f32 %v1828, %v1852
      %v1859 = vmul.f32 %v1837, %v1848
      %v1860 = vmul.f32 %v1829, %v1852
      %v1861 = vmul.f32 %v1838, %v1848
      %v1862 = vmul.f32 %v1830, %v1852
      %v1863 = vmul.f32 %v1839, %v1848
      %v1864 = vmul.f32 %v1831, %v1852
      %v1865 = vmul.f32 %v1840, %v1848
      %v1866 = vmul.f32 %v1832, %v1852
      %v1867 = vmul.f32 %v1841, %v1848
      %v1868 = vmul.f32 %v1833, %v1852
      %v1869 = vmul.f32 %v1842, %v1848
      %v1870 = vmul.f32 %v1834, %v1852
      %v1871 = vpack.c.bf16 %v1857, %v1855
      %v1872 = vpack.c.bf16 %v1858, %v1856
      %v1873 = vpack.c.bf16 %v1861, %v1859
      %v1874 = vpack.c.bf16 %v1862, %v1860
      %v1875 = vpack.c.bf16 %v1865, %v1863
      %v1876 = vpack.c.bf16 %v1866, %v1864
      %v1877 = vpack.c.bf16 %v1869, %v1867
      %v1878 = vpack.c.bf16 %v1870, %v1868
      %1879 = vst [vmem:[#allocation3 + $0x80] sm:$0xff] %v1871
      %1880 = vst [vmem:[#allocation3 + $0x88] sm:$0xff] %v1872
      %1881 = vst [vmem:[#allocation3 + $0x90] sm:$0xff] %v1873
      %1882 = vst [vmem:[#allocation3 + $0x98] sm:$0xff] %v1874
      %1883 = vst [vmem:[#allocation3 + $0xa0] sm:$0xff] %v1875
      %1884 = vst [vmem:[#allocation3 + $0xa8] sm:$0xff] %v1876
      %1885 = vst [vmem:[#allocation3 + $0xb0] sm:$0xff] %v1877
      %1886 = vst [vmem:[#allocation3 + $0xb8] sm:$0xff] %v1878
      %1887 = vrot.lane.b32.xlu0 %v1595, 1
      %v1888 = vpop.permute.xlu0 %1887
      %1889 = vrot.lane.b32.xlu0 %v1597, 1
      %v1890 = vpop.permute.xlu0 %1889
      %1891 = vrot.lane.b32.xlu0 %v1599, 1
      %v1892 = vpop.permute.xlu0 %1891
      %1893 = vrot.lane.b32.xlu0 %v1601, 1
      %v1894 = vpop.permute.xlu0 %1893
      %1895 = vrot.lane.b32.xlu0 %v1603, 1
      %v1896 = vpop.permute.xlu0 %1895
      %1897 = vrot.lane.b32.xlu0 %v1605, 1
      %v1898 = vpop.permute.xlu0 %1897
      %1899 = vrot.lane.b32.xlu0 %v1607, 1
      %v1900 = vpop.permute.xlu0 %1899
      %1901 = vrot.lane.b32.xlu0 %v1609, 1
      %v1902 = vpop.permute.xlu0 %1901
      %1903 = vrot.lane.b32.xlu0 %v1596, 1
      %v1904 = vpop.permute.xlu0 %1903
      %1905 = vrot.lane.b32.xlu0 %v1598, 1
      %v1906 = vpop.permute.xlu0 %1905
      %1907 = vrot.lane.b32.xlu0 %v1600, 1
      %v1908 = vpop.permute.xlu0 %1907
      %1909 = vrot.lane.b32.xlu0 %v1602, 1
      %v1910 = vpop.permute.xlu0 %1909
      %1911 = vrot.lane.b32.xlu0 %v1604, 1
      %v1912 = vpop.permute.xlu0 %1911
      %1913 = vrot.lane.b32.xlu0 %v1606, 1
      %v1914 = vpop.permute.xlu0 %1913
      %1915 = vrot.lane.b32.xlu0 %v1608, 1
      %v1916 = vpop.permute.xlu0 %1915
      %1917 = vrot.lane.b32.xlu0 %v1610, 1
      %v1918 = vpop.permute.xlu0 %1917
      %v1919 = vsel %vm1062, %v1888, %v1904
      %v1920 = vsel %vm1062, %v1890, %v1906
      %v1921 = vsel %vm1062, %v1892, %v1908
      %v1922 = vsel %vm1062, %v1894, %v1910
      %v1923 = vsel %vm1062, %v1896, %v1912
      %v1924 = vsel %vm1062, %v1898, %v1914
      %v1925 = vsel %vm1062, %v1900, %v1916
      %v1926 = vsel %vm1062, %v1902, %v1918
      %v1927 = vsel %vm1062, %v1904, %v1888
      %v1928 = vsel %vm1062, %v1906, %v1890
      %v1929 = vsel %vm1062, %v1908, %v1892
      %v1930 = vsel %vm1062, %v1910, %v1894
      %v1931 = vsel %vm1062, %v1912, %v1896
      %v1932 = vsel %vm1062, %v1914, %v1898
      %v1933 = vsel %vm1062, %v1916, %v1900
      %v1934 = vsel %vm1062, %v1918, %v1902
      %v1935 = vld [vmem:[%s1067] sm:$0x3]
      %v1937 = vlaneseq
      %v1938 = vshrl.u32 %v1937, 7
      %v1939 = vsub.s32 0, %v1938
      %v1940 = vrot.slane %v1935, %v1939
      %v1941 = vlaneseq
      %v1942 = vshrl.u32 %v1941, 7
      %v1943 = vsub.s32 1, %v1942
      %v1944 = vrot.slane %v1935, %v1943
      %v1947 = vmul.f32 %v1927, %v1940
      %v1948 = vmul.f32 %v1919, %v1944
      %v1949 = vmul.f32 %v1928, %v1940
      %v1950 = vmul.f32 %v1920, %v1944
      %v1951 = vmul.f32 %v1929, %v1940
      %v1952 = vmul.f32 %v1921, %v1944
      %v1953 = vmul.f32 %v1930, %v1940
      %v1954 = vmul.f32 %v1922, %v1944
      %v1955 = vmul.f32 %v1931, %v1940
      %v1956 = vmul.f32 %v1923, %v1944
      %v1957 = vmul.f32 %v1932, %v1940
      %v1958 = vmul.f32 %v1924, %v1944
      %v1959 = vmul.f32 %v1933, %v1940
      %v1960 = vmul.f32 %v1925, %v1944
      %v1961 = vmul.f32 %v1934, %v1940
      %v1962 = vmul.f32 %v1926, %v1944
      %v1963 = vpack.c.bf16 %v1949, %v1947
      %v1964 = vpack.c.bf16 %v1950, %v1948
      %v1965 = vpack.c.bf16 %v1953, %v1951
      %v1966 = vpack.c.bf16 %v1954, %v1952
      %v1967 = vpack.c.bf16 %v1957, %v1955
      %v1968 = vpack.c.bf16 %v1958, %v1956
      %v1969 = vpack.c.bf16 %v1961, %v1959
      %v1970 = vpack.c.bf16 %v1962, %v1960
      %1971 = vst [vmem:[#allocation3 + $0xc0] sm:$0xff] %v1963
      %1972 = vst [vmem:[#allocation3 + $0xc8] sm:$0xff] %v1964
      %1973 = vst [vmem:[#allocation3 + $0xd0] sm:$0xff] %v1965
      %1974 = vst [vmem:[#allocation3 + $0xd8] sm:$0xff] %v1966
      %1975 = vst [vmem:[#allocation3 + $0xe0] sm:$0xff] %v1967
      %1976 = vst [vmem:[#allocation3 + $0xe8] sm:$0xff] %v1968
      %1977 = vst [vmem:[#allocation3 + $0xf0] sm:$0xff] %v1969
      %1978 = vst [vmem:[#allocation3 + $0xf8] sm:$0xff] %v1970
      %v1979 = vpack.c.bf16 %v1597, %v1595
      %v1980 = vpack.c.bf16 %v1598, %v1596
      %v1981 = vpack.c.bf16 %v1601, %v1599
      %v1982 = vpack.c.bf16 %v1602, %v1600
      %v1983 = vpack.c.bf16 %v1605, %v1603
      %v1984 = vpack.c.bf16 %v1606, %v1604
      %v1985 = vpack.c.bf16 %v1609, %v1607
      %v1986 = vpack.c.bf16 %v1610, %v1608
      %1987 = vst [vmem:[#allocation3 + $0x100] sm:$0xff] %v1979
      %1988 = vst [vmem:[#allocation3 + $0x108] sm:$0xff] %v1980
      %1989 = vst [vmem:[#allocation3 + $0x110] sm:$0xff] %v1981
      %1990 = vst [vmem:[#allocation3 + $0x118] sm:$0xff] %v1982
      %1991 = vst [vmem:[#allocation3 + $0x120] sm:$0xff] %v1983
      %1992 = vst [vmem:[#allocation3 + $0x128] sm:$0xff] %v1984
      %1993 = vst [vmem:[#allocation3 + $0x130] sm:$0xff] %v1985
      %1994 = vst [vmem:[#allocation3 + $0x138] sm:$0xff] %v1986
      %1995 = vrot.lane.b32.xlu0 %v1595, 127
      %v1996 = vpop.permute.xlu0 %1995
      %1997 = vrot.lane.b32.xlu0 %v1597, 127
      %v1998 = vpop.permute.xlu0 %1997
      %1999 = vrot.lane.b32.xlu0 %v1599, 127
      %v2000 = vpop.permute.xlu0 %1999
      %2001 = vrot.lane.b32.xlu0 %v1601, 127
      %v2002 = vpop.permute.xlu0 %2001
      %2003 = vrot.lane.b32.xlu0 %v1603, 127
      %v2004 = vpop.permute.xlu0 %2003
      %2005 = vrot.lane.b32.xlu0 %v1605, 127
      %v2006 = vpop.permute.xlu0 %2005
      %2007 = vrot.lane.b32.xlu0 %v1607, 127
      %v2008 = vpop.permute.xlu0 %2007
      %2009 = vrot.lane.b32.xlu0 %v1609, 127
      %v2010 = vpop.permute.xlu0 %2009
      %2011 = vrot.lane.b32.xlu0 %v1596, 127
      %v2012 = vpop.permute.xlu0 %2011
      %2013 = vrot.lane.b32.xlu0 %v1598, 127
      %v2014 = vpop.permute.xlu0 %2013
      %2015 = vrot.lane.b32.xlu0 %v1600, 127
      %v2016 = vpop.permute.xlu0 %2015
      %2017 = vrot.lane.b32.xlu0 %v1602, 127
      %v2018 = vpop.permute.xlu0 %2017
      %2019 = vrot.lane.b32.xlu0 %v1604, 127
      %v2020 = vpop.permute.xlu0 %2019
      %2021 = vrot.lane.b32.xlu0 %v1606, 127
      %v2022 = vpop.permute.xlu0 %2021
      %2023 = vrot.lane.b32.xlu0 %v1608, 127
      %v2024 = vpop.permute.xlu0 %2023
      %2025 = vrot.lane.b32.xlu0 %v1610, 127
      %v2026 = vpop.permute.xlu0 %2025
      %v2027 = vsel %vm1100, %v1996, %v2012
      %v2028 = vsel %vm1100, %v1998, %v2014
      %v2029 = vsel %vm1100, %v2000, %v2016
      %v2030 = vsel %vm1100, %v2002, %v2018
      %v2031 = vsel %vm1100, %v2004, %v2020
      %v2032 = vsel %vm1100, %v2006, %v2022
      %v2033 = vsel %vm1100, %v2008, %v2024
      %v2034 = vsel %vm1100, %v2010, %v2026
      %v2035 = vsel %vm1100, %v2012, %v1996
      %v2036 = vsel %vm1100, %v2014, %v1998
      %v2037 = vsel %vm1100, %v2016, %v2000
      %v2038 = vsel %vm1100, %v2018, %v2002
      %v2039 = vsel %vm1100, %v2020, %v2004
      %v2040 = vsel %vm1100, %v2022, %v2006
      %v2041 = vsel %vm1100, %v2024, %v2008
      %v2042 = vsel %vm1100, %v2026, %v2010
      %v2043 = vld [vmem:[%s1105] sm:$0x3]
      %v2045 = vlaneseq
      %v2046 = vshrl.u32 %v2045, 7
      %v2047 = vsub.s32 0, %v2046
      %v2048 = vrot.slane %v2043, %v2047
      %v2049 = vlaneseq
      %v2050 = vshrl.u32 %v2049, 7
      %v2051 = vsub.s32 1, %v2050
      %v2052 = vrot.slane %v2043, %v2051
      %v2055 = vmul.f32 %v2027, %v2048
      %v2056 = vmul.f32 %v2035, %v2052
      %v2057 = vmul.f32 %v2028, %v2048
      %v2058 = vmul.f32 %v2036, %v2052
      %v2059 = vmul.f32 %v2029, %v2048
      %v2060 = vmul.f32 %v2037, %v2052
      %v2061 = vmul.f32 %v2030, %v2048
      %v2062 = vmul.f32 %v2038, %v2052
      %v2063 = vmul.f32 %v2031, %v2048
      %v2064 = vmul.f32 %v2039, %v2052
      %v2065 = vmul.f32 %v2032, %v2048
      %v2066 = vmul.f32 %v2040, %v2052
      %v2067 = vmul.f32 %v2033, %v2048
      %v2068 = vmul.f32 %v2041, %v2052
      %v2069 = vmul.f32 %v2034, %v2048
      %v2070 = vmul.f32 %v2042, %v2052
      %v2071 = vpack.c.bf16 %v2057, %v2055
      %v2072 = vpack.c.bf16 %v2058, %v2056
      %v2073 = vpack.c.bf16 %v2061, %v2059
      %v2074 = vpack.c.bf16 %v2062, %v2060
      %v2075 = vpack.c.bf16 %v2065, %v2063
      %v2076 = vpack.c.bf16 %v2066, %v2064
      %v2077 = vpack.c.bf16 %v2069, %v2067
      %v2078 = vpack.c.bf16 %v2070, %v2068
      %2079 = vst [vmem:[#allocation3 + $0x140] sm:$0xff] %v2071
      %2080 = vst [vmem:[#allocation3 + $0x148] sm:$0xff] %v2072
      %2081 = vst [vmem:[#allocation3 + $0x150] sm:$0xff] %v2073
      %2082 = vst [vmem:[#allocation3 + $0x158] sm:$0xff] %v2074
      %2083 = vst [vmem:[#allocation3 + $0x160] sm:$0xff] %v2075
      %2084 = vst [vmem:[#allocation3 + $0x168] sm:$0xff] %v2076
      %2085 = vst [vmem:[#allocation3 + $0x170] sm:$0xff] %v2077
      %2086 = vst [vmem:[#allocation3 + $0x178] sm:$0xff] %v2078
      %2087 = vrot.lane.b32.xlu0 %v1595, 113
      %v2088 = vpop.permute.xlu0 %2087
      %2089 = vrot.lane.b32.xlu0 %v1597, 113
      %v2090 = vpop.permute.xlu0 %2089
      %2091 = vrot.lane.b32.xlu0 %v1599, 113
      %v2092 = vpop.permute.xlu0 %2091
      %2093 = vrot.lane.b32.xlu0 %v1601, 113
      %v2094 = vpop.permute.xlu0 %2093
      %2095 = vrot.lane.b32.xlu0 %v1603, 113
      %v2096 = vpop.permute.xlu0 %2095
      %2097 = vrot.lane.b32.xlu0 %v1605, 113
      %v2098 = vpop.permute.xlu0 %2097
      %2099 = vrot.lane.b32.xlu0 %v1607, 113
      %v2100 = vpop.permute.xlu0 %2099
      %2101 = vrot.lane.b32.xlu0 %v1609, 113
      %v2102 = vpop.permute.xlu0 %2101
      %2103 = vrot.lane.b32.xlu0 %v1596, 113
      %v2104 = vpop.permute.xlu0 %2103
      %2105 = vrot.lane.b32.xlu0 %v1598, 113
      %v2106 = vpop.permute.xlu0 %2105
      %2107 = vrot.lane.b32.xlu0 %v1600, 113
      %v2108 = vpop.permute.xlu0 %2107
      %2109 = vrot.lane.b32.xlu0 %v1602, 113
      %v2110 = vpop.permute.xlu0 %2109
      %2111 = vrot.lane.b32.xlu0 %v1604, 113
      %v2112 = vpop.permute.xlu0 %2111
      %2113 = vrot.lane.b32.xlu0 %v1606, 113
      %v2114 = vpop.permute.xlu0 %2113
      %2115 = vrot.lane.b32.xlu0 %v1608, 113
      %v2116 = vpop.permute.xlu0 %2115
      %2117 = vrot.lane.b32.xlu0 %v1610, 113
      %v2118 = vpop.permute.xlu0 %2117
      %v2119 = vsel %vm1134, %v2088, %v2104
      %v2120 = vsel %vm1134, %v2090, %v2106
      %v2121 = vsel %vm1134, %v2092, %v2108
      %v2122 = vsel %vm1134, %v2094, %v2110
      %v2123 = vsel %vm1134, %v2096, %v2112
      %v2124 = vsel %vm1134, %v2098, %v2114
      %v2125 = vsel %vm1134, %v2100, %v2116
      %v2126 = vsel %vm1134, %v2102, %v2118
      %v2127 = vsel %vm1134, %v2104, %v2088
      %v2128 = vsel %vm1134, %v2106, %v2090
      %v2129 = vsel %vm1134, %v2108, %v2092
      %v2130 = vsel %vm1134, %v2110, %v2094
      %v2131 = vsel %vm1134, %v2112, %v2096
      %v2132 = vsel %vm1134, %v2114, %v2098
      %v2133 = vsel %vm1134, %v2116, %v2100
      %v2134 = vsel %vm1134, %v2118, %v2102
      %v2135 = vld [vmem:[%s1139] sm:$0x3]
      %v2137 = vlaneseq
      %v2138 = vshrl.u32 %v2137, 7
      %v2139 = vsub.s32 0, %v2138
      %v2140 = vrot.slane %v2135, %v2139
      %v2141 = vlaneseq
      %v2142 = vshrl.u32 %v2141, 7
      %v2143 = vsub.s32 1, %v2142
      %v2144 = vrot.slane %v2135, %v2143
      %v2147 = vmul.f32 %v2119, %v2140
      %v2148 = vmul.f32 %v2127, %v2144
      %v2149 = vmul.f32 %v2120, %v2140
      %v2150 = vmul.f32 %v2128, %v2144
      %v2151 = vmul.f32 %v2121, %v2140
      %v2152 = vmul.f32 %v2129, %v2144
      %v2153 = vmul.f32 %v2122, %v2140
      %v2154 = vmul.f32 %v2130, %v2144
      %v2155 = vmul.f32 %v2123, %v2140
      %v2156 = vmul.f32 %v2131, %v2144
      %v2157 = vmul.f32 %v2124, %v2140
      %v2158 = vmul.f32 %v2132, %v2144
      %v2159 = vmul.f32 %v2125, %v2140
      %v2160 = vmul.f32 %v2133, %v2144
      %v2161 = vmul.f32 %v2126, %v2140
      %v2162 = vmul.f32 %v2134, %v2144
      %v2163 = vpack.c.bf16 %v2149, %v2147
      %v2164 = vpack.c.bf16 %v2150, %v2148
      %v2165 = vpack.c.bf16 %v2153, %v2151
      %v2166 = vpack.c.bf16 %v2154, %v2152
      %v2167 = vpack.c.bf16 %v2157, %v2155
      %v2168 = vpack.c.bf16 %v2158, %v2156
      %v2169 = vpack.c.bf16 %v2161, %v2159
      %v2170 = vpack.c.bf16 %v2162, %v2160
      %2171 = vst [vmem:[#allocation3 + $0x180] sm:$0xff] %v2163
      %2172 = vst [vmem:[#allocation3 + $0x188] sm:$0xff] %v2164
      %2173 = vst [vmem:[#allocation3 + $0x190] sm:$0xff] %v2165
      %2174 = vst [vmem:[#allocation3 + $0x198] sm:$0xff] %v2166
      %2175 = vst [vmem:[#allocation3 + $0x1a0] sm:$0xff] %v2167
      %2176 = vst [vmem:[#allocation3 + $0x1a8] sm:$0xff] %v2168
      %2177 = vst [vmem:[#allocation3 + $0x1b0] sm:$0xff] %v2169
      %2178 = vst [vmem:[#allocation3 + $0x1b8] sm:$0xff] %v2170
      %2179 = vrot.lane.b32.xlu0 %v1595, 112
      %v2180 = vpop.permute.xlu0 %2179
      %2181 = vrot.lane.b32.xlu0 %v1597, 112
      %v2182 = vpop.permute.xlu0 %2181
      %2183 = vrot.lane.b32.xlu0 %v1599, 112
      %v2184 = vpop.permute.xlu0 %2183
      %2185 = vrot.lane.b32.xlu0 %v1601, 112
      %v2186 = vpop.permute.xlu0 %2185
      %2187 = vrot.lane.b32.xlu0 %v1603, 112
      %v2188 = vpop.permute.xlu0 %2187
      %2189 = vrot.lane.b32.xlu0 %v1605, 112
      %v2190 = vpop.permute.xlu0 %2189
      %2191 = vrot.lane.b32.xlu0 %v1607, 112
      %v2192 = vpop.permute.xlu0 %2191
      %2193 = vrot.lane.b32.xlu0 %v1609, 112
      %v2194 = vpop.permute.xlu0 %2193
      %2195 = vrot.lane.b32.xlu0 %v1596, 112
      %v2196 = vpop.permute.xlu0 %2195
      %2197 = vrot.lane.b32.xlu0 %v1598, 112
      %v2198 = vpop.permute.xlu0 %2197
      %2199 = vrot.lane.b32.xlu0 %v1600, 112
      %v2200 = vpop.permute.xlu0 %2199
      %2201 = vrot.lane.b32.xlu0 %v1602, 112
      %v2202 = vpop.permute.xlu0 %2201
      %2203 = vrot.lane.b32.xlu0 %v1604, 112
      %v2204 = vpop.permute.xlu0 %2203
      %2205 = vrot.lane.b32.xlu0 %v1606, 112
      %v2206 = vpop.permute.xlu0 %2205
      %2207 = vrot.lane.b32.xlu0 %v1608, 112
      %v2208 = vpop.permute.xlu0 %2207
      %2209 = vrot.lane.b32.xlu0 %v1610, 112
      %v2210 = vpop.permute.xlu0 %2209
      %v2211 = vsel %vm1168, %v2180, %v2196
      %v2212 = vsel %vm1168, %v2182, %v2198
      %v2213 = vsel %vm1168, %v2184, %v2200
      %v2214 = vsel %vm1168, %v2186, %v2202
      %v2215 = vsel %vm1168, %v2188, %v2204
      %v2216 = vsel %vm1168, %v2190, %v2206
      %v2217 = vsel %vm1168, %v2192, %v2208
      %v2218 = vsel %vm1168, %v2194, %v2210
      %v2219 = vsel %vm1168, %v2196, %v2180
      %v2220 = vsel %vm1168, %v2198, %v2182
      %v2221 = vsel %vm1168, %v2200, %v2184
      %v2222 = vsel %vm1168, %v2202, %v2186
      %v2223 = vsel %vm1168, %v2204, %v2188
      %v2224 = vsel %vm1168, %v2206, %v2190
      %v2225 = vsel %vm1168, %v2208, %v2192
      %v2226 = vsel %vm1168, %v2210, %v2194
      %v2227 = vld [vmem:[%s1173] sm:$0x3]
      %v2229 = vlaneseq
      %v2230 = vshrl.u32 %v2229, 7
      %v2231 = vsub.s32 0, %v2230
      %v2232 = vrot.slane %v2227, %v2231
      %v2233 = vlaneseq
      %v2234 = vshrl.u32 %v2233, 7
      %v2235 = vsub.s32 1, %v2234
      %v2236 = vrot.slane %v2227, %v2235
      %v2239 = vmul.f32 %v2211, %v2232
      %v2240 = vmul.f32 %v2219, %v2236
      %v2241 = vmul.f32 %v2212, %v2232
      %v2242 = vmul.f32 %v2220, %v2236
      %v2243 = vmul.f32 %v2213, %v2232
      %v2244 = vmul.f32 %v2221, %v2236
      %v2245 = vmul.f32 %v2214, %v2232
      %v2246 = vmul.f32 %v2222, %v2236
      %v2247 = vmul.f32 %v2215, %v2232
      %v2248 = vmul.f32 %v2223, %v2236
      %v2249 = vmul.f32 %v2216, %v2232
      %v2250 = vmul.f32 %v2224, %v2236
      %v2251 = vmul.f32 %v2217, %v2232
      %v2252 = vmul.f32 %v2225, %v2236
      %v2253 = vmul.f32 %v2218, %v2232
      %v2254 = vmul.f32 %v2226, %v2236
      %v2255 = vpack.c.bf16 %v2241, %v2239
      %v2256 = vpack.c.bf16 %v2242, %v2240
      %v2257 = vpack.c.bf16 %v2245, %v2243
      %v2258 = vpack.c.bf16 %v2246, %v2244
      %v2259 = vpack.c.bf16 %v2249, %v2247
      %v2260 = vpack.c.bf16 %v2250, %v2248
      %v2261 = vpack.c.bf16 %v2253, %v2251
      %v2262 = vpack.c.bf16 %v2254, %v2252
      %2263 = vst [vmem:[#allocation3 + $0x1c0] sm:$0xff] %v2255
      %2264 = vst [vmem:[#allocation3 + $0x1c8] sm:$0xff] %v2256
      %2265 = vst [vmem:[#allocation3 + $0x1d0] sm:$0xff] %v2257
      %2266 = vst [vmem:[#allocation3 + $0x1d8] sm:$0xff] %v2258
      %2267 = vst [vmem:[#allocation3 + $0x1e0] sm:$0xff] %v2259
      %2268 = vst [vmem:[#allocation3 + $0x1e8] sm:$0xff] %v2260
      %2269 = vst [vmem:[#allocation3 + $0x1f0] sm:$0xff] %v2261
      %2270 = vst [vmem:[#allocation3 + $0x1f8] sm:$0xff] %v2262
      %2271 = vrot.lane.b32.xlu0 %v1595, 111
      %v2272 = vpop.permute.xlu0 %2271
      %2273 = vrot.lane.b32.xlu0 %v1597, 111
      %v2274 = vpop.permute.xlu0 %2273
      %2275 = vrot.lane.b32.xlu0 %v1599, 111
      %v2276 = vpop.permute.xlu0 %2275
      %2277 = vrot.lane.b32.xlu0 %v1601, 111
      %v2278 = vpop.permute.xlu0 %2277
      %2279 = vrot.lane.b32.xlu0 %v1603, 111
      %v2280 = vpop.permute.xlu0 %2279
      %2281 = vrot.lane.b32.xlu0 %v1605, 111
      %v2282 = vpop.permute.xlu0 %2281
      %2283 = vrot.lane.b32.xlu0 %v1607, 111
      %v2284 = vpop.permute.xlu0 %2283
      %2285 = vrot.lane.b32.xlu0 %v1609, 111
      %v2286 = vpop.permute.xlu0 %2285
      %2287 = vrot.lane.b32.xlu0 %v1596, 111
      %v2288 = vpop.permute.xlu0 %2287
      %2289 = vrot.lane.b32.xlu0 %v1598, 111
      %v2290 = vpop.permute.xlu0 %2289
      %2291 = vrot.lane.b32.xlu0 %v1600, 111
      %v2292 = vpop.permute.xlu0 %2291
      %2293 = vrot.lane.b32.xlu0 %v1602, 111
      %v2294 = vpop.permute.xlu0 %2293
      %2295 = vrot.lane.b32.xlu0 %v1604, 111
      %v2296 = vpop.permute.xlu0 %2295
      %2297 = vrot.lane.b32.xlu0 %v1606, 111
      %v2298 = vpop.permute.xlu0 %2297
      %2299 = vrot.lane.b32.xlu0 %v1608, 111
      %v2300 = vpop.permute.xlu0 %2299
      %2301 = vrot.lane.b32.xlu0 %v1610, 111
      %v2302 = vpop.permute.xlu0 %2301
      %v2303 = vsel %vm1202, %v2272, %v2288
      %v2304 = vsel %vm1202, %v2274, %v2290
      %v2305 = vsel %vm1202, %v2276, %v2292
      %v2306 = vsel %vm1202, %v2278, %v2294
      %v2307 = vsel %vm1202, %v2280, %v2296
      %v2308 = vsel %vm1202, %v2282, %v2298
      %v2309 = vsel %vm1202, %v2284, %v2300
      %v2310 = vsel %vm1202, %v2286, %v2302
      %v2311 = vsel %vm1202, %v2288, %v2272
      %v2312 = vsel %vm1202, %v2290, %v2274
      %v2313 = vsel %vm1202, %v2292, %v2276
      %v2314 = vsel %vm1202, %v2294, %v2278
      %v2315 = vsel %vm1202, %v2296, %v2280
      %v2316 = vsel %vm1202, %v2298, %v2282
      %v2317 = vsel %vm1202, %v2300, %v2284
      %v2318 = vsel %vm1202, %v2302, %v2286
      %v2319 = vld [vmem:[%s1207] sm:$0x3]
      %v2321 = vlaneseq
      %v2322 = vshrl.u32 %v2321, 7
      %v2323 = vsub.s32 0, %v2322
      %v2324 = vrot.slane %v2319, %v2323
      %v2325 = vlaneseq
      %v2326 = vshrl.u32 %v2325, 7
      %v2327 = vsub.s32 1, %v2326
      %v2328 = vrot.slane %v2319, %v2327
      %v2331 = vmul.f32 %v2303, %v2324
      %v2332 = vmul.f32 %v2311, %v2328
      %v2333 = vmul.f32 %v2304, %v2324
      %v2334 = vmul.f32 %v2312, %v2328
      %v2335 = vmul.f32 %v2305, %v2324
      %v2336 = vmul.f32 %v2313, %v2328
      %v2337 = vmul.f32 %v2306, %v2324
      %v2338 = vmul.f32 %v2314, %v2328
      %v2339 = vmul.f32 %v2307, %v2324
      %v2340 = vmul.f32 %v2315, %v2328
      %v2341 = vmul.f32 %v2308, %v2324
      %v2342 = vmul.f32 %v2316, %v2328
      %v2343 = vmul.f32 %v2309, %v2324
      %v2344 = vmul.f32 %v2317, %v2328
      %v2345 = vmul.f32 %v2310, %v2324
      %v2346 = vmul.f32 %v2318, %v2328
      %v2347 = vpack.c.bf16 %v2333, %v2331
      %v2348 = vpack.c.bf16 %v2334, %v2332
      %v2349 = vpack.c.bf16 %v2337, %v2335
      %v2350 = vpack.c.bf16 %v2338, %v2336
      %v2351 = vpack.c.bf16 %v2341, %v2339
      %v2352 = vpack.c.bf16 %v2342, %v2340
      %v2353 = vpack.c.bf16 %v2345, %v2343
      %v2354 = vpack.c.bf16 %v2346, %v2344
      %2355 = vst [vmem:[#allocation3 + $0x200] sm:$0xff] %v2347
      %2356 = vst [vmem:[#allocation3 + $0x208] sm:$0xff] %v2348
      %2357 = vst [vmem:[#allocation3 + $0x210] sm:$0xff] %v2349
      %2358 = vst [vmem:[#allocation3 + $0x218] sm:$0xff] %v2350
      %2359 = vst [vmem:[#allocation3 + $0x220] sm:$0xff] %v2351
      %2360 = vst [vmem:[#allocation3 + $0x228] sm:$0xff] %v2352
      %2361 = vst [vmem:[#allocation3 + $0x230] sm:$0xff] %v2353
      %2362 = vst [vmem:[#allocation3 + $0x238] sm:$0xff] %v2354
      %v2363 = vld [vmem:[#allocation3] sm:$0xff]
      %v2364 = vld [vmem:[#allocation3 + $0x8] sm:$0xff]
      %v2365 = vld [vmem:[#allocation3 + $0x10] sm:$0xff]
      %v2366 = vld [vmem:[#allocation3 + $0x18] sm:$0xff]
      %v2367 = vld [vmem:[#allocation3 + $0x20] sm:$0xff]
      %v2368 = vld [vmem:[#allocation3 + $0x28] sm:$0xff]
      %v2369 = vld [vmem:[#allocation3 + $0x30] sm:$0xff]
      %v2370 = vld [vmem:[#allocation3 + $0x38] sm:$0xff]
      %v2371 = vld [vmem:[#allocation3 + $0x40] sm:$0xff]
      %v2372 = vld [vmem:[#allocation3 + $0x48] sm:$0xff]
      %v2373 = vld [vmem:[#allocation3 + $0x50] sm:$0xff]
      %v2374 = vld [vmem:[#allocation3 + $0x58] sm:$0xff]
      %v2375 = vld [vmem:[#allocation3 + $0x60] sm:$0xff]
      %v2376 = vld [vmem:[#allocation3 + $0x68] sm:$0xff]
      %v2377 = vld [vmem:[#allocation3 + $0x70] sm:$0xff]
      %v2378 = vld [vmem:[#allocation3 + $0x78] sm:$0xff]
      %v2379 = vld [vmem:[#allocation3 + $0x80] sm:$0xff]
      %v2380 = vld [vmem:[#allocation3 + $0x88] sm:$0xff]
      %v2381 = vld [vmem:[#allocation3 + $0x90] sm:$0xff]
      %v2382 = vld [vmem:[#allocation3 + $0x98] sm:$0xff]
      %v2383 = vld [vmem:[#allocation3 + $0xa0] sm:$0xff]
      %v2384 = vld [vmem:[#allocation3 + $0xa8] sm:$0xff]
      %v2385 = vld [vmem:[#allocation3 + $0xb0] sm:$0xff]
      %v2386 = vld [vmem:[#allocation3 + $0xb8] sm:$0xff]
      %v2387 = vld [vmem:[#allocation3 + $0xc0] sm:$0xff]
      %v2388 = vld [vmem:[#allocation3 + $0xc8] sm:$0xff]
      %v2389 = vld [vmem:[#allocation3 + $0xd0] sm:$0xff]
      %v2390 = vld [vmem:[#allocation3 + $0xd8] sm:$0xff]
      %v2391 = vld [vmem:[#allocation3 + $0xe0] sm:$0xff]
      %v2392 = vld [vmem:[#allocation3 + $0xe8] sm:$0xff]
      %v2393 = vld [vmem:[#allocation3 + $0xf0] sm:$0xff]
      %v2394 = vld [vmem:[#allocation3 + $0xf8] sm:$0xff]
      %v2395 = vld [vmem:[#allocation3 + $0x100] sm:$0xff]
      %v2396 = vld [vmem:[#allocation3 + $0x108] sm:$0xff]
      %v2397 = vld [vmem:[#allocation3 + $0x110] sm:$0xff]
      %v2398 = vld [vmem:[#allocation3 + $0x118] sm:$0xff]
      %v2399 = vld [vmem:[#allocation3 + $0x120] sm:$0xff]
      %v2400 = vld [vmem:[#allocation3 + $0x128] sm:$0xff]
      %v2401 = vld [vmem:[#allocation3 + $0x130] sm:$0xff]
      %v2402 = vld [vmem:[#allocation3 + $0x138] sm:$0xff]
      %v2403 = vld [vmem:[#allocation3 + $0x140] sm:$0xff]
      %v2404 = vld [vmem:[#allocation3 + $0x148] sm:$0xff]
      %v2405 = vld [vmem:[#allocation3 + $0x150] sm:$0xff]
      %v2406 = vld [vmem:[#allocation3 + $0x158] sm:$0xff]
      %v2407 = vld [vmem:[#allocation3 + $0x160] sm:$0xff]
      %v2408 = vld [vmem:[#allocation3 + $0x168] sm:$0xff]
      %v2409 = vld [vmem:[#allocation3 + $0x170] sm:$0xff]
      %v2410 = vld [vmem:[#allocation3 + $0x178] sm:$0xff]
      %v2411 = vld [vmem:[#allocation3 + $0x180] sm:$0xff]
      %v2412 = vld [vmem:[#allocation3 + $0x188] sm:$0xff]
      %v2413 = vld [vmem:[#allocation3 + $0x190] sm:$0xff]
      %v2414 = vld [vmem:[#allocation3 + $0x198] sm:$0xff]
      %v2415 = vld [vmem:[#allocation3 + $0x1a0] sm:$0xff]
      %v2416 = vld [vmem:[#allocation3 + $0x1a8] sm:$0xff]
      %v2417 = vld [vmem:[#allocation3 + $0x1b0] sm:$0xff]
      %v2418 = vld [vmem:[#allocation3 + $0x1b8] sm:$0xff]
      %v2419 = vld [vmem:[#allocation3 + $0x1c0] sm:$0xff]
      %v2420 = vld [vmem:[#allocation3 + $0x1c8] sm:$0xff]
      %v2421 = vld [vmem:[#allocation3 + $0x1d0] sm:$0xff]
      %v2422 = vld [vmem:[#allocation3 + $0x1d8] sm:$0xff]
      %v2423 = vld [vmem:[#allocation3 + $0x1e0] sm:$0xff]
      %v2424 = vld [vmem:[#allocation3 + $0x1e8] sm:$0xff]
      %v2425 = vld [vmem:[#allocation3 + $0x1f0] sm:$0xff]
      %v2426 = vld [vmem:[#allocation3 + $0x1f8] sm:$0xff]
      %v2427 = vld [vmem:[#allocation3 + $0x200] sm:$0xff]
      %v2428 = vld [vmem:[#allocation3 + $0x208] sm:$0xff]
      %v2429 = vld [vmem:[#allocation3 + $0x210] sm:$0xff]
      %v2430 = vld [vmem:[#allocation3 + $0x218] sm:$0xff]
      %v2431 = vld [vmem:[#allocation3 + $0x220] sm:$0xff]
      %v2432 = vld [vmem:[#allocation3 + $0x228] sm:$0xff]
      %v2433 = vld [vmem:[#allocation3 + $0x230] sm:$0xff]
      %v2434 = vld [vmem:[#allocation3 + $0x238] sm:$0xff]
      %v2435 = vld [vmem:[%s6] sm:$0xff]
      %v2436 = vld [vmem:[%s6 + $0x8] sm:$0xff]
      %v2437 = vld [vmem:[%s6 + $0x10] sm:$0xf]
      %v2438 = vld [vmem:[%s6 + $0x14] sm:$0xff]
      %v2439 = vld [vmem:[%s6 + $0x1c] sm:$0xff]
      %v2440 = vld [vmem:[%s6 + $0x24] sm:$0xf]
      %v2441 = vld [vmem:[%s6 + $0x28] sm:$0xff]
      %v2442 = vld [vmem:[%s6 + $0x30] sm:$0xff]
      %v2443 = vld [vmem:[%s6 + $0x38] sm:$0xf]
      %v2444 = vld [vmem:[%s6 + $0x3c] sm:$0xff]
      %v2445 = vld [vmem:[%s6 + $0x44] sm:$0xff]
      %v2446 = vld [vmem:[%s6 + $0x4c] sm:$0xf]
      %v2447 = vld [vmem:[%s6 + $0x50] sm:$0xff]
      %v2448 = vld [vmem:[%s6 + $0x58] sm:$0xff]
      %v2449 = vld [vmem:[%s6 + $0x60] sm:$0xf]
      %v2450 = vld [vmem:[%s6 + $0x64] sm:$0xff]
      %v2451 = vld [vmem:[%s6 + $0x6c] sm:$0xff]
      %v2452 = vld [vmem:[%s6 + $0x74] sm:$0xf]
      %v2453 = vld [vmem:[%s6 + $0x78] sm:$0xff]
      %v2454 = vld [vmem:[%s6 + $0x80] sm:$0xff]
      %v2455 = vld [vmem:[%s6 + $0x88] sm:$0xf]
      %v2456 = vld [vmem:[%s6 + $0x8c] sm:$0xff]
      %v2457 = vld [vmem:[%s6 + $0x94] sm:$0xff]
      %v2458 = vld [vmem:[%s6 + $0x9c] sm:$0xf]
      %v2459 = vld [vmem:[%s6 + $0xa0] sm:$0xff]
      %v2460 = vld [vmem:[%s6 + $0xa8] sm:$0xff]
      %v2461 = vld [vmem:[%s6 + $0xb0] sm:$0xf]
      %v2462 = vld [vmem:[%s6 + $0xb4] sm:$0xff]
      %v2463 = vld [vmem:[%s6 + $0xbc] sm:$0xff]
      %v2464 = vld [vmem:[%s6 + $0xc4] sm:$0xf]
      %v2465 = vld [vmem:[%s6 + $0xc8] sm:$0xff]
      %v2466 = vld [vmem:[%s6 + $0xd0] sm:$0xff]
      %v2467 = vld [vmem:[%s6 + $0xd8] sm:$0xf]
      %v2468 = vld [vmem:[%s6 + $0xdc] sm:$0xff]
      %v2469 = vld [vmem:[%s6 + $0xe4] sm:$0xff]
      %v2470 = vld [vmem:[%s6 + $0xec] sm:$0xf]
      %v2471 = vld [vmem:[%s6 + $0xf0] sm:$0xff]
      %v2472 = vld [vmem:[%s6 + $0xf8] sm:$0xff]
      %v2473 = vld [vmem:[%s6 + $0x100] sm:$0xf]
      %v2474 = vld [vmem:[%s6 + $0x104] sm:$0xff]
      %v2475 = vld [vmem:[%s6 + $0x10c] sm:$0xff]
      %v2476 = vld [vmem:[%s6 + $0x114] sm:$0xf]
      %v2477 = vld [vmem:[%s6 + $0x118] sm:$0xff]
      %v2478 = vld [vmem:[%s6 + $0x120] sm:$0xff]
      %v2479 = vld [vmem:[%s6 + $0x128] sm:$0xf]
      %v2480 = vld [vmem:[%s6 + $0x12c] sm:$0xff]
      %v2481 = vld [vmem:[%s6 + $0x134] sm:$0xff]
      %v2482 = vld [vmem:[%s6 + $0x13c] sm:$0xf]
      %v2483 = vld [vmem:[%s7] sm:$0xff]
      %v2484 = vld [vmem:[%s7 + $0x8] sm:$0xff]
      %v2485 = vld [vmem:[%s7 + $0x10] sm:$0xff]
      %v2486 = vld [vmem:[%s7 + $0x18] sm:$0xff]
      %v2487 = vld [vmem:[%s7 + $0x20] sm:$0xff]
      %v2488 = vld [vmem:[%s7 + $0x28] sm:$0xff]
      %v2489 = vld [vmem:[%s7 + $0x30] sm:$0xff]
      %v2490 = vld [vmem:[%s7 + $0x38] sm:$0xff]
      %v2491 = vld [vmem:[%s7 + $0x40] sm:$0xff]
      %v2492 = vld [vmem:[%s7 + $0x48] sm:$0xff]
      %v2493 = vld [vmem:[%s7 + $0x50] sm:$0xff]
      %v2494 = vld [vmem:[%s7 + $0x58] sm:$0xff]
      %v2495 = vld [vmem:[%s7 + $0x60] sm:$0xff]
      %v2496 = vld [vmem:[%s7 + $0x68] sm:$0xff]
      %v2497 = vld [vmem:[%s7 + $0x70] sm:$0xff]
      %v2498 = vld [vmem:[%s7 + $0x78] sm:$0xff]
      %2500 = vset.pattern.permute.xlu0 0
      %2501 = vperm.xlu0 %2500, %v2483
      %v2502 = vpop.permute.xlu0 %2501
      %2505 = vset.pattern.permute.xlu0 0
      %2506 = vperm.xlu0 %2505, %v2484
      %v2507 = vpop.permute.xlu0 %2506
      %2510 = vset.pattern.permute.xlu0 0
      %2511 = vperm.xlu0 %2510, %v2485
      %v2512 = vpop.permute.xlu0 %2511
      %2515 = vset.pattern.permute.xlu0 0
      %2516 = vperm.xlu0 %2515, %v2486
      %v2517 = vpop.permute.xlu0 %2516
      %2520 = vset.pattern.permute.xlu0 0
      %2521 = vperm.xlu0 %2520, %v2487
      %v2522 = vpop.permute.xlu0 %2521
      %2525 = vset.pattern.permute.xlu0 0
      %2526 = vperm.xlu0 %2525, %v2488
      %v2527 = vpop.permute.xlu0 %2526
      %2530 = vset.pattern.permute.xlu0 0
      %2531 = vperm.xlu0 %2530, %v2489
      %v2532 = vpop.permute.xlu0 %2531
      %2535 = vset.pattern.permute.xlu0 0
      %2536 = vperm.xlu0 %2535, %v2490
      %v2537 = vpop.permute.xlu0 %2536
      %2540 = vset.pattern.permute.xlu0 0
      %2541 = vperm.xlu0 %2540, %v2491
      %v2542 = vpop.permute.xlu0 %2541
      %2545 = vset.pattern.permute.xlu0 0
      %2546 = vperm.xlu0 %2545, %v2492
      %v2547 = vpop.permute.xlu0 %2546
      %2550 = vset.pattern.permute.xlu0 0
      %2551 = vperm.xlu0 %2550, %v2493
      %v2552 = vpop.permute.xlu0 %2551
      %2555 = vset.pattern.permute.xlu0 0
      %2556 = vperm.xlu0 %2555, %v2494
      %v2557 = vpop.permute.xlu0 %2556
      %2560 = vset.pattern.permute.xlu0 0
      %2561 = vperm.xlu0 %2560, %v2495
      %v2562 = vpop.permute.xlu0 %2561
      %2565 = vset.pattern.permute.xlu0 0
      %2566 = vperm.xlu0 %2565, %v2496
      %v2567 = vpop.permute.xlu0 %2566
      %2570 = vset.pattern.permute.xlu0 0
      %2571 = vperm.xlu0 %2570, %v2497
      %v2572 = vpop.permute.xlu0 %2571
      %2575 = vset.pattern.permute.xlu0 0
      %2576 = vperm.xlu0 %2575, %v2498
      %v2577 = vpop.permute.xlu0 %2576
      %v2627 = vunpack.c.l.b16 %v2435
      %v2628 = vunpack.c.h.b16 %v2435
      %v2629 = vunpack.c.l.b16 %v2436
      %v2630 = vunpack.c.h.b16 %v2436
      %v2631 = vunpack.c.l.b16 %v2437
      %v2632 = vunpack.c.l.b16 %v2438
      %v2633 = vunpack.c.h.b16 %v2438
      %v2634 = vunpack.c.l.b16 %v2439
      %v2635 = vunpack.c.h.b16 %v2439
      %v2636 = vunpack.c.l.b16 %v2440
      %v2637 = vunpack.c.l.b16 %v2441
      %v2638 = vunpack.c.h.b16 %v2441
      %v2639 = vunpack.c.l.b16 %v2442
      %v2640 = vunpack.c.h.b16 %v2442
      %v2641 = vunpack.c.l.b16 %v2443
      %v2642 = vunpack.c.l.b16 %v2444
      %v2643 = vunpack.c.h.b16 %v2444
      %v2644 = vunpack.c.l.b16 %v2445
      %v2645 = vunpack.c.h.b16 %v2445
      %v2646 = vunpack.c.l.b16 %v2446
      %v2647 = vunpack.c.l.b16 %v2447
      %v2648 = vunpack.c.h.b16 %v2447
      %v2649 = vunpack.c.l.b16 %v2448
      %v2650 = vunpack.c.h.b16 %v2448
      %v2651 = vunpack.c.l.b16 %v2449
      %v2652 = vunpack.c.l.b16 %v2450
      %v2653 = vunpack.c.h.b16 %v2450
      %v2654 = vunpack.c.l.b16 %v2451
      %v2655 = vunpack.c.h.b16 %v2451
      %v2656 = vunpack.c.l.b16 %v2452
      %v2657 = vunpack.c.l.b16 %v2453
      %v2658 = vunpack.c.h.b16 %v2453
      %v2659 = vunpack.c.l.b16 %v2454
      %v2660 = vunpack.c.h.b16 %v2454
      %v2661 = vunpack.c.l.b16 %v2455
      %v2662 = vunpack.c.l.b16 %v2456
      %v2663 = vunpack.c.h.b16 %v2456
      %v2664 = vunpack.c.l.b16 %v2457
      %v2665 = vunpack.c.h.b16 %v2457
      %v2666 = vunpack.c.l.b16 %v2458
      %v2667 = vunpack.c.l.b16 %v2459
      %v2668 = vunpack.c.h.b16 %v2459
      %v2669 = vunpack.c.l.b16 %v2460
      %v2670 = vunpack.c.h.b16 %v2460
      %v2671 = vunpack.c.l.b16 %v2461
      %v2672 = vunpack.c.l.b16 %v2462
      %v2673 = vunpack.c.h.b16 %v2462
      %v2674 = vunpack.c.l.b16 %v2463
      %v2675 = vunpack.c.h.b16 %v2463
      %v2676 = vunpack.c.l.b16 %v2464
      %v2677 = vunpack.c.l.b16 %v2465
      %v2678 = vunpack.c.h.b16 %v2465
      %v2679 = vunpack.c.l.b16 %v2466
      %v2680 = vunpack.c.h.b16 %v2466
      %v2681 = vunpack.c.l.b16 %v2467
      %v2682 = vunpack.c.l.b16 %v2468
      %v2683 = vunpack.c.h.b16 %v2468
      %v2684 = vunpack.c.l.b16 %v2469
      %v2685 = vunpack.c.h.b16 %v2469
      %v2686 = vunpack.c.l.b16 %v2470
      %v2687 = vunpack.c.l.b16 %v2471
      %v2688 = vunpack.c.h.b16 %v2471
      %v2689 = vunpack.c.l.b16 %v2472
      %v2690 = vunpack.c.h.b16 %v2472
      %v2691 = vunpack.c.l.b16 %v2473
      %v2692 = vunpack.c.l.b16 %v2474
      %v2693 = vunpack.c.h.b16 %v2474
      %v2694 = vunpack.c.l.b16 %v2475
      %v2695 = vunpack.c.h.b16 %v2475
      %v2696 = vunpack.c.l.b16 %v2476
      %v2697 = vunpack.c.l.b16 %v2477
      %v2698 = vunpack.c.h.b16 %v2477
      %v2699 = vunpack.c.l.b16 %v2478
      %v2700 = vunpack.c.h.b16 %v2478
      %v2701 = vunpack.c.l.b16 %v2479
      %v2702 = vunpack.c.l.b16 %v2480
      %v2703 = vunpack.c.h.b16 %v2480
      %v2704 = vunpack.c.l.b16 %v2481
      %v2705 = vunpack.c.h.b16 %v2481
      %v2706 = vunpack.c.l.b16 %v2482
      %v2707 = vpack.c.b16 %v2632, %v2627
      %v2708 = vpack.c.b16 %v2633, %v2628
      %v2709 = vpack.c.b16 %v2634, %v2629
      %v2710 = vpack.c.b16 %v2635, %v2630
      %v2711 = vpack.c.b16 %v2636, %v2631
      %v2712 = vpack.c.b16 %v2642, %v2637
      %v2713 = vpack.c.b16 %v2643, %v2638
      %v2714 = vpack.c.b16 %v2644, %v2639
      %v2715 = vpack.c.b16 %v2645, %v2640
      %v2716 = vpack.c.b16 %v2646, %v2641
      %v2717 = vpack.c.b16 %v2652, %v2647
      %v2718 = vpack.c.b16 %v2653, %v2648
      %v2719 = vpack.c.b16 %v2654, %v2649
      %v2720 = vpack.c.b16 %v2655, %v2650
      %v2721 = vpack.c.b16 %v2656, %v2651
      %v2722 = vpack.c.b16 %v2662, %v2657
      %v2723 = vpack.c.b16 %v2663, %v2658
      %v2724 = vpack.c.b16 %v2664, %v2659
      %v2725 = vpack.c.b16 %v2665, %v2660
      %v2726 = vpack.c.b16 %v2666, %v2661
      %v2727 = vpack.c.b16 %v2672, %v2667
      %v2728 = vpack.c.b16 %v2673, %v2668
      %v2729 = vpack.c.b16 %v2674, %v2669
      %v2730 = vpack.c.b16 %v2675, %v2670
      %v2731 = vpack.c.b16 %v2676, %v2671
      %v2732 = vpack.c.b16 %v2682, %v2677
      %v2733 = vpack.c.b16 %v2683, %v2678
      %v2734 = vpack.c.b16 %v2684, %v2679
      %v2735 = vpack.c.b16 %v2685, %v2680
      %v2736 = vpack.c.b16 %v2686, %v2681
      %v2737 = vpack.c.b16 %v2692, %v2687
      %v2738 = vpack.c.b16 %v2693, %v2688
      %v2739 = vpack.c.b16 %v2694, %v2689
      %v2740 = vpack.c.b16 %v2695, %v2690
      %v2741 = vpack.c.b16 %v2696, %v2691
      %v2742 = vpack.c.b16 %v2702, %v2697
      %v2743 = vpack.c.b16 %v2703, %v2698
      %v2744 = vpack.c.b16 %v2704, %v2699
      %v2745 = vpack.c.b16 %v2705, %v2700
      %v2746 = vpack.c.b16 %v2706, %v2701
      %vm2779 = vcmask 523264
      %v2781 = vsel %vm2779, %v2711, 0
      %v2784 = vsel %vm2779, %v2716, 0
      %v2787 = vsel %vm2779, %v2721, 0
      %v2790 = vsel %vm2779, %v2726, 0
      %v2793 = vsel %vm2779, %v2731, 0
      %v2796 = vsel %vm2779, %v2736, 0
      %v2799 = vsel %vm2779, %v2741, 0
      %v2802 = vsel %vm2779, %v2746, 0
      %2804 = vmatprep.subr.bf16.mxu0 %v2364
      %2805 = vmatpush1.bf16.msra.mxu0 %v2363
      %2806 = vmatprep.subr.bf16.mxu0 %v2366
      %2807 = vmatpush1.bf16.msra.mxu0 %v2365
      %2808 = vmatprep.subr.bf16.mxu0 %v2368
      %2809 = vmatpush1.bf16.msra.mxu0 %v2367
      %2810 = vmatprep.subr.bf16.mxu0 %v2370
      %2811 = vmatpush1.bf16.msra.mxu0 %v2369
      %2812 = vmatprep.subr.bf16.mxu0 %v2372
      %2813 = vmatpush1.bf16.msra.mxu0 %v2371
      %2814 = vmatprep.subr.bf16.mxu0 %v2374
      %2815 = vmatpush1.bf16.msra.mxu0 %v2373
      %2816 = vmatprep.subr.bf16.mxu0 %v2376
      %2817 = vmatpush1.bf16.msra.mxu0 %v2375
      %2818 = vmatprep.subr.bf16.mxu0 %v2378
      %2819 = vmatpush1.bf16.msra.mxu0 %v2377
      %2820 = vmatprep.subr.bf16.mxu0 %v2380
      %2821 = vmatpush1.bf16.msra.mxu0 %v2379
      %2822 = vmatprep.subr.bf16.mxu0 %v2382
      %2823 = vmatpush1.bf16.msra.mxu0 %v2381
      %2824 = vmatprep.subr.bf16.mxu0 %v2384
      %2825 = vmatpush1.bf16.msra.mxu0 %v2383
      %2826 = vmatprep.subr.bf16.mxu0 %v2386
      %2827 = vmatpush1.bf16.msra.mxu0 %v2385
      %2828 = vmatprep.subr.bf16.mxu0 %v2388
      %2829 = vmatpush1.bf16.msra.mxu0 %v2387
      %2830 = vmatprep.subr.bf16.mxu0 %v2390
      %2831 = vmatpush1.bf16.msra.mxu0 %v2389
      %2832 = vmatprep.subr.bf16.mxu0 %v2392
      %2833 = vmatpush1.bf16.msra.mxu0 %v2391
      %2834 = vmatprep.subr.bf16.mxu0 %v2394
      %2835 = vmatpush1.bf16.msra.mxu0 %v2393
      %2836 = vmatprep.mubr.bf16.mxu0 %v2708
      %2837 = vmatmul.mubr.bf16.gmra.mrb[0].mxu0 %v2707
      %v2838 = vpop.f32.mrb[0].mxu0
      %v2839 = vadd.f32 %v2502, %v2838
      %v2840 = vpop.f32.mrb[0].mxu0
      %v2841 = vadd.f32 %v2502, %v2840
      %v2842 = vpop.f32.mrb[0].mxu0
      %v2843 = vadd.f32 %v2507, %v2842
      %v2844 = vpop.f32.mrb[0].mxu0
      %v2845 = vadd.f32 %v2507, %v2844
      %2846 = vmatprep.mubr.bf16.mxu0 %v2713
      %2847 = vmatmul.mubr.bf16.gmra.mrb[0].mxu0 %v2712
      %v2848 = vpop.f32.mrb[0].mxu0
      %v2849 = vadd.f32 %v2512, %v2848
      %v2850 = vpop.f32.mrb[0].mxu0
      %v2851 = vadd.f32 %v2512, %v2850
      %v2852 = vpop.f32.mrb[0].mxu0
      %v2853 = vadd.f32 %v2517, %v2852
      %v2854 = vpop.f32.mrb[0].mxu0
      %v2855 = vadd.f32 %v2517, %v2854
      %2856 = vmatprep.mubr.bf16.mxu0 %v2718
      %2857 = vmatmul.mubr.bf16.gmra.mrb[0].mxu0 %v2717
      %v2858 = vpop.f32.mrb[0].mxu0
      %v2859 = vadd.f32 %v2522, %v2858
      %v2860 = vpop.f32.mrb[0].mxu0
      %v2861 = vadd.f32 %v2522, %v2860
      %v2862 = vpop.f32.mrb[0].mxu0
      %v2863 = vadd.f32 %v2527, %v2862
      %v2864 = vpop.f32.mrb[0].mxu0
      %v2865 = vadd.f32 %v2527, %v2864
      %2866 = vmatprep.mubr.bf16.mxu0 %v2723
      %2867 = vmatmul.mubr.bf16.gmra.mrb[0].mxu0 %v2722
      %v2868 = vpop.f32.mrb[0].mxu0
      %v2869 = vadd.f32 %v2532, %v2868
      %v2870 = vpop.f32.mrb[0].mxu0
      %v2871 = vadd.f32 %v2532, %v2870
      %v2872 = vpop.f32.mrb[0].mxu0
      %v2873 = vadd.f32 %v2537, %v2872
      %v2874 = vpop.f32.mrb[0].mxu0
      %v2875 = vadd.f32 %v2537, %v2874
      %2876 = vmatprep.mubr.bf16.mxu0 %v2728
      %2877 = vmatmul.mubr.bf16.gmra.mrb[0].mxu0 %v2727
      %v2878 = vpop.f32.mrb[0].mxu0
      %v2879 = vadd.f32 %v2542, %v2878
      %v2880 = vpop.f32.mrb[0].mxu0
      %v2881 = vadd.f32 %v2542, %v2880
      %v2882 = vpop.f32.mrb[0].mxu0
      %v2883 = vadd.f32 %v2547, %v2882
      %v2884 = vpop.f32.mrb[0].mxu0
      %v2885 = vadd.f32 %v2547, %v2884
      %2886 = vmatprep.mubr.bf16.mxu0 %v2733
      %2887 = vmatmul.mubr.bf16.gmra.mrb[0].mxu0 %v2732
      %v2888 = vpop.f32.mrb[0].mxu0
      %v2889 = vadd.f32 %v2552, %v2888
      %v2890 = vpop.f32.mrb[0].mxu0
      %v2891 = vadd.f32 %v2552, %v2890
      %v2892 = vpop.f32.mrb[0].mxu0
      %v2893 = vadd.f32 %v2557, %v2892
      %v2894 = vpop.f32.mrb[0].mxu0
      %v2895 = vadd.f32 %v2557, %v2894
      %2896 = vmatprep.mubr.bf16.mxu0 %v2738
      %2897 = vmatmul.mubr.bf16.gmra.mrb[0].mxu0 %v2737
      %v2898 = vpop.f32.mrb[0].mxu0
      %v2899 = vadd.f32 %v2562, %v2898
      %v2900 = vpop.f32.mrb[0].mxu0
      %v2901 = vadd.f32 %v2562, %v2900
      %v2902 = vpop.f32.mrb[0].mxu0
      %v2903 = vadd.f32 %v2567, %v2902
      %v2904 = vpop.f32.mrb[0].mxu0
      %v2905 = vadd.f32 %v2567, %v2904
      %2906 = vmatprep.mubr.bf16.mxu0 %v2743
      %2907 = vmatmul.mubr.bf16.gmra.mrb[0].mxu0 %v2742
      %v2908 = vpop.f32.mrb[0].mxu0
      %v2909 = vadd.f32 %v2572, %v2908
      %v2910 = vpop.f32.mrb[0].mxu0
      %v2911 = vadd.f32 %v2572, %v2910
      %v2912 = vpop.f32.mrb[0].mxu0
      %v2913 = vadd.f32 %v2577, %v2912
      %v2914 = vpop.f32.mrb[0].mxu0
      %v2915 = vadd.f32 %v2577, %v2914
      %2916 = vdwg.mxu0
      %2917 = vmatprep.subr.bf16.mxu0 %v2396
      %2918 = vmatpush1.bf16.msra.mxu0 %v2395
      %2919 = vmatprep.subr.bf16.mxu0 %v2398
      %2920 = vmatpush1.bf16.msra.mxu0 %v2397
      %2921 = vmatprep.subr.bf16.mxu0 %v2400
      %2922 = vmatpush1.bf16.msra.mxu0 %v2399
      %2923 = vmatprep.subr.bf16.mxu0 %v2402
      %2924 = vmatpush1.bf16.msra.mxu0 %v2401
      %2925 = vmatprep.subr.bf16.mxu0 %v2404
      %2926 = vmatpush1.bf16.msra.mxu0 %v2403
      %2927 = vmatprep.subr.bf16.mxu0 %v2406
      %2928 = vmatpush1.bf16.msra.mxu0 %v2405
      %2929 = vmatprep.subr.bf16.mxu0 %v2408
      %2930 = vmatpush1.bf16.msra.mxu0 %v2407
      %2931 = vmatprep.subr.bf16.mxu0 %v2410
      %2932 = vmatpush1.bf16.msra.mxu0 %v2409
      %2933 = vmatprep.subr.bf16.mxu0 %v2412
      %2934 = vmatpush1.bf16.msra.mxu0 %v2411
      %2935 = vmatprep.subr.bf16.mxu0 %v2414
      %2936 = vmatpush1.bf16.msra.mxu0 %v2413
      %2937 = vmatprep.subr.bf16.mxu0 %v2416
      %2938 = vmatpush1.bf16.msra.mxu0 %v2415
      %2939 = vmatprep.subr.bf16.mxu0 %v2418
      %2940 = vmatpush1.bf16.msra.mxu0 %v2417
      %2941 = vmatprep.subr.bf16.mxu0 %v2420
      %2942 = vmatpush1.bf16.msra.mxu0 %v2419
      %2943 = vmatprep.subr.bf16.mxu0 %v2422
      %2944 = vmatpush1.bf16.msra.mxu0 %v2421
      %2945 = vmatprep.subr.bf16.mxu0 %v2424
      %2946 = vmatpush1.bf16.msra.mxu0 %v2423
      %2947 = vmatprep.subr.bf16.mxu0 %v2426
      %2948 = vmatpush1.bf16.msra.mxu0 %v2425
      %2949 = vmatprep.mubr.bf16.mxu0 %v2710
      %2950 = vmatmul.mubr.bf16.gmra.mrb[0].mxu0 %v2709
      %v2951 = vpop.f32.mrb[0].mxu0
      %v2952 = vadd.f32 %v2839, %v2951
      %v2953 = vpop.f32.mrb[0].mxu0
      %v2954 = vadd.f32 %v2841, %v2953
      %v2955 = vpop.f32.mrb[0].mxu0
      %v2956 = vadd.f32 %v2843, %v2955
      %v2957 = vpop.f32.mrb[0].mxu0
      %v2958 = vadd.f32 %v2845, %v2957
      %2959 = vmatprep.mubr.bf16.mxu0 %v2715
      %2960 = vmatmul.mubr.bf16.gmra.mrb[0].mxu0 %v2714
      %v2961 = vpop.f32.mrb[0].mxu0
      %v2962 = vadd.f32 %v2849, %v2961
      %v2963 = vpop.f32.mrb[0].mxu0
      %v2964 = vadd.f32 %v2851, %v2963
      %v2965 = vpop.f32.mrb[0].mxu0
      %v2966 = vadd.f32 %v2853, %v2965
      %v2967 = vpop.f32.mrb[0].mxu0
      %v2968 = vadd.f32 %v2855, %v2967
      %2969 = vmatprep.mubr.bf16.mxu0 %v2720
      %2970 = vmatmul.mubr.bf16.gmra.mrb[0].mxu0 %v2719
      %v2971 = vpop.f32.mrb[0].mxu0
      %v2972 = vadd.f32 %v2859, %v2971
      %v2973 = vpop.f32.mrb[0].mxu0
      %v2974 = vadd.f32 %v2861, %v2973
      %v2975 = vpop.f32.mrb[0].mxu0
      %v2976 = vadd.f32 %v2863, %v2975
      %v2977 = vpop.f32.mrb[0].mxu0
      %v2978 = vadd.f32 %v2865, %v2977
      %2979 = vmatprep.mubr.bf16.mxu0 %v2725
      %2980 = vmatmul.mubr.bf16.gmra.mrb[0].mxu0 %v2724
      %v2981 = vpop.f32.mrb[0].mxu0
      %v2982 = vadd.f32 %v2869, %v2981
      %v2983 = vpop.f32.mrb[0].mxu0
      %v2984 = vadd.f32 %v2871, %v2983
      %v2985 = vpop.f32.mrb[0].mxu0
      %v2986 = vadd.f32 %v2873, %v2985
      %v2987 = vpop.f32.mrb[0].mxu0
      %v2988 = vadd.f32 %v2875, %v2987
      %2989 = vmatprep.mubr.bf16.mxu0 %v2730
      %2990 = vmatmul.mubr.bf16.gmra.mrb[0].mxu0 %v2729
      %v2991 = vpop.f32.mrb[0].mxu0
      %v2992 = vadd.f32 %v2879, %v2991
      %v2993 = vpop.f32.mrb[0].mxu0
      %v2994 = vadd.f32 %v2881, %v2993
      %v2995 = vpop.f32.mrb[0].mxu0
      %v2996 = vadd.f32 %v2883, %v2995
      %v2997 = vpop.f32.mrb[0].mxu0
      %v2998 = vadd.f32 %v2885, %v2997
      %2999 = vmatprep.mubr.bf16.mxu0 %v2735
      %3000 = vmatmul.mubr.bf16.gmra.mrb[0].mxu0 %v2734
      %v3001 = vpop.f32.mrb[0].mxu0
      %v3002 = vadd.f32 %v2889, %v3001
      %v3003 = vpop.f32.mrb[0].mxu0
      %v3004 = vadd.f32 %v2891, %v3003
      %v3005 = vpop.f32.mrb[0].mxu0
      %v3006 = vadd.f32 %v2893, %v3005
      %v3007 = vpop.f32.mrb[0].mxu0
      %v3008 = vadd.f32 %v2895, %v3007
      %3009 = vmatprep.mubr.bf16.mxu0 %v2740
      %3010 = vmatmul.mubr.bf16.gmra.mrb[0].mxu0 %v2739
      %v3011 = vpop.f32.mrb[0].mxu0
      %v3012 = vadd.f32 %v2899, %v3011
      %v3013 = vpop.f32.mrb[0].mxu0
      %v3014 = vadd.f32 %v2901, %v3013
      %v3015 = vpop.f32.mrb[0].mxu0
      %v3016 = vadd.f32 %v2903, %v3015
      %v3017 = vpop.f32.mrb[0].mxu0
      %v3018 = vadd.f32 %v2905, %v3017
      %3019 = vmatprep.mubr.bf16.mxu0 %v2745
      %3020 = vmatmul.mubr.bf16.gmra.mrb[0].mxu0 %v2744
      %v3021 = vpop.f32.mrb[0].mxu0
      %v3022 = vadd.f32 %v2909, %v3021
      %v3023 = vpop.f32.mrb[0].mxu0
      %v3024 = vadd.f32 %v2911, %v3023
      %v3025 = vpop.f32.mrb[0].mxu0
      %v3026 = vadd.f32 %v2913, %v3025
      %v3027 = vpop.f32.mrb[0].mxu0
      %v3028 = vadd.f32 %v2915, %v3027
      %3029 = vdwg.mxu0
      %3030 = vmatprep.subr.bf16.mxu0 %v2428
      %3031 = vmatpush1.bf16.msra.mxu0 %v2427
      %3032 = vmatprep.subr.bf16.mxu0 %v2430
      %3033 = vmatpush1.bf16.msra.mxu0 %v2429
      %3034 = vmatprep.subr.bf16.mxu0 %v2432
      %3035 = vmatpush1.bf16.msra.mxu0 %v2431
      %3036 = vmatprep.subr.bf16.mxu0 %v2434
      %3037 = vmatpush1.bf16.msra.mxu0 %v2433
      %3038 = vmatprep.subr.bf16.mxu0 0
      %3039 = vmatpush1.bf16.msra.mxu0 0
      %3040 = vmatprep.subr.bf16.mxu0 0
      %3041 = vmatpush1.bf16.msra.mxu0 0
      %3042 = vmatprep.subr.bf16.mxu0 0
      %3043 = vmatpush1.bf16.msra.mxu0 0
      %3044 = vmatprep.subr.bf16.mxu0 0
      %3045 = vmatpush1.bf16.msra.mxu0 0
      %3046 = vmatprep.subr.bf16.mxu0 0
      %3047 = vmatpush1.bf16.msra.mxu0 0
      %3048 = vmatprep.subr.bf16.mxu0 0
      %3049 = vmatpush1.bf16.msra.mxu0 0
      %3050 = vmatprep.subr.bf16.mxu0 0
      %3051 = vmatpush1.bf16.msra.mxu0 0
      %3052 = vmatprep.subr.bf16.mxu0 0
      %3053 = vmatpush1.bf16.msra.mxu0 0
      %3054 = vmatprep.subr.bf16.mxu0 0
      %3055 = vmatpush1.bf16.msra.mxu0 0
      %3056 = vmatprep.subr.bf16.mxu0 0
      %3057 = vmatpush1.bf16.msra.mxu0 0
      %3058 = vmatprep.subr.bf16.mxu0 0
      %3059 = vmatpush1.bf16.msra.mxu0 0
      %3060 = vmatprep.subr.bf16.mxu0 0
      %3061 = vmatpush1.bf16.msra.mxu0 0
      %3062 = vmatprep.mubr.bf16.mxu0 0
      %3063 = vmatmul.mubr.bf16.gmra.mrb[0].mxu0 %v2781
      %v3064 = vpop.f32.mrb[0].mxu0
      %v3065 = vadd.f32 %v2952, %v3064
      %v3066 = vpop.f32.mrb[0].mxu0
      %v3067 = vadd.f32 %v2954, %v3066
      %v3068 = vpop.f32.mrb[0].mxu0
      %v3069 = vadd.f32 %v2956, %v3068
      %v3070 = vpop.f32.mrb[0].mxu0
      %v3071 = vadd.f32 %v2958, %v3070
      %3072 = vmatprep.mubr.bf16.mxu0 0
      %3073 = vmatmul.mubr.bf16.gmra.mrb[0].mxu0 %v2784
      %v3074 = vpop.f32.mrb[0].mxu0
      %v3075 = vadd.f32 %v2962, %v3074
      %v3076 = vpop.f32.mrb[0].mxu0
      %v3077 = vadd.f32 %v2964, %v3076
      %v3078 = vpop.f32.mrb[0].mxu0
      %v3079 = vadd.f32 %v2966, %v3078
      %v3080 = vpop.f32.mrb[0].mxu0
      %v3081 = vadd.f32 %v2968, %v3080
      %3082 = vmatprep.mubr.bf16.mxu0 0
      %3083 = vmatmul.mubr.bf16.gmra.mrb[0].mxu0 %v2787
      %v3084 = vpop.f32.mrb[0].mxu0
      %v3085 = vadd.f32 %v2972, %v3084
      %v3086 = vpop.f32.mrb[0].mxu0
      %v3087 = vadd.f32 %v2974, %v3086
      %v3088 = vpop.f32.mrb[0].mxu0
      %v3089 = vadd.f32 %v2976, %v3088
      %v3090 = vpop.f32.mrb[0].mxu0
      %v3091 = vadd.f32 %v2978, %v3090
      %3092 = vmatprep.mubr.bf16.mxu0 0
      %3093 = vmatmul.mubr.bf16.gmra.mrb[0].mxu0 %v2790
      %v3094 = vpop.f32.mrb[0].mxu0
      %v3095 = vadd.f32 %v2982, %v3094
      %v3096 = vpop.f32.mrb[0].mxu0
      %v3097 = vadd.f32 %v2984, %v3096
      %v3098 = vpop.f32.mrb[0].mxu0
      %v3099 = vadd.f32 %v2986, %v3098
      %v3100 = vpop.f32.mrb[0].mxu0
      %v3101 = vadd.f32 %v2988, %v3100
      %3102 = vmatprep.mubr.bf16.mxu0 0
      %3103 = vmatmul.mubr.bf16.gmra.mrb[0].mxu0 %v2793
      %v3104 = vpop.f32.mrb[0].mxu0
      %v3105 = vadd.f32 %v2992, %v3104
      %v3106 = vpop.f32.mrb[0].mxu0
      %v3107 = vadd.f32 %v2994, %v3106
      %v3108 = vpop.f32.mrb[0].mxu0
      %v3109 = vadd.f32 %v2996, %v3108
      %v3110 = vpop.f32.mrb[0].mxu0
      %v3111 = vadd.f32 %v2998, %v3110
      %3112 = vmatprep.mubr.bf16.mxu0 0
      %3113 = vmatmul.mubr.bf16.gmra.mrb[0].mxu0 %v2796
      %v3114 = vpop.f32.mrb[0].mxu0
      %v3115 = vadd.f32 %v3002, %v3114
      %v3116 = vpop.f32.mrb[0].mxu0
      %v3117 = vadd.f32 %v3004, %v3116
      %v3118 = vpop.f32.mrb[0].mxu0
      %v3119 = vadd.f32 %v3006, %v3118
      %v3120 = vpop.f32.mrb[0].mxu0
      %v3121 = vadd.f32 %v3008, %v3120
      %3122 = vmatprep.mubr.bf16.mxu0 0
      %3123 = vmatmul.mubr.bf16.gmra.mrb[0].mxu0 %v2799
      %v3124 = vpop.f32.mrb[0].mxu0
      %v3125 = vadd.f32 %v3012, %v3124
      %v3126 = vpop.f32.mrb[0].mxu0
      %v3127 = vadd.f32 %v3014, %v3126
      %v3128 = vpop.f32.mrb[0].mxu0
      %v3129 = vadd.f32 %v3016, %v3128
      %v3130 = vpop.f32.mrb[0].mxu0
      %v3131 = vadd.f32 %v3018, %v3130
      %3132 = vmatprep.mubr.bf16.mxu0 0
      %3133 = vmatmul.mubr.bf16.gmra.mrb[0].mxu0 %v2802
      %v3134 = vpop.f32.mrb[0].mxu0
      %v3135 = vadd.f32 %v3022, %v3134
      %v3136 = vpop.f32.mrb[0].mxu0
      %v3137 = vadd.f32 %v3024, %v3136
      %v3138 = vpop.f32.mrb[0].mxu0
      %v3139 = vadd.f32 %v3026, %v3138
      %v3140 = vpop.f32.mrb[0].mxu0
      %v3141 = vadd.f32 %v3028, %v3140
      %3142 = vdwg.mxu0
      %v3143 = vmax.f32 %v3065, 0.0
      %v3144 = vmax.f32 %v3067, 0.0
      %v3145 = vmax.f32 %v3069, 0.0
      %v3146 = vmax.f32 %v3071, 0.0
      %v3147 = vmax.f32 %v3075, 0.0
      %v3148 = vmax.f32 %v3077, 0.0
      %v3149 = vmax.f32 %v3079, 0.0
      %v3150 = vmax.f32 %v3081, 0.0
      %v3151 = vmax.f32 %v3085, 0.0
      %v3152 = vmax.f32 %v3087, 0.0
      %v3153 = vmax.f32 %v3089, 0.0
      %v3154 = vmax.f32 %v3091, 0.0
      %v3155 = vmax.f32 %v3095, 0.0
      %v3156 = vmax.f32 %v3097, 0.0
      %v3157 = vmax.f32 %v3099, 0.0
      %v3158 = vmax.f32 %v3101, 0.0
      %v3159 = vmax.f32 %v3105, 0.0
      %v3160 = vmax.f32 %v3107, 0.0
      %v3161 = vmax.f32 %v3109, 0.0
      %v3162 = vmax.f32 %v3111, 0.0
      %v3163 = vmax.f32 %v3115, 0.0
      %v3164 = vmax.f32 %v3117, 0.0
      %v3165 = vmax.f32 %v3119, 0.0
      %v3166 = vmax.f32 %v3121, 0.0
      %v3167 = vmax.f32 %v3125, 0.0
      %v3168 = vmax.f32 %v3127, 0.0
      %v3169 = vmax.f32 %v3129, 0.0
      %v3170 = vmax.f32 %v3131, 0.0
      %v3171 = vmax.f32 %v3135, 0.0
      %v3172 = vmax.f32 %v3137, 0.0
      %v3173 = vmax.f32 %v3139, 0.0
      %v3174 = vmax.f32 %v3141, 0.0
      %3175 = vst [vmem:[#allocation5] sm:$0xff] %v3143
      %3176 = vst [vmem:[#allocation5 + $0x8] sm:$0xff] %v3144
      %3177 = vst [vmem:[#allocation5 + $0x10] sm:$0xff] %v3145
      %3178 = vst [vmem:[#allocation5 + $0x18] sm:$0xff] %v3146
      %3179 = vst [vmem:[#allocation5 + $0x20] sm:$0xff] %v3147
      %3180 = vst [vmem:[#allocation5 + $0x28] sm:$0xff] %v3148
      %3181 = vst [vmem:[#allocation5 + $0x30] sm:$0xff] %v3149
      %3182 = vst [vmem:[#allocation5 + $0x38] sm:$0xff] %v3150
      %3183 = vst [vmem:[#allocation5 + $0x40] sm:$0xff] %v3151
      %3184 = vst [vmem:[#allocation5 + $0x48] sm:$0xff] %v3152
      %3185 = vst [vmem:[#allocation5 + $0x50] sm:$0xff] %v3153
      %3186 = vst [vmem:[#allocation5 + $0x58] sm:$0xff] %v3154
      %3187 = vst [vmem:[#allocation5 + $0x60] sm:$0xff] %v3155
      %3188 = vst [vmem:[#allocation5 + $0x68] sm:$0xff] %v3156
      %3189 = vst [vmem:[#allocation5 + $0x70] sm:$0xff] %v3157
      %3190 = vst [vmem:[#allocation5 + $0x78] sm:$0xff] %v3158
      %3191 = vst [vmem:[#allocation5 + $0x80] sm:$0xff] %v3159
      %3192 = vst [vmem:[#allocation5 + $0x88] sm:$0xff] %v3160
      %3193 = vst [vmem:[#allocation5 + $0x90] sm:$0xff] %v3161
      %3194 = vst [vmem:[#allocation5 + $0x98] sm:$0xff] %v3162
      %3195 = vst [vmem:[#allocation5 + $0xa0] sm:$0xff] %v3163
      %3196 = vst [vmem:[#allocation5 + $0xa8] sm:$0xff] %v3164
      %3197 = vst [vmem:[#allocation5 + $0xb0] sm:$0xff] %v3165
      %3198 = vst [vmem:[#allocation5 + $0xb8] sm:$0xff] %v3166
      %3199 = vst [vmem:[#allocation5 + $0xc0] sm:$0xff] %v3167
      %3200 = vst [vmem:[#allocation5 + $0xc8] sm:$0xff] %v3168
      %3201 = vst [vmem:[#allocation5 + $0xd0] sm:$0xff] %v3169
      %3202 = vst [vmem:[#allocation5 + $0xd8] sm:$0xff] %v3170
      %3203 = vst [vmem:[#allocation5 + $0xe0] sm:$0xff] %v3171
      %3204 = vst [vmem:[#allocation5 + $0xe8] sm:$0xff] %v3172
      %3205 = vst [vmem:[#allocation5 + $0xf0] sm:$0xff] %v3173
      %3206 = vst [vmem:[#allocation5 + $0xf8] sm:$0xff] %v3174
      %v3207 = vld [vmem:[#allocation5] sm:$0xff]
      %v3208 = vld [vmem:[#allocation5 + $0x8] sm:$0xff]
      %v3209 = vld [vmem:[#allocation5 + $0x10] sm:$0xff]
      %v3210 = vld [vmem:[#allocation5 + $0x18] sm:$0xff]
      %v3211 = vld [vmem:[#allocation5 + $0x20] sm:$0xff]
      %v3212 = vld [vmem:[#allocation5 + $0x28] sm:$0xff]
      %v3213 = vld [vmem:[#allocation5 + $0x30] sm:$0xff]
      %v3214 = vld [vmem:[#allocation5 + $0x38] sm:$0xff]
      %v3215 = vld [vmem:[#allocation5 + $0x40] sm:$0xff]
      %v3216 = vld [vmem:[#allocation5 + $0x48] sm:$0xff]
      %v3217 = vld [vmem:[#allocation5 + $0x50] sm:$0xff]
      %v3218 = vld [vmem:[#allocation5 + $0x58] sm:$0xff]
      %v3219 = vld [vmem:[#allocation5 + $0x60] sm:$0xff]
      %v3220 = vld [vmem:[#allocation5 + $0x68] sm:$0xff]
      %v3221 = vld [vmem:[#allocation5 + $0x70] sm:$0xff]
      %v3222 = vld [vmem:[#allocation5 + $0x78] sm:$0xff]
      %v3223 = vld [vmem:[#allocation5 + $0x80] sm:$0xff]
      %v3224 = vld [vmem:[#allocation5 + $0x88] sm:$0xff]
      %v3225 = vld [vmem:[#allocation5 + $0x90] sm:$0xff]
      %v3226 = vld [vmem:[#allocation5 + $0x98] sm:$0xff]
      %v3227 = vld [vmem:[#allocation5 + $0xa0] sm:$0xff]
      %v3228 = vld [vmem:[#allocation5 + $0xa8] sm:$0xff]
      %v3229 = vld [vmem:[#allocation5 + $0xb0] sm:$0xff]
      %v3230 = vld [vmem:[#allocation5 + $0xb8] sm:$0xff]
      %v3231 = vld [vmem:[#allocation5 + $0xc0] sm:$0xff]
      %v3232 = vld [vmem:[#allocation5 + $0xc8] sm:$0xff]
      %v3233 = vld [vmem:[#allocation5 + $0xd0] sm:$0xff]
      %v3234 = vld [vmem:[#allocation5 + $0xd8] sm:$0xff]
      %v3235 = vld [vmem:[#allocation5 + $0xe0] sm:$0xff]
      %v3236 = vld [vmem:[#allocation5 + $0xe8] sm:$0xff]
      %v3237 = vld [vmem:[#allocation5 + $0xf0] sm:$0xff]
      %v3238 = vld [vmem:[#allocation5 + $0xf8] sm:$0xff]
      %3239 = vrot.lane.b32.xlu0 %v3207, 17
      %v3240 = vpop.permute.xlu0 %3239
      %3241 = vrot.lane.b32.xlu0 %v3209, 17
      %v3242 = vpop.permute.xlu0 %3241
      %3243 = vrot.lane.b32.xlu0 %v3211, 17
      %v3244 = vpop.permute.xlu0 %3243
      %3245 = vrot.lane.b32.xlu0 %v3213, 17
      %v3246 = vpop.permute.xlu0 %3245
      %3247 = vrot.lane.b32.xlu0 %v3215, 17
      %v3248 = vpop.permute.xlu0 %3247
      %3249 = vrot.lane.b32.xlu0 %v3217, 17
      %v3250 = vpop.permute.xlu0 %3249
      %3251 = vrot.lane.b32.xlu0 %v3219, 17
      %v3252 = vpop.permute.xlu0 %3251
      %3253 = vrot.lane.b32.xlu0 %v3221, 17
      %v3254 = vpop.permute.xlu0 %3253
      %3255 = vrot.lane.b32.xlu0 %v3223, 17
      %v3256 = vpop.permute.xlu0 %3255
      %3257 = vrot.lane.b32.xlu0 %v3225, 17
      %v3258 = vpop.permute.xlu0 %3257
      %3259 = vrot.lane.b32.xlu0 %v3227, 17
      %v3260 = vpop.permute.xlu0 %3259
      %3261 = vrot.lane.b32.xlu0 %v3229, 17
      %v3262 = vpop.permute.xlu0 %3261
      %3263 = vrot.lane.b32.xlu0 %v3231, 17
      %v3264 = vpop.permute.xlu0 %3263
      %3265 = vrot.lane.b32.xlu0 %v3233, 17
      %v3266 = vpop.permute.xlu0 %3265
      %3267 = vrot.lane.b32.xlu0 %v3235, 17
      %v3268 = vpop.permute.xlu0 %3267
      %3269 = vrot.lane.b32.xlu0 %v3237, 17
      %v3270 = vpop.permute.xlu0 %3269
      %3271 = vrot.lane.b32.xlu0 %v3208, 17
      %v3272 = vpop.permute.xlu0 %3271
      %3273 = vrot.lane.b32.xlu0 %v3210, 17
      %v3274 = vpop.permute.xlu0 %3273
      %3275 = vrot.lane.b32.xlu0 %v3212, 17
      %v3276 = vpop.permute.xlu0 %3275
      %3277 = vrot.lane.b32.xlu0 %v3214, 17
      %v3278 = vpop.permute.xlu0 %3277
      %3279 = vrot.lane.b32.xlu0 %v3216, 17
      %v3280 = vpop.permute.xlu0 %3279
      %3281 = vrot.lane.b32.xlu0 %v3218, 17
      %v3282 = vpop.permute.xlu0 %3281
      %3283 = vrot.lane.b32.xlu0 %v3220, 17
      %v3284 = vpop.permute.xlu0 %3283
      %3285 = vrot.lane.b32.xlu0 %v3222, 17
      %v3286 = vpop.permute.xlu0 %3285
      %3287 = vrot.lane.b32.xlu0 %v3224, 17
      %v3288 = vpop.permute.xlu0 %3287
      %3289 = vrot.lane.b32.xlu0 %v3226, 17
      %v3290 = vpop.permute.xlu0 %3289
      %3291 = vrot.lane.b32.xlu0 %v3228, 17
      %v3292 = vpop.permute.xlu0 %3291
      %3293 = vrot.lane.b32.xlu0 %v3230, 17
      %v3294 = vpop.permute.xlu0 %3293
      %3295 = vrot.lane.b32.xlu0 %v3232, 17
      %v3296 = vpop.permute.xlu0 %3295
      %3297 = vrot.lane.b32.xlu0 %v3234, 17
      %v3298 = vpop.permute.xlu0 %3297
      %3299 = vrot.lane.b32.xlu0 %v3236, 17
      %v3300 = vpop.permute.xlu0 %3299
      %3301 = vrot.lane.b32.xlu0 %v3238, 17
      %v3302 = vpop.permute.xlu0 %3301
      %v3303 = vsel %vm961, %v3240, %v3272
      %v3304 = vsel %vm961, %v3242, %v3274
      %v3305 = vsel %vm961, %v3244, %v3276
      %v3306 = vsel %vm961, %v3246, %v3278
      %v3307 = vsel %vm961, %v3248, %v3280
      %v3308 = vsel %vm961, %v3250, %v3282
      %v3309 = vsel %vm961, %v3252, %v3284
      %v3310 = vsel %vm961, %v3254, %v3286
      %v3311 = vsel %vm961, %v3256, %v3288
      %v3312 = vsel %vm961, %v3258, %v3290
      %v3313 = vsel %vm961, %v3260, %v3292
      %v3314 = vsel %vm961, %v3262, %v3294
      %v3315 = vsel %vm961, %v3264, %v3296
      %v3316 = vsel %vm961, %v3266, %v3298
      %v3317 = vsel %vm961, %v3268, %v3300
      %v3318 = vsel %vm961, %v3270, %v3302
      %v3319 = vsel %vm961, %v3272, %v3240
      %v3320 = vsel %vm961, %v3274, %v3242
      %v3321 = vsel %vm961, %v3276, %v3244
      %v3322 = vsel %vm961, %v3278, %v3246
      %v3323 = vsel %vm961, %v3280, %v3248
      %v3324 = vsel %vm961, %v3282, %v3250
      %v3325 = vsel %vm961, %v3284, %v3252
      %v3326 = vsel %vm961, %v3286, %v3254
      %v3327 = vsel %vm961, %v3288, %v3256
      %v3328 = vsel %vm961, %v3290, %v3258
      %v3329 = vsel %vm961, %v3292, %v3260
      %v3330 = vsel %vm961, %v3294, %v3262
      %v3331 = vsel %vm961, %v3296, %v3264
      %v3332 = vsel %vm961, %v3298, %v3266
      %v3333 = vsel %vm961, %v3300, %v3268
      %v3334 = vsel %vm961, %v3302, %v3270
      %v3335 = vld [vmem:[%s3] sm:$0x3]
      %v3337 = vlaneseq
      %v3338 = vshrl.u32 %v3337, 7
      %v3339 = vsub.s32 0, %v3338
      %v3340 = vrot.slane %v3335, %v3339
      %v3341 = vlaneseq
      %v3342 = vshrl.u32 %v3341, 7
      %v3343 = vsub.s32 1, %v3342
      %v3344 = vrot.slane %v3335, %v3343
      %v3347 = vmul.f32 %v3319, %v3340
      %v3348 = vmul.f32 %v3303, %v3344
      %v3349 = vmul.f32 %v3320, %v3340
      %v3350 = vmul.f32 %v3304, %v3344
      %v3351 = vmul.f32 %v3321, %v3340
      %v3352 = vmul.f32 %v3305, %v3344
      %v3353 = vmul.f32 %v3322, %v3340
      %v3354 = vmul.f32 %v3306, %v3344
      %v3355 = vmul.f32 %v3323, %v3340
      %v3356 = vmul.f32 %v3307, %v3344
      %v3357 = vmul.f32 %v3324, %v3340
      %v3358 = vmul.f32 %v3308, %v3344
      %v3359 = vmul.f32 %v3325, %v3340
      %v3360 = vmul.f32 %v3309, %v3344
      %v3361 = vmul.f32 %v3326, %v3340
      %v3362 = vmul.f32 %v3310, %v3344
      %v3363 = vmul.f32 %v3327, %v3340
      %v3364 = vmul.f32 %v3311, %v3344
      %v3365 = vmul.f32 %v3328, %v3340
      %v3366 = vmul.f32 %v3312, %v3344
      %v3367 = vmul.f32 %v3329, %v3340
      %v3368 = vmul.f32 %v3313, %v3344
      %v3369 = vmul.f32 %v3330, %v3340
      %v3370 = vmul.f32 %v3314, %v3344
      %v3371 = vmul.f32 %v3331, %v3340
      %v3372 = vmul.f32 %v3315, %v3344
      %v3373 = vmul.f32 %v3332, %v3340
      %v3374 = vmul.f32 %v3316, %v3344
      %v3375 = vmul.f32 %v3333, %v3340
      %v3376 = vmul.f32 %v3317, %v3344
      %v3377 = vmul.f32 %v3334, %v3340
      %v3378 = vmul.f32 %v3318, %v3344
      %v3379 = vpack.c.bf16 %v3349, %v3347
      %v3380 = vpack.c.bf16 %v3350, %v3348
      %v3381 = vpack.c.bf16 %v3353, %v3351
      %v3382 = vpack.c.bf16 %v3354, %v3352
      %v3383 = vpack.c.bf16 %v3357, %v3355
      %v3384 = vpack.c.bf16 %v3358, %v3356
      %v3385 = vpack.c.bf16 %v3361, %v3359
      %v3386 = vpack.c.bf16 %v3362, %v3360
      %v3387 = vpack.c.bf16 %v3365, %v3363
      %v3388 = vpack.c.bf16 %v3366, %v3364
      %v3389 = vpack.c.bf16 %v3369, %v3367
      %v3390 = vpack.c.bf16 %v3370, %v3368
      %v3391 = vpack.c.bf16 %v3373, %v3371
      %v3392 = vpack.c.bf16 %v3374, %v3372
      %v3393 = vpack.c.bf16 %v3377, %v3375
      %v3394 = vpack.c.bf16 %v3378, %v3376
      %3395 = vst [vmem:[#allocation3] sm:$0xff] %v3379
      %3396 = vst [vmem:[#allocation3 + $0x8] sm:$0xff] %v3380
      %3397 = vst [vmem:[#allocation3 + $0x10] sm:$0xff] %v3381
      %3398 = vst [vmem:[#allocation3 + $0x18] sm:$0xff] %v3382
      %3399 = vst [vmem:[#allocation3 + $0x20] sm:$0xff] %v3383
      %3400 = vst [vmem:[#allocation3 + $0x28] sm:$0xff] %v3384
      %3401 = vst [vmem:[#allocation3 + $0x30] sm:$0xff] %v3385
      %3402 = vst [vmem:[#allocation3 + $0x38] sm:$0xff] %v3386
      %3403 = vst [vmem:[#allocation3 + $0x40] sm:$0xff] %v3387
      %3404 = vst [vmem:[#allocation3 + $0x48] sm:$0xff] %v3388
      %3405 = vst [vmem:[#allocation3 + $0x50] sm:$0xff] %v3389
      %3406 = vst [vmem:[#allocation3 + $0x58] sm:$0xff] %v3390
      %3407 = vst [vmem:[#allocation3 + $0x60] sm:$0xff] %v3391
      %3408 = vst [vmem:[#allocation3 + $0x68] sm:$0xff] %v3392
      %3409 = vst [vmem:[#allocation3 + $0x70] sm:$0xff] %v3393
      %3410 = vst [vmem:[#allocation3 + $0x78] sm:$0xff] %v3394
      %3411 = vrot.lane.b32.xlu0 %v3207, 16
      %v3412 = vpop.permute.xlu0 %3411
      %3413 = vrot.lane.b32.xlu0 %v3209, 16
      %v3414 = vpop.permute.xlu0 %3413
      %3415 = vrot.lane.b32.xlu0 %v3211, 16
      %v3416 = vpop.permute.xlu0 %3415
      %3417 = vrot.lane.b32.xlu0 %v3213, 16
      %v3418 = vpop.permute.xlu0 %3417
      %3419 = vrot.lane.b32.xlu0 %v3215, 16
      %v3420 = vpop.permute.xlu0 %3419
      %3421 = vrot.lane.b32.xlu0 %v3217, 16
      %v3422 = vpop.permute.xlu0 %3421
      %3423 = vrot.lane.b32.xlu0 %v3219, 16
      %v3424 = vpop.permute.xlu0 %3423
      %3425 = vrot.lane.b32.xlu0 %v3221, 16
      %v3426 = vpop.permute.xlu0 %3425
      %3427 = vrot.lane.b32.xlu0 %v3223, 16
      %v3428 = vpop.permute.xlu0 %3427
      %3429 = vrot.lane.b32.xlu0 %v3225, 16
      %v3430 = vpop.permute.xlu0 %3429
      %3431 = vrot.lane.b32.xlu0 %v3227, 16
      %v3432 = vpop.permute.xlu0 %3431
      %3433 = vrot.lane.b32.xlu0 %v3229, 16
      %v3434 = vpop.permute.xlu0 %3433
      %3435 = vrot.lane.b32.xlu0 %v3231, 16
      %v3436 = vpop.permute.xlu0 %3435
      %3437 = vrot.lane.b32.xlu0 %v3233, 16
      %v3438 = vpop.permute.xlu0 %3437
      %3439 = vrot.lane.b32.xlu0 %v3235, 16
      %v3440 = vpop.permute.xlu0 %3439
      %3441 = vrot.lane.b32.xlu0 %v3237, 16
      %v3442 = vpop.permute.xlu0 %3441
      %3443 = vrot.lane.b32.xlu0 %v3208, 16
      %v3444 = vpop.permute.xlu0 %3443
      %3445 = vrot.lane.b32.xlu0 %v3210, 16
      %v3446 = vpop.permute.xlu0 %3445
      %3447 = vrot.lane.b32.xlu0 %v3212, 16
      %v3448 = vpop.permute.xlu0 %3447
      %3449 = vrot.lane.b32.xlu0 %v3214, 16
      %v3450 = vpop.permute.xlu0 %3449
      %3451 = vrot.lane.b32.xlu0 %v3216, 16
      %v3452 = vpop.permute.xlu0 %3451
      %3453 = vrot.lane.b32.xlu0 %v3218, 16
      %v3454 = vpop.permute.xlu0 %3453
      %3455 = vrot.lane.b32.xlu0 %v3220, 16
      %v3456 = vpop.permute.xlu0 %3455
      %3457 = vrot.lane.b32.xlu0 %v3222, 16
      %v3458 = vpop.permute.xlu0 %3457
      %3459 = vrot.lane.b32.xlu0 %v3224, 16
      %v3460 = vpop.permute.xlu0 %3459
      %3461 = vrot.lane.b32.xlu0 %v3226, 16
      %v3462 = vpop.permute.xlu0 %3461
      %3463 = vrot.lane.b32.xlu0 %v3228, 16
      %v3464 = vpop.permute.xlu0 %3463
      %3465 = vrot.lane.b32.xlu0 %v3230, 16
      %v3466 = vpop.permute.xlu0 %3465
      %3467 = vrot.lane.b32.xlu0 %v3232, 16
      %v3468 = vpop.permute.xlu0 %3467
      %3469 = vrot.lane.b32.xlu0 %v3234, 16
      %v3470 = vpop.permute.xlu0 %3469
      %3471 = vrot.lane.b32.xlu0 %v3236, 16
      %v3472 = vpop.permute.xlu0 %3471
      %3473 = vrot.lane.b32.xlu0 %v3238, 16
      %v3474 = vpop.permute.xlu0 %3473
      %v3475 = vsel %vm994, %v3412, %v3444
      %v3476 = vsel %vm994, %v3414, %v3446
      %v3477 = vsel %vm994, %v3416, %v3448
      %v3478 = vsel %vm994, %v3418, %v3450
      %v3479 = vsel %vm994, %v3420, %v3452
      %v3480 = vsel %vm994, %v3422, %v3454
      %v3481 = vsel %vm994, %v3424, %v3456
      %v3482 = vsel %vm994, %v3426, %v3458
      %v3483 = vsel %vm994, %v3428, %v3460
      %v3484 = vsel %vm994, %v3430, %v3462
      %v3485 = vsel %vm994, %v3432, %v3464
      %v3486 = vsel %vm994, %v3434, %v3466
      %v3487 = vsel %vm994, %v3436, %v3468
      %v3488 = vsel %vm994, %v3438, %v3470
      %v3489 = vsel %vm994, %v3440, %v3472
      %v3490 = vsel %vm994, %v3442, %v3474
      %v3491 = vsel %vm994, %v3444, %v3412
      %v3492 = vsel %vm994, %v3446, %v3414
      %v3493 = vsel %vm994, %v3448, %v3416
      %v3494 = vsel %vm994, %v3450, %v3418
      %v3495 = vsel %vm994, %v3452, %v3420
      %v3496 = vsel %vm994, %v3454, %v3422
      %v3497 = vsel %vm994, %v3456, %v3424
      %v3498 = vsel %vm994, %v3458, %v3426
      %v3499 = vsel %vm994, %v3460, %v3428
      %v3500 = vsel %vm994, %v3462, %v3430
      %v3501 = vsel %vm994, %v3464, %v3432
      %v3502 = vsel %vm994, %v3466, %v3434
      %v3503 = vsel %vm994, %v3468, %v3436
      %v3504 = vsel %vm994, %v3470, %v3438
      %v3505 = vsel %vm994, %v3472, %v3440
      %v3506 = vsel %vm994, %v3474, %v3442
      %v3507 = vld [vmem:[%s999] sm:$0x3]
      %v3509 = vlaneseq
      %v3510 = vshrl.u32 %v3509, 7
      %v3511 = vsub.s32 0, %v3510
      %v3512 = vrot.slane %v3507, %v3511
      %v3513 = vlaneseq
      %v3514 = vshrl.u32 %v3513, 7
      %v3515 = vsub.s32 1, %v3514
      %v3516 = vrot.slane %v3507, %v3515
      %v3519 = vmul.f32 %v3491, %v3512
      %v3520 = vmul.f32 %v3475, %v3516
      %v3521 = vmul.f32 %v3492, %v3512
      %v3522 = vmul.f32 %v3476, %v3516
      %v3523 = vmul.f32 %v3493, %v3512
      %v3524 = vmul.f32 %v3477, %v3516
      %v3525 = vmul.f32 %v3494, %v3512
      %v3526 = vmul.f32 %v3478, %v3516
      %v3527 = vmul.f32 %v3495, %v3512
      %v3528 = vmul.f32 %v3479, %v3516
      %v3529 = vmul.f32 %v3496, %v3512
      %v3530 = vmul.f32 %v3480, %v3516
      %v3531 = vmul.f32 %v3497, %v3512
      %v3532 = vmul.f32 %v3481, %v3516
      %v3533 = vmul.f32 %v3498, %v3512
      %v3534 = vmul.f32 %v3482, %v3516
      %v3535 = vmul.f32 %v3499, %v3512
      %v3536 = vmul.f32 %v3483, %v3516
      %v3537 = vmul.f32 %v3500, %v3512
      %v3538 = vmul.f32 %v3484, %v3516
      %v3539 = vmul.f32 %v3501, %v3512
      %v3540 = vmul.f32 %v3485, %v3516
      %v3541 = vmul.f32 %v3502, %v3512
      %v3542 = vmul.f32 %v3486, %v3516
      %v3543 = vmul.f32 %v3503, %v3512
      %v3544 = vmul.f32 %v3487, %v3516
      %v3545 = vmul.f32 %v3504, %v3512
      %v3546 = vmul.f32 %v3488, %v3516
      %v3547 = vmul.f32 %v3505, %v3512
      %v3548 = vmul.f32 %v3489, %v3516
      %v3549 = vmul.f32 %v3506, %v3512
      %v3550 = vmul.f32 %v3490, %v3516
      %v3551 = vpack.c.bf16 %v3521, %v3519
      %v3552 = vpack.c.bf16 %v3522, %v3520
      %v3553 = vpack.c.bf16 %v3525, %v3523
      %v3554 = vpack.c.bf16 %v3526, %v3524
      %v3555 = vpack.c.bf16 %v3529, %v3527
      %v3556 = vpack.c.bf16 %v3530, %v3528
      %v3557 = vpack.c.bf16 %v3533, %v3531
      %v3558 = vpack.c.bf16 %v3534, %v3532
      %v3559 = vpack.c.bf16 %v3537, %v3535
      %v3560 = vpack.c.bf16 %v3538, %v3536
      %v3561 = vpack.c.bf16 %v3541, %v3539
      %v3562 = vpack.c.bf16 %v3542, %v3540
      %v3563 = vpack.c.bf16 %v3545, %v3543
      %v3564 = vpack.c.bf16 %v3546, %v3544
      %v3565 = vpack.c.bf16 %v3549, %v3547
      %v3566 = vpack.c.bf16 %v3550, %v3548
      %3567 = vst [vmem:[#allocation3 + $0x80] sm:$0xff] %v3551
      %3568 = vst [vmem:[#allocation3 + $0x88] sm:$0xff] %v3552
      %3569 = vst [vmem:[#allocation3 + $0x90] sm:$0xff] %v3553
      %3570 = vst [vmem:[#allocation3 + $0x98] sm:$0xff] %v3554
      %3571 = vst [vmem:[#allocation3 + $0xa0] sm:$0xff] %v3555
      %3572 = vst [vmem:[#allocation3 + $0xa8] sm:$0xff] %v3556
      %3573 = vst [vmem:[#allocation3 + $0xb0] sm:$0xff] %v3557
      %3574 = vst [vmem:[#allocation3 + $0xb8] sm:$0xff] %v3558
      %3575 = vst [vmem:[#allocation3 + $0xc0] sm:$0xff] %v3559
      %3576 = vst [vmem:[#allocation3 + $0xc8] sm:$0xff] %v3560
      %3577 = vst [vmem:[#allocation3 + $0xd0] sm:$0xff] %v3561
      %3578 = vst [vmem:[#allocation3 + $0xd8] sm:$0xff] %v3562
      %3579 = vst [vmem:[#allocation3 + $0xe0] sm:$0xff] %v3563
      %3580 = vst [vmem:[#allocation3 + $0xe8] sm:$0xff] %v3564
      %3581 = vst [vmem:[#allocation3 + $0xf0] sm:$0xff] %v3565
      %3582 = vst [vmem:[#allocation3 + $0xf8] sm:$0xff] %v3566
      %3583 = vrot.lane.b32.xlu0 %v3207, 15
      %v3584 = vpop.permute.xlu0 %3583
      %3585 = vrot.lane.b32.xlu0 %v3209, 15
      %v3586 = vpop.permute.xlu0 %3585
      %3587 = vrot.lane.b32.xlu0 %v3211, 15
      %v3588 = vpop.permute.xlu0 %3587
      %3589 = vrot.lane.b32.xlu0 %v3213, 15
      %v3590 = vpop.permute.xlu0 %3589
      %3591 = vrot.lane.b32.xlu0 %v3215, 15
      %v3592 = vpop.permute.xlu0 %3591
      %3593 = vrot.lane.b32.xlu0 %v3217, 15
      %v3594 = vpop.permute.xlu0 %3593
      %3595 = vrot.lane.b32.xlu0 %v3219, 15
      %v3596 = vpop.permute.xlu0 %3595
      %3597 = vrot.lane.b32.xlu0 %v3221, 15
      %v3598 = vpop.permute.xlu0 %3597
      %3599 = vrot.lane.b32.xlu0 %v3223, 15
      %v3600 = vpop.permute.xlu0 %3599
      %3601 = vrot.lane.b32.xlu0 %v3225, 15
      %v3602 = vpop.permute.xlu0 %3601
      %3603 = vrot.lane.b32.xlu0 %v3227, 15
      %v3604 = vpop.permute.xlu0 %3603
      %3605 = vrot.lane.b32.xlu0 %v3229, 15
      %v3606 = vpop.permute.xlu0 %3605
      %3607 = vrot.lane.b32.xlu0 %v3231, 15
      %v3608 = vpop.permute.xlu0 %3607
      %3609 = vrot.lane.b32.xlu0 %v3233, 15
      %v3610 = vpop.permute.xlu0 %3609
      %3611 = vrot.lane.b32.xlu0 %v3235, 15
      %v3612 = vpop.permute.xlu0 %3611
      %3613 = vrot.lane.b32.xlu0 %v3237, 15
      %v3614 = vpop.permute.xlu0 %3613
      %3615 = vrot.lane.b32.xlu0 %v3208, 15
      %v3616 = vpop.permute.xlu0 %3615
      %3617 = vrot.lane.b32.xlu0 %v3210, 15
      %v3618 = vpop.permute.xlu0 %3617
      %3619 = vrot.lane.b32.xlu0 %v3212, 15
      %v3620 = vpop.permute.xlu0 %3619
      %3621 = vrot.lane.b32.xlu0 %v3214, 15
      %v3622 = vpop.permute.xlu0 %3621
      %3623 = vrot.lane.b32.xlu0 %v3216, 15
      %v3624 = vpop.permute.xlu0 %3623
      %3625 = vrot.lane.b32.xlu0 %v3218, 15
      %v3626 = vpop.permute.xlu0 %3625
      %3627 = vrot.lane.b32.xlu0 %v3220, 15
      %v3628 = vpop.permute.xlu0 %3627
      %3629 = vrot.lane.b32.xlu0 %v3222, 15
      %v3630 = vpop.permute.xlu0 %3629
      %3631 = vrot.lane.b32.xlu0 %v3224, 15
      %v3632 = vpop.permute.xlu0 %3631
      %3633 = vrot.lane.b32.xlu0 %v3226, 15
      %v3634 = vpop.permute.xlu0 %3633
      %3635 = vrot.lane.b32.xlu0 %v3228, 15
      %v3636 = vpop.permute.xlu0 %3635
      %3637 = vrot.lane.b32.xlu0 %v3230, 15
      %v3638 = vpop.permute.xlu0 %3637
      %3639 = vrot.lane.b32.xlu0 %v3232, 15
      %v3640 = vpop.permute.xlu0 %3639
      %3641 = vrot.lane.b32.xlu0 %v3234, 15
      %v3642 = vpop.permute.xlu0 %3641
      %3643 = vrot.lane.b32.xlu0 %v3236, 15
      %v3644 = vpop.permute.xlu0 %3643
      %3645 = vrot.lane.b32.xlu0 %v3238, 15
      %v3646 = vpop.permute.xlu0 %3645
      %v3647 = vsel %vm1028, %v3584, %v3616
      %v3648 = vsel %vm1028, %v3586, %v3618
      %v3649 = vsel %vm1028, %v3588, %v3620
      %v3650 = vsel %vm1028, %v3590, %v3622
      %v3651 = vsel %vm1028, %v3592, %v3624
      %v3652 = vsel %vm1028, %v3594, %v3626
      %v3653 = vsel %vm1028, %v3596, %v3628
      %v3654 = vsel %vm1028, %v3598, %v3630
      %v3655 = vsel %vm1028, %v3600, %v3632
      %v3656 = vsel %vm1028, %v3602, %v3634
      %v3657 = vsel %vm1028, %v3604, %v3636
      %v3658 = vsel %vm1028, %v3606, %v3638
      %v3659 = vsel %vm1028, %v3608, %v3640
      %v3660 = vsel %vm1028, %v3610, %v3642
      %v3661 = vsel %vm1028, %v3612, %v3644
      %v3662 = vsel %vm1028, %v3614, %v3646
      %v3663 = vsel %vm1028, %v3616, %v3584
      %v3664 = vsel %vm1028, %v3618, %v3586
      %v3665 = vsel %vm1028, %v3620, %v3588
      %v3666 = vsel %vm1028, %v3622, %v3590
      %v3667 = vsel %vm1028, %v3624, %v3592
      %v3668 = vsel %vm1028, %v3626, %v3594
      %v3669 = vsel %vm1028, %v3628, %v3596
      %v3670 = vsel %vm1028, %v3630, %v3598
      %v3671 = vsel %vm1028, %v3632, %v3600
      %v3672 = vsel %vm1028, %v3634, %v3602
      %v3673 = vsel %vm1028, %v3636, %v3604
      %v3674 = vsel %vm1028, %v3638, %v3606
      %v3675 = vsel %vm1028, %v3640, %v3608
      %v3676 = vsel %vm1028, %v3642, %v3610
      %v3677 = vsel %vm1028, %v3644, %v3612
      %v3678 = vsel %vm1028, %v3646, %v3614
      %v3679 = vld [vmem:[%s1033] sm:$0x3]
      %v3681 = vlaneseq
      %v3682 = vshrl.u32 %v3681, 7
      %v3683 = vsub.s32 0, %v3682
      %v3684 = vrot.slane %v3679, %v3683
      %v3685 = vlaneseq
      %v3686 = vshrl.u32 %v3685, 7
      %v3687 = vsub.s32 1, %v3686
      %v3688 = vrot.slane %v3679, %v3687
      %v3691 = vmul.f32 %v3663, %v3684
      %v3692 = vmul.f32 %v3647, %v3688
      %v3693 = vmul.f32 %v3664, %v3684
      %v3694 = vmul.f32 %v3648, %v3688
      %v3695 = vmul.f32 %v3665, %v3684
      %v3696 = vmul.f32 %v3649, %v3688
      %v3697 = vmul.f32 %v3666, %v3684
      %v3698 = vmul.f32 %v3650, %v3688
      %v3699 = vmul.f32 %v3667, %v3684
      %v3700 = vmul.f32 %v3651, %v3688
      %v3701 = vmul.f32 %v3668, %v3684
      %v3702 = vmul.f32 %v3652, %v3688
      %v3703 = vmul.f32 %v3669, %v3684
      %v3704 = vmul.f32 %v3653, %v3688
      %v3705 = vmul.f32 %v3670, %v3684
      %v3706 = vmul.f32 %v3654, %v3688
      %v3707 = vmul.f32 %v3671, %v3684
      %v3708 = vmul.f32 %v3655, %v3688
      %v3709 = vmul.f32 %v3672, %v3684
      %v3710 = vmul.f32 %v3656, %v3688
      %v3711 = vmul.f32 %v3673, %v3684
      %v3712 = vmul.f32 %v3657, %v3688
      %v3713 = vmul.f32 %v3674, %v3684
      %v3714 = vmul.f32 %v3658, %v3688
      %v3715 = vmul.f32 %v3675, %v3684
      %v3716 = vmul.f32 %v3659, %v3688
      %v3717 = vmul.f32 %v3676, %v3684
      %v3718 = vmul.f32 %v3660, %v3688
      %v3719 = vmul.f32 %v3677, %v3684
      %v3720 = vmul.f32 %v3661, %v3688
      %v3721 = vmul.f32 %v3678, %v3684
      %v3722 = vmul.f32 %v3662, %v3688
      %v3723 = vpack.c.bf16 %v3693, %v3691
      %v3724 = vpack.c.bf16 %v3694, %v3692
      %v3725 = vpack.c.bf16 %v3697, %v3695
      %v3726 = vpack.c.bf16 %v3698, %v3696
      %v3727 = vpack.c.bf16 %v3701, %v3699
      %v3728 = vpack.c.bf16 %v3702, %v3700
      %v3729 = vpack.c.bf16 %v3705, %v3703
      %v3730 = vpack.c.bf16 %v3706, %v3704
      %v3731 = vpack.c.bf16 %v3709, %v3707
      %v3732 = vpack.c.bf16 %v3710, %v3708
      %v3733 = vpack.c.bf16 %v3713, %v3711
      %v3734 = vpack.c.bf16 %v3714, %v3712
      %v3735 = vpack.c.bf16 %v3717, %v3715
      %v3736 = vpack.c.bf16 %v3718, %v3716
      %v3737 = vpack.c.bf16 %v3721, %v3719
      %v3738 = vpack.c.bf16 %v3722, %v3720
      %3739 = vst [vmem:[#allocation3 + $0x100] sm:$0xff] %v3723
      %3740 = vst [vmem:[#allocation3 + $0x108] sm:$0xff] %v3724
      %3741 = vst [vmem:[#allocation3 + $0x110] sm:$0xff] %v3725
      %3742 = vst [vmem:[#allocation3 + $0x118] sm:$0xff] %v3726
      %3743 = vst [vmem:[#allocation3 + $0x120] sm:$0xff] %v3727
      %3744 = vst [vmem:[#allocation3 + $0x128] sm:$0xff] %v3728
      %3745 = vst [vmem:[#allocation3 + $0x130] sm:$0xff] %v3729
      %3746 = vst [vmem:[#allocation3 + $0x138] sm:$0xff] %v3730
      %3747 = vst [vmem:[#allocation3 + $0x140] sm:$0xff] %v3731
      %3748 = vst [vmem:[#allocation3 + $0x148] sm:$0xff] %v3732
      %3749 = vst [vmem:[#allocation3 + $0x150] sm:$0xff] %v3733
      %3750 = vst [vmem:[#allocation3 + $0x158] sm:$0xff] %v3734
      %3751 = vst [vmem:[#allocation3 + $0x160] sm:$0xff] %v3735
      %3752 = vst [vmem:[#allocation3 + $0x168] sm:$0xff] %v3736
      %3753 = vst [vmem:[#allocation3 + $0x170] sm:$0xff] %v3737
      %3754 = vst [vmem:[#allocation3 + $0x178] sm:$0xff] %v3738
      %3755 = vrot.lane.b32.xlu0 %v3207, 1
      %v3756 = vpop.permute.xlu0 %3755
      %3757 = vrot.lane.b32.xlu0 %v3209, 1
      %v3758 = vpop.permute.xlu0 %3757
      %3759 = vrot.lane.b32.xlu0 %v3211, 1
      %v3760 = vpop.permute.xlu0 %3759
      %3761 = vrot.lane.b32.xlu0 %v3213, 1
      %v3762 = vpop.permute.xlu0 %3761
      %3763 = vrot.lane.b32.xlu0 %v3215, 1
      %v3764 = vpop.permute.xlu0 %3763
      %3765 = vrot.lane.b32.xlu0 %v3217, 1
      %v3766 = vpop.permute.xlu0 %3765
      %3767 = vrot.lane.b32.xlu0 %v3219, 1
      %v3768 = vpop.permute.xlu0 %3767
      %3769 = vrot.lane.b32.xlu0 %v3221, 1
      %v3770 = vpop.permute.xlu0 %3769
      %3771 = vrot.lane.b32.xlu0 %v3223, 1
      %v3772 = vpop.permute.xlu0 %3771
      %3773 = vrot.lane.b32.xlu0 %v3225, 1
      %v3774 = vpop.permute.xlu0 %3773
      %3775 = vrot.lane.b32.xlu0 %v3227, 1
      %v3776 = vpop.permute.xlu0 %3775
      %3777 = vrot.lane.b32.xlu0 %v3229, 1
      %v3778 = vpop.permute.xlu0 %3777
      %3779 = vrot.lane.b32.xlu0 %v3231, 1
      %v3780 = vpop.permute.xlu0 %3779
      %3781 = vrot.lane.b32.xlu0 %v3233, 1
      %v3782 = vpop.permute.xlu0 %3781
      %3783 = vrot.lane.b32.xlu0 %v3235, 1
      %v3784 = vpop.permute.xlu0 %3783
      %3785 = vrot.lane.b32.xlu0 %v3237, 1
      %v3786 = vpop.permute.xlu0 %3785
      %3787 = vrot.lane.b32.xlu0 %v3208, 1
      %v3788 = vpop.permute.xlu0 %3787
      %3789 = vrot.lane.b32.xlu0 %v3210, 1
      %v3790 = vpop.permute.xlu0 %3789
      %3791 = vrot.lane.b32.xlu0 %v3212, 1
      %v3792 = vpop.permute.xlu0 %3791
      %3793 = vrot.lane.b32.xlu0 %v3214, 1
      %v3794 = vpop.permute.xlu0 %3793
      %3795 = vrot.lane.b32.xlu0 %v3216, 1
      %v3796 = vpop.permute.xlu0 %3795
      %3797 = vrot.lane.b32.xlu0 %v3218, 1
      %v3798 = vpop.permute.xlu0 %3797
      %3799 = vrot.lane.b32.xlu0 %v3220, 1
      %v3800 = vpop.permute.xlu0 %3799
      %3801 = vrot.lane.b32.xlu0 %v3222, 1
      %v3802 = vpop.permute.xlu0 %3801
      %3803 = vrot.lane.b32.xlu0 %v3224, 1
      %v3804 = vpop.permute.xlu0 %3803
      %3805 = vrot.lane.b32.xlu0 %v3226, 1
      %v3806 = vpop.permute.xlu0 %3805
      %3807 = vrot.lane.b32.xlu0 %v3228, 1
      %v3808 = vpop.permute.xlu0 %3807
      %3809 = vrot.lane.b32.xlu0 %v3230, 1
      %v3810 = vpop.permute.xlu0 %3809
      %3811 = vrot.lane.b32.xlu0 %v3232, 1
      %v3812 = vpop.permute.xlu0 %3811
      %3813 = vrot.lane.b32.xlu0 %v3234, 1
      %v3814 = vpop.permute.xlu0 %3813
      %3815 = vrot.lane.b32.xlu0 %v3236, 1
      %v3816 = vpop.permute.xlu0 %3815
      %3817 = vrot.lane.b32.xlu0 %v3238, 1
      %v3818 = vpop.permute.xlu0 %3817
      %v3819 = vsel %vm1062, %v3756, %v3788
      %v3820 = vsel %vm1062, %v3758, %v3790
      %v3821 = vsel %vm1062, %v3760, %v3792
      %v3822 = vsel %vm1062, %v3762, %v3794
      %v3823 = vsel %vm1062, %v3764, %v3796
      %v3824 = vsel %vm1062, %v3766, %v3798
      %v3825 = vsel %vm1062, %v3768, %v3800
      %v3826 = vsel %vm1062, %v3770, %v3802
      %v3827 = vsel %vm1062, %v3772, %v3804
      %v3828 = vsel %vm1062, %v3774, %v3806
      %v3829 = vsel %vm1062, %v3776, %v3808
      %v3830 = vsel %vm1062, %v3778, %v3810
      %v3831 = vsel %vm1062, %v3780, %v3812
      %v3832 = vsel %vm1062, %v3782, %v3814
      %v3833 = vsel %vm1062, %v3784, %v3816
      %v3834 = vsel %vm1062, %v3786, %v3818
      %v3835 = vsel %vm1062, %v3788, %v3756
      %v3836 = vsel %vm1062, %v3790, %v3758
      %v3837 = vsel %vm1062, %v3792, %v3760
      %v3838 = vsel %vm1062, %v3794, %v3762
      %v3839 = vsel %vm1062, %v3796, %v3764
      %v3840 = vsel %vm1062, %v3798, %v3766
      %v3841 = vsel %vm1062, %v3800, %v3768
      %v3842 = vsel %vm1062, %v3802, %v3770
      %v3843 = vsel %vm1062, %v3804, %v3772
      %v3844 = vsel %vm1062, %v3806, %v3774
      %v3845 = vsel %vm1062, %v3808, %v3776
      %v3846 = vsel %vm1062, %v3810, %v3778
      %v3847 = vsel %vm1062, %v3812, %v3780
      %v3848 = vsel %vm1062, %v3814, %v3782
      %v3849 = vsel %vm1062, %v3816, %v3784
      %v3850 = vsel %vm1062, %v3818, %v3786
      %v3851 = vld [vmem:[%s1067] sm:$0x3]
      %v3853 = vlaneseq
      %v3854 = vshrl.u32 %v3853, 7
      %v3855 = vsub.s32 0, %v3854
      %v3856 = vrot.slane %v3851, %v3855
      %v3857 = vlaneseq
      %v3858 = vshrl.u32 %v3857, 7
      %v3859 = vsub.s32 1, %v3858
      %v3860 = vrot.slane %v3851, %v3859
      %v3863 = vmul.f32 %v3835, %v3856
      %v3864 = vmul.f32 %v3819, %v3860
      %v3865 = vmul.f32 %v3836, %v3856
      %v3866 = vmul.f32 %v3820, %v3860
      %v3867 = vmul.f32 %v3837, %v3856
      %v3868 = vmul.f32 %v3821, %v3860
      %v3869 = vmul.f32 %v3838, %v3856
      %v3870 = vmul.f32 %v3822, %v3860
      %v3871 = vmul.f32 %v3839, %v3856
      %v3872 = vmul.f32 %v3823, %v3860
      %v3873 = vmul.f32 %v3840, %v3856
      %v3874 = vmul.f32 %v3824, %v3860
      %v3875 = vmul.f32 %v3841, %v3856
      %v3876 = vmul.f32 %v3825, %v3860
      %v3877 = vmul.f32 %v3842, %v3856
      %v3878 = vmul.f32 %v3826, %v3860
      %v3879 = vmul.f32 %v3843, %v3856
      %v3880 = vmul.f32 %v3827, %v3860
      %v3881 = vmul.f32 %v3844, %v3856
      %v3882 = vmul.f32 %v3828, %v3860
      %v3883 = vmul.f32 %v3845, %v3856
      %v3884 = vmul.f32 %v3829, %v3860
      %v3885 = vmul.f32 %v3846, %v3856
      %v3886 = vmul.f32 %v3830, %v3860
      %v3887 = vmul.f32 %v3847, %v3856
      %v3888 = vmul.f32 %v3831, %v3860
      %v3889 = vmul.f32 %v3848, %v3856
      %v3890 = vmul.f32 %v3832, %v3860
      %v3891 = vmul.f32 %v3849, %v3856
      %v3892 = vmul.f32 %v3833, %v3860
      %v3893 = vmul.f32 %v3850, %v3856
      %v3894 = vmul.f32 %v3834, %v3860
      %v3895 = vpack.c.bf16 %v3865, %v3863
      %v3896 = vpack.c.bf16 %v3866, %v3864
      %v3897 = vpack.c.bf16 %v3869, %v3867
      %v3898 = vpack.c.bf16 %v3870, %v3868
      %v3899 = vpack.c.bf16 %v3873, %v3871
      %v3900 = vpack.c.bf16 %v3874, %v3872
      %v3901 = vpack.c.bf16 %v3877, %v3875
      %v3902 = vpack.c.bf16 %v3878, %v3876
      %v3903 = vpack.c.bf16 %v3881, %v3879
      %v3904 = vpack.c.bf16 %v3882, %v3880
      %v3905 = vpack.c.bf16 %v3885, %v3883
      %v3906 = vpack.c.bf16 %v3886, %v3884
      %v3907 = vpack.c.bf16 %v3889, %v3887
      %v3908 = vpack.c.bf16 %v3890, %v3888
      %v3909 = vpack.c.bf16 %v3893, %v3891
      %v3910 = vpack.c.bf16 %v3894, %v3892
      %3911 = vst [vmem:[#allocation3 + $0x180] sm:$0xff] %v3895
      %3912 = vst [vmem:[#allocation3 + $0x188] sm:$0xff] %v3896
      %3913 = vst [vmem:[#allocation3 + $0x190] sm:$0xff] %v3897
      %3914 = vst [vmem:[#allocation3 + $0x198] sm:$0xff] %v3898
      %3915 = vst [vmem:[#allocation3 + $0x1a0] sm:$0xff] %v3899
      %3916 = vst [vmem:[#allocation3 + $0x1a8] sm:$0xff] %v3900
      %3917 = vst [vmem:[#allocation3 + $0x1b0] sm:$0xff] %v3901
      %3918 = vst [vmem:[#allocation3 + $0x1b8] sm:$0xff] %v3902
      %3919 = vst [vmem:[#allocation3 + $0x1c0] sm:$0xff] %v3903
      %3920 = vst [vmem:[#allocation3 + $0x1c8] sm:$0xff] %v3904
      %3921 = vst [vmem:[#allocation3 + $0x1d0] sm:$0xff] %v3905
      %3922 = vst [vmem:[#allocation3 + $0x1d8] sm:$0xff] %v3906
      %3923 = vst [vmem:[#allocation3 + $0x1e0] sm:$0xff] %v3907
      %3924 = vst [vmem:[#allocation3 + $0x1e8] sm:$0xff] %v3908
      %3925 = vst [vmem:[#allocation3 + $0x1f0] sm:$0xff] %v3909
      %3926 = vst [vmem:[#allocation3 + $0x1f8] sm:$0xff] %v3910
      %v3927 = vpack.c.bf16 %v3209, %v3207
      %v3928 = vpack.c.bf16 %v3210, %v3208
      %v3929 = vpack.c.bf16 %v3213, %v3211
      %v3930 = vpack.c.bf16 %v3214, %v3212
      %v3931 = vpack.c.bf16 %v3217, %v3215
      %v3932 = vpack.c.bf16 %v3218, %v3216
      %v3933 = vpack.c.bf16 %v3221, %v3219
      %v3934 = vpack.c.bf16 %v3222, %v3220
      %v3935 = vpack.c.bf16 %v3225, %v3223
      %v3936 = vpack.c.bf16 %v3226, %v3224
      %v3937 = vpack.c.bf16 %v3229, %v3227
      %v3938 = vpack.c.bf16 %v3230, %v3228
      %v3939 = vpack.c.bf16 %v3233, %v3231
      %v3940 = vpack.c.bf16 %v3234, %v3232
      %v3941 = vpack.c.bf16 %v3237, %v3235
      %v3942 = vpack.c.bf16 %v3238, %v3236
      %3943 = vst [vmem:[#allocation3 + $0x200] sm:$0xff] %v3927
      %3944 = vst [vmem:[#allocation3 + $0x208] sm:$0xff] %v3928
      %3945 = vst [vmem:[#allocation3 + $0x210] sm:$0xff] %v3929
      %3946 = vst [vmem:[#allocation3 + $0x218] sm:$0xff] %v3930
      %3947 = vst [vmem:[#allocation3 + $0x220] sm:$0xff] %v3931
      %3948 = vst [vmem:[#allocation3 + $0x228] sm:$0xff] %v3932
      %3949 = vst [vmem:[#allocation3 + $0x230] sm:$0xff] %v3933
      %3950 = vst [vmem:[#allocation3 + $0x238] sm:$0xff] %v3934
      %3951 = vst [vmem:[#allocation3 + $0x240] sm:$0xff] %v3935
      %3952 = vst [vmem:[#allocation3 + $0x248] sm:$0xff] %v3936
      %3953 = vst [vmem:[#allocation3 + $0x250] sm:$0xff] %v3937
      %3954 = vst [vmem:[#allocation3 + $0x258] sm:$0xff] %v3938
      %3955 = vst [vmem:[#allocation3 + $0x260] sm:$0xff] %v3939
      %3956 = vst [vmem:[#allocation3 + $0x268] sm:$0xff] %v3940
      %3957 = vst [vmem:[#allocation3 + $0x270] sm:$0xff] %v3941
      %3958 = vst [vmem:[#allocation3 + $0x278] sm:$0xff] %v3942
      %3959 = vrot.lane.b32.xlu0 %v3207, 127
      %v3960 = vpop.permute.xlu0 %3959
      %3961 = vrot.lane.b32.xlu0 %v3209, 127
      %v3962 = vpop.permute.xlu0 %3961
      %3963 = vrot.lane.b32.xlu0 %v3211, 127
      %v3964 = vpop.permute.xlu0 %3963
      %3965 = vrot.lane.b32.xlu0 %v3213, 127
      %v3966 = vpop.permute.xlu0 %3965
      %3967 = vrot.lane.b32.xlu0 %v3215, 127
      %v3968 = vpop.permute.xlu0 %3967
      %3969 = vrot.lane.b32.xlu0 %v3217, 127
      %v3970 = vpop.permute.xlu0 %3969
      %3971 = vrot.lane.b32.xlu0 %v3219, 127
      %v3972 = vpop.permute.xlu0 %3971
      %3973 = vrot.lane.b32.xlu0 %v3221, 127
      %v3974 = vpop.permute.xlu0 %3973
      %3975 = vrot.lane.b32.xlu0 %v3223, 127
      %v3976 = vpop.permute.xlu0 %3975
      %3977 = vrot.lane.b32.xlu0 %v3225, 127
      %v3978 = vpop.permute.xlu0 %3977
      %3979 = vrot.lane.b32.xlu0 %v3227, 127
      %v3980 = vpop.permute.xlu0 %3979
      %3981 = vrot.lane.b32.xlu0 %v3229, 127
      %v3982 = vpop.permute.xlu0 %3981
      %3983 = vrot.lane.b32.xlu0 %v3231, 127
      %v3984 = vpop.permute.xlu0 %3983
      %3985 = vrot.lane.b32.xlu0 %v3233, 127
      %v3986 = vpop.permute.xlu0 %3985
      %3987 = vrot.lane.b32.xlu0 %v3235, 127
      %v3988 = vpop.permute.xlu0 %3987
      %3989 = vrot.lane.b32.xlu0 %v3237, 127
      %v3990 = vpop.permute.xlu0 %3989
      %3991 = vrot.lane.b32.xlu0 %v3208, 127
      %v3992 = vpop.permute.xlu0 %3991
      %3993 = vrot.lane.b32.xlu0 %v3210, 127
      %v3994 = vpop.permute.xlu0 %3993
      %3995 = vrot.lane.b32.xlu0 %v3212, 127
      %v3996 = vpop.permute.xlu0 %3995
      %3997 = vrot.lane.b32.xlu0 %v3214, 127
      %v3998 = vpop.permute.xlu0 %3997
      %3999 = vrot.lane.b32.xlu0 %v3216, 127
      %v4000 = vpop.permute.xlu0 %3999
      %4001 = vrot.lane.b32.xlu0 %v3218, 127
      %v4002 = vpop.permute.xlu0 %4001
      %4003 = vrot.lane.b32.xlu0 %v3220, 127
      %v4004 = vpop.permute.xlu0 %4003
      %4005 = vrot.lane.b32.xlu0 %v3222, 127
      %v4006 = vpop.permute.xlu0 %4005
      %4007 = vrot.lane.b32.xlu0 %v3224, 127
      %v4008 = vpop.permute.xlu0 %4007
      %4009 = vrot.lane.b32.xlu0 %v3226, 127
      %v4010 = vpop.permute.xlu0 %4009
      %4011 = vrot.lane.b32.xlu0 %v3228, 127
      %v4012 = vpop.permute.xlu0 %4011
      %4013 = vrot.lane.b32.xlu0 %v3230, 127
      %v4014 = vpop.permute.xlu0 %4013
      %4015 = vrot.lane.b32.xlu0 %v3232, 127
      %v4016 = vpop.permute.xlu0 %4015
      %4017 = vrot.lane.b32.xlu0 %v3234, 127
      %v4018 = vpop.permute.xlu0 %4017
      %4019 = vrot.lane.b32.xlu0 %v3236, 127
      %v4020 = vpop.permute.xlu0 %4019
      %4021 = vrot.lane.b32.xlu0 %v3238, 127
      %v4022 = vpop.permute.xlu0 %4021
      %v4023 = vsel %vm1100, %v3960, %v3992
      %v4024 = vsel %vm1100, %v3962, %v3994
      %v4025 = vsel %vm1100, %v3964, %v3996
      %v4026 = vsel %vm1100, %v3966, %v3998
      %v4027 = vsel %vm1100, %v3968, %v4000
      %v4028 = vsel %vm1100, %v3970, %v4002
      %v4029 = vsel %vm1100, %v3972, %v4004
      %v4030 = vsel %vm1100, %v3974, %v4006
      %v4031 = vsel %vm1100, %v3976, %v4008
      %v4032 = vsel %vm1100, %v3978, %v4010
      %v4033 = vsel %vm1100, %v3980, %v4012
      %v4034 = vsel %vm1100, %v3982, %v4014
      %v4035 = vsel %vm1100, %v3984, %v4016
      %v4036 = vsel %vm1100, %v3986, %v4018
      %v4037 = vsel %vm1100, %v3988, %v4020
      %v4038 = vsel %vm1100, %v3990, %v4022
      %v4039 = vsel %vm1100, %v3992, %v3960
      %v4040 = vsel %vm1100, %v3994, %v3962
      %v4041 = vsel %vm1100, %v3996, %v3964
      %v4042 = vsel %vm1100, %v3998, %v3966
      %v4043 = vsel %vm1100, %v4000, %v3968
      %v4044 = vsel %vm1100, %v4002, %v3970
      %v4045 = vsel %vm1100, %v4004, %v3972
      %v4046 = vsel %vm1100, %v4006, %v3974
      %v4047 = vsel %vm1100, %v4008, %v3976
      %v4048 = vsel %vm1100, %v4010, %v3978
      %v4049 = vsel %vm1100, %v4012, %v3980
      %v4050 = vsel %vm1100, %v4014, %v3982
      %v4051 = vsel %vm1100, %v4016, %v3984
      %v4052 = vsel %vm1100, %v4018, %v3986
      %v4053 = vsel %vm1100, %v4020, %v3988
      %v4054 = vsel %vm1100, %v4022, %v3990
      %v4055 = vld [vmem:[%s1105] sm:$0x3]
      %v4057 = vlaneseq
      %v4058 = vshrl.u32 %v4057, 7
      %v4059 = vsub.s32 0, %v4058
      %v4060 = vrot.slane %v4055, %v4059
      %v4061 = vlaneseq
      %v4062 = vshrl.u32 %v4061, 7
      %v4063 = vsub.s32 1, %v4062
      %v4064 = vrot.slane %v4055, %v4063
      %v4067 = vmul.f32 %v4023, %v4060
      %v4068 = vmul.f32 %v4039, %v4064
      %v4069 = vmul.f32 %v4024, %v4060
      %v4070 = vmul.f32 %v4040, %v4064
      %v4071 = vmul.f32 %v4025, %v4060
      %v4072 = vmul.f32 %v4041, %v4064
      %v4073 = vmul.f32 %v4026, %v4060
      %v4074 = vmul.f32 %v4042, %v4064
      %v4075 = vmul.f32 %v4027, %v4060
      %v4076 = vmul.f32 %v4043, %v4064
      %v4077 = vmul.f32 %v4028, %v4060
      %v4078 = vmul.f32 %v4044, %v4064
      %v4079 = vmul.f32 %v4029, %v4060
      %v4080 = vmul.f32 %v4045, %v4064
      %v4081 = vmul.f32 %v4030, %v4060
      %v4082 = vmul.f32 %v4046, %v4064
      %v4083 = vmul.f32 %v4031, %v4060
      %v4084 = vmul.f32 %v4047, %v4064
      %v4085 = vmul.f32 %v4032, %v4060
      %v4086 = vmul.f32 %v4048, %v4064
      %v4087 = vmul.f32 %v4033, %v4060
      %v4088 = vmul.f32 %v4049, %v4064
      %v4089 = vmul.f32 %v4034, %v4060
      %v4090 = vmul.f32 %v4050, %v4064
      %v4091 = vmul.f32 %v4035, %v4060
      %v4092 = vmul.f32 %v4051, %v4064
      %v4093 = vmul.f32 %v4036, %v4060
      %v4094 = vmul.f32 %v4052, %v4064
      %v4095 = vmul.f32 %v4037, %v4060
      %v4096 = vmul.f32 %v4053, %v4064
      %v4097 = vmul.f32 %v4038, %v4060
      %v4098 = vmul.f32 %v4054, %v4064
      %v4099 = vpack.c.bf16 %v4069, %v4067
      %v4100 = vpack.c.bf16 %v4070, %v4068
      %v4101 = vpack.c.bf16 %v4073, %v4071
      %v4102 = vpack.c.bf16 %v4074, %v4072
      %v4103 = vpack.c.bf16 %v4077, %v4075
      %v4104 = vpack.c.bf16 %v4078, %v4076
      %v4105 = vpack.c.bf16 %v4081, %v4079
      %v4106 = vpack.c.bf16 %v4082, %v4080
      %v4107 = vpack.c.bf16 %v4085, %v4083
      %v4108 = vpack.c.bf16 %v4086, %v4084
      %v4109 = vpack.c.bf16 %v4089, %v4087
      %v4110 = vpack.c.bf16 %v4090, %v4088
      %v4111 = vpack.c.bf16 %v4093, %v4091
      %v4112 = vpack.c.bf16 %v4094, %v4092
      %v4113 = vpack.c.bf16 %v4097, %v4095
      %v4114 = vpack.c.bf16 %v4098, %v4096
      %4115 = vst [vmem:[#allocation3 + $0x280] sm:$0xff] %v4099
      %4116 = vst [vmem:[#allocation3 + $0x288] sm:$0xff] %v4100
      %4117 = vst [vmem:[#allocation3 + $0x290] sm:$0xff] %v4101
      %4118 = vst [vmem:[#allocation3 + $0x298] sm:$0xff] %v4102
      %4119 = vst [vmem:[#allocation3 + $0x2a0] sm:$0xff] %v4103
      %4120 = vst [vmem:[#allocation3 + $0x2a8] sm:$0xff] %v4104
      %4121 = vst [vmem:[#allocation3 + $0x2b0] sm:$0xff] %v4105
      %4122 = vst [vmem:[#allocation3 + $0x2b8] sm:$0xff] %v4106
      %4123 = vst [vmem:[#allocation3 + $0x2c0] sm:$0xff] %v4107
      %4124 = vst [vmem:[#allocation3 + $0x2c8] sm:$0xff] %v4108
      %4125 = vst [vmem:[#allocation3 + $0x2d0] sm:$0xff] %v4109
      %4126 = vst [vmem:[#allocation3 + $0x2d8] sm:$0xff] %v4110
      %4127 = vst [vmem:[#allocation3 + $0x2e0] sm:$0xff] %v4111
      %4128 = vst [vmem:[#allocation3 + $0x2e8] sm:$0xff] %v4112
      %4129 = vst [vmem:[#allocation3 + $0x2f0] sm:$0xff] %v4113
      %4130 = vst [vmem:[#allocation3 + $0x2f8] sm:$0xff] %v4114
      %4131 = vrot.lane.b32.xlu0 %v3207, 113
      %v4132 = vpop.permute.xlu0 %4131
      %4133 = vrot.lane.b32.xlu0 %v3209, 113
      %v4134 = vpop.permute.xlu0 %4133
      %4135 = vrot.lane.b32.xlu0 %v3211, 113
      %v4136 = vpop.permute.xlu0 %4135
      %4137 = vrot.lane.b32.xlu0 %v3213, 113
      %v4138 = vpop.permute.xlu0 %4137
      %4139 = vrot.lane.b32.xlu0 %v3215, 113
      %v4140 = vpop.permute.xlu0 %4139
      %4141 = vrot.lane.b32.xlu0 %v3217, 113
      %v4142 = vpop.permute.xlu0 %4141
      %4143 = vrot.lane.b32.xlu0 %v3219, 113
      %v4144 = vpop.permute.xlu0 %4143
      %4145 = vrot.lane.b32.xlu0 %v3221, 113
      %v4146 = vpop.permute.xlu0 %4145
      %4147 = vrot.lane.b32.xlu0 %v3223, 113
      %v4148 = vpop.permute.xlu0 %4147
      %4149 = vrot.lane.b32.xlu0 %v3225, 113
      %v4150 = vpop.permute.xlu0 %4149
      %4151 = vrot.lane.b32.xlu0 %v3227, 113
      %v4152 = vpop.permute.xlu0 %4151
      %4153 = vrot.lane.b32.xlu0 %v3229, 113
      %v4154 = vpop.permute.xlu0 %4153
      %4155 = vrot.lane.b32.xlu0 %v3231, 113
      %v4156 = vpop.permute.xlu0 %4155
      %4157 = vrot.lane.b32.xlu0 %v3233, 113
      %v4158 = vpop.permute.xlu0 %4157
      %4159 = vrot.lane.b32.xlu0 %v3235, 113
      %v4160 = vpop.permute.xlu0 %4159
      %4161 = vrot.lane.b32.xlu0 %v3237, 113
      %v4162 = vpop.permute.xlu0 %4161
      %4163 = vrot.lane.b32.xlu0 %v3208, 113
      %v4164 = vpop.permute.xlu0 %4163
      %4165 = vrot.lane.b32.xlu0 %v3210, 113
      %v4166 = vpop.permute.xlu0 %4165
      %4167 = vrot.lane.b32.xlu0 %v3212, 113
      %v4168 = vpop.permute.xlu0 %4167
      %4169 = vrot.lane.b32.xlu0 %v3214, 113
      %v4170 = vpop.permute.xlu0 %4169
      %4171 = vrot.lane.b32.xlu0 %v3216, 113
      %v4172 = vpop.permute.xlu0 %4171
      %4173 = vrot.lane.b32.xlu0 %v3218, 113
      %v4174 = vpop.permute.xlu0 %4173
      %4175 = vrot.lane.b32.xlu0 %v3220, 113
      %v4176 = vpop.permute.xlu0 %4175
      %4177 = vrot.lane.b32.xlu0 %v3222, 113
      %v4178 = vpop.permute.xlu0 %4177
      %4179 = vrot.lane.b32.xlu0 %v3224, 113
      %v4180 = vpop.permute.xlu0 %4179
      %4181 = vrot.lane.b32.xlu0 %v3226, 113
      %v4182 = vpop.permute.xlu0 %4181
      %4183 = vrot.lane.b32.xlu0 %v3228, 113
      %v4184 = vpop.permute.xlu0 %4183
      %4185 = vrot.lane.b32.xlu0 %v3230, 113
      %v4186 = vpop.permute.xlu0 %4185
      %4187 = vrot.lane.b32.xlu0 %v3232, 113
      %v4188 = vpop.permute.xlu0 %4187
      %4189 = vrot.lane.b32.xlu0 %v3234, 113
      %v4190 = vpop.permute.xlu0 %4189
      %4191 = vrot.lane.b32.xlu0 %v3236, 113
      %v4192 = vpop.permute.xlu0 %4191
      %4193 = vrot.lane.b32.xlu0 %v3238, 113
      %v4194 = vpop.permute.xlu0 %4193
      %v4195 = vsel %vm1134, %v4132, %v4164
      %v4196 = vsel %vm1134, %v4134, %v4166
      %v4197 = vsel %vm1134, %v4136, %v4168
      %v4198 = vsel %vm1134, %v4138, %v4170
      %v4199 = vsel %vm1134, %v4140, %v4172
      %v4200 = vsel %vm1134, %v4142, %v4174
      %v4201 = vsel %vm1134, %v4144, %v4176
      %v4202 = vsel %vm1134, %v4146, %v4178
      %v4203 = vsel %vm1134, %v4148, %v4180
      %v4204 = vsel %vm1134, %v4150, %v4182
      %v4205 = vsel %vm1134, %v4152, %v4184
      %v4206 = vsel %vm1134, %v4154, %v4186
      %v4207 = vsel %vm1134, %v4156, %v4188
      %v4208 = vsel %vm1134, %v4158, %v4190
      %v4209 = vsel %vm1134, %v4160, %v4192
      %v4210 = vsel %vm1134, %v4162, %v4194
      %v4211 = vsel %vm1134, %v4164, %v4132
      %v4212 = vsel %vm1134, %v4166, %v4134
      %v4213 = vsel %vm1134, %v4168, %v4136
      %v4214 = vsel %vm1134, %v4170, %v4138
      %v4215 = vsel %vm1134, %v4172, %v4140
      %v4216 = vsel %vm1134, %v4174, %v4142
      %v4217 = vsel %vm1134, %v4176, %v4144
      %v4218 = vsel %vm1134, %v4178, %v4146
      %v4219 = vsel %vm1134, %v4180, %v4148
      %v4220 = vsel %vm1134, %v4182, %v4150
      %v4221 = vsel %vm1134, %v4184, %v4152
      %v4222 = vsel %vm1134, %v4186, %v4154
      %v4223 = vsel %vm1134, %v4188, %v4156
      %v4224 = vsel %vm1134, %v4190, %v4158
      %v4225 = vsel %vm1134, %v4192, %v4160
      %v4226 = vsel %vm1134, %v4194, %v4162
      %v4227 = vld [vmem:[%s1139] sm:$0x3]
      %v4229 = vlaneseq
      %v4230 = vshrl.u32 %v4229, 7
      %v4231 = vsub.s32 0, %v4230
      %v4232 = vrot.slane %v4227, %v4231
      %v4233 = vlaneseq
      %v4234 = vshrl.u32 %v4233, 7
      %v4235 = vsub.s32 1, %v4234
      %v4236 = vrot.slane %v4227, %v4235
      %v4239 = vmul.f32 %v4195, %v4232
      %v4240 = vmul.f32 %v4211, %v4236
      %v4241 = vmul.f32 %v4196, %v4232
      %v4242 = vmul.f32 %v4212, %v4236
      %v4243 = vmul.f32 %v4197, %v4232
      %v4244 = vmul.f32 %v4213, %v4236
      %v4245 = vmul.f32 %v4198, %v4232
      %v4246 = vmul.f32 %v4214, %v4236
      %v4247 = vmul.f32 %v4199, %v4232
      %v4248 = vmul.f32 %v4215, %v4236
      %v4249 = vmul.f32 %v4200, %v4232
      %v4250 = vmul.f32 %v4216, %v4236
      %v4251 = vmul.f32 %v4201, %v4232
      %v4252 = vmul.f32 %v4217, %v4236
      %v4253 = vmul.f32 %v4202, %v4232
      %v4254 = vmul.f32 %v4218, %v4236
      %v4255 = vmul.f32 %v4203, %v4232
      %v4256 = vmul.f32 %v4219, %v4236
      %v4257 = vmul.f32 %v4204, %v4232
      %v4258 = vmul.f32 %v4220, %v4236
      %v4259 = vmul.f32 %v4205, %v4232
      %v4260 = vmul.f32 %v4221, %v4236
      %v4261 = vmul.f32 %v4206, %v4232
      %v4262 = vmul.f32 %v4222, %v4236
      %v4263 = vmul.f32 %v4207, %v4232
      %v4264 = vmul.f32 %v4223, %v4236
      %v4265 = vmul.f32 %v4208, %v4232
      %v4266 = vmul.f32 %v4224, %v4236
      %v4267 = vmul.f32 %v4209, %v4232
      %v4268 = vmul.f32 %v4225, %v4236
      %v4269 = vmul.f32 %v4210, %v4232
      %v4270 = vmul.f32 %v4226, %v4236
      %v4271 = vpack.c.bf16 %v4241, %v4239
      %v4272 = vpack.c.bf16 %v4242, %v4240
      %v4273 = vpack.c.bf16 %v4245, %v4243
      %v4274 = vpack.c.bf16 %v4246, %v4244
      %v4275 = vpack.c.bf16 %v4249, %v4247
      %v4276 = vpack.c.bf16 %v4250, %v4248
      %v4277 = vpack.c.bf16 %v4253, %v4251
      %v4278 = vpack.c.bf16 %v4254, %v4252
      %v4279 = vpack.c.bf16 %v4257, %v4255
      %v4280 = vpack.c.bf16 %v4258, %v4256
      %v4281 = vpack.c.bf16 %v4261, %v4259
      %v4282 = vpack.c.bf16 %v4262, %v4260
      %v4283 = vpack.c.bf16 %v4265, %v4263
      %v4284 = vpack.c.bf16 %v4266, %v4264
      %v4285 = vpack.c.bf16 %v4269, %v4267
      %v4286 = vpack.c.bf16 %v4270, %v4268
      %4287 = vst [vmem:[#allocation3 + $0x300] sm:$0xff] %v4271
      %4288 = vst [vmem:[#allocation3 + $0x308] sm:$0xff] %v4272
      %4289 = vst [vmem:[#allocation3 + $0x310] sm:$0xff] %v4273
      %4290 = vst [vmem:[#allocation3 + $0x318] sm:$0xff] %v4274
      %4291 = vst [vmem:[#allocation3 + $0x320] sm:$0xff] %v4275
      %4292 = vst [vmem:[#allocation3 + $0x328] sm:$0xff] %v4276
      %4293 = vst [vmem:[#allocation3 + $0x330] sm:$0xff] %v4277
      %4294 = vst [vmem:[#allocation3 + $0x338] sm:$0xff] %v4278
      %4295 = vst [vmem:[#allocation3 + $0x340] sm:$0xff] %v4279
      %4296 = vst [vmem:[#allocation3 + $0x348] sm:$0xff] %v4280
      %4297 = vst [vmem:[#allocation3 + $0x350] sm:$0xff] %v4281
      %4298 = vst [vmem:[#allocation3 + $0x358] sm:$0xff] %v4282
      %4299 = vst [vmem:[#allocation3 + $0x360] sm:$0xff] %v4283
      %4300 = vst [vmem:[#allocation3 + $0x368] sm:$0xff] %v4284
      %4301 = vst [vmem:[#allocation3 + $0x370] sm:$0xff] %v4285
      %4302 = vst [vmem:[#allocation3 + $0x378] sm:$0xff] %v4286
      %4303 = vrot.lane.b32.xlu0 %v3207, 112
      %v4304 = vpop.permute.xlu0 %4303
      %4305 = vrot.lane.b32.xlu0 %v3209, 112
      %v4306 = vpop.permute.xlu0 %4305
      %4307 = vrot.lane.b32.xlu0 %v3211, 112
      %v4308 = vpop.permute.xlu0 %4307
      %4309 = vrot.lane.b32.xlu0 %v3213, 112
      %v4310 = vpop.permute.xlu0 %4309
      %4311 = vrot.lane.b32.xlu0 %v3215, 112
      %v4312 = vpop.permute.xlu0 %4311
      %4313 = vrot.lane.b32.xlu0 %v3217, 112
      %v4314 = vpop.permute.xlu0 %4313
      %4315 = vrot.lane.b32.xlu0 %v3219, 112
      %v4316 = vpop.permute.xlu0 %4315
      %4317 = vrot.lane.b32.xlu0 %v3221, 112
      %v4318 = vpop.permute.xlu0 %4317
      %4319 = vrot.lane.b32.xlu0 %v3223, 112
      %v4320 = vpop.permute.xlu0 %4319
      %4321 = vrot.lane.b32.xlu0 %v3225, 112
      %v4322 = vpop.permute.xlu0 %4321
      %4323 = vrot.lane.b32.xlu0 %v3227, 112
      %v4324 = vpop.permute.xlu0 %4323
      %4325 = vrot.lane.b32.xlu0 %v3229, 112
      %v4326 = vpop.permute.xlu0 %4325
      %4327 = vrot.lane.b32.xlu0 %v3231, 112
      %v4328 = vpop.permute.xlu0 %4327
      %4329 = vrot.lane.b32.xlu0 %v3233, 112
      %v4330 = vpop.permute.xlu0 %4329
      %4331 = vrot.lane.b32.xlu0 %v3235, 112
      %v4332 = vpop.permute.xlu0 %4331
      %4333 = vrot.lane.b32.xlu0 %v3237, 112
      %v4334 = vpop.permute.xlu0 %4333
      %4335 = vrot.lane.b32.xlu0 %v3208, 112
      %v4336 = vpop.permute.xlu0 %4335
      %4337 = vrot.lane.b32.xlu0 %v3210, 112
      %v4338 = vpop.permute.xlu0 %4337
      %4339 = vrot.lane.b32.xlu0 %v3212, 112
      %v4340 = vpop.permute.xlu0 %4339
      %4341 = vrot.lane.b32.xlu0 %v3214, 112
      %v4342 = vpop.permute.xlu0 %4341
      %4343 = vrot.lane.b32.xlu0 %v3216, 112
      %v4344 = vpop.permute.xlu0 %4343
      %4345 = vrot.lane.b32.xlu0 %v3218, 112
      %v4346 = vpop.permute.xlu0 %4345
      %4347 = vrot.lane.b32.xlu0 %v3220, 112
      %v4348 = vpop.permute.xlu0 %4347
      %4349 = vrot.lane.b32.xlu0 %v3222, 112
      %v4350 = vpop.permute.xlu0 %4349
      %4351 = vrot.lane.b32.xlu0 %v3224, 112
      %v4352 = vpop.permute.xlu0 %4351
      %4353 = vrot.lane.b32.xlu0 %v3226, 112
      %v4354 = vpop.permute.xlu0 %4353
      %4355 = vrot.lane.b32.xlu0 %v3228, 112
      %v4356 = vpop.permute.xlu0 %4355
      %4357 = vrot.lane.b32.xlu0 %v3230, 112
      %v4358 = vpop.permute.xlu0 %4357
      %4359 = vrot.lane.b32.xlu0 %v3232, 112
      %v4360 = vpop.permute.xlu0 %4359
      %4361 = vrot.lane.b32.xlu0 %v3234, 112
      %v4362 = vpop.permute.xlu0 %4361
      %4363 = vrot.lane.b32.xlu0 %v3236, 112
      %v4364 = vpop.permute.xlu0 %4363
      %4365 = vrot.lane.b32.xlu0 %v3238, 112
      %v4366 = vpop.permute.xlu0 %4365
      %v4367 = vsel %vm1168, %v4304, %v4336
      %v4368 = vsel %vm1168, %v4306, %v4338
      %v4369 = vsel %vm1168, %v4308, %v4340
      %v4370 = vsel %vm1168, %v4310, %v4342
      %v4371 = vsel %vm1168, %v4312, %v4344
      %v4372 = vsel %vm1168, %v4314, %v4346
      %v4373 = vsel %vm1168, %v4316, %v4348
      %v4374 = vsel %vm1168, %v4318, %v4350
      %v4375 = vsel %vm1168, %v4320, %v4352
      %v4376 = vsel %vm1168, %v4322, %v4354
      %v4377 = vsel %vm1168, %v4324, %v4356
      %v4378 = vsel %vm1168, %v4326, %v4358
      %v4379 = vsel %vm1168, %v4328, %v4360
      %v4380 = vsel %vm1168, %v4330, %v4362
      %v4381 = vsel %vm1168, %v4332, %v4364
      %v4382 = vsel %vm1168, %v4334, %v4366
      %v4383 = vsel %vm1168, %v4336, %v4304
      %v4384 = vsel %vm1168, %v4338, %v4306
      %v4385 = vsel %vm1168, %v4340, %v4308
      %v4386 = vsel %vm1168, %v4342, %v4310
      %v4387 = vsel %vm1168, %v4344, %v4312
      %v4388 = vsel %vm1168, %v4346, %v4314
      %v4389 = vsel %vm1168, %v4348, %v4316
      %v4390 = vsel %vm1168, %v4350, %v4318
      %v4391 = vsel %vm1168, %v4352, %v4320
      %v4392 = vsel %vm1168, %v4354, %v4322
      %v4393 = vsel %vm1168, %v4356, %v4324
      %v4394 = vsel %vm1168, %v4358, %v4326
      %v4395 = vsel %vm1168, %v4360, %v4328
      %v4396 = vsel %vm1168, %v4362, %v4330
      %v4397 = vsel %vm1168, %v4364, %v4332
      %v4398 = vsel %vm1168, %v4366, %v4334
      %v4399 = vld [vmem:[%s1173] sm:$0x3]
      %v4401 = vlaneseq
      %v4402 = vshrl.u32 %v4401, 7
      %v4403 = vsub.s32 0, %v4402
      %v4404 = vrot.slane %v4399, %v4403
      %v4405 = vlaneseq
      %v4406 = vshrl.u32 %v4405, 7
      %v4407 = vsub.s32 1, %v4406
      %v4408 = vrot.slane %v4399, %v4407
      %v4411 = vmul.f32 %v4367, %v4404
      %v4412 = vmul.f32 %v4383, %v4408
      %v4413 = vmul.f32 %v4368, %v4404
      %v4414 = vmul.f32 %v4384, %v4408
      %v4415 = vmul.f32 %v4369, %v4404
      %v4416 = vmul.f32 %v4385, %v4408
      %v4417 = vmul.f32 %v4370, %v4404
      %v4418 = vmul.f32 %v4386, %v4408
      %v4419 = vmul.f32 %v4371, %v4404
      %v4420 = vmul.f32 %v4387, %v4408
      %v4421 = vmul.f32 %v4372, %v4404
      %v4422 = vmul.f32 %v4388, %v4408
      %v4423 = vmul.f32 %v4373, %v4404
      %v4424 = vmul.f32 %v4389, %v4408
      %v4425 = vmul.f32 %v4374, %v4404
      %v4426 = vmul.f32 %v4390, %v4408
      %v4427 = vmul.f32 %v4375, %v4404
      %v4428 = vmul.f32 %v4391, %v4408
      %v4429 = vmul.f32 %v4376, %v4404
      %v4430 = vmul.f32 %v4392, %v4408
      %v4431 = vmul.f32 %v4377, %v4404
      %v4432 = vmul.f32 %v4393, %v4408
      %v4433 = vmul.f32 %v4378, %v4404
      %v4434 = vmul.f32 %v4394, %v4408
      %v4435 = vmul.f32 %v4379, %v4404
      %v4436 = vmul.f32 %v4395, %v4408
      %v4437 = vmul.f32 %v4380, %v4404
      %v4438 = vmul.f32 %v4396, %v4408
      %v4439 = vmul.f32 %v4381, %v4404
      %v4440 = vmul.f32 %v4397, %v4408
      %v4441 = vmul.f32 %v4382, %v4404
      %v4442 = vmul.f32 %v4398, %v4408
      %v4443 = vpack.c.bf16 %v4413, %v4411
      %v4444 = vpack.c.bf16 %v4414, %v4412
      %v4445 = vpack.c.bf16 %v4417, %v4415
      %v4446 = vpack.c.bf16 %v4418, %v4416
      %v4447 = vpack.c.bf16 %v4421, %v4419
      %v4448 = vpack.c.bf16 %v4422, %v4420
      %v4449 = vpack.c.bf16 %v4425, %v4423
      %v4450 = vpack.c.bf16 %v4426, %v4424
      %v4451 = vpack.c.bf16 %v4429, %v4427
      %v4452 = vpack.c.bf16 %v4430, %v4428
      %v4453 = vpack.c.bf16 %v4433, %v4431
      %v4454 = vpack.c.bf16 %v4434, %v4432
      %v4455 = vpack.c.bf16 %v4437, %v4435
      %v4456 = vpack.c.bf16 %v4438, %v4436
      %v4457 = vpack.c.bf16 %v4441, %v4439
      %v4458 = vpack.c.bf16 %v4442, %v4440
      %4459 = vst [vmem:[#allocation3 + $0x380] sm:$0xff] %v4443
      %4460 = vst [vmem:[#allocation3 + $0x388] sm:$0xff] %v4444
      %4461 = vst [vmem:[#allocation3 + $0x390] sm:$0xff] %v4445
      %4462 = vst [vmem:[#allocation3 + $0x398] sm:$0xff] %v4446
      %4463 = vst [vmem:[#allocation3 + $0x3a0] sm:$0xff] %v4447
      %4464 = vst [vmem:[#allocation3 + $0x3a8] sm:$0xff] %v4448
      %4465 = vst [vmem:[#allocation3 + $0x3b0] sm:$0xff] %v4449
      %4466 = vst [vmem:[#allocation3 + $0x3b8] sm:$0xff] %v4450
      %4467 = vst [vmem:[#allocation3 + $0x3c0] sm:$0xff] %v4451
      %4468 = vst [vmem:[#allocation3 + $0x3c8] sm:$0xff] %v4452
      %4469 = vst [vmem:[#allocation3 + $0x3d0] sm:$0xff] %v4453
      %4470 = vst [vmem:[#allocation3 + $0x3d8] sm:$0xff] %v4454
      %4471 = vst [vmem:[#allocation3 + $0x3e0] sm:$0xff] %v4455
      %4472 = vst [vmem:[#allocation3 + $0x3e8] sm:$0xff] %v4456
      %4473 = vst [vmem:[#allocation3 + $0x3f0] sm:$0xff] %v4457
      %4474 = vst [vmem:[#allocation3 + $0x3f8] sm:$0xff] %v4458
      %4475 = vrot.lane.b32.xlu0 %v3207, 111
      %v4476 = vpop.permute.xlu0 %4475
      %4477 = vrot.lane.b32.xlu0 %v3209, 111
      %v4478 = vpop.permute.xlu0 %4477
      %4479 = vrot.lane.b32.xlu0 %v3211, 111
      %v4480 = vpop.permute.xlu0 %4479
      %4481 = vrot.lane.b32.xlu0 %v3213, 111
      %v4482 = vpop.permute.xlu0 %4481
      %4483 = vrot.lane.b32.xlu0 %v3215, 111
      %v4484 = vpop.permute.xlu0 %4483
      %4485 = vrot.lane.b32.xlu0 %v3217, 111
      %v4486 = vpop.permute.xlu0 %4485
      %4487 = vrot.lane.b32.xlu0 %v3219, 111
      %v4488 = vpop.permute.xlu0 %4487
      %4489 = vrot.lane.b32.xlu0 %v3221, 111
      %v4490 = vpop.permute.xlu0 %4489
      %4491 = vrot.lane.b32.xlu0 %v3223, 111
      %v4492 = vpop.permute.xlu0 %4491
      %4493 = vrot.lane.b32.xlu0 %v3225, 111
      %v4494 = vpop.permute.xlu0 %4493
      %4495 = vrot.lane.b32.xlu0 %v3227, 111
      %v4496 = vpop.permute.xlu0 %4495
      %4497 = vrot.lane.b32.xlu0 %v3229, 111
      %v4498 = vpop.permute.xlu0 %4497
      %4499 = vrot.lane.b32.xlu0 %v3231, 111
      %v4500 = vpop.permute.xlu0 %4499
      %4501 = vrot.lane.b32.xlu0 %v3233, 111
      %v4502 = vpop.permute.xlu0 %4501
      %4503 = vrot.lane.b32.xlu0 %v3235, 111
      %v4504 = vpop.permute.xlu0 %4503
      %4505 = vrot.lane.b32.xlu0 %v3237, 111
      %v4506 = vpop.permute.xlu0 %4505
      %4507 = vrot.lane.b32.xlu0 %v3208, 111
      %v4508 = vpop.permute.xlu0 %4507
      %4509 = vrot.lane.b32.xlu0 %v3210, 111
      %v4510 = vpop.permute.xlu0 %4509
      %4511 = vrot.lane.b32.xlu0 %v3212, 111
      %v4512 = vpop.permute.xlu0 %4511
      %4513 = vrot.lane.b32.xlu0 %v3214, 111
      %v4514 = vpop.permute.xlu0 %4513
      %4515 = vrot.lane.b32.xlu0 %v3216, 111
      %v4516 = vpop.permute.xlu0 %4515
      %4517 = vrot.lane.b32.xlu0 %v3218, 111
      %v4518 = vpop.permute.xlu0 %4517
      %4519 = vrot.lane.b32.xlu0 %v3220, 111
      %v4520 = vpop.permute.xlu0 %4519
      %4521 = vrot.lane.b32.xlu0 %v3222, 111
      %v4522 = vpop.permute.xlu0 %4521
      %4523 = vrot.lane.b32.xlu0 %v3224, 111
      %v4524 = vpop.permute.xlu0 %4523
      %4525 = vrot.lane.b32.xlu0 %v3226, 111
      %v4526 = vpop.permute.xlu0 %4525
      %4527 = vrot.lane.b32.xlu0 %v3228, 111
      %v4528 = vpop.permute.xlu0 %4527
      %4529 = vrot.lane.b32.xlu0 %v3230, 111
      %v4530 = vpop.permute.xlu0 %4529
      %4531 = vrot.lane.b32.xlu0 %v3232, 111
      %v4532 = vpop.permute.xlu0 %4531
      %4533 = vrot.lane.b32.xlu0 %v3234, 111
      %v4534 = vpop.permute.xlu0 %4533
      %4535 = vrot.lane.b32.xlu0 %v3236, 111
      %v4536 = vpop.permute.xlu0 %4535
      %4537 = vrot.lane.b32.xlu0 %v3238, 111
      %v4538 = vpop.permute.xlu0 %4537
      %v4539 = vsel %vm1202, %v4476, %v4508
      %v4540 = vsel %vm1202, %v4478, %v4510
      %v4541 = vsel %vm1202, %v4480, %v4512
      %v4542 = vsel %vm1202, %v4482, %v4514
      %v4543 = vsel %vm1202, %v4484, %v4516
      %v4544 = vsel %vm1202, %v4486, %v4518
      %v4545 = vsel %vm1202, %v4488, %v4520
      %v4546 = vsel %vm1202, %v4490, %v4522
      %v4547 = vsel %vm1202, %v4492, %v4524
      %v4548 = vsel %vm1202, %v4494, %v4526
      %v4549 = vsel %vm1202, %v4496, %v4528
      %v4550 = vsel %vm1202, %v4498, %v4530
      %v4551 = vsel %vm1202, %v4500, %v4532
      %v4552 = vsel %vm1202, %v4502, %v4534
      %v4553 = vsel %vm1202, %v4504, %v4536
      %v4554 = vsel %vm1202, %v4506, %v4538
      %v4555 = vsel %vm1202, %v4508, %v4476
      %v4556 = vsel %vm1202, %v4510, %v4478
      %v4557 = vsel %vm1202, %v4512, %v4480
      %v4558 = vsel %vm1202, %v4514, %v4482
      %v4559 = vsel %vm1202, %v4516, %v4484
      %v4560 = vsel %vm1202, %v4518, %v4486
      %v4561 = vsel %vm1202, %v4520, %v4488
      %v4562 = vsel %vm1202, %v4522, %v4490
      %v4563 = vsel %vm1202, %v4524, %v4492
      %v4564 = vsel %vm1202, %v4526, %v4494
      %v4565 = vsel %vm1202, %v4528, %v4496
      %v4566 = vsel %vm1202, %v4530, %v4498
      %v4567 = vsel %vm1202, %v4532, %v4500
      %v4568 = vsel %vm1202, %v4534, %v4502
      %v4569 = vsel %vm1202, %v4536, %v4504
      %v4570 = vsel %vm1202, %v4538, %v4506
      %v4571 = vld [vmem:[%s1207] sm:$0x3]
      %v4573 = vlaneseq
      %v4574 = vshrl.u32 %v4573, 7
      %v4575 = vsub.s32 0, %v4574
      %v4576 = vrot.slane %v4571, %v4575
      %v4577 = vlaneseq
      %v4578 = vshrl.u32 %v4577, 7
      %v4579 = vsub.s32 1, %v4578
      %v4580 = vrot.slane %v4571, %v4579
      %v4583 = vmul.f32 %v4539, %v4576
      %v4584 = vmul.f32 %v4555, %v4580
      %v4585 = vmul.f32 %v4540, %v4576
      %v4586 = vmul.f32 %v4556, %v4580
      %v4587 = vmul.f32 %v4541, %v4576
      %v4588 = vmul.f32 %v4557, %v4580
      %v4589 = vmul.f32 %v4542, %v4576
      %v4590 = vmul.f32 %v4558, %v4580
      %v4591 = vmul.f32 %v4543, %v4576
      %v4592 = vmul.f32 %v4559, %v4580
      %v4593 = vmul.f32 %v4544, %v4576
      %v4594 = vmul.f32 %v4560, %v4580
      %v4595 = vmul.f32 %v4545, %v4576
      %v4596 = vmul.f32 %v4561, %v4580
      %v4597 = vmul.f32 %v4546, %v4576
      %v4598 = vmul.f32 %v4562, %v4580
      %v4599 = vmul.f32 %v4547, %v4576
      %v4600 = vmul.f32 %v4563, %v4580
      %v4601 = vmul.f32 %v4548, %v4576
      %v4602 = vmul.f32 %v4564, %v4580
      %v4603 = vmul.f32 %v4549, %v4576
      %v4604 = vmul.f32 %v4565, %v4580
      %v4605 = vmul.f32 %v4550, %v4576
      %v4606 = vmul.f32 %v4566, %v4580
      %v4607 = vmul.f32 %v4551, %v4576
      %v4608 = vmul.f32 %v4567, %v4580
      %v4609 = vmul.f32 %v4552, %v4576
      %v4610 = vmul.f32 %v4568, %v4580
      %v4611 = vmul.f32 %v4553, %v4576
      %v4612 = vmul.f32 %v4569, %v4580
      %v4613 = vmul.f32 %v4554, %v4576
      %v4614 = vmul.f32 %v4570, %v4580
      %v4615 = vpack.c.bf16 %v4585, %v4583
      %v4616 = vpack.c.bf16 %v4586, %v4584
      %v4617 = vpack.c.bf16 %v4589, %v4587
      %v4618 = vpack.c.bf16 %v4590, %v4588
      %v4619 = vpack.c.bf16 %v4593, %v4591
      %v4620 = vpack.c.bf16 %v4594, %v4592
      %v4621 = vpack.c.bf16 %v4597, %v4595
      %v4622 = vpack.c.bf16 %v4598, %v4596
      %v4623 = vpack.c.bf16 %v4601, %v4599
      %v4624 = vpack.c.bf16 %v4602, %v4600
      %v4625 = vpack.c.bf16 %v4605, %v4603
      %v4626 = vpack.c.bf16 %v4606, %v4604
      %v4627 = vpack.c.bf16 %v4609, %v4607
      %v4628 = vpack.c.bf16 %v4610, %v4608
      %v4629 = vpack.c.bf16 %v4613, %v4611
      %v4630 = vpack.c.bf16 %v4614, %v4612
      %4631 = vst [vmem:[#allocation3 + $0x400] sm:$0xff] %v4615
      %4632 = vst [vmem:[#allocation3 + $0x408] sm:$0xff] %v4616
      %4633 = vst [vmem:[#allocation3 + $0x410] sm:$0xff] %v4617
      %4634 = vst [vmem:[#allocation3 + $0x418] sm:$0xff] %v4618
      %4635 = vst [vmem:[#allocation3 + $0x420] sm:$0xff] %v4619
      %4636 = vst [vmem:[#allocation3 + $0x428] sm:$0xff] %v4620
      %4637 = vst [vmem:[#allocation3 + $0x430] sm:$0xff] %v4621
      %4638 = vst [vmem:[#allocation3 + $0x438] sm:$0xff] %v4622
      %4639 = vst [vmem:[#allocation3 + $0x440] sm:$0xff] %v4623
      %4640 = vst [vmem:[#allocation3 + $0x448] sm:$0xff] %v4624
      %4641 = vst [vmem:[#allocation3 + $0x450] sm:$0xff] %v4625
      %4642 = vst [vmem:[#allocation3 + $0x458] sm:$0xff] %v4626
      %4643 = vst [vmem:[#allocation3 + $0x460] sm:$0xff] %v4627
      %4644 = vst [vmem:[#allocation3 + $0x468] sm:$0xff] %v4628
      %4645 = vst [vmem:[#allocation3 + $0x470] sm:$0xff] %v4629
      %4646 = vst [vmem:[#allocation3 + $0x478] sm:$0xff] %v4630
      %v4647 = vld [vmem:[#allocation3] sm:$0xff]
      %v4648 = vld [vmem:[#allocation3 + $0x8] sm:$0xff]
      %v4649 = vld [vmem:[#allocation3 + $0x10] sm:$0xff]
      %v4650 = vld [vmem:[#allocation3 + $0x18] sm:$0xff]
      %v4651 = vld [vmem:[#allocation3 + $0x20] sm:$0xff]
      %v4652 = vld [vmem:[#allocation3 + $0x28] sm:$0xff]
      %v4653 = vld [vmem:[#allocation3 + $0x30] sm:$0xff]
      %v4654 = vld [vmem:[#allocation3 + $0x38] sm:$0xff]
      %v4655 = vld [vmem:[#allocation3 + $0x40] sm:$0xff]
      %v4656 = vld [vmem:[#allocation3 + $0x48] sm:$0xff]
      %v4657 = vld [vmem:[#allocation3 + $0x50] sm:$0xff]
      %v4658 = vld [vmem:[#allocation3 + $0x58] sm:$0xff]
      %v4659 = vld [vmem:[#allocation3 + $0x60] sm:$0xff]
      %v4660 = vld [vmem:[#allocation3 + $0x68] sm:$0xff]
      %v4661 = vld [vmem:[#allocation3 + $0x70] sm:$0xff]
      %v4662 = vld [vmem:[#allocation3 + $0x78] sm:$0xff]
      %v4663 = vld [vmem:[#allocation3 + $0x80] sm:$0xff]
      %v4664 = vld [vmem:[#allocation3 + $0x88] sm:$0xff]
      %v4665 = vld [vmem:[#allocation3 + $0x90] sm:$0xff]
      %v4666 = vld [vmem:[#allocation3 + $0x98] sm:$0xff]
      %v4667 = vld [vmem:[#allocation3 + $0xa0] sm:$0xff]
      %v4668 = vld [vmem:[#allocation3 + $0xa8] sm:$0xff]
      %v4669 = vld [vmem:[#allocation3 + $0xb0] sm:$0xff]
      %v4670 = vld [vmem:[#allocation3 + $0xb8] sm:$0xff]
      %v4671 = vld [vmem:[#allocation3 + $0xc0] sm:$0xff]
      %v4672 = vld [vmem:[#allocation3 + $0xc8] sm:$0xff]
      %v4673 = vld [vmem:[#allocation3 + $0xd0] sm:$0xff]
      %v4674 = vld [vmem:[#allocation3 + $0xd8] sm:$0xff]
      %v4675 = vld [vmem:[#allocation3 + $0xe0] sm:$0xff]
      %v4676 = vld [vmem:[#allocation3 + $0xe8] sm:$0xff]
      %v4677 = vld [vmem:[#allocation3 + $0xf0] sm:$0xff]
      %v4678 = vld [vmem:[#allocation3 + $0xf8] sm:$0xff]
      %v4679 = vld [vmem:[#allocation3 + $0x100] sm:$0xff]
      %v4680 = vld [vmem:[#allocation3 + $0x108] sm:$0xff]
      %v4681 = vld [vmem:[#allocation3 + $0x110] sm:$0xff]
      %v4682 = vld [vmem:[#allocation3 + $0x118] sm:$0xff]
      %v4683 = vld [vmem:[#allocation3 + $0x120] sm:$0xff]
      %v4684 = vld [vmem:[#allocation3 + $0x128] sm:$0xff]
      %v4685 = vld [vmem:[#allocation3 + $0x130] sm:$0xff]
      %v4686 = vld [vmem:[#allocation3 + $0x138] sm:$0xff]
      %v4687 = vld [vmem:[#allocation3 + $0x140] sm:$0xff]
      %v4688 = vld [vmem:[#allocation3 + $0x148] sm:$0xff]
      %v4689 = vld [vmem:[#allocation3 + $0x150] sm:$0xff]
      %v4690 = vld [vmem:[#allocation3 + $0x158] sm:$0xff]
      %v4691 = vld [vmem:[#allocation3 + $0x160] sm:$0xff]
      %v4692 = vld [vmem:[#allocation3 + $0x168] sm:$0xff]
      %v4693 = vld [vmem:[#allocation3 + $0x170] sm:$0xff]
      %v4694 = vld [vmem:[#allocation3 + $0x178] sm:$0xff]
      %v4695 = vld [vmem:[#allocation3 + $0x180] sm:$0xff]
      %v4696 = vld [vmem:[#allocation3 + $0x188] sm:$0xff]
      %v4697 = vld [vmem:[#allocation3 + $0x190] sm:$0xff]
      %v4698 = vld [vmem:[#allocation3 + $0x198] sm:$0xff]
      %v4699 = vld [vmem:[#allocation3 + $0x1a0] sm:$0xff]
      %v4700 = vld [vmem:[#allocation3 + $0x1a8] sm:$0xff]
      %v4701 = vld [vmem:[#allocation3 + $0x1b0] sm:$0xff]
      %v4702 = vld [vmem:[#allocation3 + $0x1b8] sm:$0xff]
      %v4703 = vld [vmem:[#allocation3 + $0x1c0] sm:$0xff]
      %v4704 = vld [vmem:[#allocation3 + $0x1c8] sm:$0xff]
      %v4705 = vld [vmem:[#allocation3 + $0x1d0] sm:$0xff]
      %v4706 = vld [vmem:[#allocation3 + $0x1d8] sm:$0xff]
      %v4707 = vld [vmem:[#allocation3 + $0x1e0] sm:$0xff]
      %v4708 = vld [vmem:[#allocation3 + $0x1e8] sm:$0xff]
      %v4709 = vld [vmem:[#allocation3 + $0x1f0] sm:$0xff]
      %v4710 = vld [vmem:[#allocation3 + $0x1f8] sm:$0xff]
      %v4711 = vld [vmem:[#allocation3 + $0x200] sm:$0xff]
      %v4712 = vld [vmem:[#allocation3 + $0x208] sm:$0xff]
      %v4713 = vld [vmem:[#allocation3 + $0x210] sm:$0xff]
      %v4714 = vld [vmem:[#allocation3 + $0x218] sm:$0xff]
      %v4715 = vld [vmem:[#allocation3 + $0x220] sm:$0xff]
      %v4716 = vld [vmem:[#allocation3 + $0x228] sm:$0xff]
      %v4717 = vld [vmem:[#allocation3 + $0x230] sm:$0xff]
      %v4718 = vld [vmem:[#allocation3 + $0x238] sm:$0xff]
      %v4719 = vld [vmem:[#allocation3 + $0x240] sm:$0xff]
      %v4720 = vld [vmem:[#allocation3 + $0x248] sm:$0xff]
      %v4721 = vld [vmem:[#allocation3 + $0x250] sm:$0xff]
      %v4722 = vld [vmem:[#allocation3 + $0x258] sm:$0xff]
      %v4723 = vld [vmem:[#allocation3 + $0x260] sm:$0xff]
      %v4724 = vld [vmem:[#allocation3 + $0x268] sm:$0xff]
      %v4725 = vld [vmem:[#allocation3 + $0x270] sm:$0xff]
      %v4726 = vld [vmem:[#allocation3 + $0x278] sm:$0xff]
      %v4727 = vld [vmem:[#allocation3 + $0x280] sm:$0xff]
      %v4728 = vld [vmem:[#allocation3 + $0x288] sm:$0xff]
      %v4729 = vld [vmem:[#allocation3 + $0x290] sm:$0xff]
      %v4730 = vld [vmem:[#allocation3 + $0x298] sm:$0xff]
      %v4731 = vld [vmem:[#allocation3 + $0x2a0] sm:$0xff]
      %v4732 = vld [vmem:[#allocation3 + $0x2a8] sm:$0xff]
      %v4733 = vld [vmem:[#allocation3 + $0x2b0] sm:$0xff]
      %v4734 = vld [vmem:[#allocation3 + $0x2b8] sm:$0xff]
      %v4735 = vld [vmem:[#allocation3 + $0x2c0] sm:$0xff]
      %v4736 = vld [vmem:[#allocation3 + $0x2c8] sm:$0xff]
      %v4737 = vld [vmem:[#allocation3 + $0x2d0] sm:$0xff]
      %v4738 = vld [vmem:[#allocation3 + $0x2d8] sm:$0xff]
      %v4739 = vld [vmem:[#allocation3 + $0x2e0] sm:$0xff]
      %v4740 = vld [vmem:[#allocation3 + $0x2e8] sm:$0xff]
      %v4741 = vld [vmem:[#allocation3 + $0x2f0] sm:$0xff]
      %v4742 = vld [vmem:[#allocation3 + $0x2f8] sm:$0xff]
      %v4743 = vld [vmem:[#allocation3 + $0x300] sm:$0xff]
      %v4744 = vld [vmem:[#allocation3 + $0x308] sm:$0xff]
      %v4745 = vld [vmem:[#allocation3 + $0x310] sm:$0xff]
      %v4746 = vld [vmem:[#allocation3 + $0x318] sm:$0xff]
      %v4747 = vld [vmem:[#allocation3 + $0x320] sm:$0xff]
      %v4748 = vld [vmem:[#allocation3 + $0x328] sm:$0xff]
      %v4749 = vld [vmem:[#allocation3 + $0x330] sm:$0xff]
      %v4750 = vld [vmem:[#allocation3 + $0x338] sm:$0xff]
      %v4751 = vld [vmem:[#allocation3 + $0x340] sm:$0xff]
      %v4752 = vld [vmem:[#allocation3 + $0x348] sm:$0xff]
      %v4753 = vld [vmem:[#allocation3 + $0x350] sm:$0xff]
      %v4754 = vld [vmem:[#allocation3 + $0x358] sm:$0xff]
      %v4755 = vld [vmem:[#allocation3 + $0x360] sm:$0xff]
      %v4756 = vld [vmem:[#allocation3 + $0x368] sm:$0xff]
      %v4757 = vld [vmem:[#allocation3 + $0x370] sm:$0xff]
      %v4758 = vld [vmem:[#allocation3 + $0x378] sm:$0xff]
      %v4759 = vld [vmem:[#allocation3 + $0x380] sm:$0xff]
      %v4760 = vld [vmem:[#allocation3 + $0x388] sm:$0xff]
      %v4761 = vld [vmem:[#allocation3 + $0x390] sm:$0xff]
      %v4762 = vld [vmem:[#allocation3 + $0x398] sm:$0xff]
      %v4763 = vld [vmem:[#allocation3 + $0x3a0] sm:$0xff]
      %v4764 = vld [vmem:[#allocation3 + $0x3a8] sm:$0xff]
      %v4765 = vld [vmem:[#allocation3 + $0x3b0] sm:$0xff]
      %v4766 = vld [vmem:[#allocation3 + $0x3b8] sm:$0xff]
      %v4767 = vld [vmem:[#allocation3 + $0x3c0] sm:$0xff]
      %v4768 = vld [vmem:[#allocation3 + $0x3c8] sm:$0xff]
      %v4769 = vld [vmem:[#allocation3 + $0x3d0] sm:$0xff]
      %v4770 = vld [vmem:[#allocation3 + $0x3d8] sm:$0xff]
      %v4771 = vld [vmem:[#allocation3 + $0x3e0] sm:$0xff]
      %v4772 = vld [vmem:[#allocation3 + $0x3e8] sm:$0xff]
      %v4773 = vld [vmem:[#allocation3 + $0x3f0] sm:$0xff]
      %v4774 = vld [vmem:[#allocation3 + $0x3f8] sm:$0xff]
      %v4775 = vld [vmem:[#allocation3 + $0x400] sm:$0xff]
      %v4776 = vld [vmem:[#allocation3 + $0x408] sm:$0xff]
      %v4777 = vld [vmem:[#allocation3 + $0x410] sm:$0xff]
      %v4778 = vld [vmem:[#allocation3 + $0x418] sm:$0xff]
      %v4779 = vld [vmem:[#allocation3 + $0x420] sm:$0xff]
      %v4780 = vld [vmem:[#allocation3 + $0x428] sm:$0xff]
      %v4781 = vld [vmem:[#allocation3 + $0x430] sm:$0xff]
      %v4782 = vld [vmem:[#allocation3 + $0x438] sm:$0xff]
      %v4783 = vld [vmem:[#allocation3 + $0x440] sm:$0xff]
      %v4784 = vld [vmem:[#allocation3 + $0x448] sm:$0xff]
      %v4785 = vld [vmem:[#allocation3 + $0x450] sm:$0xff]
      %v4786 = vld [vmem:[#allocation3 + $0x458] sm:$0xff]
      %v4787 = vld [vmem:[#allocation3 + $0x460] sm:$0xff]
      %v4788 = vld [vmem:[#allocation3 + $0x468] sm:$0xff]
      %v4789 = vld [vmem:[#allocation3 + $0x470] sm:$0xff]
      %v4790 = vld [vmem:[#allocation3 + $0x478] sm:$0xff]
      %v4791 = vld [vmem:[%s8] sm:$0xff]
      %v4792 = vld [vmem:[%s8 + $0x8] sm:$0xff]
      %v4793 = vld [vmem:[%s8 + $0x10] sm:$0xff]
      %v4794 = vld [vmem:[%s8 + $0x18] sm:$0xff]
      %v4795 = vld [vmem:[%s8 + $0x20] sm:$0xf]
      %v4796 = vld [vmem:[%s8 + $0x24] sm:$0xff]
      %v4797 = vld [vmem:[%s8 + $0x2c] sm:$0xff]
      %v4798 = vld [vmem:[%s8 + $0x34] sm:$0xff]
      %v4799 = vld [vmem:[%s8 + $0x3c] sm:$0xff]
      %v4800 = vld [vmem:[%s8 + $0x44] sm:$0xf]
      %v4801 = vld [vmem:[%s8 + $0x48] sm:$0xff]
      %v4802 = vld [vmem:[%s8 + $0x50] sm:$0xff]
      %v4803 = vld [vmem:[%s8 + $0x58] sm:$0xff]
      %v4804 = vld [vmem:[%s8 + $0x60] sm:$0xff]
      %v4805 = vld [vmem:[%s8 + $0x68] sm:$0xf]
      %v4806 = vld [vmem:[%s8 + $0x6c] sm:$0xff]
      %v4807 = vld [vmem:[%s8 + $0x74] sm:$0xff]
      %v4808 = vld [vmem:[%s8 + $0x7c] sm:$0xff]
      %v4809 = vld [vmem:[%s8 + $0x84] sm:$0xff]
      %v4810 = vld [vmem:[%s8 + $0x8c] sm:$0xf]
      %v4811 = vld [vmem:[%s8 + $0x90] sm:$0xff]
      %v4812 = vld [vmem:[%s8 + $0x98] sm:$0xff]
      %v4813 = vld [vmem:[%s8 + $0xa0] sm:$0xff]
      %v4814 = vld [vmem:[%s8 + $0xa8] sm:$0xff]
      %v4815 = vld [vmem:[%s8 + $0xb0] sm:$0xf]
      %v4816 = vld [vmem:[%s8 + $0xb4] sm:$0xff]
      %v4817 = vld [vmem:[%s8 + $0xbc] sm:$0xff]
      %v4818 = vld [vmem:[%s8 + $0xc4] sm:$0xff]
      %v4819 = vld [vmem:[%s8 + $0xcc] sm:$0xff]
      %v4820 = vld [vmem:[%s8 + $0xd4] sm:$0xf]
      %v4821 = vld [vmem:[%s8 + $0xd8] sm:$0xff]
      %v4822 = vld [vmem:[%s8 + $0xe0] sm:$0xff]
      %v4823 = vld [vmem:[%s8 + $0xe8] sm:$0xff]
      %v4824 = vld [vmem:[%s8 + $0xf0] sm:$0xff]
      %v4825 = vld [vmem:[%s8 + $0xf8] sm:$0xf]
      %v4826 = vld [vmem:[%s8 + $0xfc] sm:$0xff]
      %v4827 = vld [vmem:[%s8 + $0x104] sm:$0xff]
      %v4828 = vld [vmem:[%s8 + $0x10c] sm:$0xff]
      %v4829 = vld [vmem:[%s8 + $0x114] sm:$0xff]
      %v4830 = vld [vmem:[%s8 + $0x11c] sm:$0xf]
      %v4831 = vld [vmem:[%s8 + $0x120] sm:$0xff]
      %v4832 = vld [vmem:[%s8 + $0x128] sm:$0xff]
      %v4833 = vld [vmem:[%s8 + $0x130] sm:$0xff]
      %v4834 = vld [vmem:[%s8 + $0x138] sm:$0xff]
      %v4835 = vld [vmem:[%s8 + $0x140] sm:$0xf]
      %v4836 = vld [vmem:[%s8 + $0x144] sm:$0xff]
      %v4837 = vld [vmem:[%s8 + $0x14c] sm:$0xff]
      %v4838 = vld [vmem:[%s8 + $0x154] sm:$0xff]
      %v4839 = vld [vmem:[%s8 + $0x15c] sm:$0xff]
      %v4840 = vld [vmem:[%s8 + $0x164] sm:$0xf]
      %v4841 = vld [vmem:[%s8 + $0x168] sm:$0xff]
      %v4842 = vld [vmem:[%s8 + $0x170] sm:$0xff]
      %v4843 = vld [vmem:[%s8 + $0x178] sm:$0xff]
      %v4844 = vld [vmem:[%s8 + $0x180] sm:$0xff]
      %v4845 = vld [vmem:[%s8 + $0x188] sm:$0xf]
      %v4846 = vld [vmem:[%s8 + $0x18c] sm:$0xff]
      %v4847 = vld [vmem:[%s8 + $0x194] sm:$0xff]
      %v4848 = vld [vmem:[%s8 + $0x19c] sm:$0xff]
      %v4849 = vld [vmem:[%s8 + $0x1a4] sm:$0xff]
      %v4850 = vld [vmem:[%s8 + $0x1ac] sm:$0xf]
      %v4851 = vld [vmem:[%s8 + $0x1b0] sm:$0xff]
      %v4852 = vld [vmem:[%s8 + $0x1b8] sm:$0xff]
      %v4853 = vld [vmem:[%s8 + $0x1c0] sm:$0xff]
      %v4854 = vld [vmem:[%s8 + $0x1c8] sm:$0xff]
      %v4855 = vld [vmem:[%s8 + $0x1d0] sm:$0xf]
      %v4856 = vld [vmem:[%s8 + $0x1d4] sm:$0xff]
      %v4857 = vld [vmem:[%s8 + $0x1dc] sm:$0xff]
      %v4858 = vld [vmem:[%s8 + $0x1e4] sm:$0xff]
      %v4859 = vld [vmem:[%s8 + $0x1ec] sm:$0xff]
      %v4860 = vld [vmem:[%s8 + $0x1f4] sm:$0xf]
      %v4861 = vld [vmem:[%s8 + $0x1f8] sm:$0xff]
      %v4862 = vld [vmem:[%s8 + $0x200] sm:$0xff]
      %v4863 = vld [vmem:[%s8 + $0x208] sm:$0xff]
      %v4864 = vld [vmem:[%s8 + $0x210] sm:$0xff]
      %v4865 = vld [vmem:[%s8 + $0x218] sm:$0xf]
      %v4866 = vld [vmem:[%s8 + $0x21c] sm:$0xff]
      %v4867 = vld [vmem:[%s8 + $0x224] sm:$0xff]
      %v4868 = vld [vmem:[%s8 + $0x22c] sm:$0xff]
      %v4869 = vld [vmem:[%s8 + $0x234] sm:$0xff]
      %v4870 = vld [vmem:[%s8 + $0x23c] sm:$0xf]
      %v4871 = vld [vmem:[%s9] sm:$0xff]
      %v4872 = vld [vmem:[%s9 + $0x8] sm:$0xff]
      %v4873 = vld [vmem:[%s9 + $0x10] sm:$0xff]
      %v4874 = vld [vmem:[%s9 + $0x18] sm:$0xff]
      %v4875 = vld [vmem:[%s9 + $0x20] sm:$0xff]
      %v4876 = vld [vmem:[%s9 + $0x28] sm:$0xff]
      %v4877 = vld [vmem:[%s9 + $0x30] sm:$0xff]
      %v4878 = vld [vmem:[%s9 + $0x38] sm:$0xff]
      %v4879 = vld [vmem:[%s9 + $0x40] sm:$0xff]
      %v4880 = vld [vmem:[%s9 + $0x48] sm:$0xff]
      %v4881 = vld [vmem:[%s9 + $0x50] sm:$0xff]
      %v4882 = vld [vmem:[%s9 + $0x58] sm:$0xff]
      %v4883 = vld [vmem:[%s9 + $0x60] sm:$0xff]
      %v4884 = vld [vmem:[%s9 + $0x68] sm:$0xff]
      %v4885 = vld [vmem:[%s9 + $0x70] sm:$0xff]
      %v4886 = vld [vmem:[%s9 + $0x78] sm:$0xff]
      %4888 = vset.pattern.permute.xlu0 0
      %4889 = vperm.xlu0 %4888, %v4871
      %v4890 = vpop.permute.xlu0 %4889
      %4893 = vset.pattern.permute.xlu0 0
      %4894 = vperm.xlu0 %4893, %v4872
      %v4895 = vpop.permute.xlu0 %4894
      %4898 = vset.pattern.permute.xlu0 0
      %4899 = vperm.xlu0 %4898, %v4873
      %v4900 = vpop.permute.xlu0 %4899
      %4903 = vset.pattern.permute.xlu0 0
      %4904 = vperm.xlu0 %4903, %v4874
      %v4905 = vpop.permute.xlu0 %4904
      %4908 = vset.pattern.permute.xlu0 0
      %4909 = vperm.xlu0 %4908, %v4875
      %v4910 = vpop.permute.xlu0 %4909
      %4913 = vset.pattern.permute.xlu0 0
      %4914 = vperm.xlu0 %4913, %v4876
      %v4915 = vpop.permute.xlu0 %4914
      %4918 = vset.pattern.permute.xlu0 0
      %4919 = vperm.xlu0 %4918, %v4877
      %v4920 = vpop.permute.xlu0 %4919
      %4923 = vset.pattern.permute.xlu0 0
      %4924 = vperm.xlu0 %4923, %v4878
      %v4925 = vpop.permute.xlu0 %4924
      %4928 = vset.pattern.permute.xlu0 0
      %4929 = vperm.xlu0 %4928, %v4879
      %v4930 = vpop.permute.xlu0 %4929
      %4933 = vset.pattern.permute.xlu0 0
      %4934 = vperm.xlu0 %4933, %v4880
      %v4935 = vpop.permute.xlu0 %4934
      %4938 = vset.pattern.permute.xlu0 0
      %4939 = vperm.xlu0 %4938, %v4881
      %v4940 = vpop.permute.xlu0 %4939
      %4943 = vset.pattern.permute.xlu0 0
      %4944 = vperm.xlu0 %4943, %v4882
      %v4945 = vpop.permute.xlu0 %4944
      %4948 = vset.pattern.permute.xlu0 0
      %4949 = vperm.xlu0 %4948, %v4883
      %v4950 = vpop.permute.xlu0 %4949
      %4953 = vset.pattern.permute.xlu0 0
      %4954 = vperm.xlu0 %4953, %v4884
      %v4955 = vpop.permute.xlu0 %4954
      %4958 = vset.pattern.permute.xlu0 0
      %4959 = vperm.xlu0 %4958, %v4885
      %v4960 = vpop.permute.xlu0 %4959
      %4963 = vset.pattern.permute.xlu0 0
      %4964 = vperm.xlu0 %4963, %v4886
      %v4965 = vpop.permute.xlu0 %4964
      %v5047 = vunpack.c.l.b16 %v4791
      %v5048 = vunpack.c.h.b16 %v4791
      %v5049 = vunpack.c.l.b16 %v4792
      %v5050 = vunpack.c.h.b16 %v4792
      %v5051 = vunpack.c.l.b16 %v4793
      %v5052 = vunpack.c.h.b16 %v4793
      %v5053 = vunpack.c.l.b16 %v4794
      %v5054 = vunpack.c.h.b16 %v4794
      %v5055 = vunpack.c.l.b16 %v4795
      %v5056 = vunpack.c.l.b16 %v4796
      %v5057 = vunpack.c.h.b16 %v4796
      %v5058 = vunpack.c.l.b16 %v4797
      %v5059 = vunpack.c.h.b16 %v4797
      %v5060 = vunpack.c.l.b16 %v4798
      %v5061 = vunpack.c.h.b16 %v4798
      %v5062 = vunpack.c.l.b16 %v4799
      %v5063 = vunpack.c.h.b16 %v4799
      %v5064 = vunpack.c.l.b16 %v4800
      %v5065 = vunpack.c.l.b16 %v4801
      %v5066 = vunpack.c.h.b16 %v4801
      %v5067 = vunpack.c.l.b16 %v4802
      %v5068 = vunpack.c.h.b16 %v4802
      %v5069 = vunpack.c.l.b16 %v4803
      %v5070 = vunpack.c.h.b16 %v4803
      %v5071 = vunpack.c.l.b16 %v4804
      %v5072 = vunpack.c.h.b16 %v4804
      %v5073 = vunpack.c.l.b16 %v4805
      %v5074 = vunpack.c.l.b16 %v4806
      %v5075 = vunpack.c.h.b16 %v4806
      %v5076 = vunpack.c.l.b16 %v4807
      %v5077 = vunpack.c.h.b16 %v4807
      %v5078 = vunpack.c.l.b16 %v4808
      %v5079 = vunpack.c.h.b16 %v4808
      %v5080 = vunpack.c.l.b16 %v4809
      %v5081 = vunpack.c.h.b16 %v4809
      %v5082 = vunpack.c.l.b16 %v4810
      %v5083 = vunpack.c.l.b16 %v4811
      %v5084 = vunpack.c.h.b16 %v4811
      %v5085 = vunpack.c.l.b16 %v4812
      %v5086 = vunpack.c.h.b16 %v4812
      %v5087 = vunpack.c.l.b16 %v4813
      %v5088 = vunpack.c.h.b16 %v4813
      %v5089 = vunpack.c.l.b16 %v4814
      %v5090 = vunpack.c.h.b16 %v4814
      %v5091 = vunpack.c.l.b16 %v4815
      %v5092 = vunpack.c.l.b16 %v4816
      %v5093 = vunpack.c.h.b16 %v4816
      %v5094 = vunpack.c.l.b16 %v4817
      %v5095 = vunpack.c.h.b16 %v4817
      %v5096 = vunpack.c.l.b16 %v4818
      %v5097 = vunpack.c.h.b16 %v4818
      %v5098 = vunpack.c.l.b16 %v4819
      %v5099 = vunpack.c.h.b16 %v4819
      %v5100 = vunpack.c.l.b16 %v4820
      %v5101 = vunpack.c.l.b16 %v4821
      %v5102 = vunpack.c.h.b16 %v4821
      %v5103 = vunpack.c.l.b16 %v4822
      %v5104 = vunpack.c.h.b16 %v4822
      %v5105 = vunpack.c.l.b16 %v4823
      %v5106 = vunpack.c.h.b16 %v4823
      %v5107 = vunpack.c.l.b16 %v4824
      %v5108 = vunpack.c.h.b16 %v4824
      %v5109 = vunpack.c.l.b16 %v4825
      %v5110 = vunpack.c.l.b16 %v4826
      %v5111 = vunpack.c.h.b16 %v4826
      %v5112 = vunpack.c.l.b16 %v4827
      %v5113 = vunpack.c.h.b16 %v4827
      %v5114 = vunpack.c.l.b16 %v4828
      %v5115 = vunpack.c.h.b16 %v4828
      %v5116 = vunpack.c.l.b16 %v4829
      %v5117 = vunpack.c.h.b16 %v4829
      %v5118 = vunpack.c.l.b16 %v4830
      %v5119 = vunpack.c.l.b16 %v4831
      %v5120 = vunpack.c.h.b16 %v4831
      %v5121 = vunpack.c.l.b16 %v4832
      %v5122 = vunpack.c.h.b16 %v4832
      %v5123 = vunpack.c.l.b16 %v4833
      %v5124 = vunpack.c.h.b16 %v4833
      %v5125 = vunpack.c.l.b16 %v4834
      %v5126 = vunpack.c.h.b16 %v4834
      %v5127 = vunpack.c.l.b16 %v4835
      %v5128 = vunpack.c.l.b16 %v4836
      %v5129 = vunpack.c.h.b16 %v4836
      %v5130 = vunpack.c.l.b16 %v4837
      %v5131 = vunpack.c.h.b16 %v4837
      %v5132 = vunpack.c.l.b16 %v4838
      %v5133 = vunpack.c.h.b16 %v4838
      %v5134 = vunpack.c.l.b16 %v4839
      %v5135 = vunpack.c.h.b16 %v4839
      %v5136 = vunpack.c.l.b16 %v4840
      %v5137 = vunpack.c.l.b16 %v4841
      %v5138 = vunpack.c.h.b16 %v4841
      %v5139 = vunpack.c.l.b16 %v4842
      %v5140 = vunpack.c.h.b16 %v4842
      %v5141 = vunpack.c.l.b16 %v4843
      %v5142 = vunpack.c.h.b16 %v4843
      %v5143 = vunpack.c.l.b16 %v4844
      %v5144 = vunpack.c.h.b16 %v4844
      %v5145 = vunpack.c.l.b16 %v4845
      %v5146 = vunpack.c.l.b16 %v4846
      %v5147 = vunpack.c.h.b16 %v4846
      %v5148 = vunpack.c.l.b16 %v4847
      %v5149 = vunpack.c.h.b16 %v4847
      %v5150 = vunpack.c.l.b16 %v4848
      %v5151 = vunpack.c.h.b16 %v4848
      %v5152 = vunpack.c.l.b16 %v4849
      %v5153 = vunpack.c.h.b16 %v4849
      %v5154 = vunpack.c.l.b16 %v4850
      %v5155 = vunpack.c.l.b16 %v4851
      %v5156 = vunpack.c.h.b16 %v4851
      %v5157 = vunpack.c.l.b16 %v4852
      %v5158 = vunpack.c.h.b16 %v4852
      %v5159 = vunpack.c.l.b16 %v4853
      %v5160 = vunpack.c.h.b16 %v4853
      %v5161 = vunpack.c.l.b16 %v4854
      %v5162 = vunpack.c.h.b16 %v4854
      %v5163 = vunpack.c.l.b16 %v4855
      %v5164 = vunpack.c.l.b16 %v4856
      %v5165 = vunpack.c.h.b16 %v4856
      %v5166 = vunpack.c.l.b16 %v4857
      %v5167 = vunpack.c.h.b16 %v4857
      %v5168 = vunpack.c.l.b16 %v4858
      %v5169 = vunpack.c.h.b16 %v4858
      %v5170 = vunpack.c.l.b16 %v4859
      %v5171 = vunpack.c.h.b16 %v4859
      %v5172 = vunpack.c.l.b16 %v4860
      %v5173 = vunpack.c.l.b16 %v4861
      %v5174 = vunpack.c.h.b16 %v4861
      %v5175 = vunpack.c.l.b16 %v4862
      %v5176 = vunpack.c.h.b16 %v4862
      %v5177 = vunpack.c.l.b16 %v4863
      %v5178 = vunpack.c.h.b16 %v4863
      %v5179 = vunpack.c.l.b16 %v4864
      %v5180 = vunpack.c.h.b16 %v4864
      %v5181 = vunpack.c.l.b16 %v4865
      %v5182 = vunpack.c.l.b16 %v4866
      %v5183 = vunpack.c.h.b16 %v4866
      %v5184 = vunpack.c.l.b16 %v4867
      %v5185 = vunpack.c.h.b16 %v4867
      %v5186 = vunpack.c.l.b16 %v4868
      %v5187 = vunpack.c.h.b16 %v4868
      %v5188 = vunpack.c.l.b16 %v4869
      %v5189 = vunpack.c.h.b16 %v4869
      %v5190 = vunpack.c.l.b16 %v4870
      %v5191 = vpack.c.b16 %v5056, %v5047
      %v5192 = vpack.c.b16 %v5057, %v5048
      %v5193 = vpack.c.b16 %v5058, %v5049
      %v5194 = vpack.c.b16 %v5059, %v5050
      %v5195 = vpack.c.b16 %v5060, %v5051
      %v5196 = vpack.c.b16 %v5061, %v5052
      %v5197 = vpack.c.b16 %v5062, %v5053
      %v5198 = vpack.c.b16 %v5063, %v5054
      %v5199 = vpack.c.b16 %v5064, %v5055
      %v5200 = vpack.c.b16 %v5074, %v5065
      %v5201 = vpack.c.b16 %v5075, %v5066
      %v5202 = vpack.c.b16 %v5076, %v5067
      %v5203 = vpack.c.b16 %v5077, %v5068
      %v5204 = vpack.c.b16 %v5078, %v5069
      %v5205 = vpack.c.b16 %v5079, %v5070
      %v5206 = vpack.c.b16 %v5080, %v5071
      %v5207 = vpack.c.b16 %v5081, %v5072
      %v5208 = vpack.c.b16 %v5082, %v5073
      %v5209 = vpack.c.b16 %v5092, %v5083
      %v5210 = vpack.c.b16 %v5093, %v5084
      %v5211 = vpack.c.b16 %v5094, %v5085
      %v5212 = vpack.c.b16 %v5095, %v5086
      %v5213 = vpack.c.b16 %v5096, %v5087
      %v5214 = vpack.c.b16 %v5097, %v5088
      %v5215 = vpack.c.b16 %v5098, %v5089
      %v5216 = vpack.c.b16 %v5099, %v5090
      %v5217 = vpack.c.b16 %v5100, %v5091
      %v5218 = vpack.c.b16 %v5110, %v5101
      %v5219 = vpack.c.b16 %v5111, %v5102
      %v5220 = vpack.c.b16 %v5112, %v5103
      %v5221 = vpack.c.b16 %v5113, %v5104
      %v5222 = vpack.c.b16 %v5114, %v5105
      %v5223 = vpack.c.b16 %v5115, %v5106
      %v5224 = vpack.c.b16 %v5116, %v5107
      %v5225 = vpack.c.b16 %v5117, %v5108
      %v5226 = vpack.c.b16 %v5118, %v5109
      %v5227 = vpack.c.b16 %v5128, %v5119
      %v5228 = vpack.c.b16 %v5129, %v5120
      %v5229 = vpack.c.b16 %v5130, %v5121
      %v5230 = vpack.c.b16 %v5131, %v5122
      %v5231 = vpack.c.b16 %v5132, %v5123
      %v5232 = vpack.c.b16 %v5133, %v5124
      %v5233 = vpack.c.b16 %v5134, %v5125
      %v5234 = vpack.c.b16 %v5135, %v5126
      %v5235 = vpack.c.b16 %v5136, %v5127
      %v5236 = vpack.c.b16 %v5146, %v5137
      %v5237 = vpack.c.b16 %v5147, %v5138
      %v5238 = vpack.c.b16 %v5148, %v5139
      %v5239 = vpack.c.b16 %v5149, %v5140
      %v5240 = vpack.c.b16 %v5150, %v5141
      %v5241 = vpack.c.b16 %v5151, %v5142
      %v5242 = vpack.c.b16 %v5152, %v5143
      %v5243 = vpack.c.b16 %v5153, %v5144
      %v5244 = vpack.c.b16 %v5154, %v5145
      %v5245 = vpack.c.b16 %v5164, %v5155
      %v5246 = vpack.c.b16 %v5165, %v5156
      %v5247 = vpack.c.b16 %v5166, %v5157
      %v5248 = vpack.c.b16 %v5167, %v5158
      %v5249 = vpack.c.b16 %v5168, %v5159
      %v5250 = vpack.c.b16 %v5169, %v5160
      %v5251 = vpack.c.b16 %v5170, %v5161
      %v5252 = vpack.c.b16 %v5171, %v5162
      %v5253 = vpack.c.b16 %v5172, %v5163
      %v5254 = vpack.c.b16 %v5182, %v5173
      %v5255 = vpack.c.b16 %v5183, %v5174
      %v5256 = vpack.c.b16 %v5184, %v5175
      %v5257 = vpack.c.b16 %v5185, %v5176
      %v5258 = vpack.c.b16 %v5186, %v5177
      %v5259 = vpack.c.b16 %v5187, %v5178
      %v5260 = vpack.c.b16 %v5188, %v5179
      %v5261 = vpack.c.b16 %v5189, %v5180
      %v5262 = vpack.c.b16 %v5190, %v5181
      %5335 = vmatprep.subr.bf16.mxu0 %v4648
      %5336 = vmatpush1.bf16.msra.mxu0 %v4647
      %5337 = vmatprep.subr.bf16.mxu0 %v4650
      %5338 = vmatpush1.bf16.msra.mxu0 %v4649
      %5339 = vmatprep.subr.bf16.mxu0 %v4652
      %5340 = vmatpush1.bf16.msra.mxu0 %v4651
      %5341 = vmatprep.subr.bf16.mxu0 %v4654
      %5342 = vmatpush1.bf16.msra.mxu0 %v4653
      %5343 = vmatprep.subr.bf16.mxu0 %v4656
      %5344 = vmatpush1.bf16.msra.mxu0 %v4655
      %5345 = vmatprep.subr.bf16.mxu0 %v4658
      %5346 = vmatpush1.bf16.msra.mxu0 %v4657
      %5347 = vmatprep.subr.bf16.mxu0 %v4660
      %5348 = vmatpush1.bf16.msra.mxu0 %v4659
      %5349 = vmatprep.subr.bf16.mxu0 %v4662
      %5350 = vmatpush1.bf16.msra.mxu0 %v4661
      %5351 = vmatprep.subr.bf16.mxu0 %v4664
      %5352 = vmatpush1.bf16.msra.mxu0 %v4663
      %5353 = vmatprep.subr.bf16.mxu0 %v4666
      %5354 = vmatpush1.bf16.msra.mxu0 %v4665
      %5355 = vmatprep.subr.bf16.mxu0 %v4668
      %5356 = vmatpush1.bf16.msra.mxu0 %v4667
      %5357 = vmatprep.subr.bf16.mxu0 %v4670
      %5358 = vmatpush1.bf16.msra.mxu0 %v4669
      %5359 = vmatprep.subr.bf16.mxu0 %v4672
      %5360 = vmatpush1.bf16.msra.mxu0 %v4671
      %5361 = vmatprep.subr.bf16.mxu0 %v4674
      %5362 = vmatpush1.bf16.msra.mxu0 %v4673
      %5363 = vmatprep.subr.bf16.mxu0 %v4676
      %5364 = vmatpush1.bf16.msra.mxu0 %v4675
      %5365 = vmatprep.subr.bf16.mxu0 %v4678
      %5366 = vmatpush1.bf16.msra.mxu0 %v4677
      %5367 = vmatprep.mubr.bf16.mxu0 %v5192
      %5368 = vmatmul.mubr.bf16.gmra.mrb[0].mxu0 %v5191
      %v5369 = vpop.f32.mrb[0].mxu0
      %v5370 = vadd.f32 %v4890, %v5369
      %v5371 = vpop.f32.mrb[0].mxu0
      %v5372 = vadd.f32 %v4890, %v5371
      %v5373 = vpop.f32.mrb[0].mxu0
      %v5374 = vadd.f32 %v4895, %v5373
      %v5375 = vpop.f32.mrb[0].mxu0
      %v5376 = vadd.f32 %v4895, %v5375
      %5377 = vmatprep.mubr.bf16.mxu0 %v5201
      %5378 = vmatmul.mubr.bf16.gmra.mrb[0].mxu0 %v5200
      %v5379 = vpop.f32.mrb[0].mxu0
      %v5380 = vadd.f32 %v4900, %v5379
      %v5381 = vpop.f32.mrb[0].mxu0
      %v5382 = vadd.f32 %v4900, %v5381
      %v5383 = vpop.f32.mrb[0].mxu0
      %v5384 = vadd.f32 %v4905, %v5383
      %v5385 = vpop.f32.mrb[0].mxu0
      %v5386 = vadd.f32 %v4905, %v5385
      %5387 = vmatprep.mubr.bf16.mxu0 %v5210
      %5388 = vmatmul.mubr.bf16.gmra.mrb[0].mxu0 %v5209
      %v5389 = vpop.f32.mrb[0].mxu0
      %v5390 = vadd.f32 %v4910, %v5389
      %v5391 = vpop.f32.mrb[0].mxu0
      %v5392 = vadd.f32 %v4910, %v5391
      %v5393 = vpop.f32.mrb[0].mxu0
      %v5394 = vadd.f32 %v4915, %v5393
      %v5395 = vpop.f32.mrb[0].mxu0
      %v5396 = vadd.f32 %v4915, %v5395
      %5397 = vmatprep.mubr.bf16.mxu0 %v5219
      %5398 = vmatmul.mubr.bf16.gmra.mrb[0].mxu0 %v5218
      %v5399 = vpop.f32.mrb[0].mxu0
      %v5400 = vadd.f32 %v4920, %v5399
      %v5401 = vpop.f32.mrb[0].mxu0
      %v5402 = vadd.f32 %v4920, %v5401
      %v5403 = vpop.f32.mrb[0].mxu0
      %v5404 = vadd.f32 %v4925, %v5403
      %v5405 = vpop.f32.mrb[0].mxu0
      %v5406 = vadd.f32 %v4925, %v5405
      %5407 = vmatprep.mubr.bf16.mxu0 %v5228
      %5408 = vmatmul.mubr.bf16.gmra.mrb[0].mxu0 %v5227
      %v5409 = vpop.f32.mrb[0].mxu0
      %v5410 = vadd.f32 %v4930, %v5409
      %v5411 = vpop.f32.mrb[0].mxu0
      %v5412 = vadd.f32 %v4930, %v5411
      %v5413 = vpop.f32.mrb[0].mxu0
      %v5414 = vadd.f32 %v4935, %v5413
      %v5415 = vpop.f32.mrb[0].mxu0
      %v5416 = vadd.f32 %v4935, %v5415
      %5417 = vmatprep.mubr.bf16.mxu0 %v5237
      %5418 = vmatmul.mubr.bf16.gmra.mrb[0].mxu0 %v5236
      %v5419 = vpop.f32.mrb[0].mxu0
      %v5420 = vadd.f32 %v4940, %v5419
      %v5421 = vpop.f32.mrb[0].mxu0
      %v5422 = vadd.f32 %v4940, %v5421
      %v5423 = vpop.f32.mrb[0].mxu0
      %v5424 = vadd.f32 %v4945, %v5423
      %v5425 = vpop.f32.mrb[0].mxu0
      %v5426 = vadd.f32 %v4945, %v5425
      %5427 = vmatprep.mubr.bf16.mxu0 %v5246
      %5428 = vmatmul.mubr.bf16.gmra.mrb[0].mxu0 %v5245
      %v5429 = vpop.f32.mrb[0].mxu0
      %v5430 = vadd.f32 %v4950, %v5429
      %v5431 = vpop.f32.mrb[0].mxu0
      %v5432 = vadd.f32 %v4950, %v5431
      %v5433 = vpop.f32.mrb[0].mxu0
      %v5434 = vadd.f32 %v4955, %v5433
      %v5435 = vpop.f32.mrb[0].mxu0
      %v5436 = vadd.f32 %v4955, %v5435
      %5437 = vmatprep.mubr.bf16.mxu0 %v5255
      %5438 = vmatmul.mubr.bf16.gmra.mrb[0].mxu0 %v5254
      %v5439 = vpop.f32.mrb[0].mxu0
      %v5440 = vadd.f32 %v4960, %v5439
      %v5441 = vpop.f32.mrb[0].mxu0
      %v5442 = vadd.f32 %v4960, %v5441
      %v5443 = vpop.f32.mrb[0].mxu0
      %v5444 = vadd.f32 %v4965, %v5443
      %v5445 = vpop.f32.mrb[0].mxu0
      %v5446 = vadd.f32 %v4965, %v5445
      %5447 = vdwg.mxu0
      %5448 = vmatprep.subr.bf16.mxu0 %v4680
      %5449 = vmatpush1.bf16.msra.mxu0 %v4679
      %5450 = vmatprep.subr.bf16.mxu0 %v4682
      %5451 = vmatpush1.bf16.msra.mxu0 %v4681
      %5452 = vmatprep.subr.bf16.mxu0 %v4684
      %5453 = vmatpush1.bf16.msra.mxu0 %v4683
      %5454 = vmatprep.subr.bf16.mxu0 %v4686
      %5455 = vmatpush1.bf16.msra.mxu0 %v4685
      %5456 = vmatprep.subr.bf16.mxu0 %v4688
      %5457 = vmatpush1.bf16.msra.mxu0 %v4687
      %5458 = vmatprep.subr.bf16.mxu0 %v4690
      %5459 = vmatpush1.bf16.msra.mxu0 %v4689
      %5460 = vmatprep.subr.bf16.mxu0 %v4692
      %5461 = vmatpush1.bf16.msra.mxu0 %v4691
      %5462 = vmatprep.subr.bf16.mxu0 %v4694
      %5463 = vmatpush1.bf16.msra.mxu0 %v4693
      %5464 = vmatprep.subr.bf16.mxu0 %v4696
      %5465 = vmatpush1.bf16.msra.mxu0 %v4695
      %5466 = vmatprep.subr.bf16.mxu0 %v4698
      %5467 = vmatpush1.bf16.msra.mxu0 %v4697
      %5468 = vmatprep.subr.bf16.mxu0 %v4700
      %5469 = vmatpush1.bf16.msra.mxu0 %v4699
      %5470 = vmatprep.subr.bf16.mxu0 %v4702
      %5471 = vmatpush1.bf16.msra.mxu0 %v4701
      %5472 = vmatprep.subr.bf16.mxu0 %v4704
      %5473 = vmatpush1.bf16.msra.mxu0 %v4703
      %5474 = vmatprep.subr.bf16.mxu0 %v4706
      %5475 = vmatpush1.bf16.msra.mxu0 %v4705
      %5476 = vmatprep.subr.bf16.mxu0 %v4708
      %5477 = vmatpush1.bf16.msra.mxu0 %v4707
      %5478 = vmatprep.subr.bf16.mxu0 %v4710
      %5479 = vmatpush1.bf16.msra.mxu0 %v4709
      %5480 = vmatprep.mubr.bf16.mxu0 %v5194
      %5481 = vmatmul.mubr.bf16.gmra.mrb[0].mxu0 %v5193
      %v5482 = vpop.f32.mrb[0].mxu0
      %v5483 = vadd.f32 %v5370, %v5482
      %v5484 = vpop.f32.mrb[0].mxu0
      %v5485 = vadd.f32 %v5372, %v5484
      %v5486 = vpop.f32.mrb[0].mxu0
      %v5487 = vadd.f32 %v5374, %v5486
      %v5488 = vpop.f32.mrb[0].mxu0
      %v5489 = vadd.f32 %v5376, %v5488
      %5490 = vmatprep.mubr.bf16.mxu0 %v5203
      %5491 = vmatmul.mubr.bf16.gmra.mrb[0].mxu0 %v5202
      %v5492 = vpop.f32.mrb[0].mxu0
      %v5493 = vadd.f32 %v5380, %v5492
      %v5494 = vpop.f32.mrb[0].mxu0
      %v5495 = vadd.f32 %v5382, %v5494
      %v5496 = vpop.f32.mrb[0].mxu0
      %v5497 = vadd.f32 %v5384, %v5496
      %v5498 = vpop.f32.mrb[0].mxu0
      %v5499 = vadd.f32 %v5386, %v5498
      %5500 = vmatprep.mubr.bf16.mxu0 %v5212
      %5501 = vmatmul.mubr.bf16.gmra.mrb[0].mxu0 %v5211
      %v5502 = vpop.f32.mrb[0].mxu0
      %v5503 = vadd.f32 %v5390, %v5502
      %v5504 = vpop.f32.mrb[0].mxu0
      %v5505 = vadd.f32 %v5392, %v5504
      %v5506 = vpop.f32.mrb[0].mxu0
      %v5507 = vadd.f32 %v5394, %v5506
      %v5508 = vpop.f32.mrb[0].mxu0
      %v5509 = vadd.f32 %v5396, %v5508
      %5510 = vmatprep.mubr.bf16.mxu0 %v5221
      %5511 = vmatmul.mubr.bf16.gmra.mrb[0].mxu0 %v5220
      %v5512 = vpop.f32.mrb[0].mxu0
      %v5513 = vadd.f32 %v5400, %v5512
      %v5514 = vpop.f32.mrb[0].mxu0
      %v5515 = vadd.f32 %v5402, %v5514
      %v5516 = vpop.f32.mrb[0].mxu0
      %v5517 = vadd.f32 %v5404, %v5516
      %v5518 = vpop.f32.mrb[0].mxu0
      %v5519 = vadd.f32 %v5406, %v5518
      %5520 = vmatprep.mubr.bf16.mxu0 %v5230
      %5521 = vmatmul.mubr.bf16.gmra.mrb[0].mxu0 %v5229
      %v5522 = vpop.f32.mrb[0].mxu0
      %v5523 = vadd.f32 %v5410, %v5522
      %v5524 = vpop.f32.mrb[0].mxu0
      %v5525 = vadd.f32 %v5412, %v5524
      %v5526 = vpop.f32.mrb[0].mxu0
      %v5527 = vadd.f32 %v5414, %v5526
      %v5528 = vpop.f32.mrb[0].mxu0
      %v5529 = vadd.f32 %v5416, %v5528
      %5530 = vmatprep.mubr.bf16.mxu0 %v5239
      %5531 = vmatmul.mubr.bf16.gmra.mrb[0].mxu0 %v5238
      %v5532 = vpop.f32.mrb[0].mxu0
      %v5533 = vadd.f32 %v5420, %v5532
      %v5534 = vpop.f32.mrb[0].mxu0
      %v5535 = vadd.f32 %v5422, %v5534
      %v5536 = vpop.f32.mrb[0].mxu0
      %v5537 = vadd.f32 %v5424, %v5536
      %v5538 = vpop.f32.mrb[0].mxu0
      %v5539 = vadd.f32 %v5426, %v5538
      %5540 = vmatprep.mubr.bf16.mxu0 %v5248
      %5541 = vmatmul.mubr.bf16.gmra.mrb[0].mxu0 %v5247
      %v5542 = vpop.f32.mrb[0].mxu0
      %v5543 = vadd.f32 %v5430, %v5542
      %v5544 = vpop.f32.mrb[0].mxu0
      %v5545 = vadd.f32 %v5432, %v5544
      %v5546 = vpop.f32.mrb[0].mxu0
      %v5547 = vadd.f32 %v5434, %v5546
      %v5548 = vpop.f32.mrb[0].mxu0
      %v5549 = vadd.f32 %v5436, %v5548
      %5550 = vmatprep.mubr.bf16.mxu0 %v5257
      %5551 = vmatmul.mubr.bf16.gmra.mrb[0].mxu0 %v5256
      %v5552 = vpop.f32.mrb[0].mxu0
      %v5553 = vadd.f32 %v5440, %v5552
      %v5554 = vpop.f32.mrb[0].mxu0
      %v5555 = vadd.f32 %v5442, %v5554
      %v5556 = vpop.f32.mrb[0].mxu0
      %v5557 = vadd.f32 %v5444, %v5556
      %v5558 = vpop.f32.mrb[0].mxu0
      %v5559 = vadd.f32 %v5446, %v5558
      %5560 = vdwg.mxu0
      %5561 = vmatprep.subr.bf16.mxu0 %v4712
      %5562 = vmatpush1.bf16.msra.mxu0 %v4711
      %5563 = vmatprep.subr.bf16.mxu0 %v4714
      %5564 = vmatpush1.bf16.msra.mxu0 %v4713
      %5565 = vmatprep.subr.bf16.mxu0 %v4716
      %5566 = vmatpush1.bf16.msra.mxu0 %v4715
      %5567 = vmatprep.subr.bf16.mxu0 %v4718
      %5568 = vmatpush1.bf16.msra.mxu0 %v4717
      %5569 = vmatprep.subr.bf16.mxu0 %v4720
      %5570 = vmatpush1.bf16.msra.mxu0 %v4719
      %5571 = vmatprep.subr.bf16.mxu0 %v4722
      %5572 = vmatpush1.bf16.msra.mxu0 %v4721
      %5573 = vmatprep.subr.bf16.mxu0 %v4724
      %5574 = vmatpush1.bf16.msra.mxu0 %v4723
      %5575 = vmatprep.subr.bf16.mxu0 %v4726
      %5576 = vmatpush1.bf16.msra.mxu0 %v4725
      %5577 = vmatprep.subr.bf16.mxu0 %v4728
      %5578 = vmatpush1.bf16.msra.mxu0 %v4727
      %5579 = vmatprep.subr.bf16.mxu0 %v4730
      %5580 = vmatpush1.bf16.msra.mxu0 %v4729
      %5581 = vmatprep.subr.bf16.mxu0 %v4732
      %5582 = vmatpush1.bf16.msra.mxu0 %v4731
      %5583 = vmatprep.subr.bf16.mxu0 %v4734
      %5584 = vmatpush1.bf16.msra.mxu0 %v4733
      %5585 = vmatprep.subr.bf16.mxu0 %v4736
      %5586 = vmatpush1.bf16.msra.mxu0 %v4735
      %5587 = vmatprep.subr.bf16.mxu0 %v4738
      %5588 = vmatpush1.bf16.msra.mxu0 %v4737
      %5589 = vmatprep.subr.bf16.mxu0 %v4740
      %5590 = vmatpush1.bf16.msra.mxu0 %v4739
      %5591 = vmatprep.subr.bf16.mxu0 %v4742
      %5592 = vmatpush1.bf16.msra.mxu0 %v4741
      %5593 = vmatprep.mubr.bf16.mxu0 %v5196
      %5594 = vmatmul.mubr.bf16.gmra.mrb[0].mxu0 %v5195
      %v5595 = vpop.f32.mrb[0].mxu0
      %v5596 = vadd.f32 %v5483, %v5595
      %v5597 = vpop.f32.mrb[0].mxu0
      %v5598 = vadd.f32 %v5485, %v5597
      %v5599 = vpop.f32.mrb[0].mxu0
      %v5600 = vadd.f32 %v5487, %v5599
      %v5601 = vpop.f32.mrb[0].mxu0
      %v5602 = vadd.f32 %v5489, %v5601
      %5603 = vmatprep.mubr.bf16.mxu0 %v5205
      %5604 = vmatmul.mubr.bf16.gmra.mrb[0].mxu0 %v5204
      %v5605 = vpop.f32.mrb[0].mxu0
      %v5606 = vadd.f32 %v5493, %v5605
      %v5607 = vpop.f32.mrb[0].mxu0
      %v5608 = vadd.f32 %v5495, %v5607
      %v5609 = vpop.f32.mrb[0].mxu0
      %v5610 = vadd.f32 %v5497, %v5609
      %v5611 = vpop.f32.mrb[0].mxu0
      %v5612 = vadd.f32 %v5499, %v5611
      %5613 = vmatprep.mubr.bf16.mxu0 %v5214
      %5614 = vmatmul.mubr.bf16.gmra.mrb[0].mxu0 %v5213
      %v5615 = vpop.f32.mrb[0].mxu0
      %v5616 = vadd.f32 %v5503, %v5615
      %v5617 = vpop.f32.mrb[0].mxu0
      %v5618 = vadd.f32 %v5505, %v5617
      %v5619 = vpop.f32.mrb[0].mxu0
      %v5620 = vadd.f32 %v5507, %v5619
      %v5621 = vpop.f32.mrb[0].mxu0
      %v5622 = vadd.f32 %v5509, %v5621
      %5623 = vmatprep.mubr.bf16.mxu0 %v5223
      %5624 = vmatmul.mubr.bf16.gmra.mrb[0].mxu0 %v5222
      %v5625 = vpop.f32.mrb[0].mxu0
      %v5626 = vadd.f32 %v5513, %v5625
      %v5627 = vpop.f32.mrb[0].mxu0
      %v5628 = vadd.f32 %v5515, %v5627
      %v5629 = vpop.f32.mrb[0].mxu0
      %v5630 = vadd.f32 %v5517, %v5629
      %v5631 = vpop.f32.mrb[0].mxu0
      %v5632 = vadd.f32 %v5519, %v5631
      %5633 = vmatprep.mubr.bf16.mxu0 %v5232
      %5634 = vmatmul.mubr.bf16.gmra.mrb[0].mxu0 %v5231
      %v5635 = vpop.f32.mrb[0].mxu0
      %v5636 = vadd.f32 %v5523, %v5635
      %v5637 = vpop.f32.mrb[0].mxu0
      %v5638 = vadd.f32 %v5525, %v5637
      %v5639 = vpop.f32.mrb[0].mxu0
      %v5640 = vadd.f32 %v5527, %v5639
      %v5641 = vpop.f32.mrb[0].mxu0
      %v5642 = vadd.f32 %v5529, %v5641
      %5643 = vmatprep.mubr.bf16.mxu0 %v5241
      %5644 = vmatmul.mubr.bf16.gmra.mrb[0].mxu0 %v5240
      %v5645 = vpop.f32.mrb[0].mxu0
      %v5646 = vadd.f32 %v5533, %v5645
      %v5647 = vpop.f32.mrb[0].mxu0
      %v5648 = vadd.f32 %v5535, %v5647
      %v5649 = vpop.f32.mrb[0].mxu0
      %v5650 = vadd.f32 %v5537, %v5649
      %v5651 = vpop.f32.mrb[0].mxu0
      %v5652 = vadd.f32 %v5539, %v5651
      %5653 = vmatprep.mubr.bf16.mxu0 %v5250
      %5654 = vmatmul.mubr.bf16.gmra.mrb[0].mxu0 %v5249
      %v5655 = vpop.f32.mrb[0].mxu0
      %v5656 = vadd.f32 %v5543, %v5655
      %v5657 = vpop.f32.mrb[0].mxu0
      %v5658 = vadd.f32 %v5545, %v5657
      %v5659 = vpop.f32.mrb[0].mxu0
      %v5660 = vadd.f32 %v5547, %v5659
      %v5661 = vpop.f32.mrb[0].mxu0
      %v5662 = vadd.f32 %v5549, %v5661
      %5663 = vmatprep.mubr.bf16.mxu0 %v5259
      %5664 = vmatmul.mubr.bf16.gmra.mrb[0].mxu0 %v5258
      %v5665 = vpop.f32.mrb[0].mxu0
      %v5666 = vadd.f32 %v5553, %v5665
      %v5667 = vpop.f32.mrb[0].mxu0
      %v5668 = vadd.f32 %v5555, %v5667
      %v5669 = vpop.f32.mrb[0].mxu0
      %v5670 = vadd.f32 %v5557, %v5669
      %v5671 = vpop.f32.mrb[0].mxu0
      %v5672 = vadd.f32 %v5559, %v5671
      %5673 = vdwg.mxu0
      %5674 = vmatprep.subr.bf16.mxu0 %v4744
      %5675 = vmatpush1.bf16.msra.mxu0 %v4743
      %5676 = vmatprep.subr.bf16.mxu0 %v4746
      %5677 = vmatpush1.bf16.msra.mxu0 %v4745
      %5678 = vmatprep.subr.bf16.mxu0 %v4748
      %5679 = vmatpush1.bf16.msra.mxu0 %v4747
      %5680 = vmatprep.subr.bf16.mxu0 %v4750
      %5681 = vmatpush1.bf16.msra.mxu0 %v4749
      %5682 = vmatprep.subr.bf16.mxu0 %v4752
      %5683 = vmatpush1.bf16.msra.mxu0 %v4751
      %5684 = vmatprep.subr.bf16.mxu0 %v4754
      %5685 = vmatpush1.bf16.msra.mxu0 %v4753
      %5686 = vmatprep.subr.bf16.mxu0 %v4756
      %5687 = vmatpush1.bf16.msra.mxu0 %v4755
      %5688 = vmatprep.subr.bf16.mxu0 %v4758
      %5689 = vmatpush1.bf16.msra.mxu0 %v4757
      %5690 = vmatprep.subr.bf16.mxu0 %v4760
      %5691 = vmatpush1.bf16.msra.mxu0 %v4759
      %5692 = vmatprep.subr.bf16.mxu0 %v4762
      %5693 = vmatpush1.bf16.msra.mxu0 %v4761
      %5694 = vmatprep.subr.bf16.mxu0 %v4764
      %5695 = vmatpush1.bf16.msra.mxu0 %v4763
      %5696 = vmatprep.subr.bf16.mxu0 %v4766
      %5697 = vmatpush1.bf16.msra.mxu0 %v4765
      %5698 = vmatprep.subr.bf16.mxu0 %v4768
      %5699 = vmatpush1.bf16.msra.mxu0 %v4767
      %5700 = vmatprep.subr.bf16.mxu0 %v4770
      %5701 = vmatpush1.bf16.msra.mxu0 %v4769
      %5702 = vmatprep.subr.bf16.mxu0 %v4772
      %5703 = vmatpush1.bf16.msra.mxu0 %v4771
      %5704 = vmatprep.subr.bf16.mxu0 %v4774
      %5705 = vmatpush1.bf16.msra.mxu0 %v4773
      %5706 = vmatprep.mubr.bf16.mxu0 %v5198
      %5707 = vmatmul.mubr.bf16.gmra.mrb[0].mxu0 %v5197
      %v5708 = vpop.f32.mrb[0].mxu0
      %v5709 = vadd.f32 %v5596, %v5708
      %v5710 = vpop.f32.mrb[0].mxu0
      %v5711 = vadd.f32 %v5598, %v5710
      %v5712 = vpop.f32.mrb[0].mxu0
      %v5713 = vadd.f32 %v5600, %v5712
      %v5714 = vpop.f32.mrb[0].mxu0
      %v5715 = vadd.f32 %v5602, %v5714
      %5716 = vmatprep.mubr.bf16.mxu0 %v5207
      %5717 = vmatmul.mubr.bf16.gmra.mrb[0].mxu0 %v5206
      %v5718 = vpop.f32.mrb[0].mxu0
      %v5719 = vadd.f32 %v5606, %v5718
      %v5720 = vpop.f32.mrb[0].mxu0
      %v5721 = vadd.f32 %v5608, %v5720
      %v5722 = vpop.f32.mrb[0].mxu0
      %v5723 = vadd.f32 %v5610, %v5722
      %v5724 = vpop.f32.mrb[0].mxu0
      %v5725 = vadd.f32 %v5612, %v5724
      %5726 = vmatprep.mubr.bf16.mxu0 %v5216
      %5727 = vmatmul.mubr.bf16.gmra.mrb[0].mxu0 %v5215
      %v5728 = vpop.f32.mrb[0].mxu0
      %v5729 = vadd.f32 %v5616, %v5728
      %v5730 = vpop.f32.mrb[0].mxu0
      %v5731 = vadd.f32 %v5618, %v5730
      %v5732 = vpop.f32.mrb[0].mxu0
      %v5733 = vadd.f32 %v5620, %v5732
      %v5734 = vpop.f32.mrb[0].mxu0
      %v5735 = vadd.f32 %v5622, %v5734
      %5736 = vmatprep.mubr.bf16.mxu0 %v5225
      %5737 = vmatmul.mubr.bf16.gmra.mrb[0].mxu0 %v5224
      %v5738 = vpop.f32.mrb[0].mxu0
      %v5739 = vadd.f32 %v5626, %v5738
      %v5740 = vpop.f32.mrb[0].mxu0
      %v5741 = vadd.f32 %v5628, %v5740
      %v5742 = vpop.f32.mrb[0].mxu0
      %v5743 = vadd.f32 %v5630, %v5742
      %v5744 = vpop.f32.mrb[0].mxu0
      %v5745 = vadd.f32 %v5632, %v5744
      %5746 = vmatprep.mubr.bf16.mxu0 %v5234
      %5747 = vmatmul.mubr.bf16.gmra.mrb[0].mxu0 %v5233
      %v5748 = vpop.f32.mrb[0].mxu0
      %v5749 = vadd.f32 %v5636, %v5748
      %v5750 = vpop.f32.mrb[0].mxu0
      %v5751 = vadd.f32 %v5638, %v5750
      %v5752 = vpop.f32.mrb[0].mxu0
      %v5753 = vadd.f32 %v5640, %v5752
      %v5754 = vpop.f32.mrb[0].mxu0
      %v5755 = vadd.f32 %v5642, %v5754
      %5756 = vmatprep.mubr.bf16.mxu0 %v5243
      %5757 = vmatmul.mubr.bf16.gmra.mrb[0].mxu0 %v5242
      %v5758 = vpop.f32.mrb[0].mxu0
      %v5759 = vadd.f32 %v5646, %v5758
      %v5760 = vpop.f32.mrb[0].mxu0
      %v5761 = vadd.f32 %v5648, %v5760
      %v5762 = vpop.f32.mrb[0].mxu0
      %v5763 = vadd.f32 %v5650, %v5762
      %v5764 = vpop.f32.mrb[0].mxu0
      %v5765 = vadd.f32 %v5652, %v5764
      %5766 = vmatprep.mubr.bf16.mxu0 %v5252
      %5767 = vmatmul.mubr.bf16.gmra.mrb[0].mxu0 %v5251
      %v5768 = vpop.f32.mrb[0].mxu0
      %v5769 = vadd.f32 %v5656, %v5768
      %v5770 = vpop.f32.mrb[0].mxu0
      %v5771 = vadd.f32 %v5658, %v5770
      %v5772 = vpop.f32.mrb[0].mxu0
      %v5773 = vadd.f32 %v5660, %v5772
      %v5774 = vpop.f32.mrb[0].mxu0
      %v5775 = vadd.f32 %v5662, %v5774
      %5776 = vmatprep.mubr.bf16.mxu0 %v5261
      %5777 = vmatmul.mubr.bf16.gmra.mrb[0].mxu0 %v5260
      %v5778 = vpop.f32.mrb[0].mxu0
      %v5779 = vadd.f32 %v5666, %v5778
      %v5780 = vpop.f32.mrb[0].mxu0
      %v5781 = vadd.f32 %v5668, %v5780
      %v5782 = vpop.f32.mrb[0].mxu0
      %v5783 = vadd.f32 %v5670, %v5782
      %v5784 = vpop.f32.mrb[0].mxu0
      %v5785 = vadd.f32 %v5672, %v5784
      %5786 = vdwg.mxu0
      %5787 = vmatprep.subr.bf16.mxu0 %v4776
      %5788 = vmatpush1.bf16.msra.mxu0 %v4775
      %5789 = vmatprep.subr.bf16.mxu0 %v4778
      %5790 = vmatpush1.bf16.msra.mxu0 %v4777
      %5791 = vmatprep.subr.bf16.mxu0 %v4780
      %5792 = vmatpush1.bf16.msra.mxu0 %v4779
      %5793 = vmatprep.subr.bf16.mxu0 %v4782
      %5794 = vmatpush1.bf16.msra.mxu0 %v4781
      %5795 = vmatprep.subr.bf16.mxu0 %v4784
      %5796 = vmatpush1.bf16.msra.mxu0 %v4783
      %5797 = vmatprep.subr.bf16.mxu0 %v4786
      %5798 = vmatpush1.bf16.msra.mxu0 %v4785
      %5799 = vmatprep.subr.bf16.mxu0 %v4788
      %5800 = vmatpush1.bf16.msra.mxu0 %v4787
      %5801 = vmatprep.subr.bf16.mxu0 %v4790
      %5802 = vmatpush1.bf16.msra.mxu0 %v4789
      %5803 = vmatprep.subr.bf16.mxu0 0
      %5804 = vmatpush1.bf16.msra.mxu0 0
      %5805 = vmatprep.subr.bf16.mxu0 0
      %5806 = vmatpush1.bf16.msra.mxu0 0
      %5807 = vmatprep.subr.bf16.mxu0 0
      %5808 = vmatpush1.bf16.msra.mxu0 0
      %5809 = vmatprep.subr.bf16.mxu0 0
      %5810 = vmatpush1.bf16.msra.mxu0 0
      %5811 = vmatprep.subr.bf16.mxu0 0
      %5812 = vmatpush1.bf16.msra.mxu0 0
      %5813 = vmatprep.subr.bf16.mxu0 0
      %5814 = vmatpush1.bf16.msra.mxu0 0
      %5815 = vmatprep.subr.bf16.mxu0 0
      %5816 = vmatpush1.bf16.msra.mxu0 0
      %5817 = vmatprep.subr.bf16.mxu0 0
      %5818 = vmatpush1.bf16.msra.mxu0 0
      %5819 = vmatprep.mubr.bf16.mxu0 0
      %5820 = vmatmul.mubr.bf16.gmra.mrb[0].mxu0 %v5199
      %v5821 = vpop.f32.mrb[0].mxu0
      %v5822 = vadd.f32 %v5709, %v5821
      %v5823 = vpop.f32.mrb[0].mxu0
      %v5824 = vadd.f32 %v5711, %v5823
      %v5825 = vpop.f32.mrb[0].mxu0
      %v5826 = vadd.f32 %v5713, %v5825
      %v5827 = vpop.f32.mrb[0].mxu0
      %v5828 = vadd.f32 %v5715, %v5827
      %5829 = vmatprep.mubr.bf16.mxu0 0
      %5830 = vmatmul.mubr.bf16.gmra.mrb[0].mxu0 %v5208
      %v5831 = vpop.f32.mrb[0].mxu0
      %v5832 = vadd.f32 %v5719, %v5831
      %v5833 = vpop.f32.mrb[0].mxu0
      %v5834 = vadd.f32 %v5721, %v5833
      %v5835 = vpop.f32.mrb[0].mxu0
      %v5836 = vadd.f32 %v5723, %v5835
      %v5837 = vpop.f32.mrb[0].mxu0
      %v5838 = vadd.f32 %v5725, %v5837
      %5839 = vmatprep.mubr.bf16.mxu0 0
      %5840 = vmatmul.mubr.bf16.gmra.mrb[0].mxu0 %v5217
      %v5841 = vpop.f32.mrb[0].mxu0
      %v5842 = vadd.f32 %v5729, %v5841
      %v5843 = vpop.f32.mrb[0].mxu0
      %v5844 = vadd.f32 %v5731, %v5843
      %v5845 = vpop.f32.mrb[0].mxu0
      %v5846 = vadd.f32 %v5733, %v5845
      %v5847 = vpop.f32.mrb[0].mxu0
      %v5848 = vadd.f32 %v5735, %v5847
      %5849 = vmatprep.mubr.bf16.mxu0 0
      %5850 = vmatmul.mubr.bf16.gmra.mrb[0].mxu0 %v5226
      %v5851 = vpop.f32.mrb[0].mxu0
      %v5852 = vadd.f32 %v5739, %v5851
      %v5853 = vpop.f32.mrb[0].mxu0
      %v5854 = vadd.f32 %v5741, %v5853
      %v5855 = vpop.f32.mrb[0].mxu0
      %v5856 = vadd.f32 %v5743, %v5855
      %v5857 = vpop.f32.mrb[0].mxu0
      %v5858 = vadd.f32 %v5745, %v5857
      %5859 = vmatprep.mubr.bf16.mxu0 0
      %5860 = vmatmul.mubr.bf16.gmra.mrb[0].mxu0 %v5235
      %v5861 = vpop.f32.mrb[0].mxu0
      %v5862 = vadd.f32 %v5749, %v5861
      %v5863 = vpop.f32.mrb[0].mxu0
      %v5864 = vadd.f32 %v5751, %v5863
      %v5865 = vpop.f32.mrb[0].mxu0
      %v5866 = vadd.f32 %v5753, %v5865
      %v5867 = vpop.f32.mrb[0].mxu0
      %v5868 = vadd.f32 %v5755, %v5867
      %5869 = vmatprep.mubr.bf16.mxu0 0
      %5870 = vmatmul.mubr.bf16.gmra.mrb[0].mxu0 %v5244
      %v5871 = vpop.f32.mrb[0].mxu0
      %v5872 = vadd.f32 %v5759, %v5871
      %v5873 = vpop.f32.mrb[0].mxu0
      %v5874 = vadd.f32 %v5761, %v5873
      %v5875 = vpop.f32.mrb[0].mxu0
      %v5876 = vadd.f32 %v5763, %v5875
      %v5877 = vpop.f32.mrb[0].mxu0
      %v5878 = vadd.f32 %v5765, %v5877
      %5879 = vmatprep.mubr.bf16.mxu0 0
      %5880 = vmatmul.mubr.bf16.gmra.mrb[0].mxu0 %v5253
      %v5881 = vpop.f32.mrb[0].mxu0
      %v5882 = vadd.f32 %v5769, %v5881
      %v5883 = vpop.f32.mrb[0].mxu0
      %v5884 = vadd.f32 %v5771, %v5883
      %v5885 = vpop.f32.mrb[0].mxu0
      %v5886 = vadd.f32 %v5773, %v5885
      %v5887 = vpop.f32.mrb[0].mxu0
      %v5888 = vadd.f32 %v5775, %v5887
      %5889 = vmatprep.mubr.bf16.mxu0 0
      %5890 = vmatmul.mubr.bf16.gmra.mrb[0].mxu0 %v5262
      %v5891 = vpop.f32.mrb[0].mxu0
      %v5892 = vadd.f32 %v5779, %v5891
      %v5893 = vpop.f32.mrb[0].mxu0
      %v5894 = vadd.f32 %v5781, %v5893
      %v5895 = vpop.f32.mrb[0].mxu0
      %v5896 = vadd.f32 %v5783, %v5895
      %v5897 = vpop.f32.mrb[0].mxu0
      %v5898 = vadd.f32 %v5785, %v5897
      %5899 = vdwg.mxu0
      %v5900 = vmax.f32 %v5822, 0.0
      %v5901 = vmax.f32 %v5824, 0.0
      %v5902 = vmax.f32 %v5826, 0.0
      %v5903 = vmax.f32 %v5828, 0.0
      %v5904 = vmax.f32 %v5832, 0.0
      %v5905 = vmax.f32 %v5834, 0.0
      %v5906 = vmax.f32 %v5836, 0.0
      %v5907 = vmax.f32 %v5838, 0.0
      %v5908 = vmax.f32 %v5842, 0.0
      %v5909 = vmax.f32 %v5844, 0.0
      %v5910 = vmax.f32 %v5846, 0.0
      %v5911 = vmax.f32 %v5848, 0.0
      %v5912 = vmax.f32 %v5852, 0.0
      %v5913 = vmax.f32 %v5854, 0.0
      %v5914 = vmax.f32 %v5856, 0.0
      %v5915 = vmax.f32 %v5858, 0.0
      %v5916 = vmax.f32 %v5862, 0.0
      %v5917 = vmax.f32 %v5864, 0.0
      %v5918 = vmax.f32 %v5866, 0.0
      %v5919 = vmax.f32 %v5868, 0.0
      %v5920 = vmax.f32 %v5872, 0.0
      %v5921 = vmax.f32 %v5874, 0.0
      %v5922 = vmax.f32 %v5876, 0.0
      %v5923 = vmax.f32 %v5878, 0.0
      %v5924 = vmax.f32 %v5882, 0.0
      %v5925 = vmax.f32 %v5884, 0.0
      %v5926 = vmax.f32 %v5886, 0.0
      %v5927 = vmax.f32 %v5888, 0.0
      %v5928 = vmax.f32 %v5892, 0.0
      %v5929 = vmax.f32 %v5894, 0.0
      %v5930 = vmax.f32 %v5896, 0.0
      %v5931 = vmax.f32 %v5898, 0.0
      %v5932 = vpack.c.bf16 %v5902, %v5900
      %v5933 = vpack.c.bf16 %v5903, %v5901
      %v5934 = vpack.c.bf16 %v5906, %v5904
      %v5935 = vpack.c.bf16 %v5907, %v5905
      %v5936 = vpack.c.bf16 %v5910, %v5908
      %v5937 = vpack.c.bf16 %v5911, %v5909
      %v5938 = vpack.c.bf16 %v5914, %v5912
      %v5939 = vpack.c.bf16 %v5915, %v5913
      %v5940 = vpack.c.bf16 %v5918, %v5916
      %v5941 = vpack.c.bf16 %v5919, %v5917
      %v5942 = vpack.c.bf16 %v5922, %v5920
      %v5943 = vpack.c.bf16 %v5923, %v5921
      %v5944 = vpack.c.bf16 %v5926, %v5924
      %v5945 = vpack.c.bf16 %v5927, %v5925
      %v5946 = vpack.c.bf16 %v5930, %v5928
      %v5947 = vpack.c.bf16 %v5931, %v5929
      %5948 = vst [vmem:[#allocation6] sm:$0xff] %v5932
      %5949 = vst [vmem:[#allocation6 + $0x8] sm:$0xff] %v5933
      %5950 = vst [vmem:[#allocation6 + $0x10] sm:$0xff] %v5934
      %5951 = vst [vmem:[#allocation6 + $0x18] sm:$0xff] %v5935
      %5952 = vst [vmem:[#allocation6 + $0x20] sm:$0xff] %v5936
      %5953 = vst [vmem:[#allocation6 + $0x28] sm:$0xff] %v5937
      %5954 = vst [vmem:[#allocation6 + $0x30] sm:$0xff] %v5938
      %5955 = vst [vmem:[#allocation6 + $0x38] sm:$0xff] %v5939
      %5956 = vst [vmem:[#allocation6 + $0x40] sm:$0xff] %v5940
      %5957 = vst [vmem:[#allocation6 + $0x48] sm:$0xff] %v5941
      %5958 = vst [vmem:[#allocation6 + $0x50] sm:$0xff] %v5942
      %5959 = vst [vmem:[#allocation6 + $0x58] sm:$0xff] %v5943
      %5960 = vst [vmem:[#allocation6 + $0x60] sm:$0xff] %v5944
      %5961 = vst [vmem:[#allocation6 + $0x68] sm:$0xff] %v5945
      %5962 = vst [vmem:[#allocation6 + $0x70] sm:$0xff] %v5946
      %5963 = vst [vmem:[#allocation6 + $0x78] sm:$0xff] %v5947
      %v5964 = vld [vmem:[%s8 + $0x240] sm:$0xff]
      %v5965 = vld [vmem:[%s8 + $0x248] sm:$0xff]
      %v5966 = vld [vmem:[%s8 + $0x250] sm:$0xff]
      %v5967 = vld [vmem:[%s8 + $0x258] sm:$0xff]
      %v5968 = vld [vmem:[%s8 + $0x260] sm:$0xf]
      %v5969 = vld [vmem:[%s8 + $0x264] sm:$0xff]
      %v5970 = vld [vmem:[%s8 + $0x26c] sm:$0xff]
      %v5971 = vld [vmem:[%s8 + $0x274] sm:$0xff]
      %v5972 = vld [vmem:[%s8 + $0x27c] sm:$0xff]
      %v5973 = vld [vmem:[%s8 + $0x284] sm:$0xf]
      %v5974 = vld [vmem:[%s8 + $0x288] sm:$0xff]
      %v5975 = vld [vmem:[%s8 + $0x290] sm:$0xff]
      %v5976 = vld [vmem:[%s8 + $0x298] sm:$0xff]
      %v5977 = vld [vmem:[%s8 + $0x2a0] sm:$0xff]
      %v5978 = vld [vmem:[%s8 + $0x2a8] sm:$0xf]
      %v5979 = vld [vmem:[%s8 + $0x2ac] sm:$0xff]
      %v5980 = vld [vmem:[%s8 + $0x2b4] sm:$0xff]
      %v5981 = vld [vmem:[%s8 + $0x2bc] sm:$0xff]
      %v5982 = vld [vmem:[%s8 + $0x2c4] sm:$0xff]
      %v5983 = vld [vmem:[%s8 + $0x2cc] sm:$0xf]
      %v5984 = vld [vmem:[%s8 + $0x2d0] sm:$0xff]
      %v5985 = vld [vmem:[%s8 + $0x2d8] sm:$0xff]
      %v5986 = vld [vmem:[%s8 + $0x2e0] sm:$0xff]
      %v5987 = vld [vmem:[%s8 + $0x2e8] sm:$0xff]
      %v5988 = vld [vmem:[%s8 + $0x2f0] sm:$0xf]
      %v5989 = vld [vmem:[%s8 + $0x2f4] sm:$0xff]
      %v5990 = vld [vmem:[%s8 + $0x2fc] sm:$0xff]
      %v5991 = vld [vmem:[%s8 + $0x304] sm:$0xff]
      %v5992 = vld [vmem:[%s8 + $0x30c] sm:$0xff]
      %v5993 = vld [vmem:[%s8 + $0x314] sm:$0xf]
      %v5994 = vld [vmem:[%s8 + $0x318] sm:$0xff]
      %v5995 = vld [vmem:[%s8 + $0x320] sm:$0xff]
      %v5996 = vld [vmem:[%s8 + $0x328] sm:$0xff]
      %v5997 = vld [vmem:[%s8 + $0x330] sm:$0xff]
      %v5998 = vld [vmem:[%s8 + $0x338] sm:$0xf]
      %v5999 = vld [vmem:[%s8 + $0x33c] sm:$0xff]
      %v6000 = vld [vmem:[%s8 + $0x344] sm:$0xff]
      %v6001 = vld [vmem:[%s8 + $0x34c] sm:$0xff]
      %v6002 = vld [vmem:[%s8 + $0x354] sm:$0xff]
      %v6003 = vld [vmem:[%s8 + $0x35c] sm:$0xf]
      %v6004 = vld [vmem:[%s8 + $0x360] sm:$0xff]
      %v6005 = vld [vmem:[%s8 + $0x368] sm:$0xff]
      %v6006 = vld [vmem:[%s8 + $0x370] sm:$0xff]
      %v6007 = vld [vmem:[%s8 + $0x378] sm:$0xff]
      %v6008 = vld [vmem:[%s8 + $0x380] sm:$0xf]
      %v6009 = vld [vmem:[%s8 + $0x384] sm:$0xff]
      %v6010 = vld [vmem:[%s8 + $0x38c] sm:$0xff]
      %v6011 = vld [vmem:[%s8 + $0x394] sm:$0xff]
      %v6012 = vld [vmem:[%s8 + $0x39c] sm:$0xff]
      %v6013 = vld [vmem:[%s8 + $0x3a4] sm:$0xf]
      %v6014 = vld [vmem:[%s8 + $0x3a8] sm:$0xff]
      %v6015 = vld [vmem:[%s8 + $0x3b0] sm:$0xff]
      %v6016 = vld [vmem:[%s8 + $0x3b8] sm:$0xff]
      %v6017 = vld [vmem:[%s8 + $0x3c0] sm:$0xff]
      %v6018 = vld [vmem:[%s8 + $0x3c8] sm:$0xf]
      %v6019 = vld [vmem:[%s8 + $0x3cc] sm:$0xff]
      %v6020 = vld [vmem:[%s8 + $0x3d4] sm:$0xff]
      %v6021 = vld [vmem:[%s8 + $0x3dc] sm:$0xff]
      %v6022 = vld [vmem:[%s8 + $0x3e4] sm:$0xff]
      %v6023 = vld [vmem:[%s8 + $0x3ec] sm:$0xf]
      %v6024 = vld [vmem:[%s8 + $0x3f0] sm:$0xff]
      %v6025 = vld [vmem:[%s8 + $0x3f8] sm:$0xff]
      %v6026 = vld [vmem:[%s8 + $0x400] sm:$0xff]
      %v6027 = vld [vmem:[%s8 + $0x408] sm:$0xff]
      %v6028 = vld [vmem:[%s8 + $0x410] sm:$0xf]
      %v6029 = vld [vmem:[%s8 + $0x414] sm:$0xff]
      %v6030 = vld [vmem:[%s8 + $0x41c] sm:$0xff]
      %v6031 = vld [vmem:[%s8 + $0x424] sm:$0xff]
      %v6032 = vld [vmem:[%s8 + $0x42c] sm:$0xff]
      %v6033 = vld [vmem:[%s8 + $0x434] sm:$0xf]
      %v6034 = vld [vmem:[%s8 + $0x438] sm:$0xff]
      %v6035 = vld [vmem:[%s8 + $0x440] sm:$0xff]
      %v6036 = vld [vmem:[%s8 + $0x448] sm:$0xff]
      %v6037 = vld [vmem:[%s8 + $0x450] sm:$0xff]
      %v6038 = vld [vmem:[%s8 + $0x458] sm:$0xf]
      %v6039 = vld [vmem:[%s8 + $0x45c] sm:$0xff]
      %v6040 = vld [vmem:[%s8 + $0x464] sm:$0xff]
      %v6041 = vld [vmem:[%s8 + $0x46c] sm:$0xff]
      %v6042 = vld [vmem:[%s8 + $0x474] sm:$0xff]
      %v6043 = vld [vmem:[%s8 + $0x47c] sm:$0xf]
      %v6044 = vld [vmem:[%s9 + $0x80] sm:$0xff]
      %v6045 = vld [vmem:[%s9 + $0x88] sm:$0xff]
      %v6046 = vld [vmem:[%s9 + $0x90] sm:$0xff]
      %v6047 = vld [vmem:[%s9 + $0x98] sm:$0xff]
      %v6048 = vld [vmem:[%s9 + $0xa0] sm:$0xff]
      %v6049 = vld [vmem:[%s9 + $0xa8] sm:$0xff]
      %v6050 = vld [vmem:[%s9 + $0xb0] sm:$0xff]
      %v6051 = vld [vmem:[%s9 + $0xb8] sm:$0xff]
      %v6052 = vld [vmem:[%s9 + $0xc0] sm:$0xff]
      %v6053 = vld [vmem:[%s9 + $0xc8] sm:$0xff]
      %v6054 = vld [vmem:[%s9 + $0xd0] sm:$0xff]
      %v6055 = vld [vmem:[%s9 + $0xd8] sm:$0xff]
      %v6056 = vld [vmem:[%s9 + $0xe0] sm:$0xff]
      %v6057 = vld [vmem:[%s9 + $0xe8] sm:$0xff]
      %v6058 = vld [vmem:[%s9 + $0xf0] sm:$0xff]
      %v6059 = vld [vmem:[%s9 + $0xf8] sm:$0xff]
      %6061 = vset.pattern.permute.xlu0 0
      %6062 = vperm.xlu0 %6061, %v6044
      %v6063 = vpop.permute.xlu0 %6062
      %6066 = vset.pattern.permute.xlu0 0
      %6067 = vperm.xlu0 %6066, %v6045
      %v6068 = vpop.permute.xlu0 %6067
      %6071 = vset.pattern.permute.xlu0 0
      %6072 = vperm.xlu0 %6071, %v6046
      %v6073 = vpop.permute.xlu0 %6072
      %6076 = vset.pattern.permute.xlu0 0
      %6077 = vperm.xlu0 %6076, %v6047
      %v6078 = vpop.permute.xlu0 %6077
      %6081 = vset.pattern.permute.xlu0 0
      %6082 = vperm.xlu0 %6081, %v6048
      %v6083 = vpop.permute.xlu0 %6082
      %6086 = vset.pattern.permute.xlu0 0
      %6087 = vperm.xlu0 %6086, %v6049
      %v6088 = vpop.permute.xlu0 %6087
      %6091 = vset.pattern.permute.xlu0 0
      %6092 = vperm.xlu0 %6091, %v6050
      %v6093 = vpop.permute.xlu0 %6092
      %6096 = vset.pattern.permute.xlu0 0
      %6097 = vperm.xlu0 %6096, %v6051
      %v6098 = vpop.permute.xlu0 %6097
      %6101 = vset.pattern.permute.xlu0 0
      %6102 = vperm.xlu0 %6101, %v6052
      %v6103 = vpop.permute.xlu0 %6102
      %6106 = vset.pattern.permute.xlu0 0
      %6107 = vperm.xlu0 %6106, %v6053
      %v6108 = vpop.permute.xlu0 %6107
      %6111 = vset.pattern.permute.xlu0 0
      %6112 = vperm.xlu0 %6111, %v6054
      %v6113 = vpop.permute.xlu0 %6112
      %6116 = vset.pattern.permute.xlu0 0
      %6117 = vperm.xlu0 %6116, %v6055
      %v6118 = vpop.permute.xlu0 %6117
      %6121 = vset.pattern.permute.xlu0 0
      %6122 = vperm.xlu0 %6121, %v6056
      %v6123 = vpop.permute.xlu0 %6122
      %6126 = vset.pattern.permute.xlu0 0
      %6127 = vperm.xlu0 %6126, %v6057
      %v6128 = vpop.permute.xlu0 %6127
      %6131 = vset.pattern.permute.xlu0 0
      %6132 = vperm.xlu0 %6131, %v6058
      %v6133 = vpop.permute.xlu0 %6132
      %6136 = vset.pattern.permute.xlu0 0
      %6137 = vperm.xlu0 %6136, %v6059
      %v6138 = vpop.permute.xlu0 %6137
      %v6220 = vunpack.c.l.b16 %v5964
      %v6221 = vunpack.c.h.b16 %v5964
      %v6222 = vunpack.c.l.b16 %v5965
      %v6223 = vunpack.c.h.b16 %v5965
      %v6224 = vunpack.c.l.b16 %v5966
      %v6225 = vunpack.c.h.b16 %v5966
      %v6226 = vunpack.c.l.b16 %v5967
      %v6227 = vunpack.c.h.b16 %v5967
      %v6228 = vunpack.c.l.b16 %v5968
      %v6229 = vunpack.c.l.b16 %v5969
      %v6230 = vunpack.c.h.b16 %v5969
      %v6231 = vunpack.c.l.b16 %v5970
      %v6232 = vunpack.c.h.b16 %v5970
      %v6233 = vunpack.c.l.b16 %v5971
      %v6234 = vunpack.c.h.b16 %v5971
      %v6235 = vunpack.c.l.b16 %v5972
      %v6236 = vunpack.c.h.b16 %v5972
      %v6237 = vunpack.c.l.b16 %v5973
      %v6238 = vunpack.c.l.b16 %v5974
      %v6239 = vunpack.c.h.b16 %v5974
      %v6240 = vunpack.c.l.b16 %v5975
      %v6241 = vunpack.c.h.b16 %v5975
      %v6242 = vunpack.c.l.b16 %v5976
      %v6243 = vunpack.c.h.b16 %v5976
      %v6244 = vunpack.c.l.b16 %v5977
      %v6245 = vunpack.c.h.b16 %v5977
      %v6246 = vunpack.c.l.b16 %v5978
      %v6247 = vunpack.c.l.b16 %v5979
      %v6248 = vunpack.c.h.b16 %v5979
      %v6249 = vunpack.c.l.b16 %v5980
      %v6250 = vunpack.c.h.b16 %v5980
      %v6251 = vunpack.c.l.b16 %v5981
      %v6252 = vunpack.c.h.b16 %v5981
      %v6253 = vunpack.c.l.b16 %v5982
      %v6254 = vunpack.c.h.b16 %v5982
      %v6255 = vunpack.c.l.b16 %v5983
      %v6256 = vunpack.c.l.b16 %v5984
      %v6257 = vunpack.c.h.b16 %v5984
      %v6258 = vunpack.c.l.b16 %v5985
      %v6259 = vunpack.c.h.b16 %v5985
      %v6260 = vunpack.c.l.b16 %v5986
      %v6261 = vunpack.c.h.b16 %v5986
      %v6262 = vunpack.c.l.b16 %v5987
      %v6263 = vunpack.c.h.b16 %v5987
      %v6264 = vunpack.c.l.b16 %v5988
      %v6265 = vunpack.c.l.b16 %v5989
      %v6266 = vunpack.c.h.b16 %v5989
      %v6267 = vunpack.c.l.b16 %v5990
      %v6268 = vunpack.c.h.b16 %v5990
      %v6269 = vunpack.c.l.b16 %v5991
      %v6270 = vunpack.c.h.b16 %v5991
      %v6271 = vunpack.c.l.b16 %v5992
      %v6272 = vunpack.c.h.b16 %v5992
      %v6273 = vunpack.c.l.b16 %v5993
      %v6274 = vunpack.c.l.b16 %v5994
      %v6275 = vunpack.c.h.b16 %v5994
      %v6276 = vunpack.c.l.b16 %v5995
      %v6277 = vunpack.c.h.b16 %v5995
      %v6278 = vunpack.c.l.b16 %v5996
      %v6279 = vunpack.c.h.b16 %v5996
      %v6280 = vunpack.c.l.b16 %v5997
      %v6281 = vunpack.c.h.b16 %v5997
      %v6282 = vunpack.c.l.b16 %v5998
      %v6283 = vunpack.c.l.b16 %v5999
      %v6284 = vunpack.c.h.b16 %v5999
      %v6285 = vunpack.c.l.b16 %v6000
      %v6286 = vunpack.c.h.b16 %v6000
      %v6287 = vunpack.c.l.b16 %v6001
      %v6288 = vunpack.c.h.b16 %v6001
      %v6289 = vunpack.c.l.b16 %v6002
      %v6290 = vunpack.c.h.b16 %v6002
      %v6291 = vunpack.c.l.b16 %v6003
      %v6292 = vunpack.c.l.b16 %v6004
      %v6293 = vunpack.c.h.b16 %v6004
      %v6294 = vunpack.c.l.b16 %v6005
      %v6295 = vunpack.c.h.b16 %v6005
      %v6296 = vunpack.c.l.b16 %v6006
      %v6297 = vunpack.c.h.b16 %v6006
      %v6298 = vunpack.c.l.b16 %v6007
      %v6299 = vunpack.c.h.b16 %v6007
      %v6300 = vunpack.c.l.b16 %v6008
      %v6301 = vunpack.c.l.b16 %v6009
      %v6302 = vunpack.c.h.b16 %v6009
      %v6303 = vunpack.c.l.b16 %v6010
      %v6304 = vunpack.c.h.b16 %v6010
      %v6305 = vunpack.c.l.b16 %v6011
      %v6306 = vunpack.c.h.b16 %v6011
      %v6307 = vunpack.c.l.b16 %v6012
      %v6308 = vunpack.c.h.b16 %v6012
      %v6309 = vunpack.c.l.b16 %v6013
      %v6310 = vunpack.c.l.b16 %v6014
      %v6311 = vunpack.c.h.b16 %v6014
      %v6312 = vunpack.c.l.b16 %v6015
      %v6313 = vunpack.c.h.b16 %v6015
      %v6314 = vunpack.c.l.b16 %v6016
      %v6315 = vunpack.c.h.b16 %v6016
      %v6316 = vunpack.c.l.b16 %v6017
      %v6317 = vunpack.c.h.b16 %v6017
      %v6318 = vunpack.c.l.b16 %v6018
      %v6319 = vunpack.c.l.b16 %v6019
      %v6320 = vunpack.c.h.b16 %v6019
      %v6321 = vunpack.c.l.b16 %v6020
      %v6322 = vunpack.c.h.b16 %v6020
      %v6323 = vunpack.c.l.b16 %v6021
      %v6324 = vunpack.c.h.b16 %v6021
      %v6325 = vunpack.c.l.b16 %v6022
      %v6326 = vunpack.c.h.b16 %v6022
      %v6327 = vunpack.c.l.b16 %v6023
      %v6328 = vunpack.c.l.b16 %v6024
      %v6329 = vunpack.c.h.b16 %v6024
      %v6330 = vunpack.c.l.b16 %v6025
      %v6331 = vunpack.c.h.b16 %v6025
      %v6332 = vunpack.c.l.b16 %v6026
      %v6333 = vunpack.c.h.b16 %v6026
      %v6334 = vunpack.c.l.b16 %v6027
      %v6335 = vunpack.c.h.b16 %v6027
      %v6336 = vunpack.c.l.b16 %v6028
      %v6337 = vunpack.c.l.b16 %v6029
      %v6338 = vunpack.c.h.b16 %v6029
      %v6339 = vunpack.c.l.b16 %v6030
      %v6340 = vunpack.c.h.b16 %v6030
      %v6341 = vunpack.c.l.b16 %v6031
      %v6342 = vunpack.c.h.b16 %v6031
      %v6343 = vunpack.c.l.b16 %v6032
      %v6344 = vunpack.c.h.b16 %v6032
      %v6345 = vunpack.c.l.b16 %v6033
      %v6346 = vunpack.c.l.b16 %v6034
      %v6347 = vunpack.c.h.b16 %v6034
      %v6348 = vunpack.c.l.b16 %v6035
      %v6349 = vunpack.c.h.b16 %v6035
      %v6350 = vunpack.c.l.b16 %v6036
      %v6351 = vunpack.c.h.b16 %v6036
      %v6352 = vunpack.c.l.b16 %v6037
      %v6353 = vunpack.c.h.b16 %v6037
      %v6354 = vunpack.c.l.b16 %v6038
      %v6355 = vunpack.c.l.b16 %v6039
      %v6356 = vunpack.c.h.b16 %v6039
      %v6357 = vunpack.c.l.b16 %v6040
      %v6358 = vunpack.c.h.b16 %v6040
      %v6359 = vunpack.c.l.b16 %v6041
      %v6360 = vunpack.c.h.b16 %v6041
      %v6361 = vunpack.c.l.b16 %v6042
      %v6362 = vunpack.c.h.b16 %v6042
      %v6363 = vunpack.c.l.b16 %v6043
      %v6364 = vpack.c.b16 %v6229, %v6220
      %v6365 = vpack.c.b16 %v6230, %v6221
      %v6366 = vpack.c.b16 %v6231, %v6222
      %v6367 = vpack.c.b16 %v6232, %v6223
      %v6368 = vpack.c.b16 %v6233, %v6224
      %v6369 = vpack.c.b16 %v6234, %v6225
      %v6370 = vpack.c.b16 %v6235, %v6226
      %v6371 = vpack.c.b16 %v6236, %v6227
      %v6372 = vpack.c.b16 %v6237, %v6228
      %v6373 = vpack.c.b16 %v6247, %v6238
      %v6374 = vpack.c.b16 %v6248, %v6239
      %v6375 = vpack.c.b16 %v6249, %v6240
      %v6376 = vpack.c.b16 %v6250, %v6241
      %v6377 = vpack.c.b16 %v6251, %v6242
      %v6378 = vpack.c.b16 %v6252, %v6243
      %v6379 = vpack.c.b16 %v6253, %v6244
      %v6380 = vpack.c.b16 %v6254, %v6245
      %v6381 = vpack.c.b16 %v6255, %v6246
      %v6382 = vpack.c.b16 %v6265, %v6256
      %v6383 = vpack.c.b16 %v6266, %v6257
      %v6384 = vpack.c.b16 %v6267, %v6258
      %v6385 = vpack.c.b16 %v6268, %v6259
      %v6386 = vpack.c.b16 %v6269, %v6260
      %v6387 = vpack.c.b16 %v6270, %v6261
      %v6388 = vpack.c.b16 %v6271, %v6262
      %v6389 = vpack.c.b16 %v6272, %v6263
      %v6390 = vpack.c.b16 %v6273, %v6264
      %v6391 = vpack.c.b16 %v6283, %v6274
      %v6392 = vpack.c.b16 %v6284, %v6275
      %v6393 = vpack.c.b16 %v6285, %v6276
      %v6394 = vpack.c.b16 %v6286, %v6277
      %v6395 = vpack.c.b16 %v6287, %v6278
      %v6396 = vpack.c.b16 %v6288, %v6279
      %v6397 = vpack.c.b16 %v6289, %v6280
      %v6398 = vpack.c.b16 %v6290, %v6281
      %v6399 = vpack.c.b16 %v6291, %v6282
      %v6400 = vpack.c.b16 %v6301, %v6292
      %v6401 = vpack.c.b16 %v6302, %v6293
      %v6402 = vpack.c.b16 %v6303, %v6294
      %v6403 = vpack.c.b16 %v6304, %v6295
      %v6404 = vpack.c.b16 %v6305, %v6296
      %v6405 = vpack.c.b16 %v6306, %v6297
      %v6406 = vpack.c.b16 %v6307, %v6298
      %v6407 = vpack.c.b16 %v6308, %v6299
      %v6408 = vpack.c.b16 %v6309, %v6300
      %v6409 = vpack.c.b16 %v6319, %v6310
      %v6410 = vpack.c.b16 %v6320, %v6311
      %v6411 = vpack.c.b16 %v6321, %v6312
      %v6412 = vpack.c.b16 %v6322, %v6313
      %v6413 = vpack.c.b16 %v6323, %v6314
      %v6414 = vpack.c.b16 %v6324, %v6315
      %v6415 = vpack.c.b16 %v6325, %v6316
      %v6416 = vpack.c.b16 %v6326, %v6317
      %v6417 = vpack.c.b16 %v6327, %v6318
      %v6418 = vpack.c.b16 %v6337, %v6328
      %v6419 = vpack.c.b16 %v6338, %v6329
      %v6420 = vpack.c.b16 %v6339, %v6330
      %v6421 = vpack.c.b16 %v6340, %v6331
      %v6422 = vpack.c.b16 %v6341, %v6332
      %v6423 = vpack.c.b16 %v6342, %v6333
      %v6424 = vpack.c.b16 %v6343, %v6334
      %v6425 = vpack.c.b16 %v6344, %v6335
      %v6426 = vpack.c.b16 %v6345, %v6336
      %v6427 = vpack.c.b16 %v6355, %v6346
      %v6428 = vpack.c.b16 %v6356, %v6347
      %v6429 = vpack.c.b16 %v6357, %v6348
      %v6430 = vpack.c.b16 %v6358, %v6349
      %v6431 = vpack.c.b16 %v6359, %v6350
      %v6432 = vpack.c.b16 %v6360, %v6351
      %v6433 = vpack.c.b16 %v6361, %v6352
      %v6434 = vpack.c.b16 %v6362, %v6353
      %v6435 = vpack.c.b16 %v6363, %v6354
      %6508 = vmatprep.subr.bf16.mxu0 %v4648
      %6509 = vmatpush1.bf16.msra.mxu0 %v4647
      %6510 = vmatprep.subr.bf16.mxu0 %v4650
      %6511 = vmatpush1.bf16.msra.mxu0 %v4649
      %6512 = vmatprep.subr.bf16.mxu0 %v4652
      %6513 = vmatpush1.bf16.msra.mxu0 %v4651
      %6514 = vmatprep.subr.bf16.mxu0 %v4654
      %6515 = vmatpush1.bf16.msra.mxu0 %v4653
      %6516 = vmatprep.subr.bf16.mxu0 %v4656
      %6517 = vmatpush1.bf16.msra.mxu0 %v4655
      %6518 = vmatprep.subr.bf16.mxu0 %v4658
      %6519 = vmatpush1.bf16.msra.mxu0 %v4657
      %6520 = vmatprep.subr.bf16.mxu0 %v4660
      %6521 = vmatpush1.bf16.msra.mxu0 %v4659
      %6522 = vmatprep.subr.bf16.mxu0 %v4662
      %6523 = vmatpush1.bf16.msra.mxu0 %v4661
      %6524 = vmatprep.subr.bf16.mxu0 %v4664
      %6525 = vmatpush1.bf16.msra.mxu0 %v4663
      %6526 = vmatprep.subr.bf16.mxu0 %v4666
      %6527 = vmatpush1.bf16.msra.mxu0 %v4665
      %6528 = vmatprep.subr.bf16.mxu0 %v4668
      %6529 = vmatpush1.bf16.msra.mxu0 %v4667
      %6530 = vmatprep.subr.bf16.mxu0 %v4670
      %6531 = vmatpush1.bf16.msra.mxu0 %v4669
      %6532 = vmatprep.subr.bf16.mxu0 %v4672
      %6533 = vmatpush1.bf16.msra.mxu0 %v4671
      %6534 = vmatprep.subr.bf16.mxu0 %v4674
      %6535 = vmatpush1.bf16.msra.mxu0 %v4673
      %6536 = vmatprep.subr.bf16.mxu0 %v4676
      %6537 = vmatpush1.bf16.msra.mxu0 %v4675
      %6538 = vmatprep.subr.bf16.mxu0 %v4678
      %6539 = vmatpush1.bf16.msra.mxu0 %v4677
      %6540 = vmatprep.mubr.bf16.mxu0 %v6365
      %6541 = vmatmul.mubr.bf16.gmra.mrb[0].mxu0 %v6364
      %v6542 = vpop.f32.mrb[0].mxu0
      %v6543 = vadd.f32 %v6063, %v6542
      %v6544 = vpop.f32.mrb[0].mxu0
      %v6545 = vadd.f32 %v6063, %v6544
      %v6546 = vpop.f32.mrb[0].mxu0
      %v6547 = vadd.f32 %v6068, %v6546
      %v6548 = vpop.f32.mrb[0].mxu0
      %v6549 = vadd.f32 %v6068, %v6548
      %6550 = vmatprep.mubr.bf16.mxu0 %v6374
      %6551 = vmatmul.mubr.bf16.gmra.mrb[0].mxu0 %v6373
      %v6552 = vpop.f32.mrb[0].mxu0
      %v6553 = vadd.f32 %v6073, %v6552
      %v6554 = vpop.f32.mrb[0].mxu0
      %v6555 = vadd.f32 %v6073, %v6554
      %v6556 = vpop.f32.mrb[0].mxu0
      %v6557 = vadd.f32 %v6078, %v6556
      %v6558 = vpop.f32.mrb[0].mxu0
      %v6559 = vadd.f32 %v6078, %v6558
      %6560 = vmatprep.mubr.bf16.mxu0 %v6383
      %6561 = vmatmul.mubr.bf16.gmra.mrb[0].mxu0 %v6382
      %v6562 = vpop.f32.mrb[0].mxu0
      %v6563 = vadd.f32 %v6083, %v6562
      %v6564 = vpop.f32.mrb[0].mxu0
      %v6565 = vadd.f32 %v6083, %v6564
      %v6566 = vpop.f32.mrb[0].mxu0
      %v6567 = vadd.f32 %v6088, %v6566
      %v6568 = vpop.f32.mrb[0].mxu0
      %v6569 = vadd.f32 %v6088, %v6568
      %6570 = vmatprep.mubr.bf16.mxu0 %v6392
      %6571 = vmatmul.mubr.bf16.gmra.mrb[0].mxu0 %v6391
      %v6572 = vpop.f32.mrb[0].mxu0
      %v6573 = vadd.f32 %v6093, %v6572
      %v6574 = vpop.f32.mrb[0].mxu0
      %v6575 = vadd.f32 %v6093, %v6574
      %v6576 = vpop.f32.mrb[0].mxu0
      %v6577 = vadd.f32 %v6098, %v6576
      %v6578 = vpop.f32.mrb[0].mxu0
      %v6579 = vadd.f32 %v6098, %v6578
      %6580 = vmatprep.mubr.bf16.mxu0 %v6401
      %6581 = vmatmul.mubr.bf16.gmra.mrb[0].mxu0 %v6400
      %v6582 = vpop.f32.mrb[0].mxu0
      %v6583 = vadd.f32 %v6103, %v6582
      %v6584 = vpop.f32.mrb[0].mxu0
      %v6585 = vadd.f32 %v6103, %v6584
      %v6586 = vpop.f32.mrb[0].mxu0
      %v6587 = vadd.f32 %v6108, %v6586
      %v6588 = vpop.f32.mrb[0].mxu0
      %v6589 = vadd.f32 %v6108, %v6588
      %6590 = vmatprep.mubr.bf16.mxu0 %v6410
      %6591 = vmatmul.mubr.bf16.gmra.mrb[0].mxu0 %v6409
      %v6592 = vpop.f32.mrb[0].mxu0
      %v6593 = vadd.f32 %v6113, %v6592
      %v6594 = vpop.f32.mrb[0].mxu0
      %v6595 = vadd.f32 %v6113, %v6594
      %v6596 = vpop.f32.mrb[0].mxu0
      %v6597 = vadd.f32 %v6118, %v6596
      %v6598 = vpop.f32.mrb[0].mxu0
      %v6599 = vadd.f32 %v6118, %v6598
      %6600 = vmatprep.mubr.bf16.mxu0 %v6419
      %6601 = vmatmul.mubr.bf16.gmra.mrb[0].mxu0 %v6418
      %v6602 = vpop.f32.mrb[0].mxu0
      %v6603 = vadd.f32 %v6123, %v6602
      %v6604 = vpop.f32.mrb[0].mxu0
      %v6605 = vadd.f32 %v6123, %v6604
      %v6606 = vpop.f32.mrb[0].mxu0
      %v6607 = vadd.f32 %v6128, %v6606
      %v6608 = vpop.f32.mrb[0].mxu0
      %v6609 = vadd.f32 %v6128, %v6608
      %6610 = vmatprep.mubr.bf16.mxu0 %v6428
      %6611 = vmatmul.mubr.bf16.gmra.mrb[0].mxu0 %v6427
      %v6612 = vpop.f32.mrb[0].mxu0
      %v6613 = vadd.f32 %v6133, %v6612
      %v6614 = vpop.f32.mrb[0].mxu0
      %v6615 = vadd.f32 %v6133, %v6614
      %v6616 = vpop.f32.mrb[0].mxu0
      %v6617 = vadd.f32 %v6138, %v6616
      %v6618 = vpop.f32.mrb[0].mxu0
      %v6619 = vadd.f32 %v6138, %v6618
      %6620 = vdwg.mxu0
      %6621 = vmatprep.subr.bf16.mxu0 %v4680
      %6622 = vmatpush1.bf16.msra.mxu0 %v4679
      %6623 = vmatprep.subr.bf16.mxu0 %v4682
      %6624 = vmatpush1.bf16.msra.mxu0 %v4681
      %6625 = vmatprep.subr.bf16.mxu0 %v4684
      %6626 = vmatpush1.bf16.msra.mxu0 %v4683
      %6627 = vmatprep.subr.bf16.mxu0 %v4686
      %6628 = vmatpush1.bf16.msra.mxu0 %v4685
      %6629 = vmatprep.subr.bf16.mxu0 %v4688
      %6630 = vmatpush1.bf16.msra.mxu0 %v4687
      %6631 = vmatprep.subr.bf16.mxu0 %v4690
      %6632 = vmatpush1.bf16.msra.mxu0 %v4689
      %6633 = vmatprep.subr.bf16.mxu0 %v4692
      %6634 = vmatpush1.bf16.msra.mxu0 %v4691
      %6635 = vmatprep.subr.bf16.mxu0 %v4694
      %6636 = vmatpush1.bf16.msra.mxu0 %v4693
      %6637 = vmatprep.subr.bf16.mxu0 %v4696
      %6638 = vmatpush1.bf16.msra.mxu0 %v4695
      %6639 = vmatprep.subr.bf16.mxu0 %v4698
      %6640 = vmatpush1.bf16.msra.mxu0 %v4697
      %6641 = vmatprep.subr.bf16.mxu0 %v4700
      %6642 = vmatpush1.bf16.msra.mxu0 %v4699
      %6643 = vmatprep.subr.bf16.mxu0 %v4702
      %6644 = vmatpush1.bf16.msra.mxu0 %v4701
      %6645 = vmatprep.subr.bf16.mxu0 %v4704
      %6646 = vmatpush1.bf16.msra.mxu0 %v4703
      %6647 = vmatprep.subr.bf16.mxu0 %v4706
      %6648 = vmatpush1.bf16.msra.mxu0 %v4705
      %6649 = vmatprep.subr.bf16.mxu0 %v4708
      %6650 = vmatpush1.bf16.msra.mxu0 %v4707
      %6651 = vmatprep.subr.bf16.mxu0 %v4710
      %6652 = vmatpush1.bf16.msra.mxu0 %v4709
      %6653 = vmatprep.mubr.bf16.mxu0 %v6367
      %6654 = vmatmul.mubr.bf16.gmra.mrb[0].mxu0 %v6366
      %v6655 = vpop.f32.mrb[0].mxu0
      %v6656 = vadd.f32 %v6543, %v6655
      %v6657 = vpop.f32.mrb[0].mxu0
      %v6658 = vadd.f32 %v6545, %v6657
      %v6659 = vpop.f32.mrb[0].mxu0
      %v6660 = vadd.f32 %v6547, %v6659
      %v6661 = vpop.f32.mrb[0].mxu0
      %v6662 = vadd.f32 %v6549, %v6661
      %6663 = vmatprep.mubr.bf16.mxu0 %v6376
      %6664 = vmatmul.mubr.bf16.gmra.mrb[0].mxu0 %v6375
      %v6665 = vpop.f32.mrb[0].mxu0
      %v6666 = vadd.f32 %v6553, %v6665
      %v6667 = vpop.f32.mrb[0].mxu0
      %v6668 = vadd.f32 %v6555, %v6667
      %v6669 = vpop.f32.mrb[0].mxu0
      %v6670 = vadd.f32 %v6557, %v6669
      %v6671 = vpop.f32.mrb[0].mxu0
      %v6672 = vadd.f32 %v6559, %v6671
      %6673 = vmatprep.mubr.bf16.mxu0 %v6385
      %6674 = vmatmul.mubr.bf16.gmra.mrb[0].mxu0 %v6384
      %v6675 = vpop.f32.mrb[0].mxu0
      %v6676 = vadd.f32 %v6563, %v6675
      %v6677 = vpop.f32.mrb[0].mxu0
      %v6678 = vadd.f32 %v6565, %v6677
      %v6679 = vpop.f32.mrb[0].mxu0
      %v6680 = vadd.f32 %v6567, %v6679
      %v6681 = vpop.f32.mrb[0].mxu0
      %v6682 = vadd.f32 %v6569, %v6681
      %6683 = vmatprep.mubr.bf16.mxu0 %v6394
      %6684 = vmatmul.mubr.bf16.gmra.mrb[0].mxu0 %v6393
      %v6685 = vpop.f32.mrb[0].mxu0
      %v6686 = vadd.f32 %v6573, %v6685
      %v6687 = vpop.f32.mrb[0].mxu0
      %v6688 = vadd.f32 %v6575, %v6687
      %v6689 = vpop.f32.mrb[0].mxu0
      %v6690 = vadd.f32 %v6577, %v6689
      %v6691 = vpop.f32.mrb[0].mxu0
      %v6692 = vadd.f32 %v6579, %v6691
      %6693 = vmatprep.mubr.bf16.mxu0 %v6403
      %6694 = vmatmul.mubr.bf16.gmra.mrb[0].mxu0 %v6402
      %v6695 = vpop.f32.mrb[0].mxu0
      %v6696 = vadd.f32 %v6583, %v6695
      %v6697 = vpop.f32.mrb[0].mxu0
      %v6698 = vadd.f32 %v6585, %v6697
      %v6699 = vpop.f32.mrb[0].mxu0
      %v6700 = vadd.f32 %v6587, %v6699
      %v6701 = vpop.f32.mrb[0].mxu0
      %v6702 = vadd.f32 %v6589, %v6701
      %6703 = vmatprep.mubr.bf16.mxu0 %v6412
      %6704 = vmatmul.mubr.bf16.gmra.mrb[0].mxu0 %v6411
      %v6705 = vpop.f32.mrb[0].mxu0
      %v6706 = vadd.f32 %v6593, %v6705
      %v6707 = vpop.f32.mrb[0].mxu0
      %v6708 = vadd.f32 %v6595, %v6707
      %v6709 = vpop.f32.mrb[0].mxu0
      %v6710 = vadd.f32 %v6597, %v6709
      %v6711 = vpop.f32.mrb[0].mxu0
      %v6712 = vadd.f32 %v6599, %v6711
      %6713 = vmatprep.mubr.bf16.mxu0 %v6421
      %6714 = vmatmul.mubr.bf16.gmra.mrb[0].mxu0 %v6420
      %v6715 = vpop.f32.mrb[0].mxu0
      %v6716 = vadd.f32 %v6603, %v6715
      %v6717 = vpop.f32.mrb[0].mxu0
      %v6718 = vadd.f32 %v6605, %v6717
      %v6719 = vpop.f32.mrb[0].mxu0
      %v6720 = vadd.f32 %v6607, %v6719
      %v6721 = vpop.f32.mrb[0].mxu0
      %v6722 = vadd.f32 %v6609, %v6721
      %6723 = vmatprep.mubr.bf16.mxu0 %v6430
      %6724 = vmatmul.mubr.bf16.gmra.mrb[0].mxu0 %v6429
      %v6725 = vpop.f32.mrb[0].mxu0
      %v6726 = vadd.f32 %v6613, %v6725
      %v6727 = vpop.f32.mrb[0].mxu0
      %v6728 = vadd.f32 %v6615, %v6727
      %v6729 = vpop.f32.mrb[0].mxu0
      %v6730 = vadd.f32 %v6617, %v6729
      %v6731 = vpop.f32.mrb[0].mxu0
      %v6732 = vadd.f32 %v6619, %v6731
      %6733 = vdwg.mxu0
      %6734 = vmatprep.subr.bf16.mxu0 %v4712
      %6735 = vmatpush1.bf16.msra.mxu0 %v4711
      %6736 = vmatprep.subr.bf16.mxu0 %v4714
      %6737 = vmatpush1.bf16.msra.mxu0 %v4713
      %6738 = vmatprep.subr.bf16.mxu0 %v4716
      %6739 = vmatpush1.bf16.msra.mxu0 %v4715
      %6740 = vmatprep.subr.bf16.mxu0 %v4718
      %6741 = vmatpush1.bf16.msra.mxu0 %v4717
      %6742 = vmatprep.subr.bf16.mxu0 %v4720
      %6743 = vmatpush1.bf16.msra.mxu0 %v4719
      %6744 = vmatprep.subr.bf16.mxu0 %v4722
      %6745 = vmatpush1.bf16.msra.mxu0 %v4721
      %6746 = vmatprep.subr.bf16.mxu0 %v4724
      %6747 = vmatpush1.bf16.msra.mxu0 %v4723
      %6748 = vmatprep.subr.bf16.mxu0 %v4726
      %6749 = vmatpush1.bf16.msra.mxu0 %v4725
      %6750 = vmatprep.subr.bf16.mxu0 %v4728
      %6751 = vmatpush1.bf16.msra.mxu0 %v4727
      %6752 = vmatprep.subr.bf16.mxu0 %v4730
      %6753 = vmatpush1.bf16.msra.mxu0 %v4729
      %6754 = vmatprep.subr.bf16.mxu0 %v4732
      %6755 = vmatpush1.bf16.msra.mxu0 %v4731
      %6756 = vmatprep.subr.bf16.mxu0 %v4734
      %6757 = vmatpush1.bf16.msra.mxu0 %v4733
      %6758 = vmatprep.subr.bf16.mxu0 %v4736
      %6759 = vmatpush1.bf16.msra.mxu0 %v4735
      %6760 = vmatprep.subr.bf16.mxu0 %v4738
      %6761 = vmatpush1.bf16.msra.mxu0 %v4737
      %6762 = vmatprep.subr.bf16.mxu0 %v4740
      %6763 = vmatpush1.bf16.msra.mxu0 %v4739
      %6764 = vmatprep.subr.bf16.mxu0 %v4742
      %6765 = vmatpush1.bf16.msra.mxu0 %v4741
      %6766 = vmatprep.mubr.bf16.mxu0 %v6369
      %6767 = vmatmul.mubr.bf16.gmra.mrb[0].mxu0 %v6368
      %v6768 = vpop.f32.mrb[0].mxu0
      %v6769 = vadd.f32 %v6656, %v6768
      %v6770 = vpop.f32.mrb[0].mxu0
      %v6771 = vadd.f32 %v6658, %v6770
      %v6772 = vpop.f32.mrb[0].mxu0
      %v6773 = vadd.f32 %v6660, %v6772
      %v6774 = vpop.f32.mrb[0].mxu0
      %v6775 = vadd.f32 %v6662, %v6774
      %6776 = vmatprep.mubr.bf16.mxu0 %v6378
      %6777 = vmatmul.mubr.bf16.gmra.mrb[0].mxu0 %v6377
      %v6778 = vpop.f32.mrb[0].mxu0
      %v6779 = vadd.f32 %v6666, %v6778
      %v6780 = vpop.f32.mrb[0].mxu0
      %v6781 = vadd.f32 %v6668, %v6780
      %v6782 = vpop.f32.mrb[0].mxu0
      %v6783 = vadd.f32 %v6670, %v6782
      %v6784 = vpop.f32.mrb[0].mxu0
      %v6785 = vadd.f32 %v6672, %v6784
      %6786 = vmatprep.mubr.bf16.mxu0 %v6387
      %6787 = vmatmul.mubr.bf16.gmra.mrb[0].mxu0 %v6386
      %v6788 = vpop.f32.mrb[0].mxu0
      %v6789 = vadd.f32 %v6676, %v6788
      %v6790 = vpop.f32.mrb[0].mxu0
      %v6791 = vadd.f32 %v6678, %v6790
      %v6792 = vpop.f32.mrb[0].mxu0
      %v6793 = vadd.f32 %v6680, %v6792
      %v6794 = vpop.f32.mrb[0].mxu0
      %v6795 = vadd.f32 %v6682, %v6794
      %6796 = vmatprep.mubr.bf16.mxu0 %v6396
      %6797 = vmatmul.mubr.bf16.gmra.mrb[0].mxu0 %v6395
      %v6798 = vpop.f32.mrb[0].mxu0
      %v6799 = vadd.f32 %v6686, %v6798
      %v6800 = vpop.f32.mrb[0].mxu0
      %v6801 = vadd.f32 %v6688, %v6800
      %v6802 = vpop.f32.mrb[0].mxu0
      %v6803 = vadd.f32 %v6690, %v6802
      %v6804 = vpop.f32.mrb[0].mxu0
      %v6805 = vadd.f32 %v6692, %v6804
      %6806 = vmatprep.mubr.bf16.mxu0 %v6405
      %6807 = vmatmul.mubr.bf16.gmra.mrb[0].mxu0 %v6404
      %v6808 = vpop.f32.mrb[0].mxu0
      %v6809 = vadd.f32 %v6696, %v6808
      %v6810 = vpop.f32.mrb[0].mxu0
      %v6811 = vadd.f32 %v6698, %v6810
      %v6812 = vpop.f32.mrb[0].mxu0
      %v6813 = vadd.f32 %v6700, %v6812
      %v6814 = vpop.f32.mrb[0].mxu0
      %v6815 = vadd.f32 %v6702, %v6814
      %6816 = vmatprep.mubr.bf16.mxu0 %v6414
      %6817 = vmatmul.mubr.bf16.gmra.mrb[0].mxu0 %v6413
      %v6818 = vpop.f32.mrb[0].mxu0
      %v6819 = vadd.f32 %v6706, %v6818
      %v6820 = vpop.f32.mrb[0].mxu0
      %v6821 = vadd.f32 %v6708, %v6820
      %v6822 = vpop.f32.mrb[0].mxu0
      %v6823 = vadd.f32 %v6710, %v6822
      %v6824 = vpop.f32.mrb[0].mxu0
      %v6825 = vadd.f32 %v6712, %v6824
      %6826 = vmatprep.mubr.bf16.mxu0 %v6423
      %6827 = vmatmul.mubr.bf16.gmra.mrb[0].mxu0 %v6422
      %v6828 = vpop.f32.mrb[0].mxu0
      %v6829 = vadd.f32 %v6716, %v6828
      %v6830 = vpop.f32.mrb[0].mxu0
      %v6831 = vadd.f32 %v6718, %v6830
      %v6832 = vpop.f32.mrb[0].mxu0
      %v6833 = vadd.f32 %v6720, %v6832
      %v6834 = vpop.f32.mrb[0].mxu0
      %v6835 = vadd.f32 %v6722, %v6834
      %6836 = vmatprep.mubr.bf16.mxu0 %v6432
      %6837 = vmatmul.mubr.bf16.gmra.mrb[0].mxu0 %v6431
      %v6838 = vpop.f32.mrb[0].mxu0
      %v6839 = vadd.f32 %v6726, %v6838
      %v6840 = vpop.f32.mrb[0].mxu0
      %v6841 = vadd.f32 %v6728, %v6840
      %v6842 = vpop.f32.mrb[0].mxu0
      %v6843 = vadd.f32 %v6730, %v6842
      %v6844 = vpop.f32.mrb[0].mxu0
      %v6845 = vadd.f32 %v6732, %v6844
      %6846 = vdwg.mxu0
      %6847 = vmatprep.subr.bf16.mxu0 %v4744
      %6848 = vmatpush1.bf16.msra.mxu0 %v4743
      %6849 = vmatprep.subr.bf16.mxu0 %v4746
      %6850 = vmatpush1.bf16.msra.mxu0 %v4745
      %6851 = vmatprep.subr.bf16.mxu0 %v4748
      %6852 = vmatpush1.bf16.msra.mxu0 %v4747
      %6853 = vmatprep.subr.bf16.mxu0 %v4750
      %6854 = vmatpush1.bf16.msra.mxu0 %v4749
      %6855 = vmatprep.subr.bf16.mxu0 %v4752
      %6856 = vmatpush1.bf16.msra.mxu0 %v4751
      %6857 = vmatprep.subr.bf16.mxu0 %v4754
      %6858 = vmatpush1.bf16.msra.mxu0 %v4753
      %6859 = vmatprep.subr.bf16.mxu0 %v4756
      %6860 = vmatpush1.bf16.msra.mxu0 %v4755
      %6861 = vmatprep.subr.bf16.mxu0 %v4758
      %6862 = vmatpush1.bf16.msra.mxu0 %v4757
      %6863 = vmatprep.subr.bf16.mxu0 %v4760
      %6864 = vmatpush1.bf16.msra.mxu0 %v4759
      %6865 = vmatprep.subr.bf16.mxu0 %v4762
      %6866 = vmatpush1.bf16.msra.mxu0 %v4761
      %6867 = vmatprep.subr.bf16.mxu0 %v4764
      %6868 = vmatpush1.bf16.msra.mxu0 %v4763
      %6869 = vmatprep.subr.bf16.mxu0 %v4766
      %6870 = vmatpush1.bf16.msra.mxu0 %v4765
      %6871 = vmatprep.subr.bf16.mxu0 %v4768
      %6872 = vmatpush1.bf16.msra.mxu0 %v4767
      %6873 = vmatprep.subr.bf16.mxu0 %v4770
      %6874 = vmatpush1.bf16.msra.mxu0 %v4769
      %6875 = vmatprep.subr.bf16.mxu0 %v4772
      %6876 = vmatpush1.bf16.msra.mxu0 %v4771
      %6877 = vmatprep.subr.bf16.mxu0 %v4774
      %6878 = vmatpush1.bf16.msra.mxu0 %v4773
      %6879 = vmatprep.mubr.bf16.mxu0 %v6371
      %6880 = vmatmul.mubr.bf16.gmra.mrb[0].mxu0 %v6370
      %v6881 = vpop.f32.mrb[0].mxu0
      %v6882 = vadd.f32 %v6769, %v6881
      %v6883 = vpop.f32.mrb[0].mxu0
      %v6884 = vadd.f32 %v6771, %v6883
      %v6885 = vpop.f32.mrb[0].mxu0
      %v6886 = vadd.f32 %v6773, %v6885
      %v6887 = vpop.f32.mrb[0].mxu0
      %v6888 = vadd.f32 %v6775, %v6887
      %6889 = vmatprep.mubr.bf16.mxu0 %v6380
      %6890 = vmatmul.mubr.bf16.gmra.mrb[0].mxu0 %v6379
      %v6891 = vpop.f32.mrb[0].mxu0
      %v6892 = vadd.f32 %v6779, %v6891
      %v6893 = vpop.f32.mrb[0].mxu0
      %v6894 = vadd.f32 %v6781, %v6893
      %v6895 = vpop.f32.mrb[0].mxu0
      %v6896 = vadd.f32 %v6783, %v6895
      %v6897 = vpop.f32.mrb[0].mxu0
      %v6898 = vadd.f32 %v6785, %v6897
      %6899 = vmatprep.mubr.bf16.mxu0 %v6389
      %6900 = vmatmul.mubr.bf16.gmra.mrb[0].mxu0 %v6388
      %v6901 = vpop.f32.mrb[0].mxu0
      %v6902 = vadd.f32 %v6789, %v6901
      %v6903 = vpop.f32.mrb[0].mxu0
      %v6904 = vadd.f32 %v6791, %v6903
      %v6905 = vpop.f32.mrb[0].mxu0
      %v6906 = vadd.f32 %v6793, %v6905
      %v6907 = vpop.f32.mrb[0].mxu0
      %v6908 = vadd.f32 %v6795, %v6907
      %6909 = vmatprep.mubr.bf16.mxu0 %v6398
      %6910 = vmatmul.mubr.bf16.gmra.mrb[0].mxu0 %v6397
      %v6911 = vpop.f32.mrb[0].mxu0
      %v6912 = vadd.f32 %v6799, %v6911
      %v6913 = vpop.f32.mrb[0].mxu0
      %v6914 = vadd.f32 %v6801, %v6913
      %v6915 = vpop.f32.mrb[0].mxu0
      %v6916 = vadd.f32 %v6803, %v6915
      %v6917 = vpop.f32.mrb[0].mxu0
      %v6918 = vadd.f32 %v6805, %v6917
      %6919 = vmatprep.mubr.bf16.mxu0 %v6407
      %6920 = vmatmul.mubr.bf16.gmra.mrb[0].mxu0 %v6406
      %v6921 = vpop.f32.mrb[0].mxu0
      %v6922 = vadd.f32 %v6809, %v6921
      %v6923 = vpop.f32.mrb[0].mxu0
      %v6924 = vadd.f32 %v6811, %v6923
      %v6925 = vpop.f32.mrb[0].mxu0
      %v6926 = vadd.f32 %v6813, %v6925
      %v6927 = vpop.f32.mrb[0].mxu0
      %v6928 = vadd.f32 %v6815, %v6927
      %6929 = vmatprep.mubr.bf16.mxu0 %v6416
      %6930 = vmatmul.mubr.bf16.gmra.mrb[0].mxu0 %v6415
      %v6931 = vpop.f32.mrb[0].mxu0
      %v6932 = vadd.f32 %v6819, %v6931
      %v6933 = vpop.f32.mrb[0].mxu0
      %v6934 = vadd.f32 %v6821, %v6933
      %v6935 = vpop.f32.mrb[0].mxu0
      %v6936 = vadd.f32 %v6823, %v6935
      %v6937 = vpop.f32.mrb[0].mxu0
      %v6938 = vadd.f32 %v6825, %v6937
      %6939 = vmatprep.mubr.bf16.mxu0 %v6425
      %6940 = vmatmul.mubr.bf16.gmra.mrb[0].mxu0 %v6424
      %v6941 = vpop.f32.mrb[0].mxu0
      %v6942 = vadd.f32 %v6829, %v6941
      %v6943 = vpop.f32.mrb[0].mxu0
      %v6944 = vadd.f32 %v6831, %v6943
      %v6945 = vpop.f32.mrb[0].mxu0
      %v6946 = vadd.f32 %v6833, %v6945
      %v6947 = vpop.f32.mrb[0].mxu0
      %v6948 = vadd.f32 %v6835, %v6947
      %6949 = vmatprep.mubr.bf16.mxu0 %v6434
      %6950 = vmatmul.mubr.bf16.gmra.mrb[0].mxu0 %v6433
      %v6951 = vpop.f32.mrb[0].mxu0
      %v6952 = vadd.f32 %v6839, %v6951
      %v6953 = vpop.f32.mrb[0].mxu0
      %v6954 = vadd.f32 %v6841, %v6953
      %v6955 = vpop.f32.mrb[0].mxu0
      %v6956 = vadd.f32 %v6843, %v6955
      %v6957 = vpop.f32.mrb[0].mxu0
      %v6958 = vadd.f32 %v6845, %v6957
      %6959 = vdwg.mxu0
      %6960 = vmatprep.subr.bf16.mxu0 %v4776
      %6961 = vmatpush1.bf16.msra.mxu0 %v4775
      %6962 = vmatprep.subr.bf16.mxu0 %v4778
      %6963 = vmatpush1.bf16.msra.mxu0 %v4777
      %6964 = vmatprep.subr.bf16.mxu0 %v4780
      %6965 = vmatpush1.bf16.msra.mxu0 %v4779
      %6966 = vmatprep.subr.bf16.mxu0 %v4782
      %6967 = vmatpush1.bf16.msra.mxu0 %v4781
      %6968 = vmatprep.subr.bf16.mxu0 %v4784
      %6969 = vmatpush1.bf16.msra.mxu0 %v4783
      %6970 = vmatprep.subr.bf16.mxu0 %v4786
      %6971 = vmatpush1.bf16.msra.mxu0 %v4785
      %6972 = vmatprep.subr.bf16.mxu0 %v4788
      %6973 = vmatpush1.bf16.msra.mxu0 %v4787
      %6974 = vmatprep.subr.bf16.mxu0 %v4790
      %6975 = vmatpush1.bf16.msra.mxu0 %v4789
      %6976 = vmatprep.subr.bf16.mxu0 0
      %6977 = vmatpush1.bf16.msra.mxu0 0
      %6978 = vmatprep.subr.bf16.mxu0 0
      %6979 = vmatpush1.bf16.msra.mxu0 0
      %6980 = vmatprep.subr.bf16.mxu0 0
      %6981 = vmatpush1.bf16.msra.mxu0 0
      %6982 = vmatprep.subr.bf16.mxu0 0
      %6983 = vmatpush1.bf16.msra.mxu0 0
      %6984 = vmatprep.subr.bf16.mxu0 0
      %6985 = vmatpush1.bf16.msra.mxu0 0
      %6986 = vmatprep.subr.bf16.mxu0 0
      %6987 = vmatpush1.bf16.msra.mxu0 0
      %6988 = vmatprep.subr.bf16.mxu0 0
      %6989 = vmatpush1.bf16.msra.mxu0 0
      %6990 = vmatprep.subr.bf16.mxu0 0
      %6991 = vmatpush1.bf16.msra.mxu0 0
      %6992 = vmatprep.mubr.bf16.mxu0 0
      %6993 = vmatmul.mubr.bf16.gmra.mrb[0].mxu0 %v6372
      %v6994 = vpop.f32.mrb[0].mxu0
      %v6995 = vadd.f32 %v6882, %v6994
      %v6996 = vpop.f32.mrb[0].mxu0
      %v6997 = vadd.f32 %v6884, %v6996
      %v6998 = vpop.f32.mrb[0].mxu0
      %v6999 = vadd.f32 %v6886, %v6998
      %v7000 = vpop.f32.mrb[0].mxu0
      %v7001 = vadd.f32 %v6888, %v7000
      %7002 = vmatprep.mubr.bf16.mxu0 0
      %7003 = vmatmul.mubr.bf16.gmra.mrb[0].mxu0 %v6381
      %v7004 = vpop.f32.mrb[0].mxu0
      %v7005 = vadd.f32 %v6892, %v7004
      %v7006 = vpop.f32.mrb[0].mxu0
      %v7007 = vadd.f32 %v6894, %v7006
      %v7008 = vpop.f32.mrb[0].mxu0
      %v7009 = vadd.f32 %v6896, %v7008
      %v7010 = vpop.f32.mrb[0].mxu0
      %v7011 = vadd.f32 %v6898, %v7010
      %7012 = vmatprep.mubr.bf16.mxu0 0
      %7013 = vmatmul.mubr.bf16.gmra.mrb[0].mxu0 %v6390
      %v7014 = vpop.f32.mrb[0].mxu0
      %v7015 = vadd.f32 %v6902, %v7014
      %v7016 = vpop.f32.mrb[0].mxu0
      %v7017 = vadd.f32 %v6904, %v7016
      %v7018 = vpop.f32.mrb[0].mxu0
      %v7019 = vadd.f32 %v6906, %v7018
      %v7020 = vpop.f32.mrb[0].mxu0
      %v7021 = vadd.f32 %v6908, %v7020
      %7022 = vmatprep.mubr.bf16.mxu0 0
      %7023 = vmatmul.mubr.bf16.gmra.mrb[0].mxu0 %v6399
      %v7024 = vpop.f32.mrb[0].mxu0
      %v7025 = vadd.f32 %v6912, %v7024
      %v7026 = vpop.f32.mrb[0].mxu0
      %v7027 = vadd.f32 %v6914, %v7026
      %v7028 = vpop.f32.mrb[0].mxu0
      %v7029 = vadd.f32 %v6916, %v7028
      %v7030 = vpop.f32.mrb[0].mxu0
      %v7031 = vadd.f32 %v6918, %v7030
      %7032 = vmatprep.mubr.bf16.mxu0 0
      %7033 = vmatmul.mubr.bf16.gmra.mrb[0].mxu0 %v6408
      %v7034 = vpop.f32.mrb[0].mxu0
      %v7035 = vadd.f32 %v6922, %v7034
      %v7036 = vpop.f32.mrb[0].mxu0
      %v7037 = vadd.f32 %v6924, %v7036
      %v7038 = vpop.f32.mrb[0].mxu0
      %v7039 = vadd.f32 %v6926, %v7038
      %v7040 = vpop.f32.mrb[0].mxu0
      %v7041 = vadd.f32 %v6928, %v7040
      %7042 = vmatprep.mubr.bf16.mxu0 0
      %7043 = vmatmul.mubr.bf16.gmra.mrb[0].mxu0 %v6417
      %v7044 = vpop.f32.mrb[0].mxu0
      %v7045 = vadd.f32 %v6932, %v7044
      %v7046 = vpop.f32.mrb[0].mxu0
      %v7047 = vadd.f32 %v6934, %v7046
      %v7048 = vpop.f32.mrb[0].mxu0
      %v7049 = vadd.f32 %v6936, %v7048
      %v7050 = vpop.f32.mrb[0].mxu0
      %v7051 = vadd.f32 %v6938, %v7050
      %7052 = vmatprep.mubr.bf16.mxu0 0
      %7053 = vmatmul.mubr.bf16.gmra.mrb[0].mxu0 %v6426
      %v7054 = vpop.f32.mrb[0].mxu0
      %v7055 = vadd.f32 %v6942, %v7054
      %v7056 = vpop.f32.mrb[0].mxu0
      %v7057 = vadd.f32 %v6944, %v7056
      %v7058 = vpop.f32.mrb[0].mxu0
      %v7059 = vadd.f32 %v6946, %v7058
      %v7060 = vpop.f32.mrb[0].mxu0
      %v7061 = vadd.f32 %v6948, %v7060
      %7062 = vmatprep.mubr.bf16.mxu0 0
      %7063 = vmatmul.mubr.bf16.gmra.mrb[0].mxu0 %v6435
      %v7064 = vpop.f32.mrb[0].mxu0
      %v7065 = vadd.f32 %v6952, %v7064
      %v7066 = vpop.f32.mrb[0].mxu0
      %v7067 = vadd.f32 %v6954, %v7066
      %v7068 = vpop.f32.mrb[0].mxu0
      %v7069 = vadd.f32 %v6956, %v7068
      %v7070 = vpop.f32.mrb[0].mxu0
      %v7071 = vadd.f32 %v6958, %v7070
      %7072 = vdwg.mxu0
      %v7073 = vmax.f32 %v6995, 0.0
      %v7074 = vmax.f32 %v6997, 0.0
      %v7075 = vmax.f32 %v6999, 0.0
      %v7076 = vmax.f32 %v7001, 0.0
      %v7077 = vmax.f32 %v7005, 0.0
      %v7078 = vmax.f32 %v7007, 0.0
      %v7079 = vmax.f32 %v7009, 0.0
      %v7080 = vmax.f32 %v7011, 0.0
      %v7081 = vmax.f32 %v7015, 0.0
      %v7082 = vmax.f32 %v7017, 0.0
      %v7083 = vmax.f32 %v7019, 0.0
      %v7084 = vmax.f32 %v7021, 0.0
      %v7085 = vmax.f32 %v7025, 0.0
      %v7086 = vmax.f32 %v7027, 0.0
      %v7087 = vmax.f32 %v7029, 0.0
      %v7088 = vmax.f32 %v7031, 0.0
      %v7089 = vmax.f32 %v7035, 0.0
      %v7090 = vmax.f32 %v7037, 0.0
      %v7091 = vmax.f32 %v7039, 0.0
      %v7092 = vmax.f32 %v7041, 0.0
      %v7093 = vmax.f32 %v7045, 0.0
      %v7094 = vmax.f32 %v7047, 0.0
      %v7095 = vmax.f32 %v7049, 0.0
      %v7096 = vmax.f32 %v7051, 0.0
      %v7097 = vmax.f32 %v7055, 0.0
      %v7098 = vmax.f32 %v7057, 0.0
      %v7099 = vmax.f32 %v7059, 0.0
      %v7100 = vmax.f32 %v7061, 0.0
      %v7101 = vmax.f32 %v7065, 0.0
      %v7102 = vmax.f32 %v7067, 0.0
      %v7103 = vmax.f32 %v7069, 0.0
      %v7104 = vmax.f32 %v7071, 0.0
      %v7105 = vpack.c.bf16 %v7075, %v7073
      %v7106 = vpack.c.bf16 %v7076, %v7074
      %v7107 = vpack.c.bf16 %v7079, %v7077
      %v7108 = vpack.c.bf16 %v7080, %v7078
      %v7109 = vpack.c.bf16 %v7083, %v7081
      %v7110 = vpack.c.bf16 %v7084, %v7082
      %v7111 = vpack.c.bf16 %v7087, %v7085
      %v7112 = vpack.c.bf16 %v7088, %v7086
      %v7113 = vpack.c.bf16 %v7091, %v7089
      %v7114 = vpack.c.bf16 %v7092, %v7090
      %v7115 = vpack.c.bf16 %v7095, %v7093
      %v7116 = vpack.c.bf16 %v7096, %v7094
      %v7117 = vpack.c.bf16 %v7099, %v7097
      %v7118 = vpack.c.bf16 %v7100, %v7098
      %v7119 = vpack.c.bf16 %v7103, %v7101
      %v7120 = vpack.c.bf16 %v7104, %v7102
      %7121 = vst [vmem:[#allocation6 + $0x80] sm:$0xff] %v7105
      %7122 = vst [vmem:[#allocation6 + $0x88] sm:$0xff] %v7106
      %7123 = vst [vmem:[#allocation6 + $0x90] sm:$0xff] %v7107
      %7124 = vst [vmem:[#allocation6 + $0x98] sm:$0xff] %v7108
      %7125 = vst [vmem:[#allocation6 + $0xa0] sm:$0xff] %v7109
      %7126 = vst [vmem:[#allocation6 + $0xa8] sm:$0xff] %v7110
      %7127 = vst [vmem:[#allocation6 + $0xb0] sm:$0xff] %v7111
      %7128 = vst [vmem:[#allocation6 + $0xb8] sm:$0xff] %v7112
      %7129 = vst [vmem:[#allocation6 + $0xc0] sm:$0xff] %v7113
      %7130 = vst [vmem:[#allocation6 + $0xc8] sm:$0xff] %v7114
      %7131 = vst [vmem:[#allocation6 + $0xd0] sm:$0xff] %v7115
      %7132 = vst [vmem:[#allocation6 + $0xd8] sm:$0xff] %v7116
      %7133 = vst [vmem:[#allocation6 + $0xe0] sm:$0xff] %v7117
      %7134 = vst [vmem:[#allocation6 + $0xe8] sm:$0xff] %v7118
      %7135 = vst [vmem:[#allocation6 + $0xf0] sm:$0xff] %v7119
      %7136 = vst [vmem:[#allocation6 + $0xf8] sm:$0xff] %v7120
      %v7137 = vld [vmem:[#allocation6] sm:$0xff]
      %v7138 = vld [vmem:[#allocation6 + $0x8] sm:$0xff]
      %v7139 = vld [vmem:[#allocation6 + $0x10] sm:$0xff]
      %v7140 = vld [vmem:[#allocation6 + $0x18] sm:$0xff]
      %v7141 = vld [vmem:[#allocation6 + $0x20] sm:$0xff]
      %v7142 = vld [vmem:[#allocation6 + $0x28] sm:$0xff]
      %v7143 = vld [vmem:[#allocation6 + $0x30] sm:$0xff]
      %v7144 = vld [vmem:[#allocation6 + $0x38] sm:$0xff]
      %v7145 = vld [vmem:[#allocation6 + $0x40] sm:$0xff]
      %v7146 = vld [vmem:[#allocation6 + $0x48] sm:$0xff]
      %v7147 = vld [vmem:[#allocation6 + $0x50] sm:$0xff]
      %v7148 = vld [vmem:[#allocation6 + $0x58] sm:$0xff]
      %v7149 = vld [vmem:[#allocation6 + $0x60] sm:$0xff]
      %v7150 = vld [vmem:[#allocation6 + $0x68] sm:$0xff]
      %v7151 = vld [vmem:[#allocation6 + $0x70] sm:$0xff]
      %v7152 = vld [vmem:[#allocation6 + $0x78] sm:$0xff]
      %v7153 = vld [vmem:[#allocation6 + $0x80] sm:$0xff]
      %v7154 = vld [vmem:[#allocation6 + $0x88] sm:$0xff]
      %v7155 = vld [vmem:[#allocation6 + $0x90] sm:$0xff]
      %v7156 = vld [vmem:[#allocation6 + $0x98] sm:$0xff]
      %v7157 = vld [vmem:[#allocation6 + $0xa0] sm:$0xff]
      %v7158 = vld [vmem:[#allocation6 + $0xa8] sm:$0xff]
      %v7159 = vld [vmem:[#allocation6 + $0xb0] sm:$0xff]
      %v7160 = vld [vmem:[#allocation6 + $0xb8] sm:$0xff]
      %v7161 = vld [vmem:[#allocation6 + $0xc0] sm:$0xff]
      %v7162 = vld [vmem:[#allocation6 + $0xc8] sm:$0xff]
      %v7163 = vld [vmem:[#allocation6 + $0xd0] sm:$0xff]
      %v7164 = vld [vmem:[#allocation6 + $0xd8] sm:$0xff]
      %v7165 = vld [vmem:[#allocation6 + $0xe0] sm:$0xff]
      %v7166 = vld [vmem:[#allocation6 + $0xe8] sm:$0xff]
      %v7167 = vld [vmem:[#allocation6 + $0xf0] sm:$0xff]
      %v7168 = vld [vmem:[#allocation6 + $0xf8] sm:$0xff]
      %v7169 = vld [vmem:[%s10] sm:$0xff]
      %v7170 = vld [vmem:[%s10 + $0x8] sm:$0xff]
      %v7171 = vld [vmem:[%s10 + $0x10] sm:$0xff]
      %v7172 = vld [vmem:[%s10 + $0x18] sm:$0xff]
      %v7173 = vld [vmem:[%s10 + $0x20] sm:$0xff]
      %v7174 = vld [vmem:[%s10 + $0x28] sm:$0xff]
      %v7175 = vld [vmem:[%s10 + $0x30] sm:$0xff]
      %v7176 = vld [vmem:[%s10 + $0x38] sm:$0xff]
      %v7177 = vld [vmem:[%s11] sm:$0xff]
      %v7178 = vld [vmem:[%s11 + $0x8] sm:$0xff]
      %v7179 = vld [vmem:[%s11 + $0x10] sm:$0xff]
      %v7180 = vld [vmem:[%s11 + $0x18] sm:$0xff]
      %v7181 = vld [vmem:[%s11 + $0x20] sm:$0xff]
      %v7182 = vld [vmem:[%s11 + $0x28] sm:$0xff]
      %v7183 = vld [vmem:[%s11 + $0x30] sm:$0xff]
      %v7184 = vld [vmem:[%s11 + $0x38] sm:$0xff]
      %7186 = vset.pattern.permute.xlu0 0
      %7187 = vperm.xlu0 %7186, %v7177
      %v7188 = vpop.permute.xlu0 %7187
      %7191 = vset.pattern.permute.xlu0 0
      %7192 = vperm.xlu0 %7191, %v7178
      %v7193 = vpop.permute.xlu0 %7192
      %7196 = vset.pattern.permute.xlu0 0
      %7197 = vperm.xlu0 %7196, %v7179
      %v7198 = vpop.permute.xlu0 %7197
      %7201 = vset.pattern.permute.xlu0 0
      %7202 = vperm.xlu0 %7201, %v7180
      %v7203 = vpop.permute.xlu0 %7202
      %7206 = vset.pattern.permute.xlu0 0
      %7207 = vperm.xlu0 %7206, %v7181
      %v7208 = vpop.permute.xlu0 %7207
      %7211 = vset.pattern.permute.xlu0 0
      %7212 = vperm.xlu0 %7211, %v7182
      %v7213 = vpop.permute.xlu0 %7212
      %7216 = vset.pattern.permute.xlu0 0
      %7217 = vperm.xlu0 %7216, %v7183
      %v7218 = vpop.permute.xlu0 %7217
      %7221 = vset.pattern.permute.xlu0 0
      %7222 = vperm.xlu0 %7221, %v7184
      %v7223 = vpop.permute.xlu0 %7222
      %v7233 = vunpack.c.l.b16 %v7169
      %v7234 = vunpack.c.h.b16 %v7169
      %v7235 = vunpack.c.l.b16 %v7170
      %v7236 = vunpack.c.h.b16 %v7170
      %v7237 = vunpack.c.l.b16 %v7171
      %v7238 = vunpack.c.h.b16 %v7171
      %v7239 = vunpack.c.l.b16 %v7172
      %v7240 = vunpack.c.h.b16 %v7172
      %v7241 = vunpack.c.l.b16 %v7173
      %v7242 = vunpack.c.h.b16 %v7173
      %v7243 = vunpack.c.l.b16 %v7174
      %v7244 = vunpack.c.h.b16 %v7174
      %v7245 = vunpack.c.l.b16 %v7175
      %v7246 = vunpack.c.h.b16 %v7175
      %v7247 = vunpack.c.l.b16 %v7176
      %v7248 = vunpack.c.h.b16 %v7176
      %v7249 = vpack.c.b16 %v7235, %v7233
      %v7250 = vpack.c.b16 %v7236, %v7234
      %v7251 = vpack.c.b16 %v7239, %v7237
      %v7252 = vpack.c.b16 %v7240, %v7238
      %v7253 = vpack.c.b16 %v7243, %v7241
      %v7254 = vpack.c.b16 %v7244, %v7242
      %v7255 = vpack.c.b16 %v7247, %v7245
      %v7256 = vpack.c.b16 %v7248, %v7246
      %7265 = vmatprep.subr.bf16.mxu0 %v7138
      %7266 = vmatpush1.bf16.msra.mxu0 %v7137
      %7267 = vmatprep.subr.bf16.mxu0 %v7140
      %7268 = vmatpush1.bf16.msra.mxu0 %v7139
      %7269 = vmatprep.subr.bf16.mxu0 %v7142
      %7270 = vmatpush1.bf16.msra.mxu0 %v7141
      %7271 = vmatprep.subr.bf16.mxu0 %v7144
      %7272 = vmatpush1.bf16.msra.mxu0 %v7143
      %7273 = vmatprep.subr.bf16.mxu0 %v7146
      %7274 = vmatpush1.bf16.msra.mxu0 %v7145
      %7275 = vmatprep.subr.bf16.mxu0 %v7148
      %7276 = vmatpush1.bf16.msra.mxu0 %v7147
      %7277 = vmatprep.subr.bf16.mxu0 %v7150
      %7278 = vmatpush1.bf16.msra.mxu0 %v7149
      %7279 = vmatprep.subr.bf16.mxu0 %v7152
      %7280 = vmatpush1.bf16.msra.mxu0 %v7151
      %7281 = vmatprep.subr.bf16.mxu0 %v7154
      %7282 = vmatpush1.bf16.msra.mxu0 %v7153
      %7283 = vmatprep.subr.bf16.mxu0 %v7156
      %7284 = vmatpush1.bf16.msra.mxu0 %v7155
      %7285 = vmatprep.subr.bf16.mxu0 %v7158
      %7286 = vmatpush1.bf16.msra.mxu0 %v7157
      %7287 = vmatprep.subr.bf16.mxu0 %v7160
      %7288 = vmatpush1.bf16.msra.mxu0 %v7159
      %7289 = vmatprep.subr.bf16.mxu0 %v7162
      %7290 = vmatpush1.bf16.msra.mxu0 %v7161
      %7291 = vmatprep.subr.bf16.mxu0 %v7164
      %7292 = vmatpush1.bf16.msra.mxu0 %v7163
      %7293 = vmatprep.subr.bf16.mxu0 %v7166
      %7294 = vmatpush1.bf16.msra.mxu0 %v7165
      %7295 = vmatprep.subr.bf16.mxu0 %v7168
      %7296 = vmatpush1.bf16.msra.mxu0 %v7167
      %7297 = vmatprep.mubr.bf16.mxu0 %v7250
      %7298 = vmatmul.mubr.bf16.gmra.mrb[0].mxu0 %v7249
      %v7299 = vpop.f32.mrb[0].mxu0
      %v7300 = vadd.f32 %v7188, %v7299
      %v7301 = vpop.f32.mrb[0].mxu0
      %v7302 = vadd.f32 %v7188, %v7301
      %v7303 = vpop.f32.mrb[0].mxu0
      %v7304 = vadd.f32 %v7193, %v7303
      %v7305 = vpop.f32.mrb[0].mxu0
      %v7306 = vadd.f32 %v7193, %v7305
      %7307 = vmatprep.mubr.bf16.mxu0 %v7252
      %7308 = vmatmul.mubr.bf16.gmra.mrb[0].mxu0 %v7251
      %v7309 = vpop.f32.mrb[0].mxu0
      %v7310 = vadd.f32 %v7198, %v7309
      %v7311 = vpop.f32.mrb[0].mxu0
      %v7312 = vadd.f32 %v7198, %v7311
      %v7313 = vpop.f32.mrb[0].mxu0
      %v7314 = vadd.f32 %v7203, %v7313
      %v7315 = vpop.f32.mrb[0].mxu0
      %v7316 = vadd.f32 %v7203, %v7315
      %7317 = vmatprep.mubr.bf16.mxu0 %v7254
      %7318 = vmatmul.mubr.bf16.gmra.mrb[0].mxu0 %v7253
      %v7319 = vpop.f32.mrb[0].mxu0
      %v7320 = vadd.f32 %v7208, %v7319
      %v7321 = vpop.f32.mrb[0].mxu0
      %v7322 = vadd.f32 %v7208, %v7321
      %v7323 = vpop.f32.mrb[0].mxu0
      %v7324 = vadd.f32 %v7213, %v7323
      %v7325 = vpop.f32.mrb[0].mxu0
      %v7326 = vadd.f32 %v7213, %v7325
      %7327 = vmatprep.mubr.bf16.mxu0 %v7256
      %7328 = vmatmul.mubr.bf16.gmra.mrb[0].mxu0 %v7255
      %v7329 = vpop.f32.mrb[0].mxu0
      %v7330 = vadd.f32 %v7218, %v7329
      %v7331 = vpop.f32.mrb[0].mxu0
      %v7332 = vadd.f32 %v7218, %v7331
      %v7333 = vpop.f32.mrb[0].mxu0
      %v7334 = vadd.f32 %v7223, %v7333
      %v7335 = vpop.f32.mrb[0].mxu0
      %v7336 = vadd.f32 %v7223, %v7335
      %7337 = vdwg.mxu0
      %v7338 = vpack.c.bf16 %v7304, %v7300
      %v7339 = vpack.c.bf16 %v7306, %v7302
      %v7340 = vpack.c.bf16 %v7314, %v7310
      %v7341 = vpack.c.bf16 %v7316, %v7312
      %v7342 = vpack.c.bf16 %v7324, %v7320
      %v7343 = vpack.c.bf16 %v7326, %v7322
      %v7344 = vpack.c.bf16 %v7334, %v7330
      %v7345 = vpack.c.bf16 %v7336, %v7332
      %7346 = vst [vmem:[#allocation8] sm:$0xff] %v7338
      %7347 = vst [vmem:[#allocation8 + $0x8] sm:$0xff] %v7339
      %7348 = vst [vmem:[#allocation8 + $0x10] sm:$0xff] %v7340
      %7349 = vst [vmem:[#allocation8 + $0x18] sm:$0xff] %v7341
      %7350 = vst [vmem:[#allocation8 + $0x20] sm:$0xff] %v7342
      %7351 = vst [vmem:[#allocation8 + $0x28] sm:$0xff] %v7343
      %7352 = vst [vmem:[#allocation8 + $0x30] sm:$0xff] %v7344
      %7353 = vst [vmem:[#allocation8 + $0x38] sm:$0xff] %v7345
      %v7354 = vld [vmem:[#allocation7] sm:$0xff]
      %v7355 = vld [vmem:[#allocation7 + $0x8] sm:$0xff]
      %v7356 = vld [vmem:[#allocation7 + $0x10] sm:$0xff]
      %v7357 = vld [vmem:[#allocation7 + $0x18] sm:$0xff]
      %v7358 = vld [vmem:[#allocation7 + $0x20] sm:$0xff]
      %v7359 = vld [vmem:[#allocation7 + $0x28] sm:$0xff]
      %v7360 = vld [vmem:[#allocation7 + $0x30] sm:$0xff]
      %v7361 = vld [vmem:[#allocation7 + $0x38] sm:$0xff]
      %7362 = vrot.lane.b32.xlu0 %v7354, 17
      %v7363 = vpop.permute.xlu0 %7362
      %7364 = vrot.lane.b32.xlu0 %v7356, 17
      %v7365 = vpop.permute.xlu0 %7364
      %7366 = vrot.lane.b32.xlu0 %v7358, 17
      %v7367 = vpop.permute.xlu0 %7366
      %7368 = vrot.lane.b32.xlu0 %v7360, 17
      %v7369 = vpop.permute.xlu0 %7368
      %7370 = vrot.lane.b32.xlu0 %v7355, 17
      %v7371 = vpop.permute.xlu0 %7370
      %7372 = vrot.lane.b32.xlu0 %v7357, 17
      %v7373 = vpop.permute.xlu0 %7372
      %7374 = vrot.lane.b32.xlu0 %v7359, 17
      %v7375 = vpop.permute.xlu0 %7374
      %7376 = vrot.lane.b32.xlu0 %v7361, 17
      %v7377 = vpop.permute.xlu0 %7376
      %v7378 = vsel %vm961, %v7363, %v7371
      %v7379 = vsel %vm961, %v7365, %v7373
      %v7380 = vsel %vm961, %v7367, %v7375
      %v7381 = vsel %vm961, %v7369, %v7377
      %v7382 = vsel %vm961, %v7371, %v7363
      %v7383 = vsel %vm961, %v7373, %v7365
      %v7384 = vsel %vm961, %v7375, %v7367
      %v7385 = vsel %vm961, %v7377, %v7369
      %v7386 = vld [vmem:[%s3] sm:$0x3]
      %v7388 = vlaneseq
      %v7389 = vshrl.u32 %v7388, 7
      %v7390 = vsub.s32 0, %v7389
      %v7391 = vrot.slane %v7386, %v7390
      %v7392 = vlaneseq
      %v7393 = vshrl.u32 %v7392, 7
      %v7394 = vsub.s32 1, %v7393
      %v7395 = vrot.slane %v7386, %v7394
      %v7398 = vmul.f32 %v7382, %v7391
      %v7399 = vmul.f32 %v7378, %v7395
      %v7400 = vmul.f32 %v7383, %v7391
      %v7401 = vmul.f32 %v7379, %v7395
      %v7402 = vmul.f32 %v7384, %v7391
      %v7403 = vmul.f32 %v7380, %v7395
      %v7404 = vmul.f32 %v7385, %v7391
      %v7405 = vmul.f32 %v7381, %v7395
      %v7406 = vpack.c.bf16 %v7400, %v7398
      %v7407 = vpack.c.bf16 %v7401, %v7399
      %v7408 = vpack.c.bf16 %v7404, %v7402
      %v7409 = vpack.c.bf16 %v7405, %v7403
      %7410 = vst [vmem:[#allocation3] sm:$0xff] %v7406
      %7411 = vst [vmem:[#allocation3 + $0x8] sm:$0xff] %v7407
      %7412 = vst [vmem:[#allocation3 + $0x10] sm:$0xff] %v7408
      %7413 = vst [vmem:[#allocation3 + $0x18] sm:$0xff] %v7409
      %7414 = vrot.lane.b32.xlu0 %v7354, 16
      %v7415 = vpop.permute.xlu0 %7414
      %7416 = vrot.lane.b32.xlu0 %v7356, 16
      %v7417 = vpop.permute.xlu0 %7416
      %7418 = vrot.lane.b32.xlu0 %v7358, 16
      %v7419 = vpop.permute.xlu0 %7418
      %7420 = vrot.lane.b32.xlu0 %v7360, 16
      %v7421 = vpop.permute.xlu0 %7420
      %7422 = vrot.lane.b32.xlu0 %v7355, 16
      %v7423 = vpop.permute.xlu0 %7422
      %7424 = vrot.lane.b32.xlu0 %v7357, 16
      %v7425 = vpop.permute.xlu0 %7424
      %7426 = vrot.lane.b32.xlu0 %v7359, 16
      %v7427 = vpop.permute.xlu0 %7426
      %7428 = vrot.lane.b32.xlu0 %v7361, 16
      %v7429 = vpop.permute.xlu0 %7428
      %v7430 = vsel %vm994, %v7415, %v7423
      %v7431 = vsel %vm994, %v7417, %v7425
      %v7432 = vsel %vm994, %v7419, %v7427
      %v7433 = vsel %vm994, %v7421, %v7429
      %v7434 = vsel %vm994, %v7423, %v7415
      %v7435 = vsel %vm994, %v7425, %v7417
      %v7436 = vsel %vm994, %v7427, %v7419
      %v7437 = vsel %vm994, %v7429, %v7421
      %v7438 = vld [vmem:[%s999] sm:$0x3]
      %v7440 = vlaneseq
      %v7441 = vshrl.u32 %v7440, 7
      %v7442 = vsub.s32 0, %v7441
      %v7443 = vrot.slane %v7438, %v7442
      %v7444 = vlaneseq
      %v7445 = vshrl.u32 %v7444, 7
      %v7446 = vsub.s32 1, %v7445
      %v7447 = vrot.slane %v7438, %v7446
      %v7450 = vmul.f32 %v7434, %v7443
      %v7451 = vmul.f32 %v7430, %v7447
      %v7452 = vmul.f32 %v7435, %v7443
      %v7453 = vmul.f32 %v7431, %v7447
      %v7454 = vmul.f32 %v7436, %v7443
      %v7455 = vmul.f32 %v7432, %v7447
      %v7456 = vmul.f32 %v7437, %v7443
      %v7457 = vmul.f32 %v7433, %v7447
      %v7458 = vpack.c.bf16 %v7452, %v7450
      %v7459 = vpack.c.bf16 %v7453, %v7451
      %v7460 = vpack.c.bf16 %v7456, %v7454
      %v7461 = vpack.c.bf16 %v7457, %v7455
      %7462 = vst [vmem:[#allocation3 + $0x20] sm:$0xff] %v7458
      %7463 = vst [vmem:[#allocation3 + $0x28] sm:$0xff] %v7459
      %7464 = vst [vmem:[#allocation3 + $0x30] sm:$0xff] %v7460
      %7465 = vst [vmem:[#allocation3 + $0x38] sm:$0xff] %v7461
      %7466 = vrot.lane.b32.xlu0 %v7354, 15
      %v7467 = vpop.permute.xlu0 %7466
      %7468 = vrot.lane.b32.xlu0 %v7356, 15
      %v7469 = vpop.permute.xlu0 %7468
      %7470 = vrot.lane.b32.xlu0 %v7358, 15
      %v7471 = vpop.permute.xlu0 %7470
      %7472 = vrot.lane.b32.xlu0 %v7360, 15
      %v7473 = vpop.permute.xlu0 %7472
      %7474 = vrot.lane.b32.xlu0 %v7355, 15
      %v7475 = vpop.permute.xlu0 %7474
      %7476 = vrot.lane.b32.xlu0 %v7357, 15
      %v7477 = vpop.permute.xlu0 %7476
      %7478 = vrot.lane.b32.xlu0 %v7359, 15
      %v7479 = vpop.permute.xlu0 %7478
      %7480 = vrot.lane.b32.xlu0 %v7361, 15
      %v7481 = vpop.permute.xlu0 %7480
      %v7482 = vsel %vm1028, %v7467, %v7475
      %v7483 = vsel %vm1028, %v7469, %v7477
      %v7484 = vsel %vm1028, %v7471, %v7479
      %v7485 = vsel %vm1028, %v7473, %v7481
      %v7486 = vsel %vm1028, %v7475, %v7467
      %v7487 = vsel %vm1028, %v7477, %v7469
      %v7488 = vsel %vm1028, %v7479, %v7471
      %v7489 = vsel %vm1028, %v7481, %v7473
      %v7490 = vld [vmem:[%s1033] sm:$0x3]
      %v7492 = vlaneseq
      %v7493 = vshrl.u32 %v7492, 7
      %v7494 = vsub.s32 0, %v7493
      %v7495 = vrot.slane %v7490, %v7494
      %v7496 = vlaneseq
      %v7497 = vshrl.u32 %v7496, 7
      %v7498 = vsub.s32 1, %v7497
      %v7499 = vrot.slane %v7490, %v7498
      %v7502 = vmul.f32 %v7486, %v7495
      %v7503 = vmul.f32 %v7482, %v7499
      %v7504 = vmul.f32 %v7487, %v7495
      %v7505 = vmul.f32 %v7483, %v7499
      %v7506 = vmul.f32 %v7488, %v7495
      %v7507 = vmul.f32 %v7484, %v7499
      %v7508 = vmul.f32 %v7489, %v7495
      %v7509 = vmul.f32 %v7485, %v7499
      %v7510 = vpack.c.bf16 %v7504, %v7502
      %v7511 = vpack.c.bf16 %v7505, %v7503
      %v7512 = vpack.c.bf16 %v7508, %v7506
      %v7513 = vpack.c.bf16 %v7509, %v7507
      %7514 = vst [vmem:[#allocation3 + $0x40] sm:$0xff] %v7510
      %7515 = vst [vmem:[#allocation3 + $0x48] sm:$0xff] %v7511
      %7516 = vst [vmem:[#allocation3 + $0x50] sm:$0xff] %v7512
      %7517 = vst [vmem:[#allocation3 + $0x58] sm:$0xff] %v7513
      %7518 = vrot.lane.b32.xlu0 %v7354, 1
      %v7519 = vpop.permute.xlu0 %7518
      %7520 = vrot.lane.b32.xlu0 %v7356, 1
      %v7521 = vpop.permute.xlu0 %7520
      %7522 = vrot.lane.b32.xlu0 %v7358, 1
      %v7523 = vpop.permute.xlu0 %7522
      %7524 = vrot.lane.b32.xlu0 %v7360, 1
      %v7525 = vpop.permute.xlu0 %7524
      %7526 = vrot.lane.b32.xlu0 %v7355, 1
      %v7527 = vpop.permute.xlu0 %7526
      %7528 = vrot.lane.b32.xlu0 %v7357, 1
      %v7529 = vpop.permute.xlu0 %7528
      %7530 = vrot.lane.b32.xlu0 %v7359, 1
      %v7531 = vpop.permute.xlu0 %7530
      %7532 = vrot.lane.b32.xlu0 %v7361, 1
      %v7533 = vpop.permute.xlu0 %7532
      %v7534 = vsel %vm1062, %v7519, %v7527
      %v7535 = vsel %vm1062, %v7521, %v7529
      %v7536 = vsel %vm1062, %v7523, %v7531
      %v7537 = vsel %vm1062, %v7525, %v7533
      %v7538 = vsel %vm1062, %v7527, %v7519
      %v7539 = vsel %vm1062, %v7529, %v7521
      %v7540 = vsel %vm1062, %v7531, %v7523
      %v7541 = vsel %vm1062, %v7533, %v7525
      %v7542 = vld [vmem:[%s1067] sm:$0x3]
      %v7544 = vlaneseq
      %v7545 = vshrl.u32 %v7544, 7
      %v7546 = vsub.s32 0, %v7545
      %v7547 = vrot.slane %v7542, %v7546
      %v7548 = vlaneseq
      %v7549 = vshrl.u32 %v7548, 7
      %v7550 = vsub.s32 1, %v7549
      %v7551 = vrot.slane %v7542, %v7550
      %v7554 = vmul.f32 %v7538, %v7547
      %v7555 = vmul.f32 %v7534, %v7551
      %v7556 = vmul.f32 %v7539, %v7547
      %v7557 = vmul.f32 %v7535, %v7551
      %v7558 = vmul.f32 %v7540, %v7547
      %v7559 = vmul.f32 %v7536, %v7551
      %v7560 = vmul.f32 %v7541, %v7547
      %v7561 = vmul.f32 %v7537, %v7551
      %v7562 = vpack.c.bf16 %v7556, %v7554
      %v7563 = vpack.c.bf16 %v7557, %v7555
      %v7564 = vpack.c.bf16 %v7560, %v7558
      %v7565 = vpack.c.bf16 %v7561, %v7559
      %7566 = vst [vmem:[#allocation3 + $0x60] sm:$0xff] %v7562
      %7567 = vst [vmem:[#allocation3 + $0x68] sm:$0xff] %v7563
      %7568 = vst [vmem:[#allocation3 + $0x70] sm:$0xff] %v7564
      %7569 = vst [vmem:[#allocation3 + $0x78] sm:$0xff] %v7565
      %v7570 = vpack.c.bf16 %v7356, %v7354
      %v7571 = vpack.c.bf16 %v7357, %v7355
      %v7572 = vpack.c.bf16 %v7360, %v7358
      %v7573 = vpack.c.bf16 %v7361, %v7359
      %7574 = vst [vmem:[#allocation3 + $0x80] sm:$0xff] %v7570
      %7575 = vst [vmem:[#allocation3 + $0x88] sm:$0xff] %v7571
      %7576 = vst [vmem:[#allocation3 + $0x90] sm:$0xff] %v7572
      %7577 = vst [vmem:[#allocation3 + $0x98] sm:$0xff] %v7573
      %7578 = vrot.lane.b32.xlu0 %v7354, 127
      %v7579 = vpop.permute.xlu0 %7578
      %7580 = vrot.lane.b32.xlu0 %v7356, 127
      %v7581 = vpop.permute.xlu0 %7580
      %7582 = vrot.lane.b32.xlu0 %v7358, 127
      %v7583 = vpop.permute.xlu0 %7582
      %7584 = vrot.lane.b32.xlu0 %v7360, 127
      %v7585 = vpop.permute.xlu0 %7584
      %7586 = vrot.lane.b32.xlu0 %v7355, 127
      %v7587 = vpop.permute.xlu0 %7586
      %7588 = vrot.lane.b32.xlu0 %v7357, 127
      %v7589 = vpop.permute.xlu0 %7588
      %7590 = vrot.lane.b32.xlu0 %v7359, 127
      %v7591 = vpop.permute.xlu0 %7590
      %7592 = vrot.lane.b32.xlu0 %v7361, 127
      %v7593 = vpop.permute.xlu0 %7592
      %v7594 = vsel %vm1100, %v7579, %v7587
      %v7595 = vsel %vm1100, %v7581, %v7589
      %v7596 = vsel %vm1100, %v7583, %v7591
      %v7597 = vsel %vm1100, %v7585, %v7593
      %v7598 = vsel %vm1100, %v7587, %v7579
      %v7599 = vsel %vm1100, %v7589, %v7581
      %v7600 = vsel %vm1100, %v7591, %v7583
      %v7601 = vsel %vm1100, %v7593, %v7585
      %v7602 = vld [vmem:[%s1105] sm:$0x3]
      %v7604 = vlaneseq
      %v7605 = vshrl.u32 %v7604, 7
      %v7606 = vsub.s32 0, %v7605
      %v7607 = vrot.slane %v7602, %v7606
      %v7608 = vlaneseq
      %v7609 = vshrl.u32 %v7608, 7
      %v7610 = vsub.s32 1, %v7609
      %v7611 = vrot.slane %v7602, %v7610
      %v7614 = vmul.f32 %v7594, %v7607
      %v7615 = vmul.f32 %v7598, %v7611
      %v7616 = vmul.f32 %v7595, %v7607
      %v7617 = vmul.f32 %v7599, %v7611
      %v7618 = vmul.f32 %v7596, %v7607
      %v7619 = vmul.f32 %v7600, %v7611
      %v7620 = vmul.f32 %v7597, %v7607
      %v7621 = vmul.f32 %v7601, %v7611
      %v7622 = vpack.c.bf16 %v7616, %v7614
      %v7623 = vpack.c.bf16 %v7617, %v7615
      %v7624 = vpack.c.bf16 %v7620, %v7618
      %v7625 = vpack.c.bf16 %v7621, %v7619
      %7626 = vst [vmem:[#allocation3 + $0xa0] sm:$0xff] %v7622
      %7627 = vst [vmem:[#allocation3 + $0xa8] sm:$0xff] %v7623
      %7628 = vst [vmem:[#allocation3 + $0xb0] sm:$0xff] %v7624
      %7629 = vst [vmem:[#allocation3 + $0xb8] sm:$0xff] %v7625
      %7630 = vrot.lane.b32.xlu0 %v7354, 113
      %v7631 = vpop.permute.xlu0 %7630
      %7632 = vrot.lane.b32.xlu0 %v7356, 113
      %v7633 = vpop.permute.xlu0 %7632
      %7634 = vrot.lane.b32.xlu0 %v7358, 113
      %v7635 = vpop.permute.xlu0 %7634
      %7636 = vrot.lane.b32.xlu0 %v7360, 113
      %v7637 = vpop.permute.xlu0 %7636
      %7638 = vrot.lane.b32.xlu0 %v7355, 113
      %v7639 = vpop.permute.xlu0 %7638
      %7640 = vrot.lane.b32.xlu0 %v7357, 113
      %v7641 = vpop.permute.xlu0 %7640
      %7642 = vrot.lane.b32.xlu0 %v7359, 113
      %v7643 = vpop.permute.xlu0 %7642
      %7644 = vrot.lane.b32.xlu0 %v7361, 113
      %v7645 = vpop.permute.xlu0 %7644
      %v7646 = vsel %vm1134, %v7631, %v7639
      %v7647 = vsel %vm1134, %v7633, %v7641
      %v7648 = vsel %vm1134, %v7635, %v7643
      %v7649 = vsel %vm1134, %v7637, %v7645
      %v7650 = vsel %vm1134, %v7639, %v7631
      %v7651 = vsel %vm1134, %v7641, %v7633
      %v7652 = vsel %vm1134, %v7643, %v7635
      %v7653 = vsel %vm1134, %v7645, %v7637
      %v7654 = vld [vmem:[%s1139] sm:$0x3]
      %v7656 = vlaneseq
      %v7657 = vshrl.u32 %v7656, 7
      %v7658 = vsub.s32 0, %v7657
      %v7659 = vrot.slane %v7654, %v7658
      %v7660 = vlaneseq
      %v7661 = vshrl.u32 %v7660, 7
      %v7662 = vsub.s32 1, %v7661
      %v7663 = vrot.slane %v7654, %v7662
      %v7666 = vmul.f32 %v7646, %v7659
      %v7667 = vmul.f32 %v7650, %v7663
      %v7668 = vmul.f32 %v7647, %v7659
      %v7669 = vmul.f32 %v7651, %v7663
      %v7670 = vmul.f32 %v7648, %v7659
      %v7671 = vmul.f32 %v7652, %v7663
      %v7672 = vmul.f32 %v7649, %v7659
      %v7673 = vmul.f32 %v7653, %v7663
      %v7674 = vpack.c.bf16 %v7668, %v7666
      %v7675 = vpack.c.bf16 %v7669, %v7667
      %v7676 = vpack.c.bf16 %v7672, %v7670
      %v7677 = vpack.c.bf16 %v7673, %v7671
      %7678 = vst [vmem:[#allocation3 + $0xc0] sm:$0xff] %v7674
      %7679 = vst [vmem:[#allocation3 + $0xc8] sm:$0xff] %v7675
      %7680 = vst [vmem:[#allocation3 + $0xd0] sm:$0xff] %v7676
      %7681 = vst [vmem:[#allocation3 + $0xd8] sm:$0xff] %v7677
      %7682 = vrot.lane.b32.xlu0 %v7354, 112
      %v7683 = vpop.permute.xlu0 %7682
      %7684 = vrot.lane.b32.xlu0 %v7356, 112
      %v7685 = vpop.permute.xlu0 %7684
      %7686 = vrot.lane.b32.xlu0 %v7358, 112
      %v7687 = vpop.permute.xlu0 %7686
      %7688 = vrot.lane.b32.xlu0 %v7360, 112
      %v7689 = vpop.permute.xlu0 %7688
      %7690 = vrot.lane.b32.xlu0 %v7355, 112
      %v7691 = vpop.permute.xlu0 %7690
      %7692 = vrot.lane.b32.xlu0 %v7357, 112
      %v7693 = vpop.permute.xlu0 %7692
      %7694 = vrot.lane.b32.xlu0 %v7359, 112
      %v7695 = vpop.permute.xlu0 %7694
      %7696 = vrot.lane.b32.xlu0 %v7361, 112
      %v7697 = vpop.permute.xlu0 %7696
      %v7698 = vsel %vm1168, %v7683, %v7691
      %v7699 = vsel %vm1168, %v7685, %v7693
      %v7700 = vsel %vm1168, %v7687, %v7695
      %v7701 = vsel %vm1168, %v7689, %v7697
      %v7702 = vsel %vm1168, %v7691, %v7683
      %v7703 = vsel %vm1168, %v7693, %v7685
      %v7704 = vsel %vm1168, %v7695, %v7687
      %v7705 = vsel %vm1168, %v7697, %v7689
      %v7706 = vld [vmem:[%s1173] sm:$0x3]
      %v7708 = vlaneseq
      %v7709 = vshrl.u32 %v7708, 7
      %v7710 = vsub.s32 0, %v7709
      %v7711 = vrot.slane %v7706, %v7710
      %v7712 = vlaneseq
      %v7713 = vshrl.u32 %v7712, 7
      %v7714 = vsub.s32 1, %v7713
      %v7715 = vrot.slane %v7706, %v7714
      %v7718 = vmul.f32 %v7698, %v7711
      %v7719 = vmul.f32 %v7702, %v7715
      %v7720 = vmul.f32 %v7699, %v7711
      %v7721 = vmul.f32 %v7703, %v7715
      %v7722 = vmul.f32 %v7700, %v7711
      %v7723 = vmul.f32 %v7704, %v7715
      %v7724 = vmul.f32 %v7701, %v7711
      %v7725 = vmul.f32 %v7705, %v7715
      %v7726 = vpack.c.bf16 %v7720, %v7718
      %v7727 = vpack.c.bf16 %v7721, %v7719
      %v7728 = vpack.c.bf16 %v7724, %v7722
      %v7729 = vpack.c.bf16 %v7725, %v7723
      %7730 = vst [vmem:[#allocation3 + $0xe0] sm:$0xff] %v7726
      %7731 = vst [vmem:[#allocation3 + $0xe8] sm:$0xff] %v7727
      %7732 = vst [vmem:[#allocation3 + $0xf0] sm:$0xff] %v7728
      %7733 = vst [vmem:[#allocation3 + $0xf8] sm:$0xff] %v7729
      %7734 = vrot.lane.b32.xlu0 %v7354, 111
      %v7735 = vpop.permute.xlu0 %7734
      %7736 = vrot.lane.b32.xlu0 %v7356, 111
      %v7737 = vpop.permute.xlu0 %7736
      %7738 = vrot.lane.b32.xlu0 %v7358, 111
      %v7739 = vpop.permute.xlu0 %7738
      %7740 = vrot.lane.b32.xlu0 %v7360, 111
      %v7741 = vpop.permute.xlu0 %7740
      %7742 = vrot.lane.b32.xlu0 %v7355, 111
      %v7743 = vpop.permute.xlu0 %7742
      %7744 = vrot.lane.b32.xlu0 %v7357, 111
      %v7745 = vpop.permute.xlu0 %7744
      %7746 = vrot.lane.b32.xlu0 %v7359, 111
      %v7747 = vpop.permute.xlu0 %7746
      %7748 = vrot.lane.b32.xlu0 %v7361, 111
      %v7749 = vpop.permute.xlu0 %7748
      %v7750 = vsel %vm1202, %v7735, %v7743
      %v7751 = vsel %vm1202, %v7737, %v7745
      %v7752 = vsel %vm1202, %v7739, %v7747
      %v7753 = vsel %vm1202, %v7741, %v7749
      %v7754 = vsel %vm1202, %v7743, %v7735
      %v7755 = vsel %vm1202, %v7745, %v7737
      %v7756 = vsel %vm1202, %v7747, %v7739
      %v7757 = vsel %vm1202, %v7749, %v7741
      %v7758 = vld [vmem:[%s1207] sm:$0x3]
      %v7760 = vlaneseq
      %v7761 = vshrl.u32 %v7760, 7
      %v7762 = vsub.s32 0, %v7761
      %v7763 = vrot.slane %v7758, %v7762
      %v7764 = vlaneseq
      %v7765 = vshrl.u32 %v7764, 7
      %v7766 = vsub.s32 1, %v7765
      %v7767 = vrot.slane %v7758, %v7766
      %v7770 = vmul.f32 %v7750, %v7763
      %v7771 = vmul.f32 %v7754, %v7767
      %v7772 = vmul.f32 %v7751, %v7763
      %v7773 = vmul.f32 %v7755, %v7767
      %v7774 = vmul.f32 %v7752, %v7763
      %v7775 = vmul.f32 %v7756, %v7767
      %v7776 = vmul.f32 %v7753, %v7763
      %v7777 = vmul.f32 %v7757, %v7767
      %v7778 = vpack.c.bf16 %v7772, %v7770
      %v7779 = vpack.c.bf16 %v7773, %v7771
      %v7780 = vpack.c.bf16 %v7776, %v7774
      %v7781 = vpack.c.bf16 %v7777, %v7775
      %7782 = vst [vmem:[#allocation3 + $0x100] sm:$0xff] %v7778
      %7783 = vst [vmem:[#allocation3 + $0x108] sm:$0xff] %v7779
      %7784 = vst [vmem:[#allocation3 + $0x110] sm:$0xff] %v7780
      %7785 = vst [vmem:[#allocation3 + $0x118] sm:$0xff] %v7781
      %v7786 = vld [vmem:[#allocation3] sm:$0xff]
      %v7787 = vld [vmem:[#allocation3 + $0x8] sm:$0xff]
      %v7788 = vld [vmem:[#allocation3 + $0x10] sm:$0xff]
      %v7789 = vld [vmem:[#allocation3 + $0x18] sm:$0xff]
      %v7790 = vld [vmem:[#allocation3 + $0x20] sm:$0xff]
      %v7791 = vld [vmem:[#allocation3 + $0x28] sm:$0xff]
      %v7792 = vld [vmem:[#allocation3 + $0x30] sm:$0xff]
      %v7793 = vld [vmem:[#allocation3 + $0x38] sm:$0xff]
      %v7794 = vld [vmem:[#allocation3 + $0x40] sm:$0xff]
      %v7795 = vld [vmem:[#allocation3 + $0x48] sm:$0xff]
      %v7796 = vld [vmem:[#allocation3 + $0x50] sm:$0xff]
      %v7797 = vld [vmem:[#allocation3 + $0x58] sm:$0xff]
      %v7798 = vld [vmem:[#allocation3 + $0x60] sm:$0xff]
      %v7799 = vld [vmem:[#allocation3 + $0x68] sm:$0xff]
      %v7800 = vld [vmem:[#allocation3 + $0x70] sm:$0xff]
      %v7801 = vld [vmem:[#allocation3 + $0x78] sm:$0xff]
      %v7802 = vld [vmem:[#allocation3 + $0x80] sm:$0xff]
      %v7803 = vld [vmem:[#allocation3 + $0x88] sm:$0xff]
      %v7804 = vld [vmem:[#allocation3 + $0x90] sm:$0xff]
      %v7805 = vld [vmem:[#allocation3 + $0x98] sm:$0xff]
      %v7806 = vld [vmem:[#allocation3 + $0xa0] sm:$0xff]
      %v7807 = vld [vmem:[#allocation3 + $0xa8] sm:$0xff]
      %v7808 = vld [vmem:[#allocation3 + $0xb0] sm:$0xff]
      %v7809 = vld [vmem:[#allocation3 + $0xb8] sm:$0xff]
      %v7810 = vld [vmem:[#allocation3 + $0xc0] sm:$0xff]
      %v7811 = vld [vmem:[#allocation3 + $0xc8] sm:$0xff]
      %v7812 = vld [vmem:[#allocation3 + $0xd0] sm:$0xff]
      %v7813 = vld [vmem:[#allocation3 + $0xd8] sm:$0xff]
      %v7814 = vld [vmem:[#allocation3 + $0xe0] sm:$0xff]
      %v7815 = vld [vmem:[#allocation3 + $0xe8] sm:$0xff]
      %v7816 = vld [vmem:[#allocation3 + $0xf0] sm:$0xff]
      %v7817 = vld [vmem:[#allocation3 + $0xf8] sm:$0xff]
      %v7818 = vld [vmem:[#allocation3 + $0x100] sm:$0xff]
      %v7819 = vld [vmem:[#allocation3 + $0x108] sm:$0xff]
      %v7820 = vld [vmem:[#allocation3 + $0x110] sm:$0xff]
      %v7821 = vld [vmem:[#allocation3 + $0x118] sm:$0xff]
      %v7822 = vld [vmem:[%s14] sm:$0xff]
      %v7823 = vld [vmem:[%s14 + $0x8] sm:$0xf]
      %v7824 = vld [vmem:[%s14 + $0xc] sm:$0xff]
      %v7825 = vld [vmem:[%s14 + $0x14] sm:$0xf]
      %v7826 = vld [vmem:[%s14 + $0x18] sm:$0xff]
      %v7827 = vld [vmem:[%s14 + $0x20] sm:$0xf]
      %v7828 = vld [vmem:[%s14 + $0x24] sm:$0xff]
      %v7829 = vld [vmem:[%s14 + $0x2c] sm:$0xf]
      %v7830 = vld [vmem:[%s14 + $0x30] sm:$0xff]
      %v7831 = vld [vmem:[%s14 + $0x38] sm:$0xf]
      %v7832 = vld [vmem:[%s14 + $0x3c] sm:$0xff]
      %v7833 = vld [vmem:[%s14 + $0x44] sm:$0xf]
      %v7834 = vld [vmem:[%s14 + $0x48] sm:$0xff]
      %v7835 = vld [vmem:[%s14 + $0x50] sm:$0xf]
      %v7836 = vld [vmem:[%s14 + $0x54] sm:$0xff]
      %v7837 = vld [vmem:[%s14 + $0x5c] sm:$0xf]
      %v7838 = vld [vmem:[%s15] sm:$0xff]
      %v7839 = vld [vmem:[%s15 + $0x8] sm:$0xff]
      %v7840 = vld [vmem:[%s15 + $0x10] sm:$0xff]
      %v7841 = vld [vmem:[%s15 + $0x18] sm:$0xff]
      %v7842 = vld [vmem:[%s15 + $0x20] sm:$0xff]
      %v7843 = vld [vmem:[%s15 + $0x28] sm:$0xff]
      %v7844 = vld [vmem:[%s15 + $0x30] sm:$0xff]
      %v7845 = vld [vmem:[%s15 + $0x38] sm:$0xff]
      %7847 = vset.pattern.permute.xlu0 0
      %7848 = vperm.xlu0 %7847, %v7838
      %v7849 = vpop.permute.xlu0 %7848
      %7852 = vset.pattern.permute.xlu0 0
      %7853 = vperm.xlu0 %7852, %v7839
      %v7854 = vpop.permute.xlu0 %7853
      %7857 = vset.pattern.permute.xlu0 0
      %7858 = vperm.xlu0 %7857, %v7840
      %v7859 = vpop.permute.xlu0 %7858
      %7862 = vset.pattern.permute.xlu0 0
      %7863 = vperm.xlu0 %7862, %v7841
      %v7864 = vpop.permute.xlu0 %7863
      %7867 = vset.pattern.permute.xlu0 0
      %7868 = vperm.xlu0 %7867, %v7842
      %v7869 = vpop.permute.xlu0 %7868
      %7872 = vset.pattern.permute.xlu0 0
      %7873 = vperm.xlu0 %7872, %v7843
      %v7874 = vpop.permute.xlu0 %7873
      %7877 = vset.pattern.permute.xlu0 0
      %7878 = vperm.xlu0 %7877, %v7844
      %v7879 = vpop.permute.xlu0 %7878
      %7882 = vset.pattern.permute.xlu0 0
      %7883 = vperm.xlu0 %7882, %v7845
      %v7884 = vpop.permute.xlu0 %7883
      %v7902 = vunpack.c.l.b16 %v7822
      %v7903 = vunpack.c.h.b16 %v7822
      %v7904 = vunpack.c.l.b16 %v7823
      %v7905 = vunpack.c.l.b16 %v7824
      %v7906 = vunpack.c.h.b16 %v7824
      %v7907 = vunpack.c.l.b16 %v7825
      %v7908 = vunpack.c.l.b16 %v7826
      %v7909 = vunpack.c.h.b16 %v7826
      %v7910 = vunpack.c.l.b16 %v7827
      %v7911 = vunpack.c.l.b16 %v7828
      %v7912 = vunpack.c.h.b16 %v7828
      %v7913 = vunpack.c.l.b16 %v7829
      %v7914 = vunpack.c.l.b16 %v7830
      %v7915 = vunpack.c.h.b16 %v7830
      %v7916 = vunpack.c.l.b16 %v7831
      %v7917 = vunpack.c.l.b16 %v7832
      %v7918 = vunpack.c.h.b16 %v7832
      %v7919 = vunpack.c.l.b16 %v7833
      %v7920 = vunpack.c.l.b16 %v7834
      %v7921 = vunpack.c.h.b16 %v7834
      %v7922 = vunpack.c.l.b16 %v7835
      %v7923 = vunpack.c.l.b16 %v7836
      %v7924 = vunpack.c.h.b16 %v7836
      %v7925 = vunpack.c.l.b16 %v7837
      %v7926 = vpack.c.b16 %v7905, %v7902
      %v7927 = vpack.c.b16 %v7906, %v7903
      %v7928 = vpack.c.b16 %v7907, %v7904
      %v7929 = vpack.c.b16 %v7911, %v7908
      %v7930 = vpack.c.b16 %v7912, %v7909
      %v7931 = vpack.c.b16 %v7913, %v7910
      %v7932 = vpack.c.b16 %v7917, %v7914
      %v7933 = vpack.c.b16 %v7918, %v7915
      %v7934 = vpack.c.b16 %v7919, %v7916
      %v7935 = vpack.c.b16 %v7923, %v7920
      %v7936 = vpack.c.b16 %v7924, %v7921
      %v7937 = vpack.c.b16 %v7925, %v7922
      %vm7946 = vcmask 261120
      %v7948 = vsel %vm7946, %v7928, 0
      %v7951 = vsel %vm7946, %v7931, 0
      %v7954 = vsel %vm7946, %v7934, 0
      %v7957 = vsel %vm7946, %v7937, 0
      %7959 = vmatprep.subr.bf16.mxu0 %v7787
      %7960 = vmatpush1.bf16.msra.mxu0 %v7786
      %7961 = vmatprep.subr.bf16.mxu0 %v7789
      %7962 = vmatpush1.bf16.msra.mxu0 %v7788
      %7963 = vmatprep.subr.bf16.mxu0 %v7791
      %7964 = vmatpush1.bf16.msra.mxu0 %v7790
      %7965 = vmatprep.subr.bf16.mxu0 %v7793
      %7966 = vmatpush1.bf16.msra.mxu0 %v7792
      %7967 = vmatprep.subr.bf16.mxu0 %v7795
      %7968 = vmatpush1.bf16.msra.mxu0 %v7794
      %7969 = vmatprep.subr.bf16.mxu0 %v7797
      %7970 = vmatpush1.bf16.msra.mxu0 %v7796
      %7971 = vmatprep.subr.bf16.mxu0 %v7799
      %7972 = vmatpush1.bf16.msra.mxu0 %v7798
      %7973 = vmatprep.subr.bf16.mxu0 %v7801
      %7974 = vmatpush1.bf16.msra.mxu0 %v7800
      %7975 = vmatprep.subr.bf16.mxu0 %v7803
      %7976 = vmatpush1.bf16.msra.mxu0 %v7802
      %7977 = vmatprep.subr.bf16.mxu0 %v7805
      %7978 = vmatpush1.bf16.msra.mxu0 %v7804
      %7979 = vmatprep.subr.bf16.mxu0 %v7807
      %7980 = vmatpush1.bf16.msra.mxu0 %v7806
      %7981 = vmatprep.subr.bf16.mxu0 %v7809
      %7982 = vmatpush1.bf16.msra.mxu0 %v7808
      %7983 = vmatprep.subr.bf16.mxu0 %v7811
      %7984 = vmatpush1.bf16.msra.mxu0 %v7810
      %7985 = vmatprep.subr.bf16.mxu0 %v7813
      %7986 = vmatpush1.bf16.msra.mxu0 %v7812
      %7987 = vmatprep.subr.bf16.mxu0 %v7815
      %7988 = vmatpush1.bf16.msra.mxu0 %v7814
      %7989 = vmatprep.subr.bf16.mxu0 %v7817
      %7990 = vmatpush1.bf16.msra.mxu0 %v7816
      %7991 = vmatprep.mubr.bf16.mxu0 %v7927
      %7992 = vmatmul.mubr.bf16.gmra.mrb[0].mxu0 %v7926
      %v7993 = vpop.f32.mrb[0].mxu0
      %v7994 = vadd.f32 %v7849, %v7993
      %v7995 = vpop.f32.mrb[0].mxu0
      %v7996 = vadd.f32 %v7849, %v7995
      %v7997 = vpop.f32.mrb[0].mxu0
      %v7998 = vadd.f32 %v7854, %v7997
      %v7999 = vpop.f32.mrb[0].mxu0
      %v8000 = vadd.f32 %v7854, %v7999
      %8001 = vmatprep.mubr.bf16.mxu0 %v7930
      %8002 = vmatmul.mubr.bf16.gmra.mrb[0].mxu0 %v7929
      %v8003 = vpop.f32.mrb[0].mxu0
      %v8004 = vadd.f32 %v7859, %v8003
      %v8005 = vpop.f32.mrb[0].mxu0
      %v8006 = vadd.f32 %v7859, %v8005
      %v8007 = vpop.f32.mrb[0].mxu0
      %v8008 = vadd.f32 %v7864, %v8007
      %v8009 = vpop.f32.mrb[0].mxu0
      %v8010 = vadd.f32 %v7864, %v8009
      %8011 = vmatprep.mubr.bf16.mxu0 %v7933
      %8012 = vmatmul.mubr.bf16.gmra.mrb[0].mxu0 %v7932
      %v8013 = vpop.f32.mrb[0].mxu0
      %v8014 = vadd.f32 %v7869, %v8013
      %v8015 = vpop.f32.mrb[0].mxu0
      %v8016 = vadd.f32 %v7869, %v8015
      %v8017 = vpop.f32.mrb[0].mxu0
      %v8018 = vadd.f32 %v7874, %v8017
      %v8019 = vpop.f32.mrb[0].mxu0
      %v8020 = vadd.f32 %v7874, %v8019
      %8021 = vmatprep.mubr.bf16.mxu0 %v7936
      %8022 = vmatmul.mubr.bf16.gmra.mrb[0].mxu0 %v7935
      %v8023 = vpop.f32.mrb[0].mxu0
      %v8024 = vadd.f32 %v7879, %v8023
      %v8025 = vpop.f32.mrb[0].mxu0
      %v8026 = vadd.f32 %v7879, %v8025
      %v8027 = vpop.f32.mrb[0].mxu0
      %v8028 = vadd.f32 %v7884, %v8027
      %v8029 = vpop.f32.mrb[0].mxu0
      %v8030 = vadd.f32 %v7884, %v8029
      %8031 = vdwg.mxu0
      %8032 = vmatprep.subr.bf16.mxu0 %v7819
      %8033 = vmatpush1.bf16.msra.mxu0 %v7818
      %8034 = vmatprep.subr.bf16.mxu0 %v7821
      %8035 = vmatpush1.bf16.msra.mxu0 %v7820
      %8036 = vmatprep.subr.bf16.mxu0 0
      %8037 = vmatpush1.bf16.msra.mxu0 0
      %8038 = vmatprep.subr.bf16.mxu0 0
      %8039 = vmatpush1.bf16.msra.mxu0 0
      %8040 = vmatprep.subr.bf16.mxu0 0
      %8041 = vmatpush1.bf16.msra.mxu0 0
      %8042 = vmatprep.subr.bf16.mxu0 0
      %8043 = vmatpush1.bf16.msra.mxu0 0
      %8044 = vmatprep.subr.bf16.mxu0 0
      %8045 = vmatpush1.bf16.msra.mxu0 0
      %8046 = vmatprep.subr.bf16.mxu0 0
      %8047 = vmatpush1.bf16.msra.mxu0 0
      %8048 = vmatprep.subr.bf16.mxu0 0
      %8049 = vmatpush1.bf16.msra.mxu0 0
      %8050 = vmatprep.subr.bf16.mxu0 0
      %8051 = vmatpush1.bf16.msra.mxu0 0
      %8052 = vmatprep.subr.bf16.mxu0 0
      %8053 = vmatpush1.bf16.msra.mxu0 0
      %8054 = vmatprep.subr.bf16.mxu0 0
      %8055 = vmatpush1.bf16.msra.mxu0 0
      %8056 = vmatprep.subr.bf16.mxu0 0
      %8057 = vmatpush1.bf16.msra.mxu0 0
      %8058 = vmatprep.subr.bf16.mxu0 0
      %8059 = vmatpush1.bf16.msra.mxu0 0
      %8060 = vmatprep.subr.bf16.mxu0 0
      %8061 = vmatpush1.bf16.msra.mxu0 0
      %8062 = vmatprep.subr.bf16.mxu0 0
      %8063 = vmatpush1.bf16.msra.mxu0 0
      %8064 = vmatprep.mubr.bf16.mxu0 0
      %8065 = vmatmul.mubr.bf16.gmra.mrb[0].mxu0 %v7948
      %v8066 = vpop.f32.mrb[0].mxu0
      %v8067 = vadd.f32 %v7994, %v8066
      %v8068 = vpop.f32.mrb[0].mxu0
      %v8069 = vadd.f32 %v7996, %v8068
      %v8070 = vpop.f32.mrb[0].mxu0
      %v8071 = vadd.f32 %v7998, %v8070
      %v8072 = vpop.f32.mrb[0].mxu0
      %v8073 = vadd.f32 %v8000, %v8072
      %8074 = vmatprep.mubr.bf16.mxu0 0
      %8075 = vmatmul.mubr.bf16.gmra.mrb[0].mxu0 %v7951
      %v8076 = vpop.f32.mrb[0].mxu0
      %v8077 = vadd.f32 %v8004, %v8076
      %v8078 = vpop.f32.mrb[0].mxu0
      %v8079 = vadd.f32 %v8006, %v8078
      %v8080 = vpop.f32.mrb[0].mxu0
      %v8081 = vadd.f32 %v8008, %v8080
      %v8082 = vpop.f32.mrb[0].mxu0
      %v8083 = vadd.f32 %v8010, %v8082
      %8084 = vmatprep.mubr.bf16.mxu0 0
      %8085 = vmatmul.mubr.bf16.gmra.mrb[0].mxu0 %v7954
      %v8086 = vpop.f32.mrb[0].mxu0
      %v8087 = vadd.f32 %v8014, %v8086
      %v8088 = vpop.f32.mrb[0].mxu0
      %v8089 = vadd.f32 %v8016, %v8088
      %v8090 = vpop.f32.mrb[0].mxu0
      %v8091 = vadd.f32 %v8018, %v8090
      %v8092 = vpop.f32.mrb[0].mxu0
      %v8093 = vadd.f32 %v8020, %v8092
      %8094 = vmatprep.mubr.bf16.mxu0 0
      %8095 = vmatmul.mubr.bf16.gmra.mrb[0].mxu0 %v7957
      %v8096 = vpop.f32.mrb[0].mxu0
      %v8097 = vadd.f32 %v8024, %v8096
      %v8098 = vpop.f32.mrb[0].mxu0
      %v8099 = vadd.f32 %v8026, %v8098
      %v8100 = vpop.f32.mrb[0].mxu0
      %v8101 = vadd.f32 %v8028, %v8100
      %v8102 = vpop.f32.mrb[0].mxu0
      %v8103 = vadd.f32 %v8030, %v8102
      %8104 = vdwg.mxu0
      %v8105 = vpack.c.bf16 %v8071, %v8067
      %v8106 = vpack.c.bf16 %v8073, %v8069
      %v8107 = vpack.c.bf16 %v8081, %v8077
      %v8108 = vpack.c.bf16 %v8083, %v8079
      %v8109 = vpack.c.bf16 %v8091, %v8087
      %v8110 = vpack.c.bf16 %v8093, %v8089
      %v8111 = vpack.c.bf16 %v8101, %v8097
      %v8112 = vpack.c.bf16 %v8103, %v8099
      %8113 = vst [vmem:[#allocation8 + $0x40] sm:$0xff] %v8105
      %8114 = vst [vmem:[#allocation8 + $0x48] sm:$0xff] %v8106
      %8115 = vst [vmem:[#allocation8 + $0x50] sm:$0xff] %v8107
      %8116 = vst [vmem:[#allocation8 + $0x58] sm:$0xff] %v8108
      %8117 = vst [vmem:[#allocation8 + $0x60] sm:$0xff] %v8109
      %8118 = vst [vmem:[#allocation8 + $0x68] sm:$0xff] %v8110
      %8119 = vst [vmem:[#allocation8 + $0x70] sm:$0xff] %v8111
      %8120 = vst [vmem:[#allocation8 + $0x78] sm:$0xff] %v8112
      %v8121 = vld [vmem:[#allocation8] sm:$0xff]
      %v8122 = vld [vmem:[#allocation8 + $0x8] sm:$0xff]
      %v8123 = vld [vmem:[#allocation8 + $0x10] sm:$0xff]
      %v8124 = vld [vmem:[#allocation8 + $0x18] sm:$0xff]
      %v8125 = vld [vmem:[#allocation8 + $0x20] sm:$0xff]
      %v8126 = vld [vmem:[#allocation8 + $0x28] sm:$0xff]
      %v8127 = vld [vmem:[#allocation8 + $0x30] sm:$0xff]
      %v8128 = vld [vmem:[#allocation8 + $0x38] sm:$0xff]
      %v8129 = vld [vmem:[#allocation8 + $0x40] sm:$0xff]
      %v8130 = vld [vmem:[#allocation8 + $0x48] sm:$0xff]
      %v8131 = vld [vmem:[#allocation8 + $0x50] sm:$0xff]
      %v8132 = vld [vmem:[#allocation8 + $0x58] sm:$0xff]
      %v8133 = vld [vmem:[#allocation8 + $0x60] sm:$0xff]
      %v8134 = vld [vmem:[#allocation8 + $0x68] sm:$0xff]
      %v8135 = vld [vmem:[#allocation8 + $0x70] sm:$0xff]
      %v8136 = vld [vmem:[#allocation8 + $0x78] sm:$0xff]
      %v8137 = vld [vmem:[%s16] sm:$0xf]
      %v8138 = vld [vmem:[%s16 + $0x4] sm:$0xf]
      %v8139 = vld [vmem:[%s16 + $0x8] sm:$0xf]
      %v8140 = vld [vmem:[%s16 + $0xc] sm:$0xf]
      %v8141 = vld [vmem:[%s16 + $0x10] sm:$0xf]
      %v8142 = vld [vmem:[%s16 + $0x14] sm:$0xf]
      %v8143 = vld [vmem:[%s16 + $0x18] sm:$0xf]
      %v8144 = vld [vmem:[%s16 + $0x1c] sm:$0xf]
      %v8145 = vld [vmem:[%s17] sm:$0xff]
      %v8146 = vld [vmem:[%s17 + $0x8] sm:$0xff]
      %v8147 = vld [vmem:[%s17 + $0x10] sm:$0xff]
      %v8148 = vld [vmem:[%s17 + $0x18] sm:$0xff]
      %v8149 = vld [vmem:[%s17 + $0x20] sm:$0xff]
      %v8150 = vld [vmem:[%s17 + $0x28] sm:$0xff]
      %v8151 = vld [vmem:[%s17 + $0x30] sm:$0xff]
      %v8152 = vld [vmem:[%s17 + $0x38] sm:$0xff]
      %8154 = vset.pattern.permute.xlu0 0
      %8155 = vperm.xlu0 %8154, %v8145
      %v8156 = vpop.permute.xlu0 %8155
      %8159 = vset.pattern.permute.xlu0 0
      %8160 = vperm.xlu0 %8159, %v8146
      %v8161 = vpop.permute.xlu0 %8160
      %8164 = vset.pattern.permute.xlu0 0
      %8165 = vperm.xlu0 %8164, %v8147
      %v8166 = vpop.permute.xlu0 %8165
      %8169 = vset.pattern.permute.xlu0 0
      %8170 = vperm.xlu0 %8169, %v8148
      %v8171 = vpop.permute.xlu0 %8170
      %8174 = vset.pattern.permute.xlu0 0
      %8175 = vperm.xlu0 %8174, %v8149
      %v8176 = vpop.permute.xlu0 %8175
      %8179 = vset.pattern.permute.xlu0 0
      %8180 = vperm.xlu0 %8179, %v8150
      %v8181 = vpop.permute.xlu0 %8180
      %8184 = vset.pattern.permute.xlu0 0
      %8185 = vperm.xlu0 %8184, %v8151
      %v8186 = vpop.permute.xlu0 %8185
      %8189 = vset.pattern.permute.xlu0 0
      %8190 = vperm.xlu0 %8189, %v8152
      %v8191 = vpop.permute.xlu0 %8190
      %v8201 = vunpack.c.l.b16 %v8137
      %v8202 = vunpack.c.l.b16 %v8138
      %v8203 = vunpack.c.l.b16 %v8139
      %v8204 = vunpack.c.l.b16 %v8140
      %v8205 = vunpack.c.l.b16 %v8141
      %v8206 = vunpack.c.l.b16 %v8142
      %v8207 = vunpack.c.l.b16 %v8143
      %v8208 = vunpack.c.l.b16 %v8144
      %v8209 = vpack.c.b16 %v8202, %v8201
      %v8210 = vpack.c.b16 %v8204, %v8203
      %v8211 = vpack.c.b16 %v8206, %v8205
      %v8212 = vpack.c.b16 %v8208, %v8207
      %8217 = vmatprep.subr.bf16.mxu0 %v8122
      %8218 = vmatpush1.bf16.msra.mxu0 %v8121
      %8219 = vmatprep.subr.bf16.mxu0 %v8124
      %8220 = vmatpush1.bf16.msra.mxu0 %v8123
      %8221 = vmatprep.subr.bf16.mxu0 %v8126
      %8222 = vmatpush1.bf16.msra.mxu0 %v8125
      %8223 = vmatprep.subr.bf16.mxu0 %v8128
      %8224 = vmatpush1.bf16.msra.mxu0 %v8127
      %8225 = vmatprep.subr.bf16.mxu0 %v8130
      %8226 = vmatpush1.bf16.msra.mxu0 %v8129
      %8227 = vmatprep.subr.bf16.mxu0 %v8132
      %8228 = vmatpush1.bf16.msra.mxu0 %v8131
      %8229 = vmatprep.subr.bf16.mxu0 %v8134
      %8230 = vmatpush1.bf16.msra.mxu0 %v8133
      %8231 = vmatprep.subr.bf16.mxu0 %v8136
      %8232 = vmatpush1.bf16.msra.mxu0 %v8135
      %8233 = vmatprep.subr.bf16.mxu0 0
      %8234 = vmatpush1.bf16.msra.mxu0 0
      %8235 = vmatprep.subr.bf16.mxu0 0
      %8236 = vmatpush1.bf16.msra.mxu0 0
      %8237 = vmatprep.subr.bf16.mxu0 0
      %8238 = vmatpush1.bf16.msra.mxu0 0
      %8239 = vmatprep.subr.bf16.mxu0 0
      %8240 = vmatpush1.bf16.msra.mxu0 0
      %8241 = vmatprep.subr.bf16.mxu0 0
      %8242 = vmatpush1.bf16.msra.mxu0 0
      %8243 = vmatprep.subr.bf16.mxu0 0
      %8244 = vmatpush1.bf16.msra.mxu0 0
      %8245 = vmatprep.subr.bf16.mxu0 0
      %8246 = vmatpush1.bf16.msra.mxu0 0
      %8247 = vmatprep.subr.bf16.mxu0 0
      %8248 = vmatpush1.bf16.msra.mxu0 0
      %8249 = vmatprep.mubr.bf16.mxu0 0
      %8250 = vmatmul.mubr.bf16.gmra.mrb[0].mxu0 %v8209
      %v8251 = vpop.f32.mrb[0].mxu0
      %v8252 = vadd.f32 %v8156, %v8251
      %v8253 = vpop.f32.mrb[0].mxu0
      %v8254 = vadd.f32 %v8156, %v8253
      %v8255 = vpop.f32.mrb[0].mxu0
      %v8256 = vadd.f32 %v8161, %v8255
      %v8257 = vpop.f32.mrb[0].mxu0
      %v8258 = vadd.f32 %v8161, %v8257
      %8259 = vmatprep.mubr.bf16.mxu0 0
      %8260 = vmatmul.mubr.bf16.gmra.mrb[0].mxu0 %v8210
      %v8261 = vpop.f32.mrb[0].mxu0
      %v8262 = vadd.f32 %v8166, %v8261
      %v8263 = vpop.f32.mrb[0].mxu0
      %v8264 = vadd.f32 %v8166, %v8263
      %v8265 = vpop.f32.mrb[0].mxu0
      %v8266 = vadd.f32 %v8171, %v8265
      %v8267 = vpop.f32.mrb[0].mxu0
      %v8268 = vadd.f32 %v8171, %v8267
      %8269 = vmatprep.mubr.bf16.mxu0 0
      %8270 = vmatmul.mubr.bf16.gmra.mrb[0].mxu0 %v8211
      %v8271 = vpop.f32.mrb[0].mxu0
      %v8272 = vadd.f32 %v8176, %v8271
      %v8273 = vpop.f32.mrb[0].mxu0
      %v8274 = vadd.f32 %v8176, %v8273
      %v8275 = vpop.f32.mrb[0].mxu0
      %v8276 = vadd.f32 %v8181, %v8275
      %v8277 = vpop.f32.mrb[0].mxu0
      %v8278 = vadd.f32 %v8181, %v8277
      %8279 = vmatprep.mubr.bf16.mxu0 0
      %8280 = vmatmul.mubr.bf16.gmra.mrb[0].mxu0 %v8212
      %v8281 = vpop.f32.mrb[0].mxu0
      %v8282 = vadd.f32 %v8186, %v8281
      %v8283 = vpop.f32.mrb[0].mxu0
      %v8284 = vadd.f32 %v8186, %v8283
      %v8285 = vpop.f32.mrb[0].mxu0
      %v8286 = vadd.f32 %v8191, %v8285
      %v8287 = vpop.f32.mrb[0].mxu0
      %v8288 = vadd.f32 %v8191, %v8287
      %8289 = vdwg.mxu0
      %8290 = vst [vmem:[%s575] sm:$0xff] %v8252
      %8291 = vst [vmem:[%s575 + $0x8] sm:$0xff] %v8254
      %8292 = vst [vmem:[%s575 + $0x10] sm:$0xff] %v8256
      %8293 = vst [vmem:[%s575 + $0x18] sm:$0xff] %v8258
      %8294 = vst [vmem:[%s575 + $0x20] sm:$0xff] %v8262
      %8295 = vst [vmem:[%s575 + $0x28] sm:$0xff] %v8264
      %8296 = vst [vmem:[%s575 + $0x30] sm:$0xff] %v8266
      %8297 = vst [vmem:[%s575 + $0x38] sm:$0xff] %v8268
      %8298 = vst [vmem:[%s575 + $0x40] sm:$0xff] %v8272
      %8299 = vst [vmem:[%s575 + $0x48] sm:$0xff] %v8274
      %8300 = vst [vmem:[%s575 + $0x50] sm:$0xff] %v8276
      %8301 = vst [vmem:[%s575 + $0x58] sm:$0xff] %v8278
      %8302 = vst [vmem:[%s575 + $0x60] sm:$0xff] %v8282
      %8303 = vst [vmem:[%s575 + $0x68] sm:$0xff] %v8284
      %8304 = vst [vmem:[%s575 + $0x70] sm:$0xff] %v8286
      %8305 = vst [vmem:[%s575 + $0x78] sm:$0xff] %v8288
      %p8306 = scmp.lt.s32.totalorder %s29, 1
      %s8307 = scalar_select %p8306, %s29, 1
      %s8308 = smul.addr %s8307, 16
      %s8309 = smul.addr %s8308, 8
      %s8310 = scalar_lea.vmem %s18, %s8309
      // Predicated region
      $region93: #{_lambda_.1} parent=91 // pred_check
        %p8311 = pneg %p430
      $region94: #{_lambda_.1} parent=91 // pred_check_branch
        %8313 = sbr.rel (%p8311) target = $region96
      $region95: #{_lambda_.1} parent=91 // pred_region
        _
      $region96: #{_lambda_.1} parent=91 // pred_fallthru
        _
    $region92: #{_lambda_.1} parent=5 // pred_fallthru
      _
    %p8314 = scmp.le.s32.totalorder 2, %s24
    // Predicated region
    $region97: #{_lambda_.1} parent=5 // pred_check
      %p8315 = pneg %p8314
    $region98: #{_lambda_.1} parent=5 // pred_check_branch
      %8317 = sbr.rel (%p8315) target = $region100
    $region99: #{_lambda_.1} parent=5 // pred_region
      %s8318 = ssub.s32 %s24, 2
      // Predicated region
      $region101: #{_lambda_.1} parent=99 // pred_check
        %p8319 = pneg %p436
      $region102: #{_lambda_.1} parent=99 // pred_check_branch
        %8321 = sbr.rel (%p8319) target = $region104
      $region103: #{_lambda_.1} parent=99 // pred_region
        %p8322 = scmp.lt.s32.totalorder %s30, 1
        %s8323 = scalar_select %p8322, %s30, 1
        %s8324 = smul.addr %s8323, 16
        %s8325 = smul.addr %s8324, 8
        %s8326 = scalar_lea.vmem %s18, %s8325
      $region104: #{_lambda_.1} parent=99 // pred_fallthru
        _
    $region100: #{_lambda_.1} parent=5 // pred_fallthru
      _
  $region6: #{_lambda_.1} parent=0 // loop_footer
    %s28 = sadd.s32 1, %s24
  $region7: #{_lambda_.1} parent=0 // loop_footer_branch
    %23 = sbr.rel target = $region3
  $region8: #{_lambda_.1} parent=0 // loop_exit
    _

</llo_original>
